<compile_context>
chip_gen: v5e
topology: v5e:2x2
jax: 0.10.0
libtpu: 0.0.40
codegen_flags: <defaults>
</compile_context>

<pallas_src>
import functools
import math

import jax
import jax.numpy as jnp
from jax.experimental import pallas as pl
from jax.experimental.pallas import tpu as pltpu


# ----------------------------- BlockSpec helpers -----------------------------

def _full_spec(shape):
    """Whole-array block, same block for every grid step (weights / biases)."""
    ndim = len(shape)
    return pl.BlockSpec(shape, lambda b, _ndim=ndim: (0,) * _ndim)


def _batch_spec(K, d):
    """(1, K, d) block indexed by the batch grid axis."""
    return pl.BlockSpec((1, K, d), lambda b: (b, 0, 0))


# ----------------------------- in-kernel helpers -----------------------------

def _add_layernorm(x, residual, g, b, eps=1e-5):
    y = x + residual
    mu = jnp.mean(y, axis=-1, keepdims=True)
    yc = y - mu
    var = jnp.mean(yc * yc, axis=-1, keepdims=True)      # biased, like nn.LayerNorm
    return yc * jax.lax.rsqrt(var + eps) * g + b


def _mha_core(q, k, v, h, dq, dv, causal):
    """All heads of one batch, unrolled; q already scaled by 1/sqrt(K)."""
    Kq, Kk = q.shape[0], k.shape[0]
    heads = []
    for ht in range(h):
        qh = q[:, ht * dq:(ht + 1) * dq]                 # (Kq, dq)
        kh = k[:, ht * dq:(ht + 1) * dq]                 # (Kk, dq)
        vh = v[:, ht * dv:(ht + 1) * dv]                 # (Kk, dv)
        # contract on the last dims -> no explicit k.T (no XLU transpose)
        s = jax.lax.dot_general(qh, kh, (((1,), (1,)), ((), ())),
                                preferred_element_type=jnp.float32)  # (Kq, Kk)
        if causal:
            row = jax.lax.broadcasted_iota(jnp.int32, (Kq, Kk), 0)
            col = jax.lax.broadcasted_iota(jnp.int32, (Kq, Kk), 1)
            s = jnp.where(col > row, -jnp.inf, s)        # torch.triu(diagonal=1)
        s = s - jnp.max(s, axis=-1, keepdims=True)
        p = jnp.exp(s)
        p = p * pl.reciprocal(jnp.sum(p, axis=-1, keepdims=True), approx=True)
        heads.append(jnp.dot(p, vh, preferred_element_type=jnp.float32))
    # chunk(h, dim=0)+cat(dim=-1) of the reference == per-head concat on lanes
    return jnp.concatenate(heads, axis=-1)               # (Kq, h*dv)


# ----------------------------- fused layer kernels -----------------------------

def _linear_kernel(x_ref, w_ref, b_ref, o_ref, *, activation):
    y = jnp.dot(x_ref[0], w_ref[...], preferred_element_type=jnp.float32)
    y = y + b_ref[...]
    if activation == "sigmoid":
        y = jax.nn.sigmoid(y)
    o_ref[0] = y.astype(o_ref.dtype)


def _encoder_kernel(x_ref, wqkv_ref, bqkv_ref, wo_ref, bo_ref,
                    ln1g_ref, ln1b_ref, w1_ref, b1_ref, w2_ref, b2_ref,
                    ln2g_ref, ln2b_ref, o_ref, *, h, dq, dv, scale):
    x = x_ref[0]                                          # (K, D)
    nq = h * dq
    # --- self attention (packed QKV projection, one matmul) ---
    qkv = jnp.dot(x, wqkv_ref[...], preferred_element_type=jnp.float32) + bqkv_ref[...]
    attn = _mha_core(qkv[:, :nq] * scale, qkv[:, nq:2 * nq], qkv[:, 2 * nq:],
                     h, dq, dv, causal=False)
    a = jnp.dot(attn, wo_ref[...], preferred_element_type=jnp.float32) + bo_ref[...]
    x = _add_layernorm(a, x, ln1g_ref[...], ln1b_ref[...])
    # --- feed forward (fused pair, (K, d_ff) activation stays in VMEM) ---
    hid = jnp.maximum(
        jnp.dot(x, w1_ref[...], preferred_element_type=jnp.float32) + b1_ref[...], 0.0)
    ff = jnp.dot(hid, w2_ref[...], preferred_element_type=jnp.float32) + b2_ref[...]
    x = _add_layernorm(ff, x, ln2g_ref[...], ln2b_ref[...])
    o_ref[0] = x.astype(o_ref.dtype)


def _decoder_kernel(x_ref, mem_ref,
                    swqkv_ref, sbqkv_ref, swo_ref, sbo_ref, ln1g_ref, ln1b_ref,
                    cwq_ref, cbq_ref, cwkv_ref, cbkv_ref, cwo_ref, cbo_ref,
                    ln2g_ref, ln2b_ref,
                    w1_ref, b1_ref, w2_ref, b2_ref, ln3g_ref, ln3b_ref,
                    o_ref, *, h, dq, dv, scale):
    x = x_ref[0]                                          # (K, D)
    mem = mem_ref[0]                                      # (K, D)
    nq = h * dq
    # --- causal self attention ---
    qkv = jnp.dot(x, swqkv_ref[...], preferred_element_type=jnp.float32) + sbqkv_ref[...]
    attn = _mha_core(qkv[:, :nq] * scale, qkv[:, nq:2 * nq], qkv[:, 2 * nq:],
                     h, dq, dv, causal=True)
    a = jnp.dot(attn, swo_ref[...], preferred_element_type=jnp.float32) + sbo_ref[...]
    x = _add_layernorm(a, x, ln1g_ref[...], ln1b_ref[...])
    # --- cross attention (Q from x, K/V from encoder memory) ---
    q = (jnp.dot(x, cwq_ref[...], preferred_element_type=jnp.float32) + cbq_ref[...]) * scale
    kv = jnp.dot(mem, cwkv_ref[...], preferred_element_type=jnp.float32) + cbkv_ref[...]
    attn = _mha_core(q, kv[:, :nq], kv[:, nq:], h, dq, dv, causal=False)
    a = jnp.dot(attn, cwo_ref[...], preferred_element_type=jnp.float32) + cbo_ref[...]
    x = _add_layernorm(a, x, ln2g_ref[...], ln2b_ref[...])
    # --- feed forward ---
    hid = jnp.maximum(
        jnp.dot(x, w1_ref[...], preferred_element_type=jnp.float32) + b1_ref[...], 0.0)
    ff = jnp.dot(hid, w2_ref[...], preferred_element_type=jnp.float32) + b2_ref[...]
    x = _add_layernorm(ff, x, ln3g_ref[...], ln3b_ref[...])
    o_ref[0] = x.astype(o_ref.dtype)


# ----------------------------- pallas_call wrappers -----------------------------

_PARALLEL_B = pltpu.CompilerParams(dimension_semantics=("parallel",))


def linear_bkd(x, w, b, activation=None):
    """(B, K, d_in) @ (d_in, d_out) + b, optional sigmoid; grid over batch."""
    B, K, d_in = x.shape
    d_out = w.shape[1]
    return pl.pallas_call(
        functools.partial(_linear_kernel, activation=activation),
        grid=(B,),
        in_specs=[_batch_spec(K, d_in),
                  _full_spec((d_in, d_out)),
                  _full_spec((1, d_out))],
        out_specs=_batch_spec(K, d_out),
        out_shape=jax.ShapeDtypeStruct((B, K, d_out), jnp.float32),
        compiler_params=_PARALLEL_B,
    )(x, w, b.reshape(1, d_out))


def encoder_layer(x, p, cfg):
    # dropout (p=0.3) is identity in eval mode.
    B, K, D = x.shape
    h, dq, dv = cfg["h"], cfg["q"], cfg["v"]
    scale = 1.0 / math.sqrt(K)
    sa = p["self_attn"]
    inputs = [
        x,
        sa["Wqkv"], sa["bqkv"].reshape(1, -1),
        sa["Wo"], sa["bo"].reshape(1, -1),
        p["ln1_g"].reshape(1, -1), p["ln1_b"].reshape(1, -1),
        p["ff_W1"], p["ff_b1"].reshape(1, -1),
        p["ff_W2"], p["ff_b2"].reshape(1, -1),
        p["ln2_g"].reshape(1, -1), p["ln2_b"].reshape(1, -1),
    ]
    in_specs = [_batch_spec(K, D)] + [_full_spec(a.shape) for a in inputs[1:]]
    return pl.pallas_call(
        functools.partial(_encoder_kernel, h=h, dq=dq, dv=dv, scale=scale),
        grid=(B,),
        in_specs=in_specs,
        out_specs=_batch_spec(K, D),
        out_shape=jax.ShapeDtypeStruct((B, K, D), jnp.float32),
        compiler_params=_PARALLEL_B,
    )(*inputs)


def decoder_layer(x, memory, p, cfg):
    B, K, D = x.shape
    h, dq, dv = cfg["h"], cfg["q"], cfg["v"]
    scale = 1.0 / math.sqrt(K)
    sa, ca = p["self_attn"], p["cross_attn"]
    inputs = [
        x, memory,
        sa["Wqkv"], sa["bqkv"].reshape(1, -1),
        sa["Wo"], sa["bo"].reshape(1, -1),
        p["ln1_g"].reshape(1, -1), p["ln1_b"].reshape(1, -1),
        ca["Wq"], ca["bq"].reshape(1, -1),
        ca["Wkv"], ca["bkv"].reshape(1, -1),
        ca["Wo"], ca["bo"].reshape(1, -1),
        p["ln2_g"].reshape(1, -1), p["ln2_b"].reshape(1, -1),
        p["ff_W1"], p["ff_b1"].reshape(1, -1),
        p["ff_W2"], p["ff_b2"].reshape(1, -1),
        p["ln3_g"].reshape(1, -1), p["ln3_b"].reshape(1, -1),
    ]
    in_specs = ([_batch_spec(K, D), _batch_spec(K, D)]
                + [_full_spec(a.shape) for a in inputs[2:]])
    return pl.pallas_call(
        functools.partial(_decoder_kernel, h=h, dq=dq, dv=dv, scale=scale),
        grid=(B,),
        in_specs=in_specs,
        out_specs=_batch_spec(K, D),
        out_shape=jax.ShapeDtypeStruct((B, K, D), jnp.float32),
        compiler_params=_PARALLEL_B,
    )(*inputs)


def transformer_forward(params, x, cfg):
    encoding = linear_bkd(x, params["emb_W"], params["emb_b"])
    # pe=None -> no positional encoding added.

    list_encoding = []
    for p in params["encoders"]:
        encoding = encoder_layer(encoding, p, cfg)
        list_encoding.append(encoding)

    decoding = encoding
    for p in params["decoders"]:
        decoding = decoder_layer(decoding, encoding, p, cfg)

    out = linear_bkd(decoding, params["out_W"], params["out_b"], activation="sigmoid")
    return out, list_encoding


# ----------------------------- Parameter init -----------------------------

def _init_linear(key, d_in, d_out):
    kw, kb = jax.random.split(key)
    bound = 1.0 / math.sqrt(d_in)
    W = jax.random.uniform(kw, (d_in, d_out), jnp.float32, -bound, bound)
    b = jax.random.uniform(kb, (d_out,), jnp.float32, -bound, bound)
    return W, b


def _init_mha(key, d_model, q, v, h, cross=False):
    ks = jax.random.split(key, 4)
    Wq, bq = _init_linear(ks[0], d_model, q * h)
    Wk, bk = _init_linear(ks[1], d_model, q * h)
    Wv, bv = _init_linear(ks[2], d_model, v * h)
    Wo, bo = _init_linear(ks[3], v * h, d_model)
    if cross:
        return dict(Wq=Wq, bq=bq,
                    Wkv=jnp.concatenate([Wk, Wv], axis=1),
                    bkv=jnp.concatenate([bk, bv]),
                    Wo=Wo, bo=bo)
    return dict(Wqkv=jnp.concatenate([Wq, Wk, Wv], axis=1),
                bqkv=jnp.concatenate([bq, bk, bv]),
                Wo=Wo, bo=bo)


def _ln_params(d):
    return jnp.ones((d,), jnp.float32), jnp.zeros((d,), jnp.float32)


def _init_encoder(key, cfg):
    k1, k2, k3 = jax.random.split(key, 3)
    d_model, d_ff = cfg["d_model"], cfg["d_ff"]
    ff_W1, ff_b1 = _init_linear(k2, d_model, d_ff)
    ff_W2, ff_b2 = _init_linear(k3, d_ff, d_model)
    g1, b1 = _ln_params(d_model)
    g2, b2 = _ln_params(d_model)
    return dict(self_attn=_init_mha(k1, d_model, cfg["q"], cfg["v"], cfg["h"]),
                ff_W1=ff_W1, ff_b1=ff_b1, ff_W2=ff_W2, ff_b2=ff_b2,
                ln1_g=g1, ln1_b=b1, ln2_g=g2, ln2_b=b2)


def _init_decoder(key, cfg):
    k1, k2, k3, k4 = jax.random.split(key, 4)
    d_model, d_ff = cfg["d_model"], cfg["d_ff"]
    ff_W1, ff_b1 = _init_linear(k3, d_model, d_ff)
    ff_W2, ff_b2 = _init_linear(k4, d_ff, d_model)
    g1, b1 = _ln_params(d_model)
    g2, b2 = _ln_params(d_model)
    g3, b3 = _ln_params(d_model)
    return dict(self_attn=_init_mha(k1, d_model, cfg["q"], cfg["v"], cfg["h"]),
                cross_attn=_init_mha(k2, d_model, cfg["q"], cfg["v"], cfg["h"], cross=True),
                ff_W1=ff_W1, ff_b1=ff_b1, ff_W2=ff_W2, ff_b2=ff_b2,
                ln1_g=g1, ln1_b=b1, ln2_g=g2, ln2_b=b2, ln3_g=g3, ln3_b=b3)


def build_params(key, cfg):
    keys = jax.random.split(key, 2 + 2 * cfg["N"])
    emb_W, emb_b = _init_linear(keys[0], cfg["d_input"], cfg["d_model"])
    out_W, out_b = _init_linear(keys[1], cfg["d_model"], cfg["d_output"])
    encoders = [_init_encoder(keys[2 + i], cfg) for i in range(cfg["N"])]
    decoders = [_init_decoder(keys[2 + cfg["N"] + i], cfg) for i in range(cfg["N"])]
    return dict(emb_W=emb_W, emb_b=emb_b, out_W=out_W, out_b=out_b,
                encoders=encoders, decoders=decoders)


# TODO(synk): adapt_encoding_weight / update_weight_Boosting (training-time
# transfer-loss helpers) are not part of the forward pass and are not ported.

if __name__ == "__main__":
    cfg = dict(d_input=16, d_model=32, d_output=8, q=8, v=8, h=4, N=2, d_ff=2048)
    B, K = 2, 8

    key = jax.random.PRNGKey(0)
    kp, kx = jax.random.split(key)
    params = build_params(kp, cfg)
    x = jax.random.normal(kx, (B, K, cfg["d_input"]), jnp.float32)

    fwd = jax.jit(functools.partial(transformer_forward, cfg=cfg))
    out, list_encoding = fwd(params, x)
    out = jax.block_until_ready(out)
    list_encoding = [jax.block_until_ready(e) for e in list_encoding]

    assert out.shape == (B, K, cfg["d_output"])
    assert len(list_encoding) == cfg["N"]
    assert all(e.shape == (B, K, cfg["d_model"]) for e in list_encoding)
    assert bool(jnp.isfinite(out).all())
    assert bool((out >= 0.0).all() and (out <= 1.0).all())   # sigmoid range
    print("KERNEL_OK")
</pallas_src>

<mosaic_0001>
module attributes {stable_mosaic.version = 11 : i64} {
  func.func @_linear_kernel(%arg0: i32, %arg1: memref<1x8x16xf32, #tpu.memory_space<vmem>>, %arg2: memref<16x32xf32, #tpu.memory_space<vmem>>, %arg3: memref<1x32xf32, #tpu.memory_space<vmem>>, %arg4: memref<1x8x32xf32, #tpu.memory_space<vmem>>) attributes {dimension_semantics = [#tpu.dimension_semantics<parallel>], iteration_bounds = array<i64: 2>, scalar_prefetch = 0 : i64, scratch_operands = 0 : i64, tpu.core_type = #tpu.core_type<tc>, window_params = [{transform_indices = @transform_0, window_bounds = array<i64: 1, 8, 16>}, {pipeline_mode = #tpu.pipeline_mode<synchronous>, transform_indices = @transform_1, window_bounds = array<i64: 16, 32>}, {pipeline_mode = #tpu.pipeline_mode<synchronous>, transform_indices = @transform_2, window_bounds = array<i64: 1, 32>}, {transform_indices = @transform_3, window_bounds = array<i64: 1, 8, 32>}]} {
    %c0 = arith.constant 0 : index
    %c0_0 = arith.constant 0 : index
    %c0_1 = arith.constant 0 : index
    %0 = vector.load %arg1[%c0, %c0_0, %c0_1] : memref<1x8x16xf32, #tpu.memory_space<vmem>>, vector<1x8x16xf32>
    %1 = vector.shape_cast %0 : vector<1x8x16xf32> to vector<8x16xf32>
    %c0_2 = arith.constant 0 : index
    %c0_3 = arith.constant 0 : index
    %2 = vector.load %arg2[%c0_2, %c0_3] : memref<16x32xf32, #tpu.memory_space<vmem>>, vector<16x32xf32>
    %cst = arith.constant dense<0.000000e+00> : vector<8x32xf32>
    %3 = tpu.matmul %1, %2, %cst {dimension_numbers = #tpu.dot_dimension_numbers<[1], [0], [0], [1], [0, 0, 1, 1], [], []>} : vector<8x16xf32>, vector<16x32xf32>, vector<8x32xf32> -> vector<8x32xf32>
    %c0_4 = arith.constant 0 : index
    %c0_5 = arith.constant 0 : index
    %4 = vector.load %arg3[%c0_4, %c0_5] : memref<1x32xf32, #tpu.memory_space<vmem>>, vector<1x32xf32>
    %5 = vector.broadcast %4 : vector<1x32xf32> to vector<8x32xf32>
    %6 = arith.addf %3, %5 : vector<8x32xf32>
    %c0_6 = arith.constant 0 : index
    %c0_7 = arith.constant 0 : index
    %c0_8 = arith.constant 0 : index
    %7 = vector.load %arg4[%c0_6, %c0_7, %c0_8] : memref<1x8x32xf32, #tpu.memory_space<vmem>>, vector<1x8x32xf32>
    %8 = vector.shape_cast %7 : vector<1x8x32xf32> to vector<8x32xf32>
    %9 = vector.shape_cast %6 : vector<8x32xf32> to vector<1x8x32xf32>
    tpu.vector_store %arg4[%c0_6, %c0_7, %c0_8], %9 {strides = array<i32>} : memref<1x8x32xf32, #tpu.memory_space<vmem>>, vector<1x8x32xf32>,
    return
  }
  func.func @transform_0(%arg0: i32) -> (i32, i32, i32) {
    %c0_i32 = arith.constant 0 : i32
    %c0_i32_0 = arith.constant 0 : i32
    %c0_i32_1 = arith.constant 0 : i32
    return %arg0, %c0_i32, %c0_i32_0 : i32, i32, i32
  }
  func.func @transform_1(%arg0: i32) -> (i32, i32) {
    %c0_i32 = arith.constant 0 : i32
    %c0_i32_0 = arith.constant 0 : i32
    %c0_i32_1 = arith.constant 0 : i32
    return %c0_i32, %c0_i32_0 : i32, i32
  }
  func.func @transform_2(%arg0: i32) -> (i32, i32) {
    %c0_i32 = arith.constant 0 : i32
    %c0_i32_0 = arith.constant 0 : i32
    %c0_i32_1 = arith.constant 0 : i32
    return %c0_i32, %c0_i32_0 : i32, i32
  }
  func.func @transform_3(%arg0: i32) -> (i32, i32, i32) {
    %c0_i32 = arith.constant 0 : i32
    %c0_i32_0 = arith.constant 0 : i32
    %c0_i32_1 = arith.constant 0 : i32
    return %arg0, %c0_i32, %c0_i32_0 : i32, i32, i32
  }
}

module attributes {stable_mosaic.version = 11 : i64} {
  func.func @_encoder_kernel(%arg0: i32, %arg1: memref<1x8x32xf32, #tpu.memory_space<vmem>>, %arg2: memref<32x96xf32, #tpu.memory_space<vmem>>, %arg3: memref<1x96xf32, #tpu.memory_space<vmem>>, %arg4: memref<32x32xf32, #tpu.memory_space<vmem>>, %arg5: memref<1x32xf32, #tpu.memory_space<vmem>>, %arg6: memref<1x32xf32, #tpu.memory_space<vmem>>, %arg7: memref<1x32xf32, #tpu.memory_space<vmem>>, %arg8: memref<32x2048xf32, #tpu.memory_space<vmem>>, %arg9: memref<1x2048xf32, #tpu.memory_space<vmem>>, %arg10: memref<2048x32xf32, #tpu.memory_space<vmem>>, %arg11: memref<1x32xf32, #tpu.memory_space<vmem>>, %arg12: memref<1x32xf32, #tpu.memory_space<vmem>>, %arg13: memref<1x32xf32, #tpu.memory_space<vmem>>, %arg14: memref<1x8x32xf32, #tpu.memory_space<vmem>>) attributes {dimension_semantics = [#tpu.dimension_semantics<parallel>], iteration_bounds = array<i64: 2>, scalar_prefetch = 0 : i64, scratch_operands = 0 : i64, tpu.core_type = #tpu.core_type<tc>, window_params = [{transform_indices = @transform_0, window_bounds = array<i64: 1, 8, 32>}, {pipeline_mode = #tpu.pipeline_mode<synchronous>, transform_indices = @transform_1, window_bounds = array<i64: 32, 96>}, {pipeline_mode = #tpu.pipeline_mode<synchronous>, transform_indices = @transform_2, window_bounds = array<i64: 1, 96>}, {pipeline_mode = #tpu.pipeline_mode<synchronous>, transform_indices = @transform_3, window_bounds = array<i64: 32, 32>}, {pipeline_mode = #tpu.pipeline_mode<synchronous>, transform_indices = @transform_4, window_bounds = array<i64: 1, 32>}, {pipeline_mode = #tpu.pipeline_mode<synchronous>, transform_indices = @transform_5, window_bounds = array<i64: 1, 32>}, {pipeline_mode = #tpu.pipeline_mode<synchronous>, transform_indices = @transform_6, window_bounds = array<i64: 1, 32>}, {pipeline_mode = #tpu.pipeline_mode<synchronous>, transform_indices = @transform_7, window_bounds = array<i64: 32, 2048>}, {pipeline_mode = #tpu.pipeline_mode<synchronous>, transform_indices = @transform_8, window_bounds = array<i64: 1, 2048>}, {pipeline_mode = #tpu.pipeline_mode<synchronous>, transform_indices = @transform_9, window_bounds = array<i64: 2048, 32>}, {pipeline_mode = #tpu.pipeline_mode<synchronous>, transform_indices = @transform_10, window_bounds = array<i64: 1, 32>}, {pipeline_mode = #tpu.pipeline_mode<synchronous>, transform_indices = @transform_11, window_bounds = array<i64: 1, 32>}, {pipeline_mode = #tpu.pipeline_mode<synchronous>, transform_indices = @transform_12, window_bounds = array<i64: 1, 32>}, {transform_indices = @transform_13, window_bounds = array<i64: 1, 8, 32>}]} {
    %c0 = arith.constant 0 : index
    %c0_0 = arith.constant 0 : index
    %c0_1 = arith.constant 0 : index
    %0 = vector.load %arg1[%c0, %c0_0, %c0_1] : memref<1x8x32xf32, #tpu.memory_space<vmem>>, vector<1x8x32xf32>
    %1 = vector.shape_cast %0 : vector<1x8x32xf32> to vector<8x32xf32>
    %c0_2 = arith.constant 0 : index
    %c0_3 = arith.constant 0 : index
    %2 = vector.load %arg2[%c0_2, %c0_3] : memref<32x96xf32, #tpu.memory_space<vmem>>, vector<32x96xf32>
    %cst = arith.constant dense<0.000000e+00> : vector<8x96xf32>
    %3 = tpu.matmul %1, %2, %cst {dimension_numbers = #tpu.dot_dimension_numbers<[1], [0], [0], [1], [0, 0, 1, 1], [], []>} : vector<8x32xf32>, vector<32x96xf32>, vector<8x96xf32> -> vector<8x96xf32>
    %c0_4 = arith.constant 0 : index
    %c0_5 = arith.constant 0 : index
    %4 = vector.load %arg3[%c0_4, %c0_5] : memref<1x96xf32, #tpu.memory_space<vmem>>, vector<1x96xf32>
    %5 = vector.broadcast %4 : vector<1x96xf32> to vector<8x96xf32>
    %6 = arith.addf %3, %5 : vector<8x96xf32>
    %7 = vector.extract_strided_slice %6 {offsets = [0, 0], sizes = [8, 32], strides = [1, 1]} : vector<8x96xf32> to vector<8x32xf32>
    %cst_6 = arith.constant 0.353553385 : f32
    %8 = vector.broadcast %cst_6 : f32 to vector<8x32xf32>
    %9 = arith.mulf %7, %8 : vector<8x32xf32>
    %10 = vector.extract_strided_slice %6 {offsets = [0, 32], sizes = [8, 32], strides = [1, 1]} : vector<8x96xf32> to vector<8x32xf32>
    %11 = vector.extract_strided_slice %6 {offsets = [0, 64], sizes = [8, 32], strides = [1, 1]} : vector<8x96xf32> to vector<8x32xf32>
    %12 = vector.extract_strided_slice %9 {offsets = [0, 0], sizes = [8, 8], strides = [1, 1]} : vector<8x32xf32> to vector<8x8xf32>
    %13 = vector.extract_strided_slice %10 {offsets = [0, 0], sizes = [8, 8], strides = [1, 1]} : vector<8x32xf32> to vector<8x8xf32>
    %14 = vector.extract_strided_slice %11 {offsets = [0, 0], sizes = [8, 8], strides = [1, 1]} : vector<8x32xf32> to vector<8x8xf32>
    %cst_7 = arith.constant dense<0.000000e+00> : vector<8x8xf32>
    %15 = tpu.matmul %12, %13, %cst_7 {dimension_numbers = #tpu.dot_dimension_numbers<[1], [1], [0], [0], [0, 0, 1, 0], [], []>} : vector<8x8xf32>, vector<8x8xf32>, vector<8x8xf32> -> vector<8x8xf32>
    %cst_8 = arith.constant dense<0xFF800000> : vector<8xf32>
    %16 = vector.multi_reduction <maximumf>, %15, %cst_8 [1] : vector<8x8xf32> to vector<8xf32>
    %17 = vector.shape_cast %16 : vector<8xf32> to vector<8x1xf32>
    %18 = vector.broadcast %17 : vector<8x1xf32> to vector<8x8xf32>
    %19 = arith.subf %15, %18 : vector<8x8xf32>
    %20 = math.exp %19 : vector<8x8xf32>
    %cst_9 = arith.constant dense<0.000000e+00> : vector<8xf32>
    %21 = vector.multi_reduction <add>, %20, %cst_9 [1] : vector<8x8xf32> to vector<8xf32>
    %22 = vector.shape_cast %21 : vector<8xf32> to vector<8x1xf32>
    %23 = tpu.reciprocal %22 {approx = true} : vector<8x1xf32> -> vector<8x1xf32>
    %24 = vector.broadcast %23 : vector<8x1xf32> to vector<8x8xf32>
    %25 = arith.mulf %20, %24 : vector<8x8xf32>
    %cst_10 = arith.constant dense<0.000000e+00> : vector<8x8xf32>
    %26 = tpu.matmul %25, %14, %cst_10 {dimension_numbers = #tpu.dot_dimension_numbers<[1], [0], [0], [1], [0, 0, 1, 1], [], []>} : vector<8x8xf32>, vector<8x8xf32>, vector<8x8xf32> -> vector<8x8xf32>
    %27 = vector.extract_strided_slice %9 {offsets = [0, 8], sizes = [8, 8], strides = [1, 1]} : vector<8x32xf32> to vector<8x8xf32>
    %28 = vector.extract_strided_slice %10 {offsets = [0, 8], sizes = [8, 8], strides = [1, 1]} : vector<8x32xf32> to vector<8x8xf32>
    %29 = vector.extract_strided_slice %11 {offsets = [0, 8], sizes = [8, 8], strides = [1, 1]} : vector<8x32xf32> to vector<8x8xf32>
    %cst_11 = arith.constant dense<0.000000e+00> : vector<8x8xf32>
    %30 = tpu.matmul %27, %28, %cst_11 {dimension_numbers = #tpu.dot_dimension_numbers<[1], [1], [0], [0], [0, 0, 1, 0], [], []>} : vector<8x8xf32>, vector<8x8xf32>, vector<8x8xf32> -> vector<8x8xf32>
    %cst_12 = arith.constant dense<0xFF800000> : vector<8xf32>
    %31 = vector.multi_reduction <maximumf>, %30, %cst_12 [1] : vector<8x8xf32> to vector<8xf32>
    %32 = vector.shape_cast %31 : vector<8xf32> to vector<8x1xf32>
    %33 = vector.broadcast %32 : vector<8x1xf32> to vector<8x8xf32>
    %34 = arith.subf %30, %33 : vector<8x8xf32>
    %35 = math.exp %34 : vector<8x8xf32>
    %cst_13 = arith.constant dense<0.000000e+00> : vector<8xf32>
    %36 = vector.multi_reduction <add>, %35, %cst_13 [1] : vector<8x8xf32> to vector<8xf32>
    %37 = vector.shape_cast %36 : vector<8xf32> to vector<8x1xf32>
    %38 = tpu.reciprocal %37 {approx = true} : vector<8x1xf32> -> vector<8x1xf32>
    %39 = vector.broadcast %38 : vector<8x1xf32> to vector<8x8xf32>
    %40 = arith.mulf %35, %39 : vector<8x8xf32>
    %cst_14 = arith.constant dense<0.000000e+00> : vector<8x8xf32>
    %41 = tpu.matmul %40, %29, %cst_14 {dimension_numbers = #tpu.dot_dimension_numbers<[1], [0], [0], [1], [0, 0, 1, 1], [], []>} : vector<8x8xf32>, vector<8x8xf32>, vector<8x8xf32> -> vector<8x8xf32>
    %42 = vector.extract_strided_slice %9 {offsets = [0, 16], sizes = [8, 8], strides = [1, 1]} : vector<8x32xf32> to vector<8x8xf32>
    %43 = vector.extract_strided_slice %10 {offsets = [0, 16], sizes = [8, 8], strides = [1, 1]} : vector<8x32xf32> to vector<8x8xf32>
    %44 = vector.extract_strided_slice %11 {offsets = [0, 16], sizes = [8, 8], strides = [1, 1]} : vector<8x32xf32> to vector<8x8xf32>
    %cst_15 = arith.constant dense<0.000000e+00> : vector<8x8xf32>
    %45 = tpu.matmul %42, %43, %cst_15 {dimension_numbers = #tpu.dot_dimension_numbers<[1], [1], [0], [0], [0, 0, 1, 0], [], []>} : vector<8x8xf32>, vector<8x8xf32>, vector<8x8xf32> -> vector<8x8xf32>
    %cst_16 = arith.constant dense<0xFF800000> : vector<8xf32>
    %46 = vector.multi_reduction <maximumf>, %45, %cst_16 [1] : vector<8x8xf32> to vector<8xf32>
    %47 = vector.shape_cast %46 : vector<8xf32> to vector<8x1xf32>
    %48 = vector.broadcast %47 : vector<8x1xf32> to vector<8x8xf32>
    %49 = arith.subf %45, %48 : vector<8x8xf32>
    %50 = math.exp %49 : vector<8x8xf32>
    %cst_17 = arith.constant dense<0.000000e+00> : vector<8xf32>
    %51 = vector.multi_reduction <add>, %50, %cst_17 [1] : vector<8x8xf32> to vector<8xf32>
    %52 = vector.shape_cast %51 : vector<8xf32> to vector<8x1xf32>
    %53 = tpu.reciprocal %52 {approx = true} : vector<8x1xf32> -> vector<8x1xf32>
    %54 = vector.broadcast %53 : vector<8x1xf32> to vector<8x8xf32>
    %55 = arith.mulf %50, %54 : vector<8x8xf32>
    %cst_18 = arith.constant dense<0.000000e+00> : vector<8x8xf32>
    %56 = tpu.matmul %55, %44, %cst_18 {dimension_numbers = #tpu.dot_dimension_numbers<[1], [0], [0], [1], [0, 0, 1, 1], [], []>} : vector<8x8xf32>, vector<8x8xf32>, vector<8x8xf32> -> vector<8x8xf32>
    %57 = vector.extract_strided_slice %9 {offsets = [0, 24], sizes = [8, 8], strides = [1, 1]} : vector<8x32xf32> to vector<8x8xf32>
    %58 = vector.extract_strided_slice %10 {offsets = [0, 24], sizes = [8, 8], strides = [1, 1]} : vector<8x32xf32> to vector<8x8xf32>
    %59 = vector.extract_strided_slice %11 {offsets = [0, 24], sizes = [8, 8], strides = [1, 1]} : vector<8x32xf32> to vector<8x8xf32>
    %cst_19 = arith.constant dense<0.000000e+00> : vector<8x8xf32>
    %60 = tpu.matmul %57, %58, %cst_19 {dimension_numbers = #tpu.dot_dimension_numbers<[1], [1], [0], [0], [0, 0, 1, 0], [], []>} : vector<8x8xf32>, vector<8x8xf32>, vector<8x8xf32> -> vector<8x8xf32>
    %cst_20 = arith.constant dense<0xFF800000> : vector<8xf32>
    %61 = vector.multi_reduction <maximumf>, %60, %cst_20 [1] : vector<8x8xf32> to vector<8xf32>
    %62 = vector.shape_cast %61 : vector<8xf32> to vector<8x1xf32>
    %63 = vector.broadcast %62 : vector<8x1xf32> to vector<8x8xf32>
    %64 = arith.subf %60, %63 : vector<8x8xf32>
    %65 = math.exp %64 : vector<8x8xf32>
    %cst_21 = arith.constant dense<0.000000e+00> : vector<8xf32>
    %66 = vector.multi_reduction <add>, %65, %cst_21 [1] : vector<8x8xf32> to vector<8xf32>
    %67 = vector.shape_cast %66 : vector<8xf32> to vector<8x1xf32>
    %68 = tpu.reciprocal %67 {approx = true} : vector<8x1xf32> -> vector<8x1xf32>
    %69 = vector.broadcast %68 : vector<8x1xf32> to vector<8x8xf32>
    %70 = arith.mulf %65, %69 : vector<8x8xf32>
    %cst_22 = arith.constant dense<0.000000e+00> : vector<8x8xf32>
    %71 = tpu.matmul %70, %59, %cst_22 {dimension_numbers = #tpu.dot_dimension_numbers<[1], [0], [0], [1], [0, 0, 1, 1], [], []>} : vector<8x8xf32>, vector<8x8xf32>, vector<8x8xf32> -> vector<8x8xf32>
    %72 = tpu.concatenate %26, %41, %56, %71 in 1 : vector<8x8xf32>, vector<8x8xf32>, vector<8x8xf32>, vector<8x8xf32> -> vector<8x32xf32>
    %c0_23 = arith.constant 0 : index
    %c0_24 = arith.constant 0 : index
    %73 = vector.load %arg4[%c0_23, %c0_24] : memref<32x32xf32, #tpu.memory_space<vmem>>, vector<32x32xf32>
    %cst_25 = arith.constant dense<0.000000e+00> : vector<8x32xf32>
    %74 = tpu.matmul %72, %73, %cst_25 {dimension_numbers = #tpu.dot_dimension_numbers<[1], [0], [0], [1], [0, 0, 1, 1], [], []>} : vector<8x32xf32>, vector<32x32xf32>, vector<8x32xf32> -> vector<8x32xf32>
    %c0_26 = arith.constant 0 : index
    %c0_27 = arith.constant 0 : index
    %75 = vector.load %arg5[%c0_26, %c0_27] : memref<1x32xf32, #tpu.memory_space<vmem>>, vector<1x32xf32>
    %76 = vector.broadcast %75 : vector<1x32xf32> to vector<8x32xf32>
    %77 = arith.addf %74, %76 : vector<8x32xf32>
    %c0_28 = arith.constant 0 : index
    %c0_29 = arith.constant 0 : index
    %78 = vector.load %arg6[%c0_28, %c0_29] : memref<1x32xf32, #tpu.memory_space<vmem>>, vector<1x32xf32>
    %c0_30 = arith.constant 0 : index
    %c0_31 = arith.constant 0 : index
    %79 = vector.load %arg7[%c0_30, %c0_31] : memref<1x32xf32, #tpu.memory_space<vmem>>, vector<1x32xf32>
    %80 = arith.addf %77, %1 : vector<8x32xf32>
    %cst_32 = arith.constant dense<0.000000e+00> : vector<8xf32>
    %81 = vector.multi_reduction <add>, %80, %cst_32 [1] : vector<8x32xf32> to vector<8xf32>
    %82 = vector.shape_cast %81 : vector<8xf32> to vector<8x1xf32>
    %cst_33 = arith.constant 3.200000e+01 : f32
    %83 = vector.broadcast %cst_33 : f32 to vector<8x1xf32>
    %84 = arith.divf %82, %83 : vector<8x1xf32>
    %85 = vector.broadcast %84 : vector<8x1xf32> to vector<8x32xf32>
    %86 = arith.subf %80, %85 : vector<8x32xf32>
    %87 = arith.mulf %86, %86 : vector<8x32xf32>
    %cst_34 = arith.constant dense<0.000000e+00> : vector<8xf32>
    %88 = vector.multi_reduction <add>, %87, %cst_34 [1] : vector<8x32xf32> to vector<8xf32>
    %89 = vector.shape_cast %88 : vector<8xf32> to vector<8x1xf32>
    %cst_35 = arith.constant 3.200000e+01 : f32
    %90 = vector.broadcast %cst_35 : f32 to vector<8x1xf32>
    %91 = arith.divf %89, %90 : vector<8x1xf32>
    %cst_36 = arith.constant 9.99999974E-6 : f32
    %92 = vector.broadcast %cst_36 : f32 to vector<8x1xf32>
    %93 = arith.addf %91, %92 : vector<8x1xf32>
    %94 = math.rsqrt %93 : vector<8x1xf32>
    %95 = vector.broadcast %94 : vector<8x1xf32> to vector<8x32xf32>
    %96 = arith.mulf %86, %95 : vector<8x32xf32>
    %97 = vector.broadcast %78 : vector<1x32xf32> to vector<8x32xf32>
    %98 = arith.mulf %96, %97 : vector<8x32xf32>
    %99 = vector.broadcast %79 : vector<1x32xf32> to vector<8x32xf32>
    %100 = arith.addf %98, %99 : vector<8x32xf32>
    %c0_37 = arith.constant 0 : index
    %c0_38 = arith.constant 0 : index
    %101 = vector.load %arg8[%c0_37, %c0_38] : memref<32x2048xf32, #tpu.memory_space<vmem>>, vector<32x2048xf32>
    %cst_39 = arith.constant dense<0.000000e+00> : vector<8x2048xf32>
    %102 = tpu.matmul %100, %101, %cst_39 {dimension_numbers = #tpu.dot_dimension_numbers<[1], [0], [0], [1], [0, 0, 1, 1], [], []>} : vector<8x32xf32>, vector<32x2048xf32>, vector<8x2048xf32> -> vector<8x2048xf32>
    %c0_40 = arith.constant 0 : index
    %c0_41 = arith.constant 0 : index
    %103 = vector.load %arg9[%c0_40, %c0_41] : memref<1x2048xf32, #tpu.memory_space<vmem>>, vector<1x2048xf32>
    %104 = vector.broadcast %103 : vector<1x2048xf32> to vector<8x2048xf32>
    %105 = arith.addf %102, %104 : vector<8x2048xf32>
    %cst_42 = arith.constant 0.000000e+00 : f32
    %106 = vector.broadcast %cst_42 : f32 to vector<8x2048xf32>
    %107 = arith.maximumf %105, %106 : vector<8x2048xf32>
    %c0_43 = arith.constant 0 : index
    %c0_44 = arith.constant 0 : index
    %108 = vector.load %arg10[%c0_43, %c0_44] : memref<2048x32xf32, #tpu.memory_space<vmem>>, vector<2048x32xf32>
    %cst_45 = arith.constant dense<0.000000e+00> : vector<8x32xf32>
    %109 = tpu.matmul %107, %108, %cst_45 {dimension_numbers = #tpu.dot_dimension_numbers<[1], [0], [0], [1], [0, 0, 1, 1], [], []>} : vector<8x2048xf32>, vector<2048x32xf32>, vector<8x32xf32> -> vector<8x32xf32>
    %c0_46 = arith.constant 0 : index
    %c0_47 = arith.constant 0 : index
    %110 = vector.load %arg11[%c0_46, %c0_47] : memref<1x32xf32, #tpu.memory_space<vmem>>, vector<1x32xf32>
    %111 = vector.broadcast %110 : vector<1x32xf32> to vector<8x32xf32>
    %112 = arith.addf %109, %111 : vector<8x32xf32>
    %c0_48 = arith.constant 0 : index
    %c0_49 = arith.constant 0 : index
    %113 = vector.load %arg12[%c0_48, %c0_49] : memref<1x32xf32, #tpu.memory_space<vmem>>, vector<1x32xf32>
    %c0_50 = arith.constant 0 : index
    %c0_51 = arith.constant 0 : index
    %114 = vector.load %arg13[%c0_50, %c0_51] : memref<1x32xf32, #tpu.memory_space<vmem>>, vector<1x32xf32>
    %115 = arith.addf %112, %100 : vector<8x32xf32>
    %cst_52 = arith.constant dense<0.000000e+00> : vector<8xf32>
    %116 = vector.multi_reduction <add>, %115, %cst_52 [1] : vector<8x32xf32> to vector<8xf32>
    %117 = vector.shape_cast %116 : vector<8xf32> to vector<8x1xf32>
    %cst_53 = arith.constant 3.200000e+01 : f32
    %118 = vector.broadcast %cst_53 : f32 to vector<8x1xf32>
    %119 = arith.divf %117, %118 : vector<8x1xf32>
    %120 = vector.broadcast %119 : vector<8x1xf32> to vector<8x32xf32>
    %121 = arith.subf %115, %120 : vector<8x32xf32>
    %122 = arith.mulf %121, %121 : vector<8x32xf32>
    %cst_54 = arith.constant dense<0.000000e+00> : vector<8xf32>
    %123 = vector.multi_reduction <add>, %122, %cst_54 [1] : vector<8x32xf32> to vector<8xf32>
    %124 = vector.shape_cast %123 : vector<8xf32> to vector<8x1xf32>
    %cst_55 = arith.constant 3.200000e+01 : f32
    %125 = vector.broadcast %cst_55 : f32 to vector<8x1xf32>
    %126 = arith.divf %124, %125 : vector<8x1xf32>
    %cst_56 = arith.constant 9.99999974E-6 : f32
    %127 = vector.broadcast %cst_56 : f32 to vector<8x1xf32>
    %128 = arith.addf %126, %127 : vector<8x1xf32>
    %129 = math.rsqrt %128 : vector<8x1xf32>
    %130 = vector.broadcast %129 : vector<8x1xf32> to vector<8x32xf32>
    %131 = arith.mulf %121, %130 : vector<8x32xf32>
    %132 = vector.broadcast %113 : vector<1x32xf32> to vector<8x32xf32>
    %133 = arith.mulf %131, %132 : vector<8x32xf32>
    %134 = vector.broadcast %114 : vector<1x32xf32> to vector<8x32xf32>
    %135 = arith.addf %133, %134 : vector<8x32xf32>
    %c0_57 = arith.constant 0 : index
    %c0_58 = arith.constant 0 : index
    %c0_59 = arith.constant 0 : index
    %136 = vector.load %arg14[%c0_57, %c0_58, %c0_59] : memref<1x8x32xf32, #tpu.memory_space<vmem>>, vector<1x8x32xf32>
    %137 = vector.shape_cast %136 : vector<1x8x32xf32> to vector<8x32xf32>
    %138 = vector.shape_cast %135 : vector<8x32xf32> to vector<1x8x32xf32>
    tpu.vector_store %arg14[%c0_57, %c0_58, %c0_59], %138 {strides = array<i32>} : memref<1x8x32xf32, #tpu.memory_space<vmem>>, vector<1x8x32xf32>,
    return
  }
  func.func @transform_0(%arg0: i32) -> (i32, i32, i32) {
    %c0_i32 = arith.constant 0 : i32
    %c0_i32_0 = arith.constant 0 : i32
    %c0_i32_1 = arith.constant 0 : i32
    return %arg0, %c0_i32, %c0_i32_0 : i32, i32, i32
  }
  func.func @transform_1(%arg0: i32) -> (i32, i32) {
    %c0_i32 = arith.constant 0 : i32
    %c0_i32_0 = arith.constant 0 : i32
    %c0_i32_1 = arith.constant 0 : i32
    return %c0_i32, %c0_i32_0 : i32, i32
  }
  func.func @transform_2(%arg0: i32) -> (i32, i32) {
    %c0_i32 = arith.constant 0 : i32
    %c0_i32_0 = arith.constant 0 : i32
    %c0_i32_1 = arith.constant 0 : i32
    return %c0_i32, %c0_i32_0 : i32, i32
  }
  func.func @transform_3(%arg0: i32) -> (i32, i32) {
    %c0_i32 = arith.constant 0 : i32
    %c0_i32_0 = arith.constant 0 : i32
    %c0_i32_1 = arith.constant 0 : i32
    return %c0_i32, %c0_i32_0 : i32, i32
  }
  func.func @transform_4(%arg0: i32) -> (i32, i32) {
    %c0_i32 = arith.constant 0 : i32
    %c0_i32_0 = arith.constant 0 : i32
    %c0_i32_1 = arith.constant 0 : i32
    return %c0_i32, %c0_i32_0 : i32, i32
  }
  func.func @transform_5(%arg0: i32) -> (i32, i32) {
    %c0_i32 = arith.constant 0 : i32
    %c0_i32_0 = arith.constant 0 : i32
    %c0_i32_1 = arith.constant 0 : i32
    return %c0_i32, %c0_i32_0 : i32, i32
  }
  func.func @transform_6(%arg0: i32) -> (i32, i32) {
    %c0_i32 = arith.constant 0 : i32
    %c0_i32_0 = arith.constant 0 : i32
    %c0_i32_1 = arith.constant 0 : i32
    return %c0_i32, %c0_i32_0 : i32, i32
  }
  func.func @transform_7(%arg0: i32) -> (i32, i32) {
    %c0_i32 = arith.constant 0 : i32
    %c0_i32_0 = arith.constant 0 : i32
    %c0_i32_1 = arith.constant 0 : i32
    return %c0_i32, %c0_i32_0 : i32, i32
  }
  func.func @transform_8(%arg0: i32) -> (i32, i32) {
    %c0_i32 = arith.constant 0 : i32
    %c0_i32_0 = arith.constant 0 : i32
    %c0_i32_1 = arith.constant 0 : i32
    return %c0_i32, %c0_i32_0 : i32, i32
  }
  func.func @transform_9(%arg0: i32) -> (i32, i32) {
    %c0_i32 = arith.constant 0 : i32
    %c0_i32_0 = arith.constant 0 : i32
    %c0_i32_1 = arith.constant 0 : i32
    return %c0_i32, %c0_i32_0 : i32, i32
  }
  func.func @transform_10(%arg0: i32) -> (i32, i32) {
    %c0_i32 = arith.constant 0 : i32
    %c0_i32_0 = arith.constant 0 : i32
    %c0_i32_1 = arith.constant 0 : i32
    return %c0_i32, %c0_i32_0 : i32, i32
  }
  func.func @transform_11(%arg0: i32) -> (i32, i32) {
    %c0_i32 = arith.constant 0 : i32
    %c0_i32_0 = arith.constant 0 : i32
    %c0_i32_1 = arith.constant 0 : i32
    return %c0_i32, %c0_i32_0 : i32, i32
  }
  func.func @transform_12(%arg0: i32) -> (i32, i32) {
    %c0_i32 = arith.constant 0 : i32
    %c0_i32_0 = arith.constant 0 : i32
    %c0_i32_1 = arith.constant 0 : i32
    return %c0_i32, %c0_i32_0 : i32, i32
  }
  func.func @transform_13(%arg0: i32) -> (i32, i32, i32) {
    %c0_i32 = arith.constant 0 : i32
    %c0_i32_0 = arith.constant 0 : i32
    %c0_i32_1 = arith.constant 0 : i32
    return %arg0, %c0_i32, %c0_i32_0 : i32, i32, i32
  }
}

module attributes {stable_mosaic.version = 11 : i64} {
  func.func @_linear_kernel(%arg0: i32, %arg1: memref<1x8x32xf32, #tpu.memory_space<vmem>>, %arg2: memref<32x8xf32, #tpu.memory_space<vmem>>, %arg3: memref<1x8xf32, #tpu.memory_space<vmem>>, %arg4: memref<1x8x8xf32, #tpu.memory_space<vmem>>) attributes {dimension_semantics = [#tpu.dimension_semantics<parallel>], iteration_bounds = array<i64: 2>, scalar_prefetch = 0 : i64, scratch_operands = 0 : i64, tpu.core_type = #tpu.core_type<tc>, window_params = [{transform_indices = @transform_0, window_bounds = array<i64: 1, 8, 32>}, {pipeline_mode = #tpu.pipeline_mode<synchronous>, transform_indices = @transform_1, window_bounds = array<i64: 32, 8>}, {pipeline_mode = #tpu.pipeline_mode<synchronous>, transform_indices = @transform_2, window_bounds = array<i64: 1, 8>}, {transform_indices = @transform_3, window_bounds = array<i64: 1, 8, 8>}]} {
    %c0 = arith.constant 0 : index
    %c0_0 = arith.constant 0 : index
    %c0_1 = arith.constant 0 : index
    %0 = vector.load %arg1[%c0, %c0_0, %c0_1] : memref<1x8x32xf32, #tpu.memory_space<vmem>>, vector<1x8x32xf32>
    %1 = vector.shape_cast %0 : vector<1x8x32xf32> to vector<8x32xf32>
    %c0_2 = arith.constant 0 : index
    %c0_3 = arith.constant 0 : index
    %2 = vector.load %arg2[%c0_2, %c0_3] : memref<32x8xf32, #tpu.memory_space<vmem>>, vector<32x8xf32>
    %cst = arith.constant dense<0.000000e+00> : vector<8x8xf32>
    %3 = tpu.matmul %1, %2, %cst {dimension_numbers = #tpu.dot_dimension_numbers<[1], [0], [0], [1], [0, 0, 1, 1], [], []>} : vector<8x32xf32>, vector<32x8xf32>, vector<8x8xf32> -> vector<8x8xf32>
    %c0_4 = arith.constant 0 : index
    %c0_5 = arith.constant 0 : index
    %4 = vector.load %arg3[%c0_4, %c0_5] : memref<1x8xf32, #tpu.memory_space<vmem>>, vector<1x8xf32>
    %5 = vector.broadcast %4 : vector<1x8xf32> to vector<8x8xf32>
    %6 = arith.addf %3, %5 : vector<8x8xf32>
    %7 = arith.negf %6 : vector<8x8xf32>
    %8 = math.exp %7 : vector<8x8xf32>
    %cst_6 = arith.constant 1.000000e+00 : f32
    %9 = vector.broadcast %cst_6 : f32 to vector<8x8xf32>
    %10 = arith.addf %9, %8 : vector<8x8xf32>
    %11 = arith.divf %9, %10 : vector<8x8xf32>
    %c0_7 = arith.constant 0 : index
    %c0_8 = arith.constant 0 : index
    %c0_9 = arith.constant 0 : index
    %12 = vector.load %arg4[%c0_7, %c0_8, %c0_9] : memref<1x8x8xf32, #tpu.memory_space<vmem>>, vector<1x8x8xf32>
    %13 = vector.shape_cast %12 : vector<1x8x8xf32> to vector<8x8xf32>
    %14 = vector.shape_cast %11 : vector<8x8xf32> to vector<1x8x8xf32>
    tpu.vector_store %arg4[%c0_7, %c0_8, %c0_9], %14 {strides = array<i32>} : memref<1x8x8xf32, #tpu.memory_space<vmem>>, vector<1x8x8xf32>,
    return
  }
  func.func @transform_0(%arg0: i32) -> (i32, i32, i32) {
    %c0_i32 = arith.constant 0 : i32
    %c0_i32_0 = arith.constant 0 : i32
    %c0_i32_1 = arith.constant 0 : i32
    return %arg0, %c0_i32, %c0_i32_0 : i32, i32, i32
  }
  func.func @transform_1(%arg0: i32) -> (i32, i32) {
    %c0_i32 = arith.constant 0 : i32
    %c0_i32_0 = arith.constant 0 : i32
    %c0_i32_1 = arith.constant 0 : i32
    return %c0_i32, %c0_i32_0 : i32, i32
  }
  func.func @transform_2(%arg0: i32) -> (i32, i32) {
    %c0_i32 = arith.constant 0 : i32
    %c0_i32_0 = arith.constant 0 : i32
    %c0_i32_1 = arith.constant 0 : i32
    return %c0_i32, %c0_i32_0 : i32, i32
  }
  func.func @transform_3(%arg0: i32) -> (i32, i32, i32) {
    %c0_i32 = arith.constant 0 : i32
    %c0_i32_0 = arith.constant 0 : i32
    %c0_i32_1 = arith.constant 0 : i32
    return %arg0, %c0_i32, %c0_i32_0 : i32, i32, i32
  }
}

module attributes {stable_mosaic.version = 11 : i64} {
  func.func @_decoder_kernel(%arg0: i32, %arg1: memref<1x8x32xf32, #tpu.memory_space<vmem>>, %arg2: memref<1x8x32xf32, #tpu.memory_space<vmem>>, %arg3: memref<32x96xf32, #tpu.memory_space<vmem>>, %arg4: memref<1x96xf32, #tpu.memory_space<vmem>>, %arg5: memref<32x32xf32, #tpu.memory_space<vmem>>, %arg6: memref<1x32xf32, #tpu.memory_space<vmem>>, %arg7: memref<1x32xf32, #tpu.memory_space<vmem>>, %arg8: memref<1x32xf32, #tpu.memory_space<vmem>>, %arg9: memref<32x32xf32, #tpu.memory_space<vmem>>, %arg10: memref<1x32xf32, #tpu.memory_space<vmem>>, %arg11: memref<32x64xf32, #tpu.memory_space<vmem>>, %arg12: memref<1x64xf32, #tpu.memory_space<vmem>>, %arg13: memref<32x32xf32, #tpu.memory_space<vmem>>, %arg14: memref<1x32xf32, #tpu.memory_space<vmem>>, %arg15: memref<1x32xf32, #tpu.memory_space<vmem>>, %arg16: memref<1x32xf32, #tpu.memory_space<vmem>>, %arg17: memref<32x2048xf32, #tpu.memory_space<vmem>>, %arg18: memref<1x2048xf32, #tpu.memory_space<vmem>>, %arg19: memref<2048x32xf32, #tpu.memory_space<vmem>>, %arg20: memref<1x32xf32, #tpu.memory_space<vmem>>, %arg21: memref<1x32xf32, #tpu.memory_space<vmem>>, %arg22: memref<1x32xf32, #tpu.memory_space<vmem>>, %arg23: memref<1x8x32xf32, #tpu.memory_space<vmem>>) attributes {dimension_semantics = [#tpu.dimension_semantics<parallel>], iteration_bounds = array<i64: 2>, scalar_prefetch = 0 : i64, scratch_operands = 0 : i64, tpu.core_type = #tpu.core_type<tc>, window_params = [{transform_indices = @transform_0, window_bounds = array<i64: 1, 8, 32>}, {transform_indices = @transform_1, window_bounds = array<i64: 1, 8, 32>}, {pipeline_mode = #tpu.pipeline_mode<synchronous>, transform_indices = @transform_2, window_bounds = array<i64: 32, 96>}, {pipeline_mode = #tpu.pipeline_mode<synchronous>, transform_indices = @transform_3, window_bounds = array<i64: 1, 96>}, {pipeline_mode = #tpu.pipeline_mode<synchronous>, transform_indices = @transform_4, window_bounds = array<i64: 32, 32>}, {pipeline_mode = #tpu.pipeline_mode<synchronous>, transform_indices = @transform_5, window_bounds = array<i64: 1, 32>}, {pipeline_mode = #tpu.pipeline_mode<synchronous>, transform_indices = @transform_6, window_bounds = array<i64: 1, 32>}, {pipeline_mode = #tpu.pipeline_mode<synchronous>, transform_indices = @transform_7, window_bounds = array<i64: 1, 32>}, {pipeline_mode = #tpu.pipeline_mode<synchronous>, transform_indices = @transform_8, window_bounds = array<i64: 32, 32>}, {pipeline_mode = #tpu.pipeline_mode<synchronous>, transform_indices = @transform_9, window_bounds = array<i64: 1, 32>}, {pipeline_mode = #tpu.pipeline_mode<synchronous>, transform_indices = @transform_10, window_bounds = array<i64: 32, 64>}, {pipeline_mode = #tpu.pipeline_mode<synchronous>, transform_indices = @transform_11, window_bounds = array<i64: 1, 64>}, {pipeline_mode = #tpu.pipeline_mode<synchronous>, transform_indices = @transform_12, window_bounds = array<i64: 32, 32>}, {pipeline_mode = #tpu.pipeline_mode<synchronous>, transform_indices = @transform_13, window_bounds = array<i64: 1, 32>}, {pipeline_mode = #tpu.pipeline_mode<synchronous>, transform_indices = @transform_14, window_bounds = array<i64: 1, 32>}, {pipeline_mode = #tpu.pipeline_mode<synchronous>, transform_indices = @transform_15, window_bounds = array<i64: 1, 32>}, {pipeline_mode = #tpu.pipeline_mode<synchronous>, transform_indices = @transform_16, window_bounds = array<i64: 32, 2048>}, {pipeline_mode = #tpu.pipeline_mode<synchronous>, transform_indices = @transform_17, window_bounds = array<i64: 1, 2048>}, {pipeline_mode = #tpu.pipeline_mode<synchronous>, transform_indices = @transform_18, window_bounds = array<i64: 2048, 32>}, {pipeline_mode = #tpu.pipeline_mode<synchronous>, transform_indices = @transform_19, window_bounds = array<i64: 1, 32>}, {pipeline_mode = #tpu.pipeline_mode<synchronous>, transform_indices = @transform_20, window_bounds = array<i64: 1, 32>}, {pipeline_mode = #tpu.pipeline_mode<synchronous>, transform_indices = @transform_21, window_bounds = array<i64: 1, 32>}, {transform_indices = @transform_22, window_bounds = array<i64: 1, 8, 32>}]} {
    %c0 = arith.constant 0 : index
    %c0_0 = arith.constant 0 : index
    %c0_1 = arith.constant 0 : index
    %0 = vector.load %arg1[%c0, %c0_0, %c0_1] : memref<1x8x32xf32, #tpu.memory_space<vmem>>, vector<1x8x32xf32>
    %1 = vector.shape_cast %0 : vector<1x8x32xf32> to vector<8x32xf32>
    %c0_2 = arith.constant 0 : index
    %c0_3 = arith.constant 0 : index
    %c0_4 = arith.constant 0 : index
    %2 = vector.load %arg2[%c0_2, %c0_3, %c0_4] : memref<1x8x32xf32, #tpu.memory_space<vmem>>, vector<1x8x32xf32>
    %3 = vector.shape_cast %2 : vector<1x8x32xf32> to vector<8x32xf32>
    %c0_5 = arith.constant 0 : index
    %c0_6 = arith.constant 0 : index
    %4 = vector.load %arg3[%c0_5, %c0_6] : memref<32x96xf32, #tpu.memory_space<vmem>>, vector<32x96xf32>
    %cst = arith.constant dense<0.000000e+00> : vector<8x96xf32>
    %5 = tpu.matmul %1, %4, %cst {dimension_numbers = #tpu.dot_dimension_numbers<[1], [0], [0], [1], [0, 0, 1, 1], [], []>} : vector<8x32xf32>, vector<32x96xf32>, vector<8x96xf32> -> vector<8x96xf32>
    %c0_7 = arith.constant 0 : index
    %c0_8 = arith.constant 0 : index
    %6 = vector.load %arg4[%c0_7, %c0_8] : memref<1x96xf32, #tpu.memory_space<vmem>>, vector<1x96xf32>
    %7 = vector.broadcast %6 : vector<1x96xf32> to vector<8x96xf32>
    %8 = arith.addf %5, %7 : vector<8x96xf32>
    %9 = vector.extract_strided_slice %8 {offsets = [0, 0], sizes = [8, 32], strides = [1, 1]} : vector<8x96xf32> to vector<8x32xf32>
    %cst_9 = arith.constant 0.353553385 : f32
    %10 = vector.broadcast %cst_9 : f32 to vector<8x32xf32>
    %11 = arith.mulf %9, %10 : vector<8x32xf32>
    %12 = vector.extract_strided_slice %8 {offsets = [0, 32], sizes = [8, 32], strides = [1, 1]} : vector<8x96xf32> to vector<8x32xf32>
    %13 = vector.extract_strided_slice %8 {offsets = [0, 64], sizes = [8, 32], strides = [1, 1]} : vector<8x96xf32> to vector<8x32xf32>
    %14 = vector.extract_strided_slice %11 {offsets = [0, 0], sizes = [8, 8], strides = [1, 1]} : vector<8x32xf32> to vector<8x8xf32>
    %15 = vector.extract_strided_slice %12 {offsets = [0, 0], sizes = [8, 8], strides = [1, 1]} : vector<8x32xf32> to vector<8x8xf32>
    %16 = vector.extract_strided_slice %13 {offsets = [0, 0], sizes = [8, 8], strides = [1, 1]} : vector<8x32xf32> to vector<8x8xf32>
    %cst_10 = arith.constant dense<0.000000e+00> : vector<8x8xf32>
    %17 = tpu.matmul %14, %15, %cst_10 {dimension_numbers = #tpu.dot_dimension_numbers<[1], [1], [0], [0], [0, 0, 1, 0], [], []>} : vector<8x8xf32>, vector<8x8xf32>, vector<8x8xf32> -> vector<8x8xf32>
    %18 = tpu.iota {dimensions = array<i32: 0>} : vector<8x8xi32>
    %19 = tpu.iota {dimensions = array<i32: 1>} : vector<8x8xi32>
    %20 = arith.cmpi sgt, %19, %18 : vector<8x8xi32>
    %cst_11 = arith.constant 0xFF800000 : f32
    %21 = vector.broadcast %cst_11 : f32 to vector<8x8xf32>
    %22 = arith.select %20, %21, %17 : vector<8x8xi1>, vector<8x8xf32>
    %cst_12 = arith.constant dense<0xFF800000> : vector<8xf32>
    %23 = vector.multi_reduction <maximumf>, %22, %cst_12 [1] : vector<8x8xf32> to vector<8xf32>
    %24 = vector.shape_cast %23 : vector<8xf32> to vector<8x1xf32>
    %25 = vector.broadcast %24 : vector<8x1xf32> to vector<8x8xf32>
    %26 = arith.subf %22, %25 : vector<8x8xf32>
    %27 = math.exp %26 : vector<8x8xf32>
    %cst_13 = arith.constant dense<0.000000e+00> : vector<8xf32>
    %28 = vector.multi_reduction <add>, %27, %cst_13 [1] : vector<8x8xf32> to vector<8xf32>
    %29 = vector.shape_cast %28 : vector<8xf32> to vector<8x1xf32>
    %30 = tpu.reciprocal %29 {approx = true} : vector<8x1xf32> -> vector<8x1xf32>
    %31 = vector.broadcast %30 : vector<8x1xf32> to vector<8x8xf32>
    %32 = arith.mulf %27, %31 : vector<8x8xf32>
    %cst_14 = arith.constant dense<0.000000e+00> : vector<8x8xf32>
    %33 = tpu.matmul %32, %16, %cst_14 {dimension_numbers = #tpu.dot_dimension_numbers<[1], [0], [0], [1], [0, 0, 1, 1], [], []>} : vector<8x8xf32>, vector<8x8xf32>, vector<8x8xf32> -> vector<8x8xf32>
    %34 = vector.extract_strided_slice %11 {offsets = [0, 8], sizes = [8, 8], strides = [1, 1]} : vector<8x32xf32> to vector<8x8xf32>
    %35 = vector.extract_strided_slice %12 {offsets = [0, 8], sizes = [8, 8], strides = [1, 1]} : vector<8x32xf32> to vector<8x8xf32>
    %36 = vector.extract_strided_slice %13 {offsets = [0, 8], sizes = [8, 8], strides = [1, 1]} : vector<8x32xf32> to vector<8x8xf32>
    %cst_15 = arith.constant dense<0.000000e+00> : vector<8x8xf32>
    %37 = tpu.matmul %34, %35, %cst_15 {dimension_numbers = #tpu.dot_dimension_numbers<[1], [1], [0], [0], [0, 0, 1, 0], [], []>} : vector<8x8xf32>, vector<8x8xf32>, vector<8x8xf32> -> vector<8x8xf32>
    %38 = tpu.iota {dimensions = array<i32: 0>} : vector<8x8xi32>
    %39 = tpu.iota {dimensions = array<i32: 1>} : vector<8x8xi32>
    %40 = arith.cmpi sgt, %39, %38 : vector<8x8xi32>
    %cst_16 = arith.constant 0xFF800000 : f32
    %41 = vector.broadcast %cst_16 : f32 to vector<8x8xf32>
    %42 = arith.select %40, %41, %37 : vector<8x8xi1>, vector<8x8xf32>
    %cst_17 = arith.constant dense<0xFF800000> : vector<8xf32>
    %43 = vector.multi_reduction <maximumf>, %42, %cst_17 [1] : vector<8x8xf32> to vector<8xf32>
    %44 = vector.shape_cast %43 : vector<8xf32> to vector<8x1xf32>
    %45 = vector.broadcast %44 : vector<8x1xf32> to vector<8x8xf32>
    %46 = arith.subf %42, %45 : vector<8x8xf32>
    %47 = math.exp %46 : vector<8x8xf32>
    %cst_18 = arith.constant dense<0.000000e+00> : vector<8xf32>
    %48 = vector.multi_reduction <add>, %47, %cst_18 [1] : vector<8x8xf32> to vector<8xf32>
    %49 = vector.shape_cast %48 : vector<8xf32> to vector<8x1xf32>
    %50 = tpu.reciprocal %49 {approx = true} : vector<8x1xf32> -> vector<8x1xf32>
    %51 = vector.broadcast %50 : vector<8x1xf32> to vector<8x8xf32>
    %52 = arith.mulf %47, %51 : vector<8x8xf32>
    %cst_19 = arith.constant dense<0.000000e+00> : vector<8x8xf32>
    %53 = tpu.matmul %52, %36, %cst_19 {dimension_numbers = #tpu.dot_dimension_numbers<[1], [0], [0], [1], [0, 0, 1, 1], [], []>} : vector<8x8xf32>, vector<8x8xf32>, vector<8x8xf32> -> vector<8x8xf32>
    %54 = vector.extract_strided_slice %11 {offsets = [0, 16], sizes = [8, 8], strides = [1, 1]} : vector<8x32xf32> to vector<8x8xf32>
    %55 = vector.extract_strided_slice %12 {offsets = [0, 16], sizes = [8, 8], strides = [1, 1]} : vector<8x32xf32> to vector<8x8xf32>
    %56 = vector.extract_strided_slice %13 {offsets = [0, 16], sizes = [8, 8], strides = [1, 1]} : vector<8x32xf32> to vector<8x8xf32>
    %cst_20 = arith.constant dense<0.000000e+00> : vector<8x8xf32>
    %57 = tpu.matmul %54, %55, %cst_20 {dimension_numbers = #tpu.dot_dimension_numbers<[1], [1], [0], [0], [0, 0, 1, 0], [], []>} : vector<8x8xf32>, vector<8x8xf32>, vector<8x8xf32> -> vector<8x8xf32>
    %58 = tpu.iota {dimensions = array<i32: 0>} : vector<8x8xi32>
    %59 = tpu.iota {dimensions = array<i32: 1>} : vector<8x8xi32>
    %60 = arith.cmpi sgt, %59, %58 : vector<8x8xi32>
    %cst_21 = arith.constant 0xFF800000 : f32
    %61 = vector.broadcast %cst_21 : f32 to vector<8x8xf32>
    %62 = arith.select %60, %61, %57 : vector<8x8xi1>, vector<8x8xf32>
    %cst_22 = arith.constant dense<0xFF800000> : vector<8xf32>
    %63 = vector.multi_reduction <maximumf>, %62, %cst_22 [1] : vector<8x8xf32> to vector<8xf32>
    %64 = vector.shape_cast %63 : vector<8xf32> to vector<8x1xf32>
    %65 = vector.broadcast %64 : vector<8x1xf32> to vector<8x8xf32>
    %66 = arith.subf %62, %65 : vector<8x8xf32>
    %67 = math.exp %66 : vector<8x8xf32>
    %cst_23 = arith.constant dense<0.000000e+00> : vector<8xf32>
    %68 = vector.multi_reduction <add>, %67, %cst_23 [1] : vector<8x8xf32> to vector<8xf32>
    %69 = vector.shape_cast %68 : vector<8xf32> to vector<8x1xf32>
    %70 = tpu.reciprocal %69 {approx = true} : vector<8x1xf32> -> vector<8x1xf32>
    %71 = vector.broadcast %70 : vector<8x1xf32> to vector<8x8xf32>
    %72 = arith.mulf %67, %71 : vector<8x8xf32>
    %cst_24 = arith.constant dense<0.000000e+00> : vector<8x8xf32>
    %73 = tpu.matmul %72, %56, %cst_24 {dimension_numbers = #tpu.dot_dimension_numbers<[1], [0], [0], [1], [0, 0, 1, 1], [], []>} : vector<8x8xf32>, vector<8x8xf32>, vector<8x8xf32> -> vector<8x8xf32>
    %74 = vector.extract_strided_slice %11 {offsets = [0, 24], sizes = [8, 8], strides = [1, 1]} : vector<8x32xf32> to vector<8x8xf32>
    %75 = vector.extract_strided_slice %12 {offsets = [0, 24], sizes = [8, 8], strides = [1, 1]} : vector<8x32xf32> to vector<8x8xf32>
    %76 = vector.extract_strided_slice %13 {offsets = [0, 24], sizes = [8, 8], strides = [1, 1]} : vector<8x32xf32> to vector<8x8xf32>
    %cst_25 = arith.constant dense<0.000000e+00> : vector<8x8xf32>
    %77 = tpu.matmul %74, %75, %cst_25 {dimension_numbers = #tpu.dot_dimension_numbers<[1], [1], [0], [0], [0, 0, 1, 0], [], []>} : vector<8x8xf32>, vector<8x8xf32>, vector<8x8xf32> -> vector<8x8xf32>
    %78 = tpu.iota {dimensions = array<i32: 0>} : vector<8x8xi32>
    %79 = tpu.iota {dimensions = array<i32: 1>} : vector<8x8xi32>
    %80 = arith.cmpi sgt, %79, %78 : vector<8x8xi32>
    %cst_26 = arith.constant 0xFF800000 : f32
    %81 = vector.broadcast %cst_26 : f32 to vector<8x8xf32>
    %82 = arith.select %80, %81, %77 : vector<8x8xi1>, vector<8x8xf32>
    %cst_27 = arith.constant dense<0xFF800000> : vector<8xf32>
    %83 = vector.multi_reduction <maximumf>, %82, %cst_27 [1] : vector<8x8xf32> to vector<8xf32>
    %84 = vector.shape_cast %83 : vector<8xf32> to vector<8x1xf32>
    %85 = vector.broadcast %84 : vector<8x1xf32> to vector<8x8xf32>
    %86 = arith.subf %82, %85 : vector<8x8xf32>
    %87 = math.exp %86 : vector<8x8xf32>
    %cst_28 = arith.constant dense<0.000000e+00> : vector<8xf32>
    %88 = vector.multi_reduction <add>, %87, %cst_28 [1] : vector<8x8xf32> to vector<8xf32>
    %89 = vector.shape_cast %88 : vector<8xf32> to vector<8x1xf32>
    %90 = tpu.reciprocal %89 {approx = true} : vector<8x1xf32> -> vector<8x1xf32>
    %91 = vector.broadcast %90 : vector<8x1xf32> to vector<8x8xf32>
    %92 = arith.mulf %87, %91 : vector<8x8xf32>
    %cst_29 = arith.constant dense<0.000000e+00> : vector<8x8xf32>
    %93 = tpu.matmul %92, %76, %cst_29 {dimension_numbers = #tpu.dot_dimension_numbers<[1], [0], [0], [1], [0, 0, 1, 1], [], []>} : vector<8x8xf32>, vector<8x8xf32>, vector<8x8xf32> -> vector<8x8xf32>
    %94 = tpu.concatenate %33, %53, %73, %93 in 1 : vector<8x8xf32>, vector<8x8xf32>, vector<8x8xf32>, vector<8x8xf32> -> vector<8x32xf32>
    %c0_30 = arith.constant 0 : index
    %c0_31 = arith.constant 0 : index
    %95 = vector.load %arg5[%c0_30, %c0_31] : memref<32x32xf32, #tpu.memory_space<vmem>>, vector<32x32xf32>
    %cst_32 = arith.constant dense<0.000000e+00> : vector<8x32xf32>
    %96 = tpu.matmul %94, %95, %cst_32 {dimension_numbers = #tpu.dot_dimension_numbers<[1], [0], [0], [1], [0, 0, 1, 1], [], []>} : vector<8x32xf32>, vector<32x32xf32>, vector<8x32xf32> -> vector<8x32xf32>
    %c0_33 = arith.constant 0 : index
    %c0_34 = arith.constant 0 : index
    %97 = vector.load %arg6[%c0_33, %c0_34] : memref<1x32xf32, #tpu.memory_space<vmem>>, vector<1x32xf32>
    %98 = vector.broadcast %97 : vector<1x32xf32> to vector<8x32xf32>
    %99 = arith.addf %96, %98 : vector<8x32xf32>
    %c0_35 = arith.constant 0 : index
    %c0_36 = arith.constant 0 : index
    %100 = vector.load %arg7[%c0_35, %c0_36] : memref<1x32xf32, #tpu.memory_space<vmem>>, vector<1x32xf32>
    %c0_37 = arith.constant 0 : index
    %c0_38 = arith.constant 0 : index
    %101 = vector.load %arg8[%c0_37, %c0_38] : memref<1x32xf32, #tpu.memory_space<vmem>>, vector<1x32xf32>
    %102 = arith.addf %99, %1 : vector<8x32xf32>
    %cst_39 = arith.constant dense<0.000000e+00> : vector<8xf32>
    %103 = vector.multi_reduction <add>, %102, %cst_39 [1] : vector<8x32xf32> to vector<8xf32>
    %104 = vector.shape_cast %103 : vector<8xf32> to vector<8x1xf32>
    %cst_40 = arith.constant 3.200000e+01 : f32
    %105 = vector.broadcast %cst_40 : f32 to vector<8x1xf32>
    %106 = arith.divf %104, %105 : vector<8x1xf32>
    %107 = vector.broadcast %106 : vector<8x1xf32> to vector<8x32xf32>
    %108 = arith.subf %102, %107 : vector<8x32xf32>
    %109 = arith.mulf %108, %108 : vector<8x32xf32>
    %cst_41 = arith.constant dense<0.000000e+00> : vector<8xf32>
    %110 = vector.multi_reduction <add>, %109, %cst_41 [1] : vector<8x32xf32> to vector<8xf32>
    %111 = vector.shape_cast %110 : vector<8xf32> to vector<8x1xf32>
    %cst_42 = arith.constant 3.200000e+01 : f32
    %112 = vector.broadcast %cst_42 : f32 to vector<8x1xf32>
    %113 = arith.divf %111, %112 : vector<8x1xf32>
    %cst_43 = arith.constant 9.99999974E-6 : f32
    %114 = vector.broadcast %cst_43 : f32 to vector<8x1xf32>
    %115 = arith.addf %113, %114 : vector<8x1xf32>
    %116 = math.rsqrt %115 : vector<8x1xf32>
    %117 = vector.broadcast %116 : vector<8x1xf32> to vector<8x32xf32>
    %118 = arith.mulf %108, %117 : vector<8x32xf32>
    %119 = vector.broadcast %100 : vector<1x32xf32> to vector<8x32xf32>
    %120 = arith.mulf %118, %119 : vector<8x32xf32>
    %121 = vector.broadcast %101 : vector<1x32xf32> to vector<8x32xf32>
    %122 = arith.addf %120, %121 : vector<8x32xf32>
    %c0_44 = arith.constant 0 : index
    %c0_45 = arith.constant 0 : index
    %123 = vector.load %arg9[%c0_44, %c0_45] : memref<32x32xf32, #tpu.memory_space<vmem>>, vector<32x32xf32>
    %cst_46 = arith.constant dense<0.000000e+00> : vector<8x32xf32>
    %124 = tpu.matmul %122, %123, %cst_46 {dimension_numbers = #tpu.dot_dimension_numbers<[1], [0], [0], [1], [0, 0, 1, 1], [], []>} : vector<8x32xf32>, vector<32x32xf32>, vector<8x32xf32> -> vector<8x32xf32>
    %c0_47 = arith.constant 0 : index
    %c0_48 = arith.constant 0 : index
    %125 = vector.load %arg10[%c0_47, %c0_48] : memref<1x32xf32, #tpu.memory_space<vmem>>, vector<1x32xf32>
    %126 = vector.broadcast %125 : vector<1x32xf32> to vector<8x32xf32>
    %127 = arith.addf %124, %126 : vector<8x32xf32>
    %cst_49 = arith.constant 0.353553385 : f32
    %128 = vector.broadcast %cst_49 : f32 to vector<8x32xf32>
    %129 = arith.mulf %127, %128 : vector<8x32xf32>
    %c0_50 = arith.constant 0 : index
    %c0_51 = arith.constant 0 : index
    %130 = vector.load %arg11[%c0_50, %c0_51] : memref<32x64xf32, #tpu.memory_space<vmem>>, vector<32x64xf32>
    %cst_52 = arith.constant dense<0.000000e+00> : vector<8x64xf32>
    %131 = tpu.matmul %3, %130, %cst_52 {dimension_numbers = #tpu.dot_dimension_numbers<[1], [0], [0], [1], [0, 0, 1, 1], [], []>} : vector<8x32xf32>, vector<32x64xf32>, vector<8x64xf32> -> vector<8x64xf32>
    %c0_53 = arith.constant 0 : index
    %c0_54 = arith.constant 0 : index
    %132 = vector.load %arg12[%c0_53, %c0_54] : memref<1x64xf32, #tpu.memory_space<vmem>>, vector<1x64xf32>
    %133 = vector.broadcast %132 : vector<1x64xf32> to vector<8x64xf32>
    %134 = arith.addf %131, %133 : vector<8x64xf32>
    %135 = vector.extract_strided_slice %134 {offsets = [0, 0], sizes = [8, 32], strides = [1, 1]} : vector<8x64xf32> to vector<8x32xf32>
    %136 = vector.extract_strided_slice %134 {offsets = [0, 32], sizes = [8, 32], strides = [1, 1]} : vector<8x64xf32> to vector<8x32xf32>
    %137 = vector.extract_strided_slice %129 {offsets = [0, 0], sizes = [8, 8], strides = [1, 1]} : vector<8x32xf32> to vector<8x8xf32>
    %138 = vector.extract_strided_slice %135 {offsets = [0, 0], sizes = [8, 8], strides = [1, 1]} : vector<8x32xf32> to vector<8x8xf32>
    %139 = vector.extract_strided_slice %136 {offsets = [0, 0], sizes = [8, 8], strides = [1, 1]} : vector<8x32xf32> to vector<8x8xf32>
    %cst_55 = arith.constant dense<0.000000e+00> : vector<8x8xf32>
    %140 = tpu.matmul %137, %138, %cst_55 {dimension_numbers = #tpu.dot_dimension_numbers<[1], [1], [0], [0], [0, 0, 1, 0], [], []>} : vector<8x8xf32>, vector<8x8xf32>, vector<8x8xf32> -> vector<8x8xf32>
    %cst_56 = arith.constant dense<0xFF800000> : vector<8xf32>
    %141 = vector.multi_reduction <maximumf>, %140, %cst_56 [1] : vector<8x8xf32> to vector<8xf32>
    %142 = vector.shape_cast %141 : vector<8xf32> to vector<8x1xf32>
    %143 = vector.broadcast %142 : vector<8x1xf32> to vector<8x8xf32>
    %144 = arith.subf %140, %143 : vector<8x8xf32>
    %145 = math.exp %144 : vector<8x8xf32>
    %cst_57 = arith.constant dense<0.000000e+00> : vector<8xf32>
    %146 = vector.multi_reduction <add>, %145, %cst_57 [1] : vector<8x8xf32> to vector<8xf32>
    %147 = vector.shape_cast %146 : vector<8xf32> to vector<8x1xf32>
    %148 = tpu.reciprocal %147 {approx = true} : vector<8x1xf32> -> vector<8x1xf32>
    %149 = vector.broadcast %148 : vector<8x1xf32> to vector<8x8xf32>
    %150 = arith.mulf %145, %149 : vector<8x8xf32>
    %cst_58 = arith.constant dense<0.000000e+00> : vector<8x8xf32>
    %151 = tpu.matmul %150, %139, %cst_58 {dimension_numbers = #tpu.dot_dimension_numbers<[1], [0], [0], [1], [0, 0, 1, 1], [], []>} : vector<8x8xf32>, vector<8x8xf32>, vector<8x8xf32> -> vector<8x8xf32>
    %152 = vector.extract_strided_slice %129 {offsets = [0, 8], sizes = [8, 8], strides = [1, 1]} : vector<8x32xf32> to vector<8x8xf32>
    %153 = vector.extract_strided_slice %135 {offsets = [0, 8], sizes = [8, 8], strides = [1, 1]} : vector<8x32xf32> to vector<8x8xf32>
    %154 = vector.extract_strided_slice %136 {offsets = [0, 8], sizes = [8, 8], strides = [1, 1]} : vector<8x32xf32> to vector<8x8xf32>
    %cst_59 = arith.constant dense<0.000000e+00> : vector<8x8xf32>
    %155 = tpu.matmul %152, %153, %cst_59 {dimension_numbers = #tpu.dot_dimension_numbers<[1], [1], [0], [0], [0, 0, 1, 0], [], []>} : vector<8x8xf32>, vector<8x8xf32>, vector<8x8xf32> -> vector<8x8xf32>
    %cst_60 = arith.constant dense<0xFF800000> : vector<8xf32>
    %156 = vector.multi_reduction <maximumf>, %155, %cst_60 [1] : vector<8x8xf32> to vector<8xf32>
    %157 = vector.shape_cast %156 : vector<8xf32> to vector<8x1xf32>
    %158 = vector.broadcast %157 : vector<8x1xf32> to vector<8x8xf32>
    %159 = arith.subf %155, %158 : vector<8x8xf32>
    %160 = math.exp %159 : vector<8x8xf32>
    %cst_61 = arith.constant dense<0.000000e+00> : vector<8xf32>
    %161 = vector.multi_reduction <add>, %160, %cst_61 [1] : vector<8x8xf32> to vector<8xf32>
    %162 = vector.shape_cast %161 : vector<8xf32> to vector<8x1xf32>
    %163 = tpu.reciprocal %162 {approx = true} : vector<8x1xf32> -> vector<8x1xf32>
    %164 = vector.broadcast %163 : vector<8x1xf32> to vector<8x8xf32>
    %165 = arith.mulf %160, %164 : vector<8x8xf32>
    %cst_62 = arith.constant dense<0.000000e+00> : vector<8x8xf32>
    %166 = tpu.matmul %165, %154, %cst_62 {dimension_numbers = #tpu.dot_dimension_numbers<[1], [0], [0], [1], [0, 0, 1, 1], [], []>} : vector<8x8xf32>, vector<8x8xf32>, vector<8x8xf32> -> vector<8x8xf32>
    %167 = vector.extract_strided_slice %129 {offsets = [0, 16], sizes = [8, 8], strides = [1, 1]} : vector<8x32xf32> to vector<8x8xf32>
    %168 = vector.extract_strided_slice %135 {offsets = [0, 16], sizes = [8, 8], strides = [1, 1]} : vector<8x32xf32> to vector<8x8xf32>
    %169 = vector.extract_strided_slice %136 {offsets = [0, 16], sizes = [8, 8], strides = [1, 1]} : vector<8x32xf32> to vector<8x8xf32>
    %cst_63 = arith.constant dense<0.000000e+00> : vector<8x8xf32>
    %170 = tpu.matmul %167, %168, %cst_63 {dimension_numbers = #tpu.dot_dimension_numbers<[1], [1], [0], [0], [0, 0, 1, 0], [], []>} : vector<8x8xf32>, vector<8x8xf32>, vector<8x8xf32> -> vector<8x8xf32>
    %cst_64 = arith.constant dense<0xFF800000> : vector<8xf32>
    %171 = vector.multi_reduction <maximumf>, %170, %cst_64 [1] : vector<8x8xf32> to vector<8xf32>
    %172 = vector.shape_cast %171 : vector<8xf32> to vector<8x1xf32>
    %173 = vector.broadcast %172 : vector<8x1xf32> to vector<8x8xf32>
    %174 = arith.subf %170, %173 : vector<8x8xf32>
    %175 = math.exp %174 : vector<8x8xf32>
    %cst_65 = arith.constant dense<0.000000e+00> : vector<8xf32>
    %176 = vector.multi_reduction <add>, %175, %cst_65 [1] : vector<8x8xf32> to vector<8xf32>
    %177 = vector.shape_cast %176 : vector<8xf32> to vector<8x1xf32>
    %178 = tpu.reciprocal %177 {approx = true} : vector<8x1xf32> -> vector<8x1xf32>
    %179 = vector.broadcast %178 : vector<8x1xf32> to vector<8x8xf32>
    %180 = arith.mulf %175, %179 : vector<8x8xf32>
    %cst_66 = arith.constant dense<0.000000e+00> : vector<8x8xf32>
    %181 = tpu.matmul %180, %169, %cst_66 {dimension_numbers = #tpu.dot_dimension_numbers<[1], [0], [0], [1], [0, 0, 1, 1], [], []>} : vector<8x8xf32>, vector<8x8xf32>, vector<8x8xf32> -> vector<8x8xf32>
    %182 = vector.extract_strided_slice %129 {offsets = [0, 24], sizes = [8, 8], strides = [1, 1]} : vector<8x32xf32> to vector<8x8xf32>
    %183 = vector.extract_strided_slice %135 {offsets = [0, 24], sizes = [8, 8], strides = [1, 1]} : vector<8x32xf32> to vector<8x8xf32>
    %184 = vector.extract_strided_slice %136 {offsets = [0, 24], sizes = [8, 8], strides = [1, 1]} : vector<8x32xf32> to vector<8x8xf32>
    %cst_67 = arith.constant dense<0.000000e+00> : vector<8x8xf32>
    %185 = tpu.matmul %182, %183, %cst_67 {dimension_numbers = #tpu.dot_dimension_numbers<[1], [1], [0], [0], [0, 0, 1, 0], [], []>} : vector<8x8xf32>, vector<8x8xf32>, vector<8x8xf32> -> vector<8x8xf32>
    %cst_68 = arith.constant dense<0xFF800000> : vector<8xf32>
    %186 = vector.multi_reduction <maximumf>, %185, %cst_68 [1] : vector<8x8xf32> to vector<8xf32>
    %187 = vector.shape_cast %186 : vector<8xf32> to vector<8x1xf32>
    %188 = vector.broadcast %187 : vector<8x1xf32> to vector<8x8xf32>
    %189 = arith.subf %185, %188 : vector<8x8xf32>
    %190 = math.exp %189 : vector<8x8xf32>
    %cst_69 = arith.constant dense<0.000000e+00> : vector<8xf32>
    %191 = vector.multi_reduction <add>, %190, %cst_69 [1] : vector<8x8xf32> to vector<8xf32>
    %192 = vector.shape_cast %191 : vector<8xf32> to vector<8x1xf32>
    %193 = tpu.reciprocal %192 {approx = true} : vector<8x1xf32> -> vector<8x1xf32>
    %194 = vector.broadcast %193 : vector<8x1xf32> to vector<8x8xf32>
    %195 = arith.mulf %190, %194 : vector<8x8xf32>
    %cst_70 = arith.constant dense<0.000000e+00> : vector<8x8xf32>
    %196 = tpu.matmul %195, %184, %cst_70 {dimension_numbers = #tpu.dot_dimension_numbers<[1], [0], [0], [1], [0, 0, 1, 1], [], []>} : vector<8x8xf32>, vector<8x8xf32>, vector<8x8xf32> -> vector<8x8xf32>
    %197 = tpu.concatenate %151, %166, %181, %196 in 1 : vector<8x8xf32>, vector<8x8xf32>, vector<8x8xf32>, vector<8x8xf32> -> vector<8x32xf32>
    %c0_71 = arith.constant 0 : index
    %c0_72 = arith.constant 0 : index
    %198 = vector.load %arg13[%c0_71, %c0_72] : memref<32x32xf32, #tpu.memory_space<vmem>>, vector<32x32xf32>
    %cst_73 = arith.constant dense<0.000000e+00> : vector<8x32xf32>
    %199 = tpu.matmul %197, %198, %cst_73 {dimension_numbers = #tpu.dot_dimension_numbers<[1], [0], [0], [1], [0, 0, 1, 1], [], []>} : vector<8x32xf32>, vector<32x32xf32>, vector<8x32xf32> -> vector<8x32xf32>
    %c0_74 = arith.constant 0 : index
    %c0_75 = arith.constant 0 : index
    %200 = vector.load %arg14[%c0_74, %c0_75] : memref<1x32xf32, #tpu.memory_space<vmem>>, vector<1x32xf32>
    %201 = vector.broadcast %200 : vector<1x32xf32> to vector<8x32xf32>
    %202 = arith.addf %199, %201 : vector<8x32xf32>
    %c0_76 = arith.constant 0 : index
    %c0_77 = arith.constant 0 : index
    %203 = vector.load %arg15[%c0_76, %c0_77] : memref<1x32xf32, #tpu.memory_space<vmem>>, vector<1x32xf32>
    %c0_78 = arith.constant 0 : index
    %c0_79 = arith.constant 0 : index
    %204 = vector.load %arg16[%c0_78, %c0_79] : memref<1x32xf32, #tpu.memory_space<vmem>>, vector<1x32xf32>
    %205 = arith.addf %202, %122 : vector<8x32xf32>
    %cst_80 = arith.constant dense<0.000000e+00> : vector<8xf32>
    %206 = vector.multi_reduction <add>, %205, %cst_80 [1] : vector<8x32xf32> to vector<8xf32>
    %207 = vector.shape_cast %206 : vector<8xf32> to vector<8x1xf32>
    %cst_81 = arith.constant 3.200000e+01 : f32
    %208 = vector.broadcast %cst_81 : f32 to vector<8x1xf32>
    %209 = arith.divf %207, %208 : vector<8x1xf32>
    %210 = vector.broadcast %209 : vector<8x1xf32> to vector<8x32xf32>
    %211 = arith.subf %205, %210 : vector<8x32xf32>
    %212 = arith.mulf %211, %211 : vector<8x32xf32>
    %cst_82 = arith.constant dense<0.000000e+00> : vector<8xf32>
    %213 = vector.multi_reduction <add>, %212, %cst_82 [1] : vector<8x32xf32> to vector<8xf32>
    %214 = vector.shape_cast %213 : vector<8xf32> to vector<8x1xf32>
    %cst_83 = arith.constant 3.200000e+01 : f32
    %215 = vector.broadcast %cst_83 : f32 to vector<8x1xf32>
    %216 = arith.divf %214, %215 : vector<8x1xf32>
    %cst_84 = arith.constant 9.99999974E-6 : f32
    %217 = vector.broadcast %cst_84 : f32 to vector<8x1xf32>
    %218 = arith.addf %216, %217 : vector<8x1xf32>
    %219 = math.rsqrt %218 : vector<8x1xf32>
    %220 = vector.broadcast %219 : vector<8x1xf32> to vector<8x32xf32>
    %221 = arith.mulf %211, %220 : vector<8x32xf32>
    %222 = vector.broadcast %203 : vector<1x32xf32> to vector<8x32xf32>
    %223 = arith.mulf %221, %222 : vector<8x32xf32>
    %224 = vector.broadcast %204 : vector<1x32xf32> to vector<8x32xf32>
    %225 = arith.addf %223, %224 : vector<8x32xf32>
    %c0_85 = arith.constant 0 : index
    %c0_86 = arith.constant 0 : index
    %226 = vector.load %arg17[%c0_85, %c0_86] : memref<32x2048xf32, #tpu.memory_space<vmem>>, vector<32x2048xf32>
    %cst_87 = arith.constant dense<0.000000e+00> : vector<8x2048xf32>
    %227 = tpu.matmul %225, %226, %cst_87 {dimension_numbers = #tpu.dot_dimension_numbers<[1], [0], [0], [1], [0, 0, 1, 1], [], []>} : vector<8x32xf32>, vector<32x2048xf32>, vector<8x2048xf32> -> vector<8x2048xf32>
    %c0_88 = arith.constant 0 : index
    %c0_89 = arith.constant 0 : index
    %228 = vector.load %arg18[%c0_88, %c0_89] : memref<1x2048xf32, #tpu.memory_space<vmem>>, vector<1x2048xf32>
    %229 = vector.broadcast %228 : vector<1x2048xf32> to vector<8x2048xf32>
    %230 = arith.addf %227, %229 : vector<8x2048xf32>
    %cst_90 = arith.constant 0.000000e+00 : f32
    %231 = vector.broadcast %cst_90 : f32 to vector<8x2048xf32>
    %232 = arith.maximumf %230, %231 : vector<8x2048xf32>
    %c0_91 = arith.constant 0 : index
    %c0_92 = arith.constant 0 : index
    %233 = vector.load %arg19[%c0_91, %c0_92] : memref<2048x32xf32, #tpu.memory_space<vmem>>, vector<2048x32xf32>
    %cst_93 = arith.constant dense<0.000000e+00> : vector<8x32xf32>
    %234 = tpu.matmul %232, %233, %cst_93 {dimension_numbers = #tpu.dot_dimension_numbers<[1], [0], [0], [1], [0, 0, 1, 1], [], []>} : vector<8x2048xf32>, vector<2048x32xf32>, vector<8x32xf32> -> vector<8x32xf32>
    %c0_94 = arith.constant 0 : index
    %c0_95 = arith.constant 0 : index
    %235 = vector.load %arg20[%c0_94, %c0_95] : memref<1x32xf32, #tpu.memory_space<vmem>>, vector<1x32xf32>
    %236 = vector.broadcast %235 : vector<1x32xf32> to vector<8x32xf32>
    %237 = arith.addf %234, %236 : vector<8x32xf32>
    %c0_96 = arith.constant 0 : index
    %c0_97 = arith.constant 0 : index
    %238 = vector.load %arg21[%c0_96, %c0_97] : memref<1x32xf32, #tpu.memory_space<vmem>>, vector<1x32xf32>
    %c0_98 = arith.constant 0 : index
    %c0_99 = arith.constant 0 : index
    %239 = vector.load %arg22[%c0_98, %c0_99] : memref<1x32xf32, #tpu.memory_space<vmem>>, vector<1x32xf32>
    %240 = arith.addf %237, %225 : vector<8x32xf32>
    %cst_100 = arith.constant dense<0.000000e+00> : vector<8xf32>
    %241 = vector.multi_reduction <add>, %240, %cst_100 [1] : vector<8x32xf32> to vector<8xf32>
    %242 = vector.shape_cast %241 : vector<8xf32> to vector<8x1xf32>
    %cst_101 = arith.constant 3.200000e+01 : f32
    %243 = vector.broadcast %cst_101 : f32 to vector<8x1xf32>
    %244 = arith.divf %242, %243 : vector<8x1xf32>
    %245 = vector.broadcast %244 : vector<8x1xf32> to vector<8x32xf32>
    %246 = arith.subf %240, %245 : vector<8x32xf32>
    %247 = arith.mulf %246, %246 : vector<8x32xf32>
    %cst_102 = arith.constant dense<0.000000e+00> : vector<8xf32>
    %248 = vector.multi_reduction <add>, %247, %cst_102 [1] : vector<8x32xf32> to vector<8xf32>
    %249 = vector.shape_cast %248 : vector<8xf32> to vector<8x1xf32>
    %cst_103 = arith.constant 3.200000e+01 : f32
    %250 = vector.broadcast %cst_103 : f32 to vector<8x1xf32>
    %251 = arith.divf %249, %250 : vector<8x1xf32>
    %cst_104 = arith.constant 9.99999974E-6 : f32
    %252 = vector.broadcast %cst_104 : f32 to vector<8x1xf32>
    %253 = arith.addf %251, %252 : vector<8x1xf32>
    %254 = math.rsqrt %253 : vector<8x1xf32>
    %255 = vector.broadcast %254 : vector<8x1xf32> to vector<8x32xf32>
    %256 = arith.mulf %246, %255 : vector<8x32xf32>
    %257 = vector.broadcast %238 : vector<1x32xf32> to vector<8x32xf32>
    %258 = arith.mulf %256, %257 : vector<8x32xf32>
    %259 = vector.broadcast %239 : vector<1x32xf32> to vector<8x32xf32>
    %260 = arith.addf %258, %259 : vector<8x32xf32>
    %c0_105 = arith.constant 0 : index
    %c0_106 = arith.constant 0 : index
    %c0_107 = arith.constant 0 : index
    %261 = vector.load %arg23[%c0_105, %c0_106, %c0_107] : memref<1x8x32xf32, #tpu.memory_space<vmem>>, vector<1x8x32xf32>
    %262 = vector.shape_cast %261 : vector<1x8x32xf32> to vector<8x32xf32>
    %263 = vector.shape_cast %260 : vector<8x32xf32> to vector<1x8x32xf32>
    tpu.vector_store %arg23[%c0_105, %c0_106, %c0_107], %263 {strides = array<i32>} : memref<1x8x32xf32, #tpu.memory_space<vmem>>, vector<1x8x32xf32>,
    return
  }
  func.func @transform_0(%arg0: i32) -> (i32, i32, i32) {
    %c0_i32 = arith.constant 0 : i32
    %c0_i32_0 = arith.constant 0 : i32
    %c0_i32_1 = arith.constant 0 : i32
    return %arg0, %c0_i32, %c0_i32_0 : i32, i32, i32
  }
  func.func @transform_1(%arg0: i32) -> (i32, i32, i32) {
    %c0_i32 = arith.constant 0 : i32
    %c0_i32_0 = arith.constant 0 : i32
    %c0_i32_1 = arith.constant 0 : i32
    return %arg0, %c0_i32, %c0_i32_0 : i32, i32, i32
  }
  func.func @transform_2(%arg0: i32) -> (i32, i32) {
    %c0_i32 = arith.constant 0 : i32
    %c0_i32_0 = arith.constant 0 : i32
    %c0_i32_1 = arith.constant 0 : i32
    return %c0_i32, %c0_i32_0 : i32, i32
  }
  func.func @transform_3(%arg0: i32) -> (i32, i32) {
    %c0_i32 = arith.constant 0 : i32
    %c0_i32_0 = arith.constant 0 : i32
    %c0_i32_1 = arith.constant 0 : i32
    return %c0_i32, %c0_i32_0 : i32, i32
  }
  func.func @transform_4(%arg0: i32) -> (i32, i32) {
    %c0_i32 = arith.constant 0 : i32
    %c0_i32_0 = arith.constant 0 : i32
    %c0_i32_1 = arith.constant 0 : i32
    return %c0_i32, %c0_i32_0 : i32, i32
  }
  func.func @transform_5(%arg0: i32) -> (i32, i32) {
    %c0_i32 = arith.constant 0 : i32
    %c0_i32_0 = arith.constant 0 : i32
    %c0_i32_1 = arith.constant 0 : i32
    return %c0_i32, %c0_i32_0 : i32, i32
  }
  func.func @transform_6(%arg0: i32) -> (i32, i32) {
    %c0_i32 = arith.constant 0 : i32
    %c0_i32_0 = arith.constant 0 : i32
    %c0_i32_1 = arith.constant 0 : i32
    return %c0_i32, %c0_i32_0 : i32, i32
  }
  func.func @transform_7(%arg0: i32) -> (i32, i32) {
    %c0_i32 = arith.constant 0 : i32
    %c0_i32_0 = arith.constant 0 : i32
    %c0_i32_1 = arith.constant 0 : i32
    return %c0_i32, %c0_i32_0 : i32, i32
  }
  func.func @transform_8(%arg0: i32) -> (i32, i32) {
    %c0_i32 = arith.constant 0 : i32
    %c0_i32_0 = arith.constant 0 : i32
    %c0_i32_1 = arith.constant 0 : i32
    return %c0_i32, %c0_i32_0 : i32, i32
  }
  func.func @transform_9(%arg0: i32) -> (i32, i32) {
    %c0_i32 = arith.constant 0 : i32
    %c0_i32_0 = arith.constant 0 : i32
    %c0_i32_1 = arith.constant 0 : i32
    return %c0_i32, %c0_i32_0 : i32, i32
  }
  func.func @transform_10(%arg0: i32) -> (i32, i32) {
    %c0_i32 = arith.constant 0 : i32
    %c0_i32_0 = arith.constant 0 : i32
    %c0_i32_1 = arith.constant 0 : i32
    return %c0_i32, %c0_i32_0 : i32, i32
  }
  func.func @transform_11(%arg0: i32) -> (i32, i32) {
    %c0_i32 = arith.constant 0 : i32
    %c0_i32_0 = arith.constant 0 : i32
    %c0_i32_1 = arith.constant 0 : i32
    return %c0_i32, %c0_i32_0 : i32, i32
  }
  func.func @transform_12(%arg0: i32) -> (i32, i32) {
    %c0_i32 = arith.constant 0 : i32
    %c0_i32_0 = arith.constant 0 : i32
    %c0_i32_1 = arith.constant 0 : i32
    return %c0_i32, %c0_i32_0 : i32, i32
  }
  func.func @transform_13(%arg0: i32) -> (i32, i32) {
    %c0_i32 = arith.constant 0 : i32
    %c0_i32_0 = arith.constant 0 : i32
    %c0_i32_1 = arith.constant 0 : i32
    return %c0_i32, %c0_i32_0 : i32, i32
  }
  func.func @transform_14(%arg0: i32) -> (i32, i32) {
    %c0_i32 = arith.constant 0 : i32
    %c0_i32_0 = arith.constant 0 : i32
    %c0_i32_1 = arith.constant 0 : i32
    return %c0_i32, %c0_i32_0 : i32, i32
  }
  func.func @transform_15(%arg0: i32) -> (i32, i32) {
    %c0_i32 = arith.constant 0 : i32
    %c0_i32_0 = arith.constant 0 : i32
    %c0_i32_1 = arith.constant 0 : i32
    return %c0_i32, %c0_i32_0 : i32, i32
  }
  func.func @transform_16(%arg0: i32) -> (i32, i32) {
    %c0_i32 = arith.constant 0 : i32
    %c0_i32_0 = arith.constant 0 : i32
    %c0_i32_1 = arith.constant 0 : i32
    return %c0_i32, %c0_i32_0 : i32, i32
  }
  func.func @transform_17(%arg0: i32) -> (i32, i32) {
    %c0_i32 = arith.constant 0 : i32
    %c0_i32_0 = arith.constant 0 : i32
    %c0_i32_1 = arith.constant 0 : i32
    return %c0_i32, %c0_i32_0 : i32, i32
  }
  func.func @transform_18(%arg0: i32) -> (i32, i32) {
    %c0_i32 = arith.constant 0 : i32
    %c0_i32_0 = arith.constant 0 : i32
    %c0_i32_1 = arith.constant 0 : i32
    return %c0_i32, %c0_i32_0 : i32, i32
  }
  func.func @transform_19(%arg0: i32) -> (i32, i32) {
    %c0_i32 = arith.constant 0 : i32
    %c0_i32_0 = arith.constant 0 : i32
    %c0_i32_1 = arith.constant 0 : i32
    return %c0_i32, %c0_i32_0 : i32, i32
  }
  func.func @transform_20(%arg0: i32) -> (i32, i32) {
    %c0_i32 = arith.constant 0 : i32
    %c0_i32_0 = arith.constant 0 : i32
    %c0_i32_1 = arith.constant 0 : i32
    return %c0_i32, %c0_i32_0 : i32, i32
  }
  func.func @transform_21(%arg0: i32) -> (i32, i32) {
    %c0_i32 = arith.constant 0 : i32
    %c0_i32_0 = arith.constant 0 : i32
    %c0_i32_1 = arith.constant 0 : i32
    return %c0_i32, %c0_i32_0 : i32, i32
  }
  func.func @transform_22(%arg0: i32) -> (i32, i32, i32) {
    %c0_i32 = arith.constant 0 : i32
    %c0_i32_0 = arith.constant 0 : i32
    %c0_i32_1 = arith.constant 0 : i32
    return %arg0, %c0_i32, %c0_i32_0 : i32, i32, i32
  }
}

</mosaic_0001>

<llo_original>
// kernel: transformer_forward.6
$region0: #{transformer_forward.6}
  #allocation0 [shape = 'u32[]', space=smem, size = 0x4, offset = 0x4, fixed_abs, tag = 'smem constant byte address 0x4 - core index']
  #allocation1 [shape = 'u32[72,128]{1,0:T(1,128)}', space=vmem, size = 0x9000, scoped, tag = 'internal scratch']
  %s0 = inlined_call_operand.vmem [shape: f32[2,8,16], index: 0, kind: input, shape index: {}]
  %s1 = inlined_call_operand.vmem [shape: f32[16,32], index: 1, kind: input, shape index: {}]
  %s2 = inlined_call_operand.vmem [shape: f32[1,32], index: 2, kind: input, shape index: {}]
  %s3 = inlined_call_operand.vmem [shape: f32[2,8,32], index: 3, kind: output, shape index: {}]
  %s4 = sld [smem:[#allocation0]]
  $region45: #{transformer_forward.6} parent=0
    _
  %s6 = ssub.s32 1, %s4
  %s7 = scalar_select 0, %s6, %s4
  loop: start=0, step=1, limit=4
  $region2: #{transformer_forward.6} parent=0 // loop_pre_header
    _
  $region3: #{transformer_forward.6} parent=0 // loop_header
    %s9 = sphi 0, %s13
    %p10 = scmp.ge.s32.totalorder %s9, 4
    %s19 = sphi 0, %s21
    %s22 = sphi 0, %s19
    %s23 = sphi 0, %s22
    %s39 = sphi 0, %s23
    %s43 = sphi 0, %s43
    %s45 = sphi 0, %s43
    %s46 = sphi 0, %s45
    %s60 = sphi 0, %s46
    %s64 = sphi 0, %s64
    %s66 = sphi 0, %s64
    %s67 = sphi 0, %s66
    %s81 = sphi 0, %s67
    %s87 = sphi 0, %s89
    %s90 = sphi 0, %s87
    %s91 = sphi 0, %s90
    %s107 = sphi 0, %s91
  $region4: #{transformer_forward.6} parent=0 // loop_header_branch
    %12 = sbr.rel (%p10) target = $region8
  $region5: #{transformer_forward.6} parent=0 // loop_body
    %s14 = ssub.s32 %s9, 1
    %s15 = ssub.s32 %s9, 2
    %s16 = sadd.s32 %s9, 1
    %s17 = ssub.s32 %s9, %s16
    %p18 = scmp.eq.s32.totalorder %s17, 0
    %s20 = sadd.s32 %s19, 1
    %s21 = scalar_select %p18, %s19, %s20
    %p24 = pneg %p18
    %p25 = scmp.eq.s32.totalorder %s9, 1
    %p26 = por %p24, %p25
    %p27 = scmp.ne.s32.totalorder %s19, %s22
    %p28 = scmp.eq.s32.totalorder %s9, 0
    %p29 = por %p27, %p28
    %p30 = scmp.ne.s32.totalorder %s19, %s22
    %p31 = scmp.eq.s32.totalorder %s14, 1
    %p32 = por %p30, %p31
    %p33 = scmp.ne.s32.totalorder %s22, %s23
    %p34 = scmp.eq.s32.totalorder %s14, 0
    %p35 = por %p33, %p34
    %p36 = scmp.ne.s32.totalorder %s22, %s23
    %p37 = scmp.eq.s32.totalorder %s15, 1
    %p38 = por %p36, %p37
    %p40 = scmp.ne.s32.totalorder %s23, %s39
    %p41 = scmp.eq.s32.totalorder %s15, 0
    %p42 = por %p40, %p41
    %s44 = sadd.s32 %s43, 1
    %p47 = scmp.eq.s32.totalorder %s9, 1
    %p48 = scmp.ne.s32.totalorder %s43, %s45
    %p49 = scmp.eq.s32.totalorder %s9, 0
    %p50 = por %p48, %p49
    %p51 = scmp.ne.s32.totalorder %s43, %s45
    %p52 = scmp.eq.s32.totalorder %s14, 1
    %p53 = por %p51, %p52
    %p54 = scmp.ne.s32.totalorder %s45, %s46
    %p55 = scmp.eq.s32.totalorder %s14, 0
    %p56 = por %p54, %p55
    %p57 = scmp.ne.s32.totalorder %s45, %s46
    %p58 = scmp.eq.s32.totalorder %s15, 1
    %p59 = por %p57, %p58
    %p61 = scmp.ne.s32.totalorder %s46, %s60
    %p62 = scmp.eq.s32.totalorder %s15, 0
    %p63 = por %p61, %p62
    %s65 = sadd.s32 %s64, 1
    %p68 = scmp.eq.s32.totalorder %s9, 1
    %p69 = scmp.ne.s32.totalorder %s64, %s66
    %p70 = scmp.eq.s32.totalorder %s9, 0
    %p71 = por %p69, %p70
    %p72 = scmp.ne.s32.totalorder %s64, %s66
    %p73 = scmp.eq.s32.totalorder %s14, 1
    %p74 = por %p72, %p73
    %p75 = scmp.ne.s32.totalorder %s66, %s67
    %p76 = scmp.eq.s32.totalorder %s14, 0
    %p77 = por %p75, %p76
    %p78 = scmp.ne.s32.totalorder %s66, %s67
    %p79 = scmp.eq.s32.totalorder %s15, 1
    %p80 = por %p78, %p79
    %p82 = scmp.ne.s32.totalorder %s67, %s81
    %p83 = scmp.eq.s32.totalorder %s15, 0
    %p84 = por %p82, %p83
    %s85 = ssub.s32 %s9, %s16
    %p86 = scmp.eq.s32.totalorder %s85, 0
    %s88 = sadd.s32 %s87, 1
    %s89 = scalar_select %p86, %s87, %s88
    %p92 = pneg %p86
    %p93 = scmp.eq.s32.totalorder %s9, 1
    %p94 = por %p92, %p93
    %p95 = scmp.ne.s32.totalorder %s87, %s90
    %p96 = scmp.eq.s32.totalorder %s9, 0
    %p97 = por %p95, %p96
    %p98 = scmp.ne.s32.totalorder %s87, %s90
    %p99 = scmp.eq.s32.totalorder %s14, 1
    %p100 = por %p98, %p99
    %p101 = scmp.ne.s32.totalorder %s90, %s91
    %p102 = scmp.eq.s32.totalorder %s14, 0
    %p103 = por %p101, %p102
    %p104 = scmp.ne.s32.totalorder %s90, %s91
    %p105 = scmp.eq.s32.totalorder %s15, 1
    %p106 = por %p104, %p105
    %p108 = scmp.ne.s32.totalorder %s91, %s107
    %p109 = scmp.eq.s32.totalorder %s15, 0
    %p110 = por %p108, %p109
    %p111 = scmp.le.s32.totalorder 1, %s9
    %p112 = scmp.lt.s32.totalorder %s9, 3
    %p113 = pnand %p111, %p112
    %p114 = pneg %p113
    // Predicated region
    $region9: #{transformer_forward.6} parent=5 // pred_check
      _
    $region10: #{transformer_forward.6} parent=5 // pred_check_branch
      %116 = sbr.rel (%p113) target = $region12
    $region11: #{transformer_forward.6} parent=5 // pred_region
      %s117 = ssub.s32 %s9, 1
      // Predicated region
      $region13: #{transformer_forward.6} parent=11 // pred_check
        %p118 = pneg %p56
      $region14: #{transformer_forward.6} parent=11 // pred_check_branch
        %120 = sbr.rel (%p118) target = $region16
      $region15: #{transformer_forward.6} parent=11 // pred_region
        _
      $region16: #{transformer_forward.6} parent=11 // pred_fallthru
        _
      // Predicated region
      $region17: #{transformer_forward.6} parent=11 // pred_check
        %p121 = pneg %p77
      $region18: #{transformer_forward.6} parent=11 // pred_check_branch
        %123 = sbr.rel (%p121) target = $region20
      $region19: #{transformer_forward.6} parent=11 // pred_region
        _
      $region20: #{transformer_forward.6} parent=11 // pred_fallthru
        _
    $region12: #{transformer_forward.6} parent=5 // pred_fallthru
      _
    %p124 = scmp.lt.s32.totalorder %s9, 2
    // Predicated region
    $region21: #{transformer_forward.6} parent=5 // pred_check
      %p125 = pneg %p124
    $region22: #{transformer_forward.6} parent=5 // pred_check_branch
      %127 = sbr.rel (%p125) target = $region24
    $region23: #{transformer_forward.6} parent=5 // pred_region
      // Predicated region
      $region25: #{transformer_forward.6} parent=23 // pred_check
        %p128 = pneg %p29
      $region26: #{transformer_forward.6} parent=23 // pred_check_branch
        %130 = sbr.rel (%p128) target = $region28
      $region27: #{transformer_forward.6} parent=23 // pred_region
        %p131 = scmp.lt.s32.totalorder %s9, 1
        %s132 = scalar_select %p131, %s9, 1
        %s133 = smul.addr %s132, 8
        %s134 = scalar_lea.vmem %s0, %s133
      $region28: #{transformer_forward.6} parent=23 // pred_fallthru
        _
    $region24: #{transformer_forward.6} parent=5 // pred_fallthru
      _
    %p135 = scmp.le.s32.totalorder 1, %s9
    %p136 = scmp.lt.s32.totalorder %s9, 3
    %p137 = pnand %p135, %p136
    %p138 = pneg %p137
    // Predicated region
    $region29: #{transformer_forward.6} parent=5 // pred_check
      _
    $region30: #{transformer_forward.6} parent=5 // pred_check_branch
      %140 = sbr.rel (%p137) target = $region32
    $region31: #{transformer_forward.6} parent=5 // pred_region
      %s141 = ssub.s32 %s9, 1
      %p142 = scmp.lt.s32.totalorder %s14, 1
      %s143 = scalar_select %p142, %s14, 1
      %s144 = smul.addr %s143, 8
      %s145 = scalar_lea.vmem %s0, %s144
      %p146 = pneg %p35
      %p147 = pneg %p32
      %p148 = pneg %p56
      %p149 = pneg %p53
      %p150 = pneg %p77
      %p151 = pneg %p74
      %p152 = pneg %p103
      %p153 = pneg %p100
      %p154 = scmp.lt.s32.totalorder %s14, 1
      %s155 = scalar_select %p154, %s14, 1
      %s156 = smul.addr %s155, 8
      %s157 = scalar_lea.vmem %s3, %s156
      %p158 = scmp.lt.s32.totalorder %s14, 1
      %s159 = scalar_select %p158, %s14, 1
      %s160 = smul.addr %s159, 8
      %s161 = scalar_lea.vmem %s0, %s160
      %p162 = scmp.lt.s32.totalorder %s14, 1
      %s163 = scalar_select %p162, %s14, 1
      %s164 = smul.addr %s163, 8
      %s165 = scalar_lea.vmem %s3, %s164
      %v166 = vld [vmem:[%s161] sm:$0xff]
      %v167 = vld [vmem:[%s1] sm:$0xff]
      %v168 = vld [vmem:[%s1 + $0x8] sm:$0xff]
      %v169 = vld [vmem:[%s2] sm:$0x1]
      %v171 = vperm.slane %v169, 0
      %vm173 = vcmask 130048
      %v175 = vsel %vm173, %v166, 0
      %177 = vmatpush.msra.mxu0 0.0
      %178 = vmatpush.msra.mxu0 0.0
      %179 = vmatpush.msra.mxu0 0.0
      %180 = vmatpush.msra.mxu0 0.0
      %181 = vmatpush.msra.mxu0 0.0
      %182 = vmatpush.msra.mxu0 0.0
      %183 = vmatpush.msra.mxu0 0.0
      %184 = vmatpush.msra.mxu0 0.0
      %185 = vmatpush.msra.mxu0 0.0
      %186 = vmatpush.msra.mxu0 0.0
      %187 = vmatpush.msra.mxu0 0.0
      %188 = vmatpush.msra.mxu0 0.0
      %189 = vmatpush.msra.mxu0 0.0
      %190 = vmatpush.msra.mxu0 0.0
      %191 = vmatpush.msra.mxu0 %v168
      %192 = vmatpush.msra.mxu0 %v167
      %193 = vmatmul.f32.gmra.mxu0 %v175
      %v194 = vpop.f32.mrf.mxu0
      %v195 = vadd.f32 %v171, %v194
      %196 = vdwg.mxu0
      %vm197 = vcmask 261120
      %198 = vst.msk [vmem:[%s165] sm:$0xff] %vm197, %v195
      %p199 = scmp.lt.s32.totalorder %s14, 1
      %s200 = scalar_select %p199, %s14, 1
      %s201 = smul.addr %s200, 8
      %s202 = scalar_lea.vmem %s3, %s201
      // Predicated region
      $region33: #{transformer_forward.6} parent=31 // pred_check
        %p203 = pneg %p100
      $region34: #{transformer_forward.6} parent=31 // pred_check_branch
        %205 = sbr.rel (%p203) target = $region36
      $region35: #{transformer_forward.6} parent=31 // pred_region
        _
      $region36: #{transformer_forward.6} parent=31 // pred_fallthru
        _
    $region32: #{transformer_forward.6} parent=5 // pred_fallthru
      _
    %p206 = scmp.le.s32.totalorder 2, %s9
    // Predicated region
    $region37: #{transformer_forward.6} parent=5 // pred_check
      %p207 = pneg %p206
    $region38: #{transformer_forward.6} parent=5 // pred_check_branch
      %209 = sbr.rel (%p207) target = $region40
    $region39: #{transformer_forward.6} parent=5 // pred_region
      %s210 = ssub.s32 %s9, 2
      // Predicated region
      $region41: #{transformer_forward.6} parent=39 // pred_check
        %p211 = pneg %p106
      $region42: #{transformer_forward.6} parent=39 // pred_check_branch
        %213 = sbr.rel (%p211) target = $region44
      $region43: #{transformer_forward.6} parent=39 // pred_region
        %p214 = scmp.lt.s32.totalorder %s15, 1
        %s215 = scalar_select %p214, %s15, 1
        %s216 = smul.addr %s215, 8
        %s217 = scalar_lea.vmem %s3, %s216
      $region44: #{transformer_forward.6} parent=39 // pred_fallthru
        _
    $region40: #{transformer_forward.6} parent=5 // pred_fallthru
      _
  $region6: #{transformer_forward.6} parent=0 // loop_footer
    %s13 = sadd.s32 1, %s9
  $region7: #{transformer_forward.6} parent=0 // loop_footer_branch
    %8 = sbr.rel target = $region3
  $region8: #{transformer_forward.6} parent=0 // loop_exit
    _

// kernel: transformer_forward.11
$region0: #{transformer_forward.11}
  #allocation0 [shape = 'u32[]', space=smem, size = 0x4, offset = 0x4, fixed_abs, tag = 'smem constant byte address 0x4 - core index']
  #allocation1 [shape = 'u32[72,128]{1,0:T(1,128)}', space=vmem, size = 0x9000, scoped, tag = 'internal scratch']
  %s0 = inlined_call_operand.vmem [shape: f32[2,8,32], index: 0, kind: input, shape index: {}]
  %s1 = inlined_call_operand.vmem [shape: f32[32,8], index: 1, kind: input, shape index: {}]
  %s2 = inlined_call_operand.vmem [shape: f32[1,8], index: 2, kind: input, shape index: {}]
  %s3 = inlined_call_operand.hbm [shape: f32[2,8,8], index: 3, kind: output, shape index: {}]
  %s4 = sld [smem:[#allocation0]]
  $region45: #{transformer_forward.11} parent=0
    _
  %s6 = ssub.s32 1, %s4
  %s7 = scalar_select 0, %s6, %s4
  $region1: #{transformer_forward.11} parent=0
    #allocation2 [shape = 'u8[8192]{0}', space=vmem, size = 0x2000, scoped, tag = 'output window, operand 0']
    #allocation3 [shape = 's32[2]{0}', space=sflag, size = 0x8, scoped, tag = 'scoped memory for transformer_forward.11']
    %8 = vsyncpa [#allocation3], 0
    %s9 = scalar_lea.sflag [#allocation3], 1
    %10 = vsyncpa %s9, 0
    loop: start=0, step=1, limit=4
    $region2: #{transformer_forward.11} parent=1 // loop_pre_header
      _
    $region3: #{transformer_forward.11} parent=1 // loop_header
      %s12 = sphi 0, %s16
      %p13 = scmp.ge.s32.totalorder %s12, 4
      %s22 = sphi 0, %s24
      %s25 = sphi 0, %s22
      %s26 = sphi 0, %s25
      %s42 = sphi 0, %s26
      %s46 = sphi 0, %s46
      %s48 = sphi 0, %s46
      %s49 = sphi 0, %s48
      %s63 = sphi 0, %s49
      %s67 = sphi 0, %s67
      %s69 = sphi 0, %s67
      %s70 = sphi 0, %s69
      %s84 = sphi 0, %s70
      %s90 = sphi 0, %s92
      %s93 = sphi 0, %s90
      %s94 = sphi 0, %s93
      %s110 = sphi 0, %s94
    $region4: #{transformer_forward.11} parent=1 // loop_header_branch
      %15 = sbr.rel (%p13) target = $region8
    $region5: #{transformer_forward.11} parent=1 // loop_body
      %s17 = ssub.s32 %s12, 1
      %s18 = ssub.s32 %s12, 2
      %s19 = sadd.s32 %s12, 1
      %s20 = ssub.s32 %s12, %s19
      %p21 = scmp.eq.s32.totalorder %s20, 0
      %s23 = sadd.s32 %s22, 1
      %s24 = scalar_select %p21, %s22, %s23
      %p27 = pneg %p21
      %p28 = scmp.eq.s32.totalorder %s12, 1
      %p29 = por %p27, %p28
      %p30 = scmp.ne.s32.totalorder %s22, %s25
      %p31 = scmp.eq.s32.totalorder %s12, 0
      %p32 = por %p30, %p31
      %p33 = scmp.ne.s32.totalorder %s22, %s25
      %p34 = scmp.eq.s32.totalorder %s17, 1
      %p35 = por %p33, %p34
      %p36 = scmp.ne.s32.totalorder %s25, %s26
      %p37 = scmp.eq.s32.totalorder %s17, 0
      %p38 = por %p36, %p37
      %p39 = scmp.ne.s32.totalorder %s25, %s26
      %p40 = scmp.eq.s32.totalorder %s18, 1
      %p41 = por %p39, %p40
      %p43 = scmp.ne.s32.totalorder %s26, %s42
      %p44 = scmp.eq.s32.totalorder %s18, 0
      %p45 = por %p43, %p44
      %s47 = sadd.s32 %s46, 1
      %p50 = scmp.eq.s32.totalorder %s12, 1
      %p51 = scmp.ne.s32.totalorder %s46, %s48
      %p52 = scmp.eq.s32.totalorder %s12, 0
      %p53 = por %p51, %p52
      %p54 = scmp.ne.s32.totalorder %s46, %s48
      %p55 = scmp.eq.s32.totalorder %s17, 1
      %p56 = por %p54, %p55
      %p57 = scmp.ne.s32.totalorder %s48, %s49
      %p58 = scmp.eq.s32.totalorder %s17, 0
      %p59 = por %p57, %p58
      %p60 = scmp.ne.s32.totalorder %s48, %s49
      %p61 = scmp.eq.s32.totalorder %s18, 1
      %p62 = por %p60, %p61
      %p64 = scmp.ne.s32.totalorder %s49, %s63
      %p65 = scmp.eq.s32.totalorder %s18, 0
      %p66 = por %p64, %p65
      %s68 = sadd.s32 %s67, 1
      %p71 = scmp.eq.s32.totalorder %s12, 1
      %p72 = scmp.ne.s32.totalorder %s67, %s69
      %p73 = scmp.eq.s32.totalorder %s12, 0
      %p74 = por %p72, %p73
      %p75 = scmp.ne.s32.totalorder %s67, %s69
      %p76 = scmp.eq.s32.totalorder %s17, 1
      %p77 = por %p75, %p76
      %p78 = scmp.ne.s32.totalorder %s69, %s70
      %p79 = scmp.eq.s32.totalorder %s17, 0
      %p80 = por %p78, %p79
      %p81 = scmp.ne.s32.totalorder %s69, %s70
      %p82 = scmp.eq.s32.totalorder %s18, 1
      %p83 = por %p81, %p82
      %p85 = scmp.ne.s32.totalorder %s70, %s84
      %p86 = scmp.eq.s32.totalorder %s18, 0
      %p87 = por %p85, %p86
      %s88 = ssub.s32 %s12, %s19
      %p89 = scmp.eq.s32.totalorder %s88, 0
      %s91 = sadd.s32 %s90, 1
      %s92 = scalar_select %p89, %s90, %s91
      %p95 = pneg %p89
      %p96 = scmp.eq.s32.totalorder %s12, 1
      %p97 = por %p95, %p96
      %p98 = scmp.ne.s32.totalorder %s90, %s93
      %p99 = scmp.eq.s32.totalorder %s12, 0
      %p100 = por %p98, %p99
      %p101 = scmp.ne.s32.totalorder %s90, %s93
      %p102 = scmp.eq.s32.totalorder %s17, 1
      %p103 = por %p101, %p102
      %p104 = scmp.ne.s32.totalorder %s93, %s94
      %p105 = scmp.eq.s32.totalorder %s17, 0
      %p106 = por %p104, %p105
      %p107 = scmp.ne.s32.totalorder %s93, %s94
      %p108 = scmp.eq.s32.totalorder %s18, 1
      %p109 = por %p107, %p108
      %p111 = scmp.ne.s32.totalorder %s94, %s110
      %p112 = scmp.eq.s32.totalorder %s18, 0
      %p113 = por %p111, %p112
      %p114 = scmp.le.s32.totalorder 1, %s12
      %p115 = scmp.lt.s32.totalorder %s12, 3
      %p116 = pnand %p114, %p115
      %p117 = pneg %p116
      // Predicated region
      $region9: #{transformer_forward.11} parent=5 // pred_check
        _
      $region10: #{transformer_forward.11} parent=5 // pred_check_branch
        %119 = sbr.rel (%p116) target = $region12
      $region11: #{transformer_forward.11} parent=5 // pred_region
        %s120 = ssub.s32 %s12, 1
        // Predicated region
        $region13: #{transformer_forward.11} parent=11 // pred_check
          %p121 = pneg %p59
        $region14: #{transformer_forward.11} parent=11 // pred_check_branch
          %123 = sbr.rel (%p121) target = $region16
        $region15: #{transformer_forward.11} parent=11 // pred_region
          _
        $region16: #{transformer_forward.11} parent=11 // pred_fallthru
          _
        // Predicated region
        $region17: #{transformer_forward.11} parent=11 // pred_check
          %p124 = pneg %p80
        $region18: #{transformer_forward.11} parent=11 // pred_check_branch
          %126 = sbr.rel (%p124) target = $region20
        $region19: #{transformer_forward.11} parent=11 // pred_region
          _
        $region20: #{transformer_forward.11} parent=11 // pred_fallthru
          _
      $region12: #{transformer_forward.11} parent=5 // pred_fallthru
        _
      %p127 = scmp.lt.s32.totalorder %s12, 2
      // Predicated region
      $region21: #{transformer_forward.11} parent=5 // pred_check
        %p128 = pneg %p127
      $region22: #{transformer_forward.11} parent=5 // pred_check_branch
        %130 = sbr.rel (%p128) target = $region24
      $region23: #{transformer_forward.11} parent=5 // pred_region
        // Predicated region
        $region25: #{transformer_forward.11} parent=23 // pred_check
          %p131 = pneg %p32
        $region26: #{transformer_forward.11} parent=23 // pred_check_branch
          %133 = sbr.rel (%p131) target = $region28
        $region27: #{transformer_forward.11} parent=23 // pred_region
          %p134 = scmp.lt.s32.totalorder %s12, 1
          %s135 = scalar_select %p134, %s12, 1
          %s136 = smul.addr %s135, 8
          %s137 = scalar_lea.vmem %s0, %s136
        $region28: #{transformer_forward.11} parent=23 // pred_fallthru
          _
      $region24: #{transformer_forward.11} parent=5 // pred_fallthru
        _
      %p138 = scmp.le.s32.totalorder 1, %s12
      %p139 = scmp.lt.s32.totalorder %s12, 3
      %p140 = pnand %p138, %p139
      %p141 = pneg %p140
      // Predicated region
      $region29: #{transformer_forward.11} parent=5 // pred_check
        _
      $region30: #{transformer_forward.11} parent=5 // pred_check_branch
        %143 = sbr.rel (%p140) target = $region32
      $region31: #{transformer_forward.11} parent=5 // pred_region
        %s144 = ssub.s32 %s12, 1
        %p145 = scmp.lt.s32.totalorder %s17, 1
        %s146 = scalar_select %p145, %s17, 1
        %s147 = smul.addr %s146, 8
        %s148 = scalar_lea.vmem %s0, %s147
        %p149 = pneg %p38
        %p150 = pneg %p35
        %p151 = pneg %p59
        %p152 = pneg %p56
        %p153 = pneg %p80
        %p154 = pneg %p77
        %p155 = pneg %p106
        %p156 = pneg %p103
        %s157 = sand.u32 %s93, 1
        %s158 = scalar_lea.sflag [#allocation3], %s157
        %s159 = sand.u32 %s93, 1
        %s160 = smul.addr %s159, 8
        %s161 = scalar_lea.vmem [#allocation2], %s160
        %p162 = scmp.lt.s32.totalorder %s17, 1
        %s163 = scalar_select %p162, %s17, 1
        %s164 = smul.addr %s163, 8
        %s165 = scalar_lea.vmem %s0, %s164
        %v166 = vld [vmem:[%s165] sm:$0xff]
        %v167 = vld [vmem:[%s1] sm:$0xff]
        %v168 = vld [vmem:[%s1 + $0x8] sm:$0xff]
        %v169 = vld [vmem:[%s1 + $0x10] sm:$0xff]
        %v170 = vld [vmem:[%s1 + $0x18] sm:$0xff]
        %v171 = vld [vmem:[%s2] sm:$0x1]
        %v173 = vperm.slane %v171, 0
        %vm175 = vcmask 261120
        %v177 = vsel %vm175, %v166, 0
        %179 = vmatpush.msra.mxu0 0.0
        %180 = vmatpush.msra.mxu0 0.0
        %181 = vmatpush.msra.mxu0 0.0
        %182 = vmatpush.msra.mxu0 0.0
        %183 = vmatpush.msra.mxu0 0.0
        %184 = vmatpush.msra.mxu0 0.0
        %185 = vmatpush.msra.mxu0 0.0
        %186 = vmatpush.msra.mxu0 0.0
        %187 = vmatpush.msra.mxu0 0.0
        %188 = vmatpush.msra.mxu0 0.0
        %189 = vmatpush.msra.mxu0 0.0
        %190 = vmatpush.msra.mxu0 0.0
        %191 = vmatpush.msra.mxu0 %v170
        %192 = vmatpush.msra.mxu0 %v169
        %193 = vmatpush.msra.mxu0 %v168
        %194 = vmatpush.msra.mxu0 %v167
        %195 = vmatmul.f32.gmra.mxu0 %v177
        %v196 = vpop.f32.mrf.mxu0
        %v197 = vadd.f32 %v173, %v196
        %198 = vdwg.mxu0
        %v199 = vxor.u32 %v197, 2147483648
        %v200 = vmul.f32 %v199, 1.442695
        %v201 = vpow.pop %v200
        %v202 = vadd.f32 %v201, 1.0
        %v203 = vrcp.pop %v202
        %v204 = vmul.f32 %v202, %v203
        %v205 = vsub.f32 1.0, %v204
        %v206 = vmul.f32 %v203, %v205
        %v207 = vadd.f32 %v203, %v206
        %vm208 = vweird.f32 %v202
        %vm209 = vweird.f32 %v203
        %vm210 = vmor %vm208, %vm209
        %v211 = vsel %vm210, %v203, %v207
        %v212 = vand.u32 2147483647, %v202
        %vm213 = vcmp.eq.f32.partialorder %v212, 8.507059e+37
        %v214 = vand.u32 %v202, 2147483648
        %v215 = vor.u32 1.1754944e-38, %v214
        %v216 = vsel %vm213, %v215, %v211
        %v217 = vmul.f32 1.0, %v216
        %vm218 = vcmask 64512
        %219 = vst.msk [vmem:[%s161] sm:$0xff] %vm218, %v217
        %s220 = sand.u32 %s93, 1
        %s221 = scalar_lea.sflag [#allocation3], %s220
        %s222 = sand.u32 %s93, 1
        %s223 = smul.addr %s222, 8
        %s224 = scalar_lea.vmem [#allocation2], %s223
        // Predicated region
        $region33: #{transformer_forward.11} parent=31 // pred_check
          %p225 = pneg %p103
        $region34: #{transformer_forward.11} parent=31 // pred_check_branch
          %227 = sbr.rel (%p225) target = $region36
        $region35: #{transformer_forward.11} parent=31 // pred_region
          %229 = vsyncadd %s221, 0
          %s230 = smul.addr %s17, 8
          %s231 = scalar_lea.hbm %s3, %s230
          %s233 = sshll.u32 %s224, 4
          %s234 = int_to_ptr.vmem [resolvable:$true] %s233
          %s235 = sshll.u32 %s231, 4
          %s236 = int_to_ptr.hbm [resolvable:$true] %s235
          %238 = dma.vmem_to_hbm [thread:$0]  %s234, 128, %s236, %s221
        $region36: #{transformer_forward.11} parent=31 // pred_fallthru
          _
      $region32: #{transformer_forward.11} parent=5 // pred_fallthru
        _
      %p239 = scmp.le.s32.totalorder 2, %s12
      // Predicated region
      $region37: #{transformer_forward.11} parent=5 // pred_check
        %p240 = pneg %p239
      $region38: #{transformer_forward.11} parent=5 // pred_check_branch
        %242 = sbr.rel (%p240) target = $region40
      $region39: #{transformer_forward.11} parent=5 // pred_region
        %s243 = ssub.s32 %s12, 2
        // Predicated region
        $region41: #{transformer_forward.11} parent=39 // pred_check
          %p244 = pneg %p109
        $region42: #{transformer_forward.11} parent=39 // pred_check_branch
          %246 = sbr.rel (%p244) target = $region44
        $region43: #{transformer_forward.11} parent=39 // pred_region
          %s247 = sand.u32 %s94, 1
          %s248 = scalar_lea.sflag [#allocation3], %s247
          %s249 = sand.u32 %s94, 1
          %s250 = smul.addr %s249, 8
          %s251 = scalar_lea.vmem [#allocation2], %s250
          %253 = dma.done %s248, 128
        $region44: #{transformer_forward.11} parent=39 // pred_fallthru
          _
      $region40: #{transformer_forward.11} parent=5 // pred_fallthru
        _
    $region6: #{transformer_forward.11} parent=1 // loop_footer
      %s16 = sadd.s32 1, %s12
    $region7: #{transformer_forward.11} parent=1 // loop_footer_branch
      %11 = sbr.rel target = $region3
    $region8: #{transformer_forward.11} parent=1 // loop_exit
      _
    %254 = vsyncpa [#allocation3], 1
    %s255 = scalar_lea.sflag [#allocation3], 1
    %256 = vsyncpa %s255, 1

// kernel: transformer_forward.7
$region0: #{transformer_forward.7}
  #allocation0 [shape = 'u32[]', space=smem, size = 0x4, offset = 0x4, fixed_abs, tag = 'smem constant byte address 0x4 - core index']
  #allocation1 [shape = 'u32[72,128]{1,0:T(1,128)}', space=vmem, size = 0x9000, scoped, tag = 'internal scratch']
  %s0 = inlined_call_operand.vmem [shape: f32[2,8,32], index: 0, kind: input, shape index: {}]
  %s1 = inlined_call_operand.vmem [shape: f32[32,96], index: 1, kind: input, shape index: {}]
  %s2 = inlined_call_operand.vmem [shape: f32[1,96], index: 2, kind: input, shape index: {}]
  %s3 = inlined_call_operand.vmem [shape: f32[32,32], index: 3, kind: input, shape index: {}]
  %s4 = inlined_call_operand.vmem [shape: f32[1,32], index: 4, kind: input, shape index: {}]
  %s5 = inlined_call_operand.vmem [shape: f32[1,32], index: 5, kind: input, shape index: {}]
  %s6 = inlined_call_operand.vmem [shape: f32[1,32], index: 6, kind: input, shape index: {}]
  %s7 = inlined_call_operand.vmem [shape: f32[32,2048], index: 7, kind: input, shape index: {}]
  %s8 = inlined_call_operand.vmem [shape: f32[1,2048], index: 8, kind: input, shape index: {}]
  %s9 = inlined_call_operand.vmem [shape: f32[2048,32], index: 9, kind: input, shape index: {}]
  %s10 = inlined_call_operand.vmem [shape: f32[1,32], index: 10, kind: input, shape index: {}]
  %s11 = inlined_call_operand.vmem [shape: f32[1,32], index: 11, kind: input, shape index: {}]
  %s12 = inlined_call_operand.vmem [shape: f32[1,32], index: 12, kind: input, shape index: {}]
  %s13 = inlined_call_operand.vmem [shape: f32[2,8,32], index: 13, kind: output, shape index: {}]
  %s14 = sld [smem:[#allocation0]]
  $region85: #{transformer_forward.7} parent=0
    _
  %s16 = ssub.s32 1, %s14
  %s17 = scalar_select 0, %s16, %s14
  loop: start=0, step=1, limit=4
  $region2: #{transformer_forward.7} parent=0 // loop_pre_header
    _
  $region3: #{transformer_forward.7} parent=0 // loop_header
    %s19 = sphi 0, %s23
    %p20 = scmp.ge.s32.totalorder %s19, 4
    %s29 = sphi 0, %s31
    %s32 = sphi 0, %s29
    %s33 = sphi 0, %s32
    %s49 = sphi 0, %s33
    %s53 = sphi 0, %s53
    %s55 = sphi 0, %s53
    %s56 = sphi 0, %s55
    %s70 = sphi 0, %s56
    %s74 = sphi 0, %s74
    %s76 = sphi 0, %s74
    %s77 = sphi 0, %s76
    %s91 = sphi 0, %s77
    %s95 = sphi 0, %s95
    %s97 = sphi 0, %s95
    %s98 = sphi 0, %s97
    %s112 = sphi 0, %s98
    %s116 = sphi 0, %s116
    %s118 = sphi 0, %s116
    %s119 = sphi 0, %s118
    %s133 = sphi 0, %s119
    %s137 = sphi 0, %s137
    %s139 = sphi 0, %s137
    %s140 = sphi 0, %s139
    %s154 = sphi 0, %s140
    %s158 = sphi 0, %s158
    %s160 = sphi 0, %s158
    %s161 = sphi 0, %s160
    %s175 = sphi 0, %s161
    %s179 = sphi 0, %s179
    %s181 = sphi 0, %s179
    %s182 = sphi 0, %s181
    %s196 = sphi 0, %s182
    %s200 = sphi 0, %s200
    %s202 = sphi 0, %s200
    %s203 = sphi 0, %s202
    %s217 = sphi 0, %s203
    %s221 = sphi 0, %s221
    %s223 = sphi 0, %s221
    %s224 = sphi 0, %s223
    %s238 = sphi 0, %s224
    %s242 = sphi 0, %s242
    %s244 = sphi 0, %s242
    %s245 = sphi 0, %s244
    %s259 = sphi 0, %s245
    %s263 = sphi 0, %s263
    %s265 = sphi 0, %s263
    %s266 = sphi 0, %s265
    %s280 = sphi 0, %s266
    %s284 = sphi 0, %s284
    %s286 = sphi 0, %s284
    %s287 = sphi 0, %s286
    %s301 = sphi 0, %s287
    %s307 = sphi 0, %s309
    %s310 = sphi 0, %s307
    %s311 = sphi 0, %s310
    %s327 = sphi 0, %s311
  $region4: #{transformer_forward.7} parent=0 // loop_header_branch
    %22 = sbr.rel (%p20) target = $region8
  $region5: #{transformer_forward.7} parent=0 // loop_body
    %s24 = ssub.s32 %s19, 1
    %s25 = ssub.s32 %s19, 2
    %s26 = sadd.s32 %s19, 1
    %s27 = ssub.s32 %s19, %s26
    %p28 = scmp.eq.s32.totalorder %s27, 0
    %s30 = sadd.s32 %s29, 1
    %s31 = scalar_select %p28, %s29, %s30
    %p34 = pneg %p28
    %p35 = scmp.eq.s32.totalorder %s19, 1
    %p36 = por %p34, %p35
    %p37 = scmp.ne.s32.totalorder %s29, %s32
    %p38 = scmp.eq.s32.totalorder %s19, 0
    %p39 = por %p37, %p38
    %p40 = scmp.ne.s32.totalorder %s29, %s32
    %p41 = scmp.eq.s32.totalorder %s24, 1
    %p42 = por %p40, %p41
    %p43 = scmp.ne.s32.totalorder %s32, %s33
    %p44 = scmp.eq.s32.totalorder %s24, 0
    %p45 = por %p43, %p44
    %p46 = scmp.ne.s32.totalorder %s32, %s33
    %p47 = scmp.eq.s32.totalorder %s25, 1
    %p48 = por %p46, %p47
    %p50 = scmp.ne.s32.totalorder %s33, %s49
    %p51 = scmp.eq.s32.totalorder %s25, 0
    %p52 = por %p50, %p51
    %s54 = sadd.s32 %s53, 1
    %p57 = scmp.eq.s32.totalorder %s19, 1
    %p58 = scmp.ne.s32.totalorder %s53, %s55
    %p59 = scmp.eq.s32.totalorder %s19, 0
    %p60 = por %p58, %p59
    %p61 = scmp.ne.s32.totalorder %s53, %s55
    %p62 = scmp.eq.s32.totalorder %s24, 1
    %p63 = por %p61, %p62
    %p64 = scmp.ne.s32.totalorder %s55, %s56
    %p65 = scmp.eq.s32.totalorder %s24, 0
    %p66 = por %p64, %p65
    %p67 = scmp.ne.s32.totalorder %s55, %s56
    %p68 = scmp.eq.s32.totalorder %s25, 1
    %p69 = por %p67, %p68
    %p71 = scmp.ne.s32.totalorder %s56, %s70
    %p72 = scmp.eq.s32.totalorder %s25, 0
    %p73 = por %p71, %p72
    %s75 = sadd.s32 %s74, 1
    %p78 = scmp.eq.s32.totalorder %s19, 1
    %p79 = scmp.ne.s32.totalorder %s74, %s76
    %p80 = scmp.eq.s32.totalorder %s19, 0
    %p81 = por %p79, %p80
    %p82 = scmp.ne.s32.totalorder %s74, %s76
    %p83 = scmp.eq.s32.totalorder %s24, 1
    %p84 = por %p82, %p83
    %p85 = scmp.ne.s32.totalorder %s76, %s77
    %p86 = scmp.eq.s32.totalorder %s24, 0
    %p87 = por %p85, %p86
    %p88 = scmp.ne.s32.totalorder %s76, %s77
    %p89 = scmp.eq.s32.totalorder %s25, 1
    %p90 = por %p88, %p89
    %p92 = scmp.ne.s32.totalorder %s77, %s91
    %p93 = scmp.eq.s32.totalorder %s25, 0
    %p94 = por %p92, %p93
    %s96 = sadd.s32 %s95, 1
    %p99 = scmp.eq.s32.totalorder %s19, 1
    %p100 = scmp.ne.s32.totalorder %s95, %s97
    %p101 = scmp.eq.s32.totalorder %s19, 0
    %p102 = por %p100, %p101
    %p103 = scmp.ne.s32.totalorder %s95, %s97
    %p104 = scmp.eq.s32.totalorder %s24, 1
    %p105 = por %p103, %p104
    %p106 = scmp.ne.s32.totalorder %s97, %s98
    %p107 = scmp.eq.s32.totalorder %s24, 0
    %p108 = por %p106, %p107
    %p109 = scmp.ne.s32.totalorder %s97, %s98
    %p110 = scmp.eq.s32.totalorder %s25, 1
    %p111 = por %p109, %p110
    %p113 = scmp.ne.s32.totalorder %s98, %s112
    %p114 = scmp.eq.s32.totalorder %s25, 0
    %p115 = por %p113, %p114
    %s117 = sadd.s32 %s116, 1
    %p120 = scmp.eq.s32.totalorder %s19, 1
    %p121 = scmp.ne.s32.totalorder %s116, %s118
    %p122 = scmp.eq.s32.totalorder %s19, 0
    %p123 = por %p121, %p122
    %p124 = scmp.ne.s32.totalorder %s116, %s118
    %p125 = scmp.eq.s32.totalorder %s24, 1
    %p126 = por %p124, %p125
    %p127 = scmp.ne.s32.totalorder %s118, %s119
    %p128 = scmp.eq.s32.totalorder %s24, 0
    %p129 = por %p127, %p128
    %p130 = scmp.ne.s32.totalorder %s118, %s119
    %p131 = scmp.eq.s32.totalorder %s25, 1
    %p132 = por %p130, %p131
    %p134 = scmp.ne.s32.totalorder %s119, %s133
    %p135 = scmp.eq.s32.totalorder %s25, 0
    %p136 = por %p134, %p135
    %s138 = sadd.s32 %s137, 1
    %p141 = scmp.eq.s32.totalorder %s19, 1
    %p142 = scmp.ne.s32.totalorder %s137, %s139
    %p143 = scmp.eq.s32.totalorder %s19, 0
    %p144 = por %p142, %p143
    %p145 = scmp.ne.s32.totalorder %s137, %s139
    %p146 = scmp.eq.s32.totalorder %s24, 1
    %p147 = por %p145, %p146
    %p148 = scmp.ne.s32.totalorder %s139, %s140
    %p149 = scmp.eq.s32.totalorder %s24, 0
    %p150 = por %p148, %p149
    %p151 = scmp.ne.s32.totalorder %s139, %s140
    %p152 = scmp.eq.s32.totalorder %s25, 1
    %p153 = por %p151, %p152
    %p155 = scmp.ne.s32.totalorder %s140, %s154
    %p156 = scmp.eq.s32.totalorder %s25, 0
    %p157 = por %p155, %p156
    %s159 = sadd.s32 %s158, 1
    %p162 = scmp.eq.s32.totalorder %s19, 1
    %p163 = scmp.ne.s32.totalorder %s158, %s160
    %p164 = scmp.eq.s32.totalorder %s19, 0
    %p165 = por %p163, %p164
    %p166 = scmp.ne.s32.totalorder %s158, %s160
    %p167 = scmp.eq.s32.totalorder %s24, 1
    %p168 = por %p166, %p167
    %p169 = scmp.ne.s32.totalorder %s160, %s161
    %p170 = scmp.eq.s32.totalorder %s24, 0
    %p171 = por %p169, %p170
    %p172 = scmp.ne.s32.totalorder %s160, %s161
    %p173 = scmp.eq.s32.totalorder %s25, 1
    %p174 = por %p172, %p173
    %p176 = scmp.ne.s32.totalorder %s161, %s175
    %p177 = scmp.eq.s32.totalorder %s25, 0
    %p178 = por %p176, %p177
    %s180 = sadd.s32 %s179, 1
    %p183 = scmp.eq.s32.totalorder %s19, 1
    %p184 = scmp.ne.s32.totalorder %s179, %s181
    %p185 = scmp.eq.s32.totalorder %s19, 0
    %p186 = por %p184, %p185
    %p187 = scmp.ne.s32.totalorder %s179, %s181
    %p188 = scmp.eq.s32.totalorder %s24, 1
    %p189 = por %p187, %p188
    %p190 = scmp.ne.s32.totalorder %s181, %s182
    %p191 = scmp.eq.s32.totalorder %s24, 0
    %p192 = por %p190, %p191
    %p193 = scmp.ne.s32.totalorder %s181, %s182
    %p194 = scmp.eq.s32.totalorder %s25, 1
    %p195 = por %p193, %p194
    %p197 = scmp.ne.s32.totalorder %s182, %s196
    %p198 = scmp.eq.s32.totalorder %s25, 0
    %p199 = por %p197, %p198
    %s201 = sadd.s32 %s200, 1
    %p204 = scmp.eq.s32.totalorder %s19, 1
    %p205 = scmp.ne.s32.totalorder %s200, %s202
    %p206 = scmp.eq.s32.totalorder %s19, 0
    %p207 = por %p205, %p206
    %p208 = scmp.ne.s32.totalorder %s200, %s202
    %p209 = scmp.eq.s32.totalorder %s24, 1
    %p210 = por %p208, %p209
    %p211 = scmp.ne.s32.totalorder %s202, %s203
    %p212 = scmp.eq.s32.totalorder %s24, 0
    %p213 = por %p211, %p212
    %p214 = scmp.ne.s32.totalorder %s202, %s203
    %p215 = scmp.eq.s32.totalorder %s25, 1
    %p216 = por %p214, %p215
    %p218 = scmp.ne.s32.totalorder %s203, %s217
    %p219 = scmp.eq.s32.totalorder %s25, 0
    %p220 = por %p218, %p219
    %s222 = sadd.s32 %s221, 1
    %p225 = scmp.eq.s32.totalorder %s19, 1
    %p226 = scmp.ne.s32.totalorder %s221, %s223
    %p227 = scmp.eq.s32.totalorder %s19, 0
    %p228 = por %p226, %p227
    %p229 = scmp.ne.s32.totalorder %s221, %s223
    %p230 = scmp.eq.s32.totalorder %s24, 1
    %p231 = por %p229, %p230
    %p232 = scmp.ne.s32.totalorder %s223, %s224
    %p233 = scmp.eq.s32.totalorder %s24, 0
    %p234 = por %p232, %p233
    %p235 = scmp.ne.s32.totalorder %s223, %s224
    %p236 = scmp.eq.s32.totalorder %s25, 1
    %p237 = por %p235, %p236
    %p239 = scmp.ne.s32.totalorder %s224, %s238
    %p240 = scmp.eq.s32.totalorder %s25, 0
    %p241 = por %p239, %p240
    %s243 = sadd.s32 %s242, 1
    %p246 = scmp.eq.s32.totalorder %s19, 1
    %p247 = scmp.ne.s32.totalorder %s242, %s244
    %p248 = scmp.eq.s32.totalorder %s19, 0
    %p249 = por %p247, %p248
    %p250 = scmp.ne.s32.totalorder %s242, %s244
    %p251 = scmp.eq.s32.totalorder %s24, 1
    %p252 = por %p250, %p251
    %p253 = scmp.ne.s32.totalorder %s244, %s245
    %p254 = scmp.eq.s32.totalorder %s24, 0
    %p255 = por %p253, %p254
    %p256 = scmp.ne.s32.totalorder %s244, %s245
    %p257 = scmp.eq.s32.totalorder %s25, 1
    %p258 = por %p256, %p257
    %p260 = scmp.ne.s32.totalorder %s245, %s259
    %p261 = scmp.eq.s32.totalorder %s25, 0
    %p262 = por %p260, %p261
    %s264 = sadd.s32 %s263, 1
    %p267 = scmp.eq.s32.totalorder %s19, 1
    %p268 = scmp.ne.s32.totalorder %s263, %s265
    %p269 = scmp.eq.s32.totalorder %s19, 0
    %p270 = por %p268, %p269
    %p271 = scmp.ne.s32.totalorder %s263, %s265
    %p272 = scmp.eq.s32.totalorder %s24, 1
    %p273 = por %p271, %p272
    %p274 = scmp.ne.s32.totalorder %s265, %s266
    %p275 = scmp.eq.s32.totalorder %s24, 0
    %p276 = por %p274, %p275
    %p277 = scmp.ne.s32.totalorder %s265, %s266
    %p278 = scmp.eq.s32.totalorder %s25, 1
    %p279 = por %p277, %p278
    %p281 = scmp.ne.s32.totalorder %s266, %s280
    %p282 = scmp.eq.s32.totalorder %s25, 0
    %p283 = por %p281, %p282
    %s285 = sadd.s32 %s284, 1
    %p288 = scmp.eq.s32.totalorder %s19, 1
    %p289 = scmp.ne.s32.totalorder %s284, %s286
    %p290 = scmp.eq.s32.totalorder %s19, 0
    %p291 = por %p289, %p290
    %p292 = scmp.ne.s32.totalorder %s284, %s286
    %p293 = scmp.eq.s32.totalorder %s24, 1
    %p294 = por %p292, %p293
    %p295 = scmp.ne.s32.totalorder %s286, %s287
    %p296 = scmp.eq.s32.totalorder %s24, 0
    %p297 = por %p295, %p296
    %p298 = scmp.ne.s32.totalorder %s286, %s287
    %p299 = scmp.eq.s32.totalorder %s25, 1
    %p300 = por %p298, %p299
    %p302 = scmp.ne.s32.totalorder %s287, %s301
    %p303 = scmp.eq.s32.totalorder %s25, 0
    %p304 = por %p302, %p303
    %s305 = ssub.s32 %s19, %s26
    %p306 = scmp.eq.s32.totalorder %s305, 0
    %s308 = sadd.s32 %s307, 1
    %s309 = scalar_select %p306, %s307, %s308
    %p312 = pneg %p306
    %p313 = scmp.eq.s32.totalorder %s19, 1
    %p314 = por %p312, %p313
    %p315 = scmp.ne.s32.totalorder %s307, %s310
    %p316 = scmp.eq.s32.totalorder %s19, 0
    %p317 = por %p315, %p316
    %p318 = scmp.ne.s32.totalorder %s307, %s310
    %p319 = scmp.eq.s32.totalorder %s24, 1
    %p320 = por %p318, %p319
    %p321 = scmp.ne.s32.totalorder %s310, %s311
    %p322 = scmp.eq.s32.totalorder %s24, 0
    %p323 = por %p321, %p322
    %p324 = scmp.ne.s32.totalorder %s310, %s311
    %p325 = scmp.eq.s32.totalorder %s25, 1
    %p326 = por %p324, %p325
    %p328 = scmp.ne.s32.totalorder %s311, %s327
    %p329 = scmp.eq.s32.totalorder %s25, 0
    %p330 = por %p328, %p329
    %p331 = scmp.le.s32.totalorder 1, %s19
    %p332 = scmp.lt.s32.totalorder %s19, 3
    %p333 = pnand %p331, %p332
    %p334 = pneg %p333
    // Predicated region
    $region9: #{transformer_forward.7} parent=5 // pred_check
      _
    $region10: #{transformer_forward.7} parent=5 // pred_check_branch
      %336 = sbr.rel (%p333) target = $region12
    $region11: #{transformer_forward.7} parent=5 // pred_region
      %s337 = ssub.s32 %s19, 1
      // Predicated region
      $region13: #{transformer_forward.7} parent=11 // pred_check
        %p338 = pneg %p66
      $region14: #{transformer_forward.7} parent=11 // pred_check_branch
        %340 = sbr.rel (%p338) target = $region16
      $region15: #{transformer_forward.7} parent=11 // pred_region
        _
      $region16: #{transformer_forward.7} parent=11 // pred_fallthru
        _
      // Predicated region
      $region17: #{transformer_forward.7} parent=11 // pred_check
        %p341 = pneg %p87
      $region18: #{transformer_forward.7} parent=11 // pred_check_branch
        %343 = sbr.rel (%p341) target = $region20
      $region19: #{transformer_forward.7} parent=11 // pred_region
        _
      $region20: #{transformer_forward.7} parent=11 // pred_fallthru
        _
      // Predicated region
      $region21: #{transformer_forward.7} parent=11 // pred_check
        %p344 = pneg %p108
      $region22: #{transformer_forward.7} parent=11 // pred_check_branch
        %346 = sbr.rel (%p344) target = $region24
      $region23: #{transformer_forward.7} parent=11 // pred_region
        _
      $region24: #{transformer_forward.7} parent=11 // pred_fallthru
        _
      // Predicated region
      $region25: #{transformer_forward.7} parent=11 // pred_check
        %p347 = pneg %p129
      $region26: #{transformer_forward.7} parent=11 // pred_check_branch
        %349 = sbr.rel (%p347) target = $region28
      $region27: #{transformer_forward.7} parent=11 // pred_region
        _
      $region28: #{transformer_forward.7} parent=11 // pred_fallthru
        _
      // Predicated region
      $region29: #{transformer_forward.7} parent=11 // pred_check
        %p350 = pneg %p150
      $region30: #{transformer_forward.7} parent=11 // pred_check_branch
        %352 = sbr.rel (%p350) target = $region32
      $region31: #{transformer_forward.7} parent=11 // pred_region
        _
      $region32: #{transformer_forward.7} parent=11 // pred_fallthru
        _
      // Predicated region
      $region33: #{transformer_forward.7} parent=11 // pred_check
        %p353 = pneg %p171
      $region34: #{transformer_forward.7} parent=11 // pred_check_branch
        %355 = sbr.rel (%p353) target = $region36
      $region35: #{transformer_forward.7} parent=11 // pred_region
        _
      $region36: #{transformer_forward.7} parent=11 // pred_fallthru
        _
      // Predicated region
      $region37: #{transformer_forward.7} parent=11 // pred_check
        %p356 = pneg %p192
      $region38: #{transformer_forward.7} parent=11 // pred_check_branch
        %358 = sbr.rel (%p356) target = $region40
      $region39: #{transformer_forward.7} parent=11 // pred_region
        _
      $region40: #{transformer_forward.7} parent=11 // pred_fallthru
        _
      // Predicated region
      $region41: #{transformer_forward.7} parent=11 // pred_check
        %p359 = pneg %p213
      $region42: #{transformer_forward.7} parent=11 // pred_check_branch
        %361 = sbr.rel (%p359) target = $region44
      $region43: #{transformer_forward.7} parent=11 // pred_region
        _
      $region44: #{transformer_forward.7} parent=11 // pred_fallthru
        _
      // Predicated region
      $region45: #{transformer_forward.7} parent=11 // pred_check
        %p362 = pneg %p234
      $region46: #{transformer_forward.7} parent=11 // pred_check_branch
        %364 = sbr.rel (%p362) target = $region48
      $region47: #{transformer_forward.7} parent=11 // pred_region
        _
      $region48: #{transformer_forward.7} parent=11 // pred_fallthru
        _
      // Predicated region
      $region49: #{transformer_forward.7} parent=11 // pred_check
        %p365 = pneg %p255
      $region50: #{transformer_forward.7} parent=11 // pred_check_branch
        %367 = sbr.rel (%p365) target = $region52
      $region51: #{transformer_forward.7} parent=11 // pred_region
        _
      $region52: #{transformer_forward.7} parent=11 // pred_fallthru
        _
      // Predicated region
      $region53: #{transformer_forward.7} parent=11 // pred_check
        %p368 = pneg %p276
      $region54: #{transformer_forward.7} parent=11 // pred_check_branch
        %370 = sbr.rel (%p368) target = $region56
      $region55: #{transformer_forward.7} parent=11 // pred_region
        _
      $region56: #{transformer_forward.7} parent=11 // pred_fallthru
        _
      // Predicated region
      $region57: #{transformer_forward.7} parent=11 // pred_check
        %p371 = pneg %p297
      $region58: #{transformer_forward.7} parent=11 // pred_check_branch
        %373 = sbr.rel (%p371) target = $region60
      $region59: #{transformer_forward.7} parent=11 // pred_region
        _
      $region60: #{transformer_forward.7} parent=11 // pred_fallthru
        _
    $region12: #{transformer_forward.7} parent=5 // pred_fallthru
      _
    %p374 = scmp.lt.s32.totalorder %s19, 2
    // Predicated region
    $region61: #{transformer_forward.7} parent=5 // pred_check
      %p375 = pneg %p374
    $region62: #{transformer_forward.7} parent=5 // pred_check_branch
      %377 = sbr.rel (%p375) target = $region64
    $region63: #{transformer_forward.7} parent=5 // pred_region
      // Predicated region
      $region65: #{transformer_forward.7} parent=63 // pred_check
        %p378 = pneg %p39
      $region66: #{transformer_forward.7} parent=63 // pred_check_branch
        %380 = sbr.rel (%p378) target = $region68
      $region67: #{transformer_forward.7} parent=63 // pred_region
        %p381 = scmp.lt.s32.totalorder %s19, 1
        %s382 = scalar_select %p381, %s19, 1
        %s383 = smul.addr %s382, 8
        %s384 = scalar_lea.vmem %s0, %s383
      $region68: #{transformer_forward.7} parent=63 // pred_fallthru
        _
    $region64: #{transformer_forward.7} parent=5 // pred_fallthru
      _
    %p385 = scmp.le.s32.totalorder 1, %s19
    %p386 = scmp.lt.s32.totalorder %s19, 3
    %p387 = pnand %p385, %p386
    %p388 = pneg %p387
    // Predicated region
    $region69: #{transformer_forward.7} parent=5 // pred_check
      _
    $region70: #{transformer_forward.7} parent=5 // pred_check_branch
      %390 = sbr.rel (%p387) target = $region72
    $region71: #{transformer_forward.7} parent=5 // pred_region
      %s391 = ssub.s32 %s19, 1
      %p392 = scmp.lt.s32.totalorder %s24, 1
      %s393 = scalar_select %p392, %s24, 1
      %s394 = smul.addr %s393, 8
      %s395 = scalar_lea.vmem %s0, %s394
      %p396 = pneg %p45
      %p397 = pneg %p42
      %p398 = pneg %p66
      %p399 = pneg %p63
      %p400 = pneg %p87
      %p401 = pneg %p84
      %p402 = pneg %p108
      %p403 = pneg %p105
      %p404 = pneg %p129
      %p405 = pneg %p126
      %p406 = pneg %p150
      %p407 = pneg %p147
      %p408 = pneg %p171
      %p409 = pneg %p168
      %p410 = pneg %p192
      %p411 = pneg %p189
      %p412 = pneg %p213
      %p413 = pneg %p210
      %p414 = pneg %p234
      %p415 = pneg %p231
      %p416 = pneg %p255
      %p417 = pneg %p252
      %p418 = pneg %p276
      %p419 = pneg %p273
      %p420 = pneg %p297
      %p421 = pneg %p294
      %p422 = pneg %p323
      %p423 = pneg %p320
      %p424 = scmp.lt.s32.totalorder %s24, 1
      %s425 = scalar_select %p424, %s24, 1
      %s426 = smul.addr %s425, 8
      %s427 = scalar_lea.vmem %s13, %s426
      %p428 = scmp.lt.s32.totalorder %s24, 1
      %s429 = scalar_select %p428, %s24, 1
      %s430 = smul.addr %s429, 8
      %s431 = scalar_lea.vmem %s0, %s430
      %p432 = scmp.lt.s32.totalorder %s24, 1
      %s433 = scalar_select %p432, %s24, 1
      %s434 = smul.addr %s433, 8
      %s435 = scalar_lea.vmem %s13, %s434
      %v436 = vld [vmem:[%s431] sm:$0xff]
      %v437 = vld [vmem:[%s1] sm:$0xff]
      %v438 = vld [vmem:[%s1 + $0x8] sm:$0xff]
      %v439 = vld [vmem:[%s1 + $0x10] sm:$0xff]
      %v440 = vld [vmem:[%s1 + $0x18] sm:$0xff]
      %v441 = vld [vmem:[%s2] sm:$0x1]
      %v443 = vperm.slane %v441, 0
      %vm445 = vcmask 261120
      %v447 = vsel %vm445, %v436, 0
      %449 = vmatpush.msra.mxu0 0.0
      %450 = vmatpush.msra.mxu0 0.0
      %451 = vmatpush.msra.mxu0 0.0
      %452 = vmatpush.msra.mxu0 0.0
      %453 = vmatpush.msra.mxu0 0.0
      %454 = vmatpush.msra.mxu0 0.0
      %455 = vmatpush.msra.mxu0 0.0
      %456 = vmatpush.msra.mxu0 0.0
      %457 = vmatpush.msra.mxu0 0.0
      %458 = vmatpush.msra.mxu0 0.0
      %459 = vmatpush.msra.mxu0 0.0
      %460 = vmatpush.msra.mxu0 0.0
      %461 = vmatpush.msra.mxu0 %v440
      %462 = vmatpush.msra.mxu0 %v439
      %463 = vmatpush.msra.mxu0 %v438
      %464 = vmatpush.msra.mxu0 %v437
      %465 = vmatmul.f32.gmra.mxu0 %v447
      %v466 = vpop.f32.mrf.mxu0
      %v467 = vadd.f32 %v443, %v466
      %468 = vdwg.mxu0
      %v469 = vmul.f32 %v467, 0.35355338
      %471 = vrot.lane.b32.xlu0 %v467, 96
      %v472 = vpop.permute.xlu0 %471
      %vm473 = vcmask 64512
      %v475 = vsel %vm473, %v469, 0
      %v477 = vsel %vm473, %v472, 0
      %479 = vmatpush.xpose.msra.mxu0 0.0
      %480 = vmatpush.xpose.msra.mxu0 0.0
      %481 = vmatpush.xpose.msra.mxu0 0.0
      %482 = vmatpush.xpose.msra.mxu0 0.0
      %483 = vmatpush.xpose.msra.mxu0 0.0
      %484 = vmatpush.xpose.msra.mxu0 0.0
      %485 = vmatpush.xpose.msra.mxu0 0.0
      %486 = vmatpush.xpose.msra.mxu0 0.0
      %487 = vmatpush.xpose.msra.mxu0 0.0
      %488 = vmatpush.xpose.msra.mxu0 0.0
      %489 = vmatpush.xpose.msra.mxu0 0.0
      %490 = vmatpush.xpose.msra.mxu0 0.0
      %491 = vmatpush.xpose.msra.mxu0 0.0
      %492 = vmatpush.xpose.msra.mxu0 0.0
      %493 = vmatpush.xpose.msra.mxu0 0.0
      %494 = vmatpush.xpose.msra.mxu0 %v477
      %495 = vmatmul.f32.gmra.mxu0 %v475
      %v496 = vpop.f32.mrf.mxu0
      %v497 = vadd.f32 0.0, %v496
      %498 = vdwg.mxu0
      %v499 = vsel %vm473, %v497, -inf
      %500 = vmax.xlane.f32.xlu0 %v499
      %v501 = vpop.xlane.xlu0 %500
      %v502 = vsub.f32 %v497, %v501
      %v503 = vmul.f32 %v502, 1.442695
      %v504 = vpow.pop %v503
      %v505 = vsel %vm473, %v504, 0.0
      %506 = vadd.xlane.f32.xlu0 %v505
      %v507 = vpop.xlane.xlu0 %506
      %v508 = vrcp.pop %v507
      %v509 = vmul.f32 %v504, %v508
      %510 = vrot.lane.b32.xlu0 %v467, 64
      %v511 = vpop.permute.xlu0 %510
      %v514 = vsel %vm473, %v509, 0
      %516 = vmatpush.msra.mxu0 0.0
      %517 = vmatpush.msra.mxu0 0.0
      %518 = vmatpush.msra.mxu0 0.0
      %519 = vmatpush.msra.mxu0 0.0
      %520 = vmatpush.msra.mxu0 0.0
      %521 = vmatpush.msra.mxu0 0.0
      %522 = vmatpush.msra.mxu0 0.0
      %523 = vmatpush.msra.mxu0 0.0
      %524 = vmatpush.msra.mxu0 0.0
      %525 = vmatpush.msra.mxu0 0.0
      %526 = vmatpush.msra.mxu0 0.0
      %527 = vmatpush.msra.mxu0 0.0
      %528 = vmatpush.msra.mxu0 0.0
      %529 = vmatpush.msra.mxu0 0.0
      %530 = vmatpush.msra.mxu0 0.0
      %531 = vmatpush.msra.mxu0 %v511
      %532 = vmatmul.f32.gmra.mxu0 %v514
      %v533 = vpop.f32.mrf.mxu0
      %v534 = vadd.f32 0.0, %v533
      %535 = vdwg.mxu0
      %536 = vrot.lane.b32.xlu0 %v469, 120
      %v537 = vpop.permute.xlu0 %536
      %538 = vrot.lane.b32.xlu0 %v467, 88
      %v539 = vpop.permute.xlu0 %538
      %v540 = vsel %vm473, %v537, 0
      %v542 = vsel %vm473, %v539, 0
      %544 = vmatpush.xpose.msra.mxu0 0.0
      %545 = vmatpush.xpose.msra.mxu0 0.0
      %546 = vmatpush.xpose.msra.mxu0 0.0
      %547 = vmatpush.xpose.msra.mxu0 0.0
      %548 = vmatpush.xpose.msra.mxu0 0.0
      %549 = vmatpush.xpose.msra.mxu0 0.0
      %550 = vmatpush.xpose.msra.mxu0 0.0
      %551 = vmatpush.xpose.msra.mxu0 0.0
      %552 = vmatpush.xpose.msra.mxu0 0.0
      %553 = vmatpush.xpose.msra.mxu0 0.0
      %554 = vmatpush.xpose.msra.mxu0 0.0
      %555 = vmatpush.xpose.msra.mxu0 0.0
      %556 = vmatpush.xpose.msra.mxu0 0.0
      %557 = vmatpush.xpose.msra.mxu0 0.0
      %558 = vmatpush.xpose.msra.mxu0 0.0
      %559 = vmatpush.xpose.msra.mxu0 %v542
      %560 = vmatmul.f32.gmra.mxu0 %v540
      %v561 = vpop.f32.mrf.mxu0
      %v562 = vadd.f32 0.0, %v561
      %563 = vdwg.mxu0
      %v564 = vsel %vm473, %v562, -inf
      %565 = vmax.xlane.f32.xlu0 %v564
      %v566 = vpop.xlane.xlu0 %565
      %v567 = vsub.f32 %v562, %v566
      %v568 = vmul.f32 %v567, 1.442695
      %v569 = vpow.pop %v568
      %v570 = vsel %vm473, %v569, 0.0
      %571 = vadd.xlane.f32.xlu0 %v570
      %v572 = vpop.xlane.xlu0 %571
      %v573 = vrcp.pop %v572
      %v574 = vmul.f32 %v569, %v573
      %575 = vrot.lane.b32.xlu0 %v467, 56
      %v576 = vpop.permute.xlu0 %575
      %v579 = vsel %vm473, %v574, 0
      %581 = vmatpush.msra.mxu0 0.0
      %582 = vmatpush.msra.mxu0 0.0
      %583 = vmatpush.msra.mxu0 0.0
      %584 = vmatpush.msra.mxu0 0.0
      %585 = vmatpush.msra.mxu0 0.0
      %586 = vmatpush.msra.mxu0 0.0
      %587 = vmatpush.msra.mxu0 0.0
      %588 = vmatpush.msra.mxu0 0.0
      %589 = vmatpush.msra.mxu0 0.0
      %590 = vmatpush.msra.mxu0 0.0
      %591 = vmatpush.msra.mxu0 0.0
      %592 = vmatpush.msra.mxu0 0.0
      %593 = vmatpush.msra.mxu0 0.0
      %594 = vmatpush.msra.mxu0 0.0
      %595 = vmatpush.msra.mxu0 0.0
      %596 = vmatpush.msra.mxu0 %v576
      %597 = vmatmul.f32.gmra.mxu0 %v579
      %v598 = vpop.f32.mrf.mxu0
      %v599 = vadd.f32 0.0, %v598
      %600 = vdwg.mxu0
      %601 = vrot.lane.b32.xlu0 %v469, 112
      %v602 = vpop.permute.xlu0 %601
      %603 = vrot.lane.b32.xlu0 %v467, 80
      %v604 = vpop.permute.xlu0 %603
      %v605 = vsel %vm473, %v602, 0
      %v607 = vsel %vm473, %v604, 0
      %609 = vmatpush.xpose.msra.mxu0 0.0
      %610 = vmatpush.xpose.msra.mxu0 0.0
      %611 = vmatpush.xpose.msra.mxu0 0.0
      %612 = vmatpush.xpose.msra.mxu0 0.0
      %613 = vmatpush.xpose.msra.mxu0 0.0
      %614 = vmatpush.xpose.msra.mxu0 0.0
      %615 = vmatpush.xpose.msra.mxu0 0.0
      %616 = vmatpush.xpose.msra.mxu0 0.0
      %617 = vmatpush.xpose.msra.mxu0 0.0
      %618 = vmatpush.xpose.msra.mxu0 0.0
      %619 = vmatpush.xpose.msra.mxu0 0.0
      %620 = vmatpush.xpose.msra.mxu0 0.0
      %621 = vmatpush.xpose.msra.mxu0 0.0
      %622 = vmatpush.xpose.msra.mxu0 0.0
      %623 = vmatpush.xpose.msra.mxu0 0.0
      %624 = vmatpush.xpose.msra.mxu0 %v607
      %625 = vmatmul.f32.gmra.mxu0 %v605
      %v626 = vpop.f32.mrf.mxu0
      %v627 = vadd.f32 0.0, %v626
      %628 = vdwg.mxu0
      %v629 = vsel %vm473, %v627, -inf
      %630 = vmax.xlane.f32.xlu0 %v629
      %v631 = vpop.xlane.xlu0 %630
      %v632 = vsub.f32 %v627, %v631
      %v633 = vmul.f32 %v632, 1.442695
      %v634 = vpow.pop %v633
      %v635 = vsel %vm473, %v634, 0.0
      %636 = vadd.xlane.f32.xlu0 %v635
      %v637 = vpop.xlane.xlu0 %636
      %v638 = vrcp.pop %v637
      %v639 = vmul.f32 %v634, %v638
      %640 = vrot.lane.b32.xlu0 %v467, 48
      %v641 = vpop.permute.xlu0 %640
      %v644 = vsel %vm473, %v639, 0
      %646 = vmatpush.msra.mxu0 0.0
      %647 = vmatpush.msra.mxu0 0.0
      %648 = vmatpush.msra.mxu0 0.0
      %649 = vmatpush.msra.mxu0 0.0
      %650 = vmatpush.msra.mxu0 0.0
      %651 = vmatpush.msra.mxu0 0.0
      %652 = vmatpush.msra.mxu0 0.0
      %653 = vmatpush.msra.mxu0 0.0
      %654 = vmatpush.msra.mxu0 0.0
      %655 = vmatpush.msra.mxu0 0.0
      %656 = vmatpush.msra.mxu0 0.0
      %657 = vmatpush.msra.mxu0 0.0
      %658 = vmatpush.msra.mxu0 0.0
      %659 = vmatpush.msra.mxu0 0.0
      %660 = vmatpush.msra.mxu0 0.0
      %661 = vmatpush.msra.mxu0 %v641
      %662 = vmatmul.f32.gmra.mxu0 %v644
      %v663 = vpop.f32.mrf.mxu0
      %v664 = vadd.f32 0.0, %v663
      %665 = vdwg.mxu0
      %666 = vrot.lane.b32.xlu0 %v469, 104
      %v667 = vpop.permute.xlu0 %666
      %668 = vrot.lane.b32.xlu0 %v467, 72
      %v669 = vpop.permute.xlu0 %668
      %v670 = vsel %vm473, %v667, 0
      %v672 = vsel %vm473, %v669, 0
      %674 = vmatpush.xpose.msra.mxu0 0.0
      %675 = vmatpush.xpose.msra.mxu0 0.0
      %676 = vmatpush.xpose.msra.mxu0 0.0
      %677 = vmatpush.xpose.msra.mxu0 0.0
      %678 = vmatpush.xpose.msra.mxu0 0.0
      %679 = vmatpush.xpose.msra.mxu0 0.0
      %680 = vmatpush.xpose.msra.mxu0 0.0
      %681 = vmatpush.xpose.msra.mxu0 0.0
      %682 = vmatpush.xpose.msra.mxu0 0.0
      %683 = vmatpush.xpose.msra.mxu0 0.0
      %684 = vmatpush.xpose.msra.mxu0 0.0
      %685 = vmatpush.xpose.msra.mxu0 0.0
      %686 = vmatpush.xpose.msra.mxu0 0.0
      %687 = vmatpush.xpose.msra.mxu0 0.0
      %688 = vmatpush.xpose.msra.mxu0 0.0
      %689 = vmatpush.xpose.msra.mxu0 %v672
      %690 = vmatmul.f32.gmra.mxu0 %v670
      %v691 = vpop.f32.mrf.mxu0
      %v692 = vadd.f32 0.0, %v691
      %693 = vdwg.mxu0
      %v694 = vsel %vm473, %v692, -inf
      %695 = vmax.xlane.f32.xlu0 %v694
      %v696 = vpop.xlane.xlu0 %695
      %v697 = vsub.f32 %v692, %v696
      %v698 = vmul.f32 %v697, 1.442695
      %v699 = vpow.pop %v698
      %v700 = vsel %vm473, %v699, 0.0
      %701 = vadd.xlane.f32.xlu0 %v700
      %v702 = vpop.xlane.xlu0 %701
      %v703 = vrcp.pop %v702
      %v704 = vmul.f32 %v699, %v703
      %705 = vrot.lane.b32.xlu0 %v467, 40
      %v706 = vpop.permute.xlu0 %705
      %v709 = vsel %vm473, %v704, 0
      %711 = vmatpush.msra.mxu0 0.0
      %712 = vmatpush.msra.mxu0 0.0
      %713 = vmatpush.msra.mxu0 0.0
      %714 = vmatpush.msra.mxu0 0.0
      %715 = vmatpush.msra.mxu0 0.0
      %716 = vmatpush.msra.mxu0 0.0
      %717 = vmatpush.msra.mxu0 0.0
      %718 = vmatpush.msra.mxu0 0.0
      %719 = vmatpush.msra.mxu0 0.0
      %720 = vmatpush.msra.mxu0 0.0
      %721 = vmatpush.msra.mxu0 0.0
      %722 = vmatpush.msra.mxu0 0.0
      %723 = vmatpush.msra.mxu0 0.0
      %724 = vmatpush.msra.mxu0 0.0
      %725 = vmatpush.msra.mxu0 0.0
      %726 = vmatpush.msra.mxu0 %v706
      %727 = vmatmul.f32.gmra.mxu0 %v709
      %v728 = vpop.f32.mrf.mxu0
      %v729 = vadd.f32 0.0, %v728
      %730 = vdwg.mxu0
      %732 = vrot.lane.b32.xlu0 %v599, 8
      %v733 = vpop.permute.xlu0 %732
      %736 = vrot.lane.b32.xlu0 %v664, 16
      %v737 = vpop.permute.xlu0 %736
      %740 = vrot.lane.b32.xlu0 %v729, 24
      %v741 = vpop.permute.xlu0 %740
      %v743 = vsel %vm473, %v534, %v733
      %vm744 = vcmask 130048
      %v745 = vsel %vm744, %v743, %v737
      %vm746 = vcmask 195584
      %v747 = vsel %vm746, %v745, %v741
      %v748 = vld [vmem:[%s3] sm:$0xff]
      %v749 = vld [vmem:[%s3 + $0x8] sm:$0xff]
      %v750 = vld [vmem:[%s3 + $0x10] sm:$0xff]
      %v751 = vld [vmem:[%s3 + $0x18] sm:$0xff]
      %v752 = vld [vmem:[%s4] sm:$0x1]
      %v754 = vperm.slane %v752, 0
      %v757 = vsel %vm445, %v747, 0
      %759 = vmatpush.msra.mxu0 0.0
      %760 = vmatpush.msra.mxu0 0.0
      %761 = vmatpush.msra.mxu0 0.0
      %762 = vmatpush.msra.mxu0 0.0
      %763 = vmatpush.msra.mxu0 0.0
      %764 = vmatpush.msra.mxu0 0.0
      %765 = vmatpush.msra.mxu0 0.0
      %766 = vmatpush.msra.mxu0 0.0
      %767 = vmatpush.msra.mxu0 0.0
      %768 = vmatpush.msra.mxu0 0.0
      %769 = vmatpush.msra.mxu0 0.0
      %770 = vmatpush.msra.mxu0 0.0
      %771 = vmatpush.msra.mxu0 %v751
      %772 = vmatpush.msra.mxu0 %v750
      %773 = vmatpush.msra.mxu0 %v749
      %774 = vmatpush.msra.mxu0 %v748
      %775 = vmatmul.f32.gmra.mxu0 %v757
      %v776 = vpop.f32.mrf.mxu0
      %v777 = vadd.f32 %v754, %v776
      %778 = vdwg.mxu0
      %v779 = vld [vmem:[%s5] sm:$0x1]
      %v780 = vld [vmem:[%s6] sm:$0x1]
      %v781 = vadd.f32 %v777, %v436
      %v782 = vsel %vm445, %v781, 0.0
      %783 = vadd.xlane.f32.xlu0 %v782
      %v784 = vpop.xlane.xlu0 %783
      %v785 = vrcp.pop 32.0
      %v786 = vmul.f32 32.0, %v785
      %v787 = vsub.f32 1.0, %v786
      %v788 = vmul.f32 %v785, %v787
      %v789 = vadd.f32 %v785, %v788
      %vm790 = vweird.f32 %v785
      %v791 = vsel %vm790, %v785, %v789
      %v792 = vmul.f32 %v784, %v791
      %v793 = vsub.f32 %v781, %v792
      %v794 = vmul.f32 %v793, %v793
      %v795 = vsel %vm445, %v794, 0.0
      %796 = vadd.xlane.f32.xlu0 %v795
      %v797 = vpop.xlane.xlu0 %796
      %v798 = vmul.f32 %v797, %v791
      %v799 = vadd.f32 %v798, 1e-05
      %v800 = vrsqrt.pop %v799
      %v801 = vmul.f32 %v800, %v799
      %v802 = vmul.f32 %v801, %v800
      %v803 = vmul.f32 0.5, %v802
      %v804 = vsub.f32 1.5, %v803
      %v805 = vmul.f32 %v800, %v804
      %vm806 = vweird.f32 %v799
      %vm807 = vweird.f32 %v800
      %vm808 = vmor %vm806, %vm807
      %v809 = vsel %vm808, %v800, %v805
      %v810 = vmul.f32 %v793, %v809
      %v812 = vperm.slane %v779, 0
      %v814 = vmul.f32 %v810, %v812
      %v816 = vperm.slane %v780, 0
      %v818 = vadd.f32 %v814, %v816
      %v819 = vld [vmem:[%s7] sm:$0xff]
      %v820 = vld [vmem:[%s7 + $0x8] sm:$0xff]
      %v821 = vld [vmem:[%s7 + $0x10] sm:$0xff]
      %v822 = vld [vmem:[%s7 + $0x18] sm:$0xff]
      %v823 = vld [vmem:[%s7 + $0x20] sm:$0xff]
      %v824 = vld [vmem:[%s7 + $0x28] sm:$0xff]
      %v825 = vld [vmem:[%s7 + $0x30] sm:$0xff]
      %v826 = vld [vmem:[%s7 + $0x38] sm:$0xff]
      %v827 = vld [vmem:[%s7 + $0x40] sm:$0xff]
      %v828 = vld [vmem:[%s7 + $0x48] sm:$0xff]
      %v829 = vld [vmem:[%s7 + $0x50] sm:$0xff]
      %v830 = vld [vmem:[%s7 + $0x58] sm:$0xff]
      %v831 = vld [vmem:[%s7 + $0x60] sm:$0xff]
      %v832 = vld [vmem:[%s7 + $0x68] sm:$0xff]
      %v833 = vld [vmem:[%s7 + $0x70] sm:$0xff]
      %v834 = vld [vmem:[%s7 + $0x78] sm:$0xff]
      %v835 = vld [vmem:[%s7 + $0x80] sm:$0xff]
      %v836 = vld [vmem:[%s7 + $0x88] sm:$0xff]
      %v837 = vld [vmem:[%s7 + $0x90] sm:$0xff]
      %v838 = vld [vmem:[%s7 + $0x98] sm:$0xff]
      %v839 = vld [vmem:[%s7 + $0xa0] sm:$0xff]
      %v840 = vld [vmem:[%s7 + $0xa8] sm:$0xff]
      %v841 = vld [vmem:[%s7 + $0xb0] sm:$0xff]
      %v842 = vld [vmem:[%s7 + $0xb8] sm:$0xff]
      %v843 = vld [vmem:[%s7 + $0xc0] sm:$0xff]
      %v844 = vld [vmem:[%s7 + $0xc8] sm:$0xff]
      %v845 = vld [vmem:[%s7 + $0xd0] sm:$0xff]
      %v846 = vld [vmem:[%s7 + $0xd8] sm:$0xff]
      %v847 = vld [vmem:[%s7 + $0xe0] sm:$0xff]
      %v848 = vld [vmem:[%s7 + $0xe8] sm:$0xff]
      %v849 = vld [vmem:[%s7 + $0xf0] sm:$0xff]
      %v850 = vld [vmem:[%s7 + $0xf8] sm:$0xff]
      %v851 = vld [vmem:[%s7 + $0x100] sm:$0xff]
      %v852 = vld [vmem:[%s7 + $0x108] sm:$0xff]
      %v853 = vld [vmem:[%s7 + $0x110] sm:$0xff]
      %v854 = vld [vmem:[%s7 + $0x118] sm:$0xff]
      %v855 = vld [vmem:[%s7 + $0x120] sm:$0xff]
      %v856 = vld [vmem:[%s7 + $0x128] sm:$0xff]
      %v857 = vld [vmem:[%s7 + $0x130] sm:$0xff]
      %v858 = vld [vmem:[%s7 + $0x138] sm:$0xff]
      %v859 = vld [vmem:[%s7 + $0x140] sm:$0xff]
      %v860 = vld [vmem:[%s7 + $0x148] sm:$0xff]
      %v861 = vld [vmem:[%s7 + $0x150] sm:$0xff]
      %v862 = vld [vmem:[%s7 + $0x158] sm:$0xff]
      %v863 = vld [vmem:[%s7 + $0x160] sm:$0xff]
      %v864 = vld [vmem:[%s7 + $0x168] sm:$0xff]
      %v865 = vld [vmem:[%s7 + $0x170] sm:$0xff]
      %v866 = vld [vmem:[%s7 + $0x178] sm:$0xff]
      %v867 = vld [vmem:[%s7 + $0x180] sm:$0xff]
      %v868 = vld [vmem:[%s7 + $0x188] sm:$0xff]
      %v869 = vld [vmem:[%s7 + $0x190] sm:$0xff]
      %v870 = vld [vmem:[%s7 + $0x198] sm:$0xff]
      %v871 = vld [vmem:[%s7 + $0x1a0] sm:$0xff]
      %v872 = vld [vmem:[%s7 + $0x1a8] sm:$0xff]
      %v873 = vld [vmem:[%s7 + $0x1b0] sm:$0xff]
      %v874 = vld [vmem:[%s7 + $0x1b8] sm:$0xff]
      %v875 = vld [vmem:[%s7 + $0x1c0] sm:$0xff]
      %v876 = vld [vmem:[%s7 + $0x1c8] sm:$0xff]
      %v877 = vld [vmem:[%s7 + $0x1d0] sm:$0xff]
      %v878 = vld [vmem:[%s7 + $0x1d8] sm:$0xff]
      %v879 = vld [vmem:[%s7 + $0x1e0] sm:$0xff]
      %v880 = vld [vmem:[%s7 + $0x1e8] sm:$0xff]
      %v881 = vld [vmem:[%s7 + $0x1f0] sm:$0xff]
      %v882 = vld [vmem:[%s7 + $0x1f8] sm:$0xff]
      %v883 = vld [vmem:[%s8] sm:$0xff]
      %v884 = vld [vmem:[%s8 + $0x8] sm:$0xff]
      %v887 = vperm.slane %v883, 0
      %v888 = vperm.slane %v883, 1
      %v889 = vperm.slane %v883, 2
      %v890 = vperm.slane %v883, 3
      %v891 = vperm.slane %v883, 4
      %v892 = vperm.slane %v883, 5
      %v893 = vperm.slane %v883, 6
      %v894 = vperm.slane %v883, 7
      %v895 = vperm.slane %v884, 0
      %v896 = vperm.slane %v884, 1
      %v897 = vperm.slane %v884, 2
      %v898 = vperm.slane %v884, 3
      %v899 = vperm.slane %v884, 4
      %v900 = vperm.slane %v884, 5
      %v901 = vperm.slane %v884, 6
      %v902 = vperm.slane %v884, 7
      %v920 = vsel %vm445, %v818, 0
      %922 = vmatpush.msra.mxu0 0.0
      %923 = vmatpush.msra.mxu0 0.0
      %924 = vmatpush.msra.mxu0 0.0
      %925 = vmatpush.msra.mxu0 0.0
      %926 = vmatpush.msra.mxu0 0.0
      %927 = vmatpush.msra.mxu0 0.0
      %928 = vmatpush.msra.mxu0 0.0
      %929 = vmatpush.msra.mxu0 0.0
      %930 = vmatpush.msra.mxu0 0.0
      %931 = vmatpush.msra.mxu0 0.0
      %932 = vmatpush.msra.mxu0 0.0
      %933 = vmatpush.msra.mxu0 0.0
      %934 = vmatpush.msra.mxu0 %v867
      %935 = vmatpush.msra.mxu0 %v851
      %936 = vmatpush.msra.mxu0 %v835
      %937 = vmatpush.msra.mxu0 %v819
      %938 = vmatmul.f32.gmra.mxu0 %v920
      %v939 = vpop.f32.mrf.mxu0
      %v940 = vadd.f32 %v887, %v939
      %941 = vdwg.mxu0
      %942 = vmatpush.msra.mxu0 0.0
      %943 = vmatpush.msra.mxu0 0.0
      %944 = vmatpush.msra.mxu0 0.0
      %945 = vmatpush.msra.mxu0 0.0
      %946 = vmatpush.msra.mxu0 0.0
      %947 = vmatpush.msra.mxu0 0.0
      %948 = vmatpush.msra.mxu0 0.0
      %949 = vmatpush.msra.mxu0 0.0
      %950 = vmatpush.msra.mxu0 0.0
      %951 = vmatpush.msra.mxu0 0.0
      %952 = vmatpush.msra.mxu0 0.0
      %953 = vmatpush.msra.mxu0 0.0
      %954 = vmatpush.msra.mxu0 %v868
      %955 = vmatpush.msra.mxu0 %v852
      %956 = vmatpush.msra.mxu0 %v836
      %957 = vmatpush.msra.mxu0 %v820
      %958 = vmatmul.f32.gmra.mxu0 %v920
      %v959 = vpop.f32.mrf.mxu0
      %v960 = vadd.f32 %v888, %v959
      %961 = vdwg.mxu0
      %962 = vmatpush.msra.mxu0 0.0
      %963 = vmatpush.msra.mxu0 0.0
      %964 = vmatpush.msra.mxu0 0.0
      %965 = vmatpush.msra.mxu0 0.0
      %966 = vmatpush.msra.mxu0 0.0
      %967 = vmatpush.msra.mxu0 0.0
      %968 = vmatpush.msra.mxu0 0.0
      %969 = vmatpush.msra.mxu0 0.0
      %970 = vmatpush.msra.mxu0 0.0
      %971 = vmatpush.msra.mxu0 0.0
      %972 = vmatpush.msra.mxu0 0.0
      %973 = vmatpush.msra.mxu0 0.0
      %974 = vmatpush.msra.mxu0 %v869
      %975 = vmatpush.msra.mxu0 %v853
      %976 = vmatpush.msra.mxu0 %v837
      %977 = vmatpush.msra.mxu0 %v821
      %978 = vmatmul.f32.gmra.mxu0 %v920
      %v979 = vpop.f32.mrf.mxu0
      %v980 = vadd.f32 %v889, %v979
      %981 = vdwg.mxu0
      %982 = vmatpush.msra.mxu0 0.0
      %983 = vmatpush.msra.mxu0 0.0
      %984 = vmatpush.msra.mxu0 0.0
      %985 = vmatpush.msra.mxu0 0.0
      %986 = vmatpush.msra.mxu0 0.0
      %987 = vmatpush.msra.mxu0 0.0
      %988 = vmatpush.msra.mxu0 0.0
      %989 = vmatpush.msra.mxu0 0.0
      %990 = vmatpush.msra.mxu0 0.0
      %991 = vmatpush.msra.mxu0 0.0
      %992 = vmatpush.msra.mxu0 0.0
      %993 = vmatpush.msra.mxu0 0.0
      %994 = vmatpush.msra.mxu0 %v870
      %995 = vmatpush.msra.mxu0 %v854
      %996 = vmatpush.msra.mxu0 %v838
      %997 = vmatpush.msra.mxu0 %v822
      %998 = vmatmul.f32.gmra.mxu0 %v920
      %v999 = vpop.f32.mrf.mxu0
      %v1000 = vadd.f32 %v890, %v999
      %1001 = vdwg.mxu0
      %1002 = vmatpush.msra.mxu0 0.0
      %1003 = vmatpush.msra.mxu0 0.0
      %1004 = vmatpush.msra.mxu0 0.0
      %1005 = vmatpush.msra.mxu0 0.0
      %1006 = vmatpush.msra.mxu0 0.0
      %1007 = vmatpush.msra.mxu0 0.0
      %1008 = vmatpush.msra.mxu0 0.0
      %1009 = vmatpush.msra.mxu0 0.0
      %1010 = vmatpush.msra.mxu0 0.0
      %1011 = vmatpush.msra.mxu0 0.0
      %1012 = vmatpush.msra.mxu0 0.0
      %1013 = vmatpush.msra.mxu0 0.0
      %1014 = vmatpush.msra.mxu0 %v871
      %1015 = vmatpush.msra.mxu0 %v855
      %1016 = vmatpush.msra.mxu0 %v839
      %1017 = vmatpush.msra.mxu0 %v823
      %1018 = vmatmul.f32.gmra.mxu0 %v920
      %v1019 = vpop.f32.mrf.mxu0
      %v1020 = vadd.f32 %v891, %v1019
      %1021 = vdwg.mxu0
      %1022 = vmatpush.msra.mxu0 0.0
      %1023 = vmatpush.msra.mxu0 0.0
      %1024 = vmatpush.msra.mxu0 0.0
      %1025 = vmatpush.msra.mxu0 0.0
      %1026 = vmatpush.msra.mxu0 0.0
      %1027 = vmatpush.msra.mxu0 0.0
      %1028 = vmatpush.msra.mxu0 0.0
      %1029 = vmatpush.msra.mxu0 0.0
      %1030 = vmatpush.msra.mxu0 0.0
      %1031 = vmatpush.msra.mxu0 0.0
      %1032 = vmatpush.msra.mxu0 0.0
      %1033 = vmatpush.msra.mxu0 0.0
      %1034 = vmatpush.msra.mxu0 %v872
      %1035 = vmatpush.msra.mxu0 %v856
      %1036 = vmatpush.msra.mxu0 %v840
      %1037 = vmatpush.msra.mxu0 %v824
      %1038 = vmatmul.f32.gmra.mxu0 %v920
      %v1039 = vpop.f32.mrf.mxu0
      %v1040 = vadd.f32 %v892, %v1039
      %1041 = vdwg.mxu0
      %1042 = vmatpush.msra.mxu0 0.0
      %1043 = vmatpush.msra.mxu0 0.0
      %1044 = vmatpush.msra.mxu0 0.0
      %1045 = vmatpush.msra.mxu0 0.0
      %1046 = vmatpush.msra.mxu0 0.0
      %1047 = vmatpush.msra.mxu0 0.0
      %1048 = vmatpush.msra.mxu0 0.0
      %1049 = vmatpush.msra.mxu0 0.0
      %1050 = vmatpush.msra.mxu0 0.0
      %1051 = vmatpush.msra.mxu0 0.0
      %1052 = vmatpush.msra.mxu0 0.0
      %1053 = vmatpush.msra.mxu0 0.0
      %1054 = vmatpush.msra.mxu0 %v873
      %1055 = vmatpush.msra.mxu0 %v857
      %1056 = vmatpush.msra.mxu0 %v841
      %1057 = vmatpush.msra.mxu0 %v825
      %1058 = vmatmul.f32.gmra.mxu0 %v920
      %v1059 = vpop.f32.mrf.mxu0
      %v1060 = vadd.f32 %v893, %v1059
      %1061 = vdwg.mxu0
      %1062 = vmatpush.msra.mxu0 0.0
      %1063 = vmatpush.msra.mxu0 0.0
      %1064 = vmatpush.msra.mxu0 0.0
      %1065 = vmatpush.msra.mxu0 0.0
      %1066 = vmatpush.msra.mxu0 0.0
      %1067 = vmatpush.msra.mxu0 0.0
      %1068 = vmatpush.msra.mxu0 0.0
      %1069 = vmatpush.msra.mxu0 0.0
      %1070 = vmatpush.msra.mxu0 0.0
      %1071 = vmatpush.msra.mxu0 0.0
      %1072 = vmatpush.msra.mxu0 0.0
      %1073 = vmatpush.msra.mxu0 0.0
      %1074 = vmatpush.msra.mxu0 %v874
      %1075 = vmatpush.msra.mxu0 %v858
      %1076 = vmatpush.msra.mxu0 %v842
      %1077 = vmatpush.msra.mxu0 %v826
      %1078 = vmatmul.f32.gmra.mxu0 %v920
      %v1079 = vpop.f32.mrf.mxu0
      %v1080 = vadd.f32 %v894, %v1079
      %1081 = vdwg.mxu0
      %1082 = vmatpush.msra.mxu0 0.0
      %1083 = vmatpush.msra.mxu0 0.0
      %1084 = vmatpush.msra.mxu0 0.0
      %1085 = vmatpush.msra.mxu0 0.0
      %1086 = vmatpush.msra.mxu0 0.0
      %1087 = vmatpush.msra.mxu0 0.0
      %1088 = vmatpush.msra.mxu0 0.0
      %1089 = vmatpush.msra.mxu0 0.0
      %1090 = vmatpush.msra.mxu0 0.0
      %1091 = vmatpush.msra.mxu0 0.0
      %1092 = vmatpush.msra.mxu0 0.0
      %1093 = vmatpush.msra.mxu0 0.0
      %1094 = vmatpush.msra.mxu0 %v875
      %1095 = vmatpush.msra.mxu0 %v859
      %1096 = vmatpush.msra.mxu0 %v843
      %1097 = vmatpush.msra.mxu0 %v827
      %1098 = vmatmul.f32.gmra.mxu0 %v920
      %v1099 = vpop.f32.mrf.mxu0
      %v1100 = vadd.f32 %v895, %v1099
      %1101 = vdwg.mxu0
      %1102 = vmatpush.msra.mxu0 0.0
      %1103 = vmatpush.msra.mxu0 0.0
      %1104 = vmatpush.msra.mxu0 0.0
      %1105 = vmatpush.msra.mxu0 0.0
      %1106 = vmatpush.msra.mxu0 0.0
      %1107 = vmatpush.msra.mxu0 0.0
      %1108 = vmatpush.msra.mxu0 0.0
      %1109 = vmatpush.msra.mxu0 0.0
      %1110 = vmatpush.msra.mxu0 0.0
      %1111 = vmatpush.msra.mxu0 0.0
      %1112 = vmatpush.msra.mxu0 0.0
      %1113 = vmatpush.msra.mxu0 0.0
      %1114 = vmatpush.msra.mxu0 %v876
      %1115 = vmatpush.msra.mxu0 %v860
      %1116 = vmatpush.msra.mxu0 %v844
      %1117 = vmatpush.msra.mxu0 %v828
      %1118 = vmatmul.f32.gmra.mxu0 %v920
      %v1119 = vpop.f32.mrf.mxu0
      %v1120 = vadd.f32 %v896, %v1119
      %1121 = vdwg.mxu0
      %1122 = vmatpush.msra.mxu0 0.0
      %1123 = vmatpush.msra.mxu0 0.0
      %1124 = vmatpush.msra.mxu0 0.0
      %1125 = vmatpush.msra.mxu0 0.0
      %1126 = vmatpush.msra.mxu0 0.0
      %1127 = vmatpush.msra.mxu0 0.0
      %1128 = vmatpush.msra.mxu0 0.0
      %1129 = vmatpush.msra.mxu0 0.0
      %1130 = vmatpush.msra.mxu0 0.0
      %1131 = vmatpush.msra.mxu0 0.0
      %1132 = vmatpush.msra.mxu0 0.0
      %1133 = vmatpush.msra.mxu0 0.0
      %1134 = vmatpush.msra.mxu0 %v877
      %1135 = vmatpush.msra.mxu0 %v861
      %1136 = vmatpush.msra.mxu0 %v845
      %1137 = vmatpush.msra.mxu0 %v829
      %1138 = vmatmul.f32.gmra.mxu0 %v920
      %v1139 = vpop.f32.mrf.mxu0
      %v1140 = vadd.f32 %v897, %v1139
      %1141 = vdwg.mxu0
      %1142 = vmatpush.msra.mxu0 0.0
      %1143 = vmatpush.msra.mxu0 0.0
      %1144 = vmatpush.msra.mxu0 0.0
      %1145 = vmatpush.msra.mxu0 0.0
      %1146 = vmatpush.msra.mxu0 0.0
      %1147 = vmatpush.msra.mxu0 0.0
      %1148 = vmatpush.msra.mxu0 0.0
      %1149 = vmatpush.msra.mxu0 0.0
      %1150 = vmatpush.msra.mxu0 0.0
      %1151 = vmatpush.msra.mxu0 0.0
      %1152 = vmatpush.msra.mxu0 0.0
      %1153 = vmatpush.msra.mxu0 0.0
      %1154 = vmatpush.msra.mxu0 %v878
      %1155 = vmatpush.msra.mxu0 %v862
      %1156 = vmatpush.msra.mxu0 %v846
      %1157 = vmatpush.msra.mxu0 %v830
      %1158 = vmatmul.f32.gmra.mxu0 %v920
      %v1159 = vpop.f32.mrf.mxu0
      %v1160 = vadd.f32 %v898, %v1159
      %1161 = vdwg.mxu0
      %1162 = vmatpush.msra.mxu0 0.0
      %1163 = vmatpush.msra.mxu0 0.0
      %1164 = vmatpush.msra.mxu0 0.0
      %1165 = vmatpush.msra.mxu0 0.0
      %1166 = vmatpush.msra.mxu0 0.0
      %1167 = vmatpush.msra.mxu0 0.0
      %1168 = vmatpush.msra.mxu0 0.0
      %1169 = vmatpush.msra.mxu0 0.0
      %1170 = vmatpush.msra.mxu0 0.0
      %1171 = vmatpush.msra.mxu0 0.0
      %1172 = vmatpush.msra.mxu0 0.0
      %1173 = vmatpush.msra.mxu0 0.0
      %1174 = vmatpush.msra.mxu0 %v879
      %1175 = vmatpush.msra.mxu0 %v863
      %1176 = vmatpush.msra.mxu0 %v847
      %1177 = vmatpush.msra.mxu0 %v831
      %1178 = vmatmul.f32.gmra.mxu0 %v920
      %v1179 = vpop.f32.mrf.mxu0
      %v1180 = vadd.f32 %v899, %v1179
      %1181 = vdwg.mxu0
      %1182 = vmatpush.msra.mxu0 0.0
      %1183 = vmatpush.msra.mxu0 0.0
      %1184 = vmatpush.msra.mxu0 0.0
      %1185 = vmatpush.msra.mxu0 0.0
      %1186 = vmatpush.msra.mxu0 0.0
      %1187 = vmatpush.msra.mxu0 0.0
      %1188 = vmatpush.msra.mxu0 0.0
      %1189 = vmatpush.msra.mxu0 0.0
      %1190 = vmatpush.msra.mxu0 0.0
      %1191 = vmatpush.msra.mxu0 0.0
      %1192 = vmatpush.msra.mxu0 0.0
      %1193 = vmatpush.msra.mxu0 0.0
      %1194 = vmatpush.msra.mxu0 %v880
      %1195 = vmatpush.msra.mxu0 %v864
      %1196 = vmatpush.msra.mxu0 %v848
      %1197 = vmatpush.msra.mxu0 %v832
      %1198 = vmatmul.f32.gmra.mxu0 %v920
      %v1199 = vpop.f32.mrf.mxu0
      %v1200 = vadd.f32 %v900, %v1199
      %1201 = vdwg.mxu0
      %1202 = vmatpush.msra.mxu0 0.0
      %1203 = vmatpush.msra.mxu0 0.0
      %1204 = vmatpush.msra.mxu0 0.0
      %1205 = vmatpush.msra.mxu0 0.0
      %1206 = vmatpush.msra.mxu0 0.0
      %1207 = vmatpush.msra.mxu0 0.0
      %1208 = vmatpush.msra.mxu0 0.0
      %1209 = vmatpush.msra.mxu0 0.0
      %1210 = vmatpush.msra.mxu0 0.0
      %1211 = vmatpush.msra.mxu0 0.0
      %1212 = vmatpush.msra.mxu0 0.0
      %1213 = vmatpush.msra.mxu0 0.0
      %1214 = vmatpush.msra.mxu0 %v881
      %1215 = vmatpush.msra.mxu0 %v865
      %1216 = vmatpush.msra.mxu0 %v849
      %1217 = vmatpush.msra.mxu0 %v833
      %1218 = vmatmul.f32.gmra.mxu0 %v920
      %v1219 = vpop.f32.mrf.mxu0
      %v1220 = vadd.f32 %v901, %v1219
      %1221 = vdwg.mxu0
      %1222 = vmatpush.msra.mxu0 0.0
      %1223 = vmatpush.msra.mxu0 0.0
      %1224 = vmatpush.msra.mxu0 0.0
      %1225 = vmatpush.msra.mxu0 0.0
      %1226 = vmatpush.msra.mxu0 0.0
      %1227 = vmatpush.msra.mxu0 0.0
      %1228 = vmatpush.msra.mxu0 0.0
      %1229 = vmatpush.msra.mxu0 0.0
      %1230 = vmatpush.msra.mxu0 0.0
      %1231 = vmatpush.msra.mxu0 0.0
      %1232 = vmatpush.msra.mxu0 0.0
      %1233 = vmatpush.msra.mxu0 0.0
      %1234 = vmatpush.msra.mxu0 %v882
      %1235 = vmatpush.msra.mxu0 %v866
      %1236 = vmatpush.msra.mxu0 %v850
      %1237 = vmatpush.msra.mxu0 %v834
      %1238 = vmatmul.f32.gmra.mxu0 %v920
      %v1239 = vpop.f32.mrf.mxu0
      %v1240 = vadd.f32 %v902, %v1239
      %1241 = vdwg.mxu0
      %v1242 = vmax.f32 %v940, 0.0
      %v1243 = vmax.f32 %v960, 0.0
      %v1244 = vmax.f32 %v980, 0.0
      %v1245 = vmax.f32 %v1000, 0.0
      %v1246 = vmax.f32 %v1020, 0.0
      %v1247 = vmax.f32 %v1040, 0.0
      %v1248 = vmax.f32 %v1060, 0.0
      %v1249 = vmax.f32 %v1080, 0.0
      %v1250 = vmax.f32 %v1100, 0.0
      %v1251 = vmax.f32 %v1120, 0.0
      %v1252 = vmax.f32 %v1140, 0.0
      %v1253 = vmax.f32 %v1160, 0.0
      %v1254 = vmax.f32 %v1180, 0.0
      %v1255 = vmax.f32 %v1200, 0.0
      %v1256 = vmax.f32 %v1220, 0.0
      %v1257 = vmax.f32 %v1240, 0.0
      %v1258 = vld [vmem:[%s9] sm:$0xff]
      %v1259 = vld [vmem:[%s9 + $0x8] sm:$0xff]
      %v1260 = vld [vmem:[%s9 + $0x10] sm:$0xff]
      %v1261 = vld [vmem:[%s9 + $0x18] sm:$0xff]
      %v1262 = vld [vmem:[%s9 + $0x20] sm:$0xff]
      %v1263 = vld [vmem:[%s9 + $0x28] sm:$0xff]
      %v1264 = vld [vmem:[%s9 + $0x30] sm:$0xff]
      %v1265 = vld [vmem:[%s9 + $0x38] sm:$0xff]
      %v1266 = vld [vmem:[%s9 + $0x40] sm:$0xff]
      %v1267 = vld [vmem:[%s9 + $0x48] sm:$0xff]
      %v1268 = vld [vmem:[%s9 + $0x50] sm:$0xff]
      %v1269 = vld [vmem:[%s9 + $0x58] sm:$0xff]
      %v1270 = vld [vmem:[%s9 + $0x60] sm:$0xff]
      %v1271 = vld [vmem:[%s9 + $0x68] sm:$0xff]
      %v1272 = vld [vmem:[%s9 + $0x70] sm:$0xff]
      %v1273 = vld [vmem:[%s9 + $0x78] sm:$0xff]
      %v1274 = vld [vmem:[%s9 + $0x80] sm:$0xff]
      %v1275 = vld [vmem:[%s9 + $0x88] sm:$0xff]
      %v1276 = vld [vmem:[%s9 + $0x90] sm:$0xff]
      %v1277 = vld [vmem:[%s9 + $0x98] sm:$0xff]
      %v1278 = vld [vmem:[%s9 + $0xa0] sm:$0xff]
      %v1279 = vld [vmem:[%s9 + $0xa8] sm:$0xff]
      %v1280 = vld [vmem:[%s9 + $0xb0] sm:$0xff]
      %v1281 = vld [vmem:[%s9 + $0xb8] sm:$0xff]
      %v1282 = vld [vmem:[%s9 + $0xc0] sm:$0xff]
      %v1283 = vld [vmem:[%s9 + $0xc8] sm:$0xff]
      %v1284 = vld [vmem:[%s9 + $0xd0] sm:$0xff]
      %v1285 = vld [vmem:[%s9 + $0xd8] sm:$0xff]
      %v1286 = vld [vmem:[%s9 + $0xe0] sm:$0xff]
      %v1287 = vld [vmem:[%s9 + $0xe8] sm:$0xff]
      %v1288 = vld [vmem:[%s9 + $0xf0] sm:$0xff]
      %v1289 = vld [vmem:[%s9 + $0xf8] sm:$0xff]
      %v1290 = vld [vmem:[%s9 + $0x100] sm:$0xff]
      %v1291 = vld [vmem:[%s9 + $0x108] sm:$0xff]
      %v1292 = vld [vmem:[%s9 + $0x110] sm:$0xff]
      %v1293 = vld [vmem:[%s9 + $0x118] sm:$0xff]
      %v1294 = vld [vmem:[%s9 + $0x120] sm:$0xff]
      %v1295 = vld [vmem:[%s9 + $0x128] sm:$0xff]
      %v1296 = vld [vmem:[%s9 + $0x130] sm:$0xff]
      %v1297 = vld [vmem:[%s9 + $0x138] sm:$0xff]
      %v1298 = vld [vmem:[%s9 + $0x140] sm:$0xff]
      %v1299 = vld [vmem:[%s9 + $0x148] sm:$0xff]
      %v1300 = vld [vmem:[%s9 + $0x150] sm:$0xff]
      %v1301 = vld [vmem:[%s9 + $0x158] sm:$0xff]
      %v1302 = vld [vmem:[%s9 + $0x160] sm:$0xff]
      %v1303 = vld [vmem:[%s9 + $0x168] sm:$0xff]
      %v1304 = vld [vmem:[%s9 + $0x170] sm:$0xff]
      %v1305 = vld [vmem:[%s9 + $0x178] sm:$0xff]
      %v1306 = vld [vmem:[%s9 + $0x180] sm:$0xff]
      %v1307 = vld [vmem:[%s9 + $0x188] sm:$0xff]
      %v1308 = vld [vmem:[%s9 + $0x190] sm:$0xff]
      %v1309 = vld [vmem:[%s9 + $0x198] sm:$0xff]
      %v1310 = vld [vmem:[%s9 + $0x1a0] sm:$0xff]
      %v1311 = vld [vmem:[%s9 + $0x1a8] sm:$0xff]
      %v1312 = vld [vmem:[%s9 + $0x1b0] sm:$0xff]
      %v1313 = vld [vmem:[%s9 + $0x1b8] sm:$0xff]
      %v1314 = vld [vmem:[%s9 + $0x1c0] sm:$0xff]
      %v1315 = vld [vmem:[%s9 + $0x1c8] sm:$0xff]
      %v1316 = vld [vmem:[%s9 + $0x1d0] sm:$0xff]
      %v1317 = vld [vmem:[%s9 + $0x1d8] sm:$0xff]
      %v1318 = vld [vmem:[%s9 + $0x1e0] sm:$0xff]
      %v1319 = vld [vmem:[%s9 + $0x1e8] sm:$0xff]
      %v1320 = vld [vmem:[%s9 + $0x1f0] sm:$0xff]
      %v1321 = vld [vmem:[%s9 + $0x1f8] sm:$0xff]
      %v1322 = vld [vmem:[%s9 + $0x200] sm:$0xff]
      %v1323 = vld [vmem:[%s9 + $0x208] sm:$0xff]
      %v1324 = vld [vmem:[%s9 + $0x210] sm:$0xff]
      %v1325 = vld [vmem:[%s9 + $0x218] sm:$0xff]
      %v1326 = vld [vmem:[%s9 + $0x220] sm:$0xff]
      %v1327 = vld [vmem:[%s9 + $0x228] sm:$0xff]
      %v1328 = vld [vmem:[%s9 + $0x230] sm:$0xff]
      %v1329 = vld [vmem:[%s9 + $0x238] sm:$0xff]
      %v1330 = vld [vmem:[%s9 + $0x240] sm:$0xff]
      %v1331 = vld [vmem:[%s9 + $0x248] sm:$0xff]
      %v1332 = vld [vmem:[%s9 + $0x250] sm:$0xff]
      %v1333 = vld [vmem:[%s9 + $0x258] sm:$0xff]
      %v1334 = vld [vmem:[%s9 + $0x260] sm:$0xff]
      %v1335 = vld [vmem:[%s9 + $0x268] sm:$0xff]
      %v1336 = vld [vmem:[%s9 + $0x270] sm:$0xff]
      %v1337 = vld [vmem:[%s9 + $0x278] sm:$0xff]
      %v1338 = vld [vmem:[%s9 + $0x280] sm:$0xff]
      %v1339 = vld [vmem:[%s9 + $0x288] sm:$0xff]
      %v1340 = vld [vmem:[%s9 + $0x290] sm:$0xff]
      %v1341 = vld [vmem:[%s9 + $0x298] sm:$0xff]
      %v1342 = vld [vmem:[%s9 + $0x2a0] sm:$0xff]
      %v1343 = vld [vmem:[%s9 + $0x2a8] sm:$0xff]
      %v1344 = vld [vmem:[%s9 + $0x2b0] sm:$0xff]
      %v1345 = vld [vmem:[%s9 + $0x2b8] sm:$0xff]
      %v1346 = vld [vmem:[%s9 + $0x2c0] sm:$0xff]
      %v1347 = vld [vmem:[%s9 + $0x2c8] sm:$0xff]
      %v1348 = vld [vmem:[%s9 + $0x2d0] sm:$0xff]
      %v1349 = vld [vmem:[%s9 + $0x2d8] sm:$0xff]
      %v1350 = vld [vmem:[%s9 + $0x2e0] sm:$0xff]
      %v1351 = vld [vmem:[%s9 + $0x2e8] sm:$0xff]
      %v1352 = vld [vmem:[%s9 + $0x2f0] sm:$0xff]
      %v1353 = vld [vmem:[%s9 + $0x2f8] sm:$0xff]
      %v1354 = vld [vmem:[%s9 + $0x300] sm:$0xff]
      %v1355 = vld [vmem:[%s9 + $0x308] sm:$0xff]
      %v1356 = vld [vmem:[%s9 + $0x310] sm:$0xff]
      %v1357 = vld [vmem:[%s9 + $0x318] sm:$0xff]
      %v1358 = vld [vmem:[%s9 + $0x320] sm:$0xff]
      %v1359 = vld [vmem:[%s9 + $0x328] sm:$0xff]
      %v1360 = vld [vmem:[%s9 + $0x330] sm:$0xff]
      %v1361 = vld [vmem:[%s9 + $0x338] sm:$0xff]
      %v1362 = vld [vmem:[%s9 + $0x340] sm:$0xff]
      %v1363 = vld [vmem:[%s9 + $0x348] sm:$0xff]
      %v1364 = vld [vmem:[%s9 + $0x350] sm:$0xff]
      %v1365 = vld [vmem:[%s9 + $0x358] sm:$0xff]
      %v1366 = vld [vmem:[%s9 + $0x360] sm:$0xff]
      %v1367 = vld [vmem:[%s9 + $0x368] sm:$0xff]
      %v1368 = vld [vmem:[%s9 + $0x370] sm:$0xff]
      %v1369 = vld [vmem:[%s9 + $0x378] sm:$0xff]
      %v1370 = vld [vmem:[%s9 + $0x380] sm:$0xff]
      %v1371 = vld [vmem:[%s9 + $0x388] sm:$0xff]
      %v1372 = vld [vmem:[%s9 + $0x390] sm:$0xff]
      %v1373 = vld [vmem:[%s9 + $0x398] sm:$0xff]
      %v1374 = vld [vmem:[%s9 + $0x3a0] sm:$0xff]
      %v1375 = vld [vmem:[%s9 + $0x3a8] sm:$0xff]
      %v1376 = vld [vmem:[%s9 + $0x3b0] sm:$0xff]
      %v1377 = vld [vmem:[%s9 + $0x3b8] sm:$0xff]
      %v1378 = vld [vmem:[%s9 + $0x3c0] sm:$0xff]
      %v1379 = vld [vmem:[%s9 + $0x3c8] sm:$0xff]
      %v1380 = vld [vmem:[%s9 + $0x3d0] sm:$0xff]
      %v1381 = vld [vmem:[%s9 + $0x3d8] sm:$0xff]
      %v1382 = vld [vmem:[%s9 + $0x3e0] sm:$0xff]
      %v1383 = vld [vmem:[%s9 + $0x3e8] sm:$0xff]
      %v1384 = vld [vmem:[%s9 + $0x3f0] sm:$0xff]
      %v1385 = vld [vmem:[%s9 + $0x3f8] sm:$0xff]
      %v1386 = vld [vmem:[%s9 + $0x400] sm:$0xff]
      %v1387 = vld [vmem:[%s9 + $0x408] sm:$0xff]
      %v1388 = vld [vmem:[%s9 + $0x410] sm:$0xff]
      %v1389 = vld [vmem:[%s9 + $0x418] sm:$0xff]
      %v1390 = vld [vmem:[%s9 + $0x420] sm:$0xff]
      %v1391 = vld [vmem:[%s9 + $0x428] sm:$0xff]
      %v1392 = vld [vmem:[%s9 + $0x430] sm:$0xff]
      %v1393 = vld [vmem:[%s9 + $0x438] sm:$0xff]
      %v1394 = vld [vmem:[%s9 + $0x440] sm:$0xff]
      %v1395 = vld [vmem:[%s9 + $0x448] sm:$0xff]
      %v1396 = vld [vmem:[%s9 + $0x450] sm:$0xff]
      %v1397 = vld [vmem:[%s9 + $0x458] sm:$0xff]
      %v1398 = vld [vmem:[%s9 + $0x460] sm:$0xff]
      %v1399 = vld [vmem:[%s9 + $0x468] sm:$0xff]
      %v1400 = vld [vmem:[%s9 + $0x470] sm:$0xff]
      %v1401 = vld [vmem:[%s9 + $0x478] sm:$0xff]
      %v1402 = vld [vmem:[%s9 + $0x480] sm:$0xff]
      %v1403 = vld [vmem:[%s9 + $0x488] sm:$0xff]
      %v1404 = vld [vmem:[%s9 + $0x490] sm:$0xff]
      %v1405 = vld [vmem:[%s9 + $0x498] sm:$0xff]
      %v1406 = vld [vmem:[%s9 + $0x4a0] sm:$0xff]
      %v1407 = vld [vmem:[%s9 + $0x4a8] sm:$0xff]
      %v1408 = vld [vmem:[%s9 + $0x4b0] sm:$0xff]
      %v1409 = vld [vmem:[%s9 + $0x4b8] sm:$0xff]
      %v1410 = vld [vmem:[%s9 + $0x4c0] sm:$0xff]
      %v1411 = vld [vmem:[%s9 + $0x4c8] sm:$0xff]
      %v1412 = vld [vmem:[%s9 + $0x4d0] sm:$0xff]
      %v1413 = vld [vmem:[%s9 + $0x4d8] sm:$0xff]
      %v1414 = vld [vmem:[%s9 + $0x4e0] sm:$0xff]
      %v1415 = vld [vmem:[%s9 + $0x4e8] sm:$0xff]
      %v1416 = vld [vmem:[%s9 + $0x4f0] sm:$0xff]
      %v1417 = vld [vmem:[%s9 + $0x4f8] sm:$0xff]
      %v1418 = vld [vmem:[%s9 + $0x500] sm:$0xff]
      %v1419 = vld [vmem:[%s9 + $0x508] sm:$0xff]
      %v1420 = vld [vmem:[%s9 + $0x510] sm:$0xff]
      %v1421 = vld [vmem:[%s9 + $0x518] sm:$0xff]
      %v1422 = vld [vmem:[%s9 + $0x520] sm:$0xff]
      %v1423 = vld [vmem:[%s9 + $0x528] sm:$0xff]
      %v1424 = vld [vmem:[%s9 + $0x530] sm:$0xff]
      %v1425 = vld [vmem:[%s9 + $0x538] sm:$0xff]
      %v1426 = vld [vmem:[%s9 + $0x540] sm:$0xff]
      %v1427 = vld [vmem:[%s9 + $0x548] sm:$0xff]
      %v1428 = vld [vmem:[%s9 + $0x550] sm:$0xff]
      %v1429 = vld [vmem:[%s9 + $0x558] sm:$0xff]
      %v1430 = vld [vmem:[%s9 + $0x560] sm:$0xff]
      %v1431 = vld [vmem:[%s9 + $0x568] sm:$0xff]
      %v1432 = vld [vmem:[%s9 + $0x570] sm:$0xff]
      %v1433 = vld [vmem:[%s9 + $0x578] sm:$0xff]
      %v1434 = vld [vmem:[%s9 + $0x580] sm:$0xff]
      %v1435 = vld [vmem:[%s9 + $0x588] sm:$0xff]
      %v1436 = vld [vmem:[%s9 + $0x590] sm:$0xff]
      %v1437 = vld [vmem:[%s9 + $0x598] sm:$0xff]
      %v1438 = vld [vmem:[%s9 + $0x5a0] sm:$0xff]
      %v1439 = vld [vmem:[%s9 + $0x5a8] sm:$0xff]
      %v1440 = vld [vmem:[%s9 + $0x5b0] sm:$0xff]
      %v1441 = vld [vmem:[%s9 + $0x5b8] sm:$0xff]
      %v1442 = vld [vmem:[%s9 + $0x5c0] sm:$0xff]
      %v1443 = vld [vmem:[%s9 + $0x5c8] sm:$0xff]
      %v1444 = vld [vmem:[%s9 + $0x5d0] sm:$0xff]
      %v1445 = vld [vmem:[%s9 + $0x5d8] sm:$0xff]
      %v1446 = vld [vmem:[%s9 + $0x5e0] sm:$0xff]
      %v1447 = vld [vmem:[%s9 + $0x5e8] sm:$0xff]
      %v1448 = vld [vmem:[%s9 + $0x5f0] sm:$0xff]
      %v1449 = vld [vmem:[%s9 + $0x5f8] sm:$0xff]
      %v1450 = vld [vmem:[%s9 + $0x600] sm:$0xff]
      %v1451 = vld [vmem:[%s9 + $0x608] sm:$0xff]
      %v1452 = vld [vmem:[%s9 + $0x610] sm:$0xff]
      %v1453 = vld [vmem:[%s9 + $0x618] sm:$0xff]
      %v1454 = vld [vmem:[%s9 + $0x620] sm:$0xff]
      %v1455 = vld [vmem:[%s9 + $0x628] sm:$0xff]
      %v1456 = vld [vmem:[%s9 + $0x630] sm:$0xff]
      %v1457 = vld [vmem:[%s9 + $0x638] sm:$0xff]
      %v1458 = vld [vmem:[%s9 + $0x640] sm:$0xff]
      %v1459 = vld [vmem:[%s9 + $0x648] sm:$0xff]
      %v1460 = vld [vmem:[%s9 + $0x650] sm:$0xff]
      %v1461 = vld [vmem:[%s9 + $0x658] sm:$0xff]
      %v1462 = vld [vmem:[%s9 + $0x660] sm:$0xff]
      %v1463 = vld [vmem:[%s9 + $0x668] sm:$0xff]
      %v1464 = vld [vmem:[%s9 + $0x670] sm:$0xff]
      %v1465 = vld [vmem:[%s9 + $0x678] sm:$0xff]
      %v1466 = vld [vmem:[%s9 + $0x680] sm:$0xff]
      %v1467 = vld [vmem:[%s9 + $0x688] sm:$0xff]
      %v1468 = vld [vmem:[%s9 + $0x690] sm:$0xff]
      %v1469 = vld [vmem:[%s9 + $0x698] sm:$0xff]
      %v1470 = vld [vmem:[%s9 + $0x6a0] sm:$0xff]
      %v1471 = vld [vmem:[%s9 + $0x6a8] sm:$0xff]
      %v1472 = vld [vmem:[%s9 + $0x6b0] sm:$0xff]
      %v1473 = vld [vmem:[%s9 + $0x6b8] sm:$0xff]
      %v1474 = vld [vmem:[%s9 + $0x6c0] sm:$0xff]
      %v1475 = vld [vmem:[%s9 + $0x6c8] sm:$0xff]
      %v1476 = vld [vmem:[%s9 + $0x6d0] sm:$0xff]
      %v1477 = vld [vmem:[%s9 + $0x6d8] sm:$0xff]
      %v1478 = vld [vmem:[%s9 + $0x6e0] sm:$0xff]
      %v1479 = vld [vmem:[%s9 + $0x6e8] sm:$0xff]
      %v1480 = vld [vmem:[%s9 + $0x6f0] sm:$0xff]
      %v1481 = vld [vmem:[%s9 + $0x6f8] sm:$0xff]
      %v1482 = vld [vmem:[%s9 + $0x700] sm:$0xff]
      %v1483 = vld [vmem:[%s9 + $0x708] sm:$0xff]
      %v1484 = vld [vmem:[%s9 + $0x710] sm:$0xff]
      %v1485 = vld [vmem:[%s9 + $0x718] sm:$0xff]
      %v1486 = vld [vmem:[%s9 + $0x720] sm:$0xff]
      %v1487 = vld [vmem:[%s9 + $0x728] sm:$0xff]
      %v1488 = vld [vmem:[%s9 + $0x730] sm:$0xff]
      %v1489 = vld [vmem:[%s9 + $0x738] sm:$0xff]
      %v1490 = vld [vmem:[%s9 + $0x740] sm:$0xff]
      %v1491 = vld [vmem:[%s9 + $0x748] sm:$0xff]
      %v1492 = vld [vmem:[%s9 + $0x750] sm:$0xff]
      %v1493 = vld [vmem:[%s9 + $0x758] sm:$0xff]
      %v1494 = vld [vmem:[%s9 + $0x760] sm:$0xff]
      %v1495 = vld [vmem:[%s9 + $0x768] sm:$0xff]
      %v1496 = vld [vmem:[%s9 + $0x770] sm:$0xff]
      %v1497 = vld [vmem:[%s9 + $0x778] sm:$0xff]
      %v1498 = vld [vmem:[%s9 + $0x780] sm:$0xff]
      %v1499 = vld [vmem:[%s9 + $0x788] sm:$0xff]
      %v1500 = vld [vmem:[%s9 + $0x790] sm:$0xff]
      %v1501 = vld [vmem:[%s9 + $0x798] sm:$0xff]
      %v1502 = vld [vmem:[%s9 + $0x7a0] sm:$0xff]
      %v1503 = vld [vmem:[%s9 + $0x7a8] sm:$0xff]
      %v1504 = vld [vmem:[%s9 + $0x7b0] sm:$0xff]
      %v1505 = vld [vmem:[%s9 + $0x7b8] sm:$0xff]
      %v1506 = vld [vmem:[%s9 + $0x7c0] sm:$0xff]
      %v1507 = vld [vmem:[%s9 + $0x7c8] sm:$0xff]
      %v1508 = vld [vmem:[%s9 + $0x7d0] sm:$0xff]
      %v1509 = vld [vmem:[%s9 + $0x7d8] sm:$0xff]
      %v1510 = vld [vmem:[%s9 + $0x7e0] sm:$0xff]
      %v1511 = vld [vmem:[%s9 + $0x7e8] sm:$0xff]
      %v1512 = vld [vmem:[%s9 + $0x7f0] sm:$0xff]
      %v1513 = vld [vmem:[%s9 + $0x7f8] sm:$0xff]
      %v1514 = vld [vmem:[%s10] sm:$0x1]
      %v1516 = vperm.slane %v1514, 0
      %1518 = vmatpush.msra.mxu0 %v1273
      %1519 = vmatpush.msra.mxu0 %v1272
      %1520 = vmatpush.msra.mxu0 %v1271
      %1521 = vmatpush.msra.mxu0 %v1270
      %1522 = vmatpush.msra.mxu0 %v1269
      %1523 = vmatpush.msra.mxu0 %v1268
      %1524 = vmatpush.msra.mxu0 %v1267
      %1525 = vmatpush.msra.mxu0 %v1266
      %1526 = vmatpush.msra.mxu0 %v1265
      %1527 = vmatpush.msra.mxu0 %v1264
      %1528 = vmatpush.msra.mxu0 %v1263
      %1529 = vmatpush.msra.mxu0 %v1262
      %1530 = vmatpush.msra.mxu0 %v1261
      %1531 = vmatpush.msra.mxu0 %v1260
      %1532 = vmatpush.msra.mxu0 %v1259
      %1533 = vmatpush.msra.mxu0 %v1258
      %1534 = vmatmul.f32.gmra.mxu0 %v1242
      %v1535 = vpop.f32.mrf.mxu0
      %v1536 = vadd.f32 %v1516, %v1535
      %1537 = vdwg.mxu0
      %1538 = vmatpush.msra.mxu0 %v1289
      %1539 = vmatpush.msra.mxu0 %v1288
      %1540 = vmatpush.msra.mxu0 %v1287
      %1541 = vmatpush.msra.mxu0 %v1286
      %1542 = vmatpush.msra.mxu0 %v1285
      %1543 = vmatpush.msra.mxu0 %v1284
      %1544 = vmatpush.msra.mxu0 %v1283
      %1545 = vmatpush.msra.mxu0 %v1282
      %1546 = vmatpush.msra.mxu0 %v1281
      %1547 = vmatpush.msra.mxu0 %v1280
      %1548 = vmatpush.msra.mxu0 %v1279
      %1549 = vmatpush.msra.mxu0 %v1278
      %1550 = vmatpush.msra.mxu0 %v1277
      %1551 = vmatpush.msra.mxu0 %v1276
      %1552 = vmatpush.msra.mxu0 %v1275
      %1553 = vmatpush.msra.mxu0 %v1274
      %1554 = vmatmul.f32.gmra.mxu0 %v1243
      %v1555 = vpop.f32.mrf.mxu0
      %v1556 = vadd.f32 %v1536, %v1555
      %1557 = vdwg.mxu0
      %1558 = vmatpush.msra.mxu0 %v1305
      %1559 = vmatpush.msra.mxu0 %v1304
      %1560 = vmatpush.msra.mxu0 %v1303
      %1561 = vmatpush.msra.mxu0 %v1302
      %1562 = vmatpush.msra.mxu0 %v1301
      %1563 = vmatpush.msra.mxu0 %v1300
      %1564 = vmatpush.msra.mxu0 %v1299
      %1565 = vmatpush.msra.mxu0 %v1298
      %1566 = vmatpush.msra.mxu0 %v1297
      %1567 = vmatpush.msra.mxu0 %v1296
      %1568 = vmatpush.msra.mxu0 %v1295
      %1569 = vmatpush.msra.mxu0 %v1294
      %1570 = vmatpush.msra.mxu0 %v1293
      %1571 = vmatpush.msra.mxu0 %v1292
      %1572 = vmatpush.msra.mxu0 %v1291
      %1573 = vmatpush.msra.mxu0 %v1290
      %1574 = vmatmul.f32.gmra.mxu0 %v1244
      %v1575 = vpop.f32.mrf.mxu0
      %v1576 = vadd.f32 %v1556, %v1575
      %1577 = vdwg.mxu0
      %1578 = vmatpush.msra.mxu0 %v1321
      %1579 = vmatpush.msra.mxu0 %v1320
      %1580 = vmatpush.msra.mxu0 %v1319
      %1581 = vmatpush.msra.mxu0 %v1318
      %1582 = vmatpush.msra.mxu0 %v1317
      %1583 = vmatpush.msra.mxu0 %v1316
      %1584 = vmatpush.msra.mxu0 %v1315
      %1585 = vmatpush.msra.mxu0 %v1314
      %1586 = vmatpush.msra.mxu0 %v1313
      %1587 = vmatpush.msra.mxu0 %v1312
      %1588 = vmatpush.msra.mxu0 %v1311
      %1589 = vmatpush.msra.mxu0 %v1310
      %1590 = vmatpush.msra.mxu0 %v1309
      %1591 = vmatpush.msra.mxu0 %v1308
      %1592 = vmatpush.msra.mxu0 %v1307
      %1593 = vmatpush.msra.mxu0 %v1306
      %1594 = vmatmul.f32.gmra.mxu0 %v1245
      %v1595 = vpop.f32.mrf.mxu0
      %v1596 = vadd.f32 %v1576, %v1595
      %1597 = vdwg.mxu0
      %1598 = vmatpush.msra.mxu0 %v1337
      %1599 = vmatpush.msra.mxu0 %v1336
      %1600 = vmatpush.msra.mxu0 %v1335
      %1601 = vmatpush.msra.mxu0 %v1334
      %1602 = vmatpush.msra.mxu0 %v1333
      %1603 = vmatpush.msra.mxu0 %v1332
      %1604 = vmatpush.msra.mxu0 %v1331
      %1605 = vmatpush.msra.mxu0 %v1330
      %1606 = vmatpush.msra.mxu0 %v1329
      %1607 = vmatpush.msra.mxu0 %v1328
      %1608 = vmatpush.msra.mxu0 %v1327
      %1609 = vmatpush.msra.mxu0 %v1326
      %1610 = vmatpush.msra.mxu0 %v1325
      %1611 = vmatpush.msra.mxu0 %v1324
      %1612 = vmatpush.msra.mxu0 %v1323
      %1613 = vmatpush.msra.mxu0 %v1322
      %1614 = vmatmul.f32.gmra.mxu0 %v1246
      %v1615 = vpop.f32.mrf.mxu0
      %v1616 = vadd.f32 %v1596, %v1615
      %1617 = vdwg.mxu0
      %1618 = vmatpush.msra.mxu0 %v1353
      %1619 = vmatpush.msra.mxu0 %v1352
      %1620 = vmatpush.msra.mxu0 %v1351
      %1621 = vmatpush.msra.mxu0 %v1350
      %1622 = vmatpush.msra.mxu0 %v1349
      %1623 = vmatpush.msra.mxu0 %v1348
      %1624 = vmatpush.msra.mxu0 %v1347
      %1625 = vmatpush.msra.mxu0 %v1346
      %1626 = vmatpush.msra.mxu0 %v1345
      %1627 = vmatpush.msra.mxu0 %v1344
      %1628 = vmatpush.msra.mxu0 %v1343
      %1629 = vmatpush.msra.mxu0 %v1342
      %1630 = vmatpush.msra.mxu0 %v1341
      %1631 = vmatpush.msra.mxu0 %v1340
      %1632 = vmatpush.msra.mxu0 %v1339
      %1633 = vmatpush.msra.mxu0 %v1338
      %1634 = vmatmul.f32.gmra.mxu0 %v1247
      %v1635 = vpop.f32.mrf.mxu0
      %v1636 = vadd.f32 %v1616, %v1635
      %1637 = vdwg.mxu0
      %1638 = vmatpush.msra.mxu0 %v1369
      %1639 = vmatpush.msra.mxu0 %v1368
      %1640 = vmatpush.msra.mxu0 %v1367
      %1641 = vmatpush.msra.mxu0 %v1366
      %1642 = vmatpush.msra.mxu0 %v1365
      %1643 = vmatpush.msra.mxu0 %v1364
      %1644 = vmatpush.msra.mxu0 %v1363
      %1645 = vmatpush.msra.mxu0 %v1362
      %1646 = vmatpush.msra.mxu0 %v1361
      %1647 = vmatpush.msra.mxu0 %v1360
      %1648 = vmatpush.msra.mxu0 %v1359
      %1649 = vmatpush.msra.mxu0 %v1358
      %1650 = vmatpush.msra.mxu0 %v1357
      %1651 = vmatpush.msra.mxu0 %v1356
      %1652 = vmatpush.msra.mxu0 %v1355
      %1653 = vmatpush.msra.mxu0 %v1354
      %1654 = vmatmul.f32.gmra.mxu0 %v1248
      %v1655 = vpop.f32.mrf.mxu0
      %v1656 = vadd.f32 %v1636, %v1655
      %1657 = vdwg.mxu0
      %1658 = vmatpush.msra.mxu0 %v1385
      %1659 = vmatpush.msra.mxu0 %v1384
      %1660 = vmatpush.msra.mxu0 %v1383
      %1661 = vmatpush.msra.mxu0 %v1382
      %1662 = vmatpush.msra.mxu0 %v1381
      %1663 = vmatpush.msra.mxu0 %v1380
      %1664 = vmatpush.msra.mxu0 %v1379
      %1665 = vmatpush.msra.mxu0 %v1378
      %1666 = vmatpush.msra.mxu0 %v1377
      %1667 = vmatpush.msra.mxu0 %v1376
      %1668 = vmatpush.msra.mxu0 %v1375
      %1669 = vmatpush.msra.mxu0 %v1374
      %1670 = vmatpush.msra.mxu0 %v1373
      %1671 = vmatpush.msra.mxu0 %v1372
      %1672 = vmatpush.msra.mxu0 %v1371
      %1673 = vmatpush.msra.mxu0 %v1370
      %1674 = vmatmul.f32.gmra.mxu0 %v1249
      %v1675 = vpop.f32.mrf.mxu0
      %v1676 = vadd.f32 %v1656, %v1675
      %1677 = vdwg.mxu0
      %1678 = vmatpush.msra.mxu0 %v1401
      %1679 = vmatpush.msra.mxu0 %v1400
      %1680 = vmatpush.msra.mxu0 %v1399
      %1681 = vmatpush.msra.mxu0 %v1398
      %1682 = vmatpush.msra.mxu0 %v1397
      %1683 = vmatpush.msra.mxu0 %v1396
      %1684 = vmatpush.msra.mxu0 %v1395
      %1685 = vmatpush.msra.mxu0 %v1394
      %1686 = vmatpush.msra.mxu0 %v1393
      %1687 = vmatpush.msra.mxu0 %v1392
      %1688 = vmatpush.msra.mxu0 %v1391
      %1689 = vmatpush.msra.mxu0 %v1390
      %1690 = vmatpush.msra.mxu0 %v1389
      %1691 = vmatpush.msra.mxu0 %v1388
      %1692 = vmatpush.msra.mxu0 %v1387
      %1693 = vmatpush.msra.mxu0 %v1386
      %1694 = vmatmul.f32.gmra.mxu0 %v1250
      %v1695 = vpop.f32.mrf.mxu0
      %v1696 = vadd.f32 %v1676, %v1695
      %1697 = vdwg.mxu0
      %1698 = vmatpush.msra.mxu0 %v1417
      %1699 = vmatpush.msra.mxu0 %v1416
      %1700 = vmatpush.msra.mxu0 %v1415
      %1701 = vmatpush.msra.mxu0 %v1414
      %1702 = vmatpush.msra.mxu0 %v1413
      %1703 = vmatpush.msra.mxu0 %v1412
      %1704 = vmatpush.msra.mxu0 %v1411
      %1705 = vmatpush.msra.mxu0 %v1410
      %1706 = vmatpush.msra.mxu0 %v1409
      %1707 = vmatpush.msra.mxu0 %v1408
      %1708 = vmatpush.msra.mxu0 %v1407
      %1709 = vmatpush.msra.mxu0 %v1406
      %1710 = vmatpush.msra.mxu0 %v1405
      %1711 = vmatpush.msra.mxu0 %v1404
      %1712 = vmatpush.msra.mxu0 %v1403
      %1713 = vmatpush.msra.mxu0 %v1402
      %1714 = vmatmul.f32.gmra.mxu0 %v1251
      %v1715 = vpop.f32.mrf.mxu0
      %v1716 = vadd.f32 %v1696, %v1715
      %1717 = vdwg.mxu0
      %1718 = vmatpush.msra.mxu0 %v1433
      %1719 = vmatpush.msra.mxu0 %v1432
      %1720 = vmatpush.msra.mxu0 %v1431
      %1721 = vmatpush.msra.mxu0 %v1430
      %1722 = vmatpush.msra.mxu0 %v1429
      %1723 = vmatpush.msra.mxu0 %v1428
      %1724 = vmatpush.msra.mxu0 %v1427
      %1725 = vmatpush.msra.mxu0 %v1426
      %1726 = vmatpush.msra.mxu0 %v1425
      %1727 = vmatpush.msra.mxu0 %v1424
      %1728 = vmatpush.msra.mxu0 %v1423
      %1729 = vmatpush.msra.mxu0 %v1422
      %1730 = vmatpush.msra.mxu0 %v1421
      %1731 = vmatpush.msra.mxu0 %v1420
      %1732 = vmatpush.msra.mxu0 %v1419
      %1733 = vmatpush.msra.mxu0 %v1418
      %1734 = vmatmul.f32.gmra.mxu0 %v1252
      %v1735 = vpop.f32.mrf.mxu0
      %v1736 = vadd.f32 %v1716, %v1735
      %1737 = vdwg.mxu0
      %1738 = vmatpush.msra.mxu0 %v1449
      %1739 = vmatpush.msra.mxu0 %v1448
      %1740 = vmatpush.msra.mxu0 %v1447
      %1741 = vmatpush.msra.mxu0 %v1446
      %1742 = vmatpush.msra.mxu0 %v1445
      %1743 = vmatpush.msra.mxu0 %v1444
      %1744 = vmatpush.msra.mxu0 %v1443
      %1745 = vmatpush.msra.mxu0 %v1442
      %1746 = vmatpush.msra.mxu0 %v1441
      %1747 = vmatpush.msra.mxu0 %v1440
      %1748 = vmatpush.msra.mxu0 %v1439
      %1749 = vmatpush.msra.mxu0 %v1438
      %1750 = vmatpush.msra.mxu0 %v1437
      %1751 = vmatpush.msra.mxu0 %v1436
      %1752 = vmatpush.msra.mxu0 %v1435
      %1753 = vmatpush.msra.mxu0 %v1434
      %1754 = vmatmul.f32.gmra.mxu0 %v1253
      %v1755 = vpop.f32.mrf.mxu0
      %v1756 = vadd.f32 %v1736, %v1755
      %1757 = vdwg.mxu0
      %1758 = vmatpush.msra.mxu0 %v1465
      %1759 = vmatpush.msra.mxu0 %v1464
      %1760 = vmatpush.msra.mxu0 %v1463
      %1761 = vmatpush.msra.mxu0 %v1462
      %1762 = vmatpush.msra.mxu0 %v1461
      %1763 = vmatpush.msra.mxu0 %v1460
      %1764 = vmatpush.msra.mxu0 %v1459
      %1765 = vmatpush.msra.mxu0 %v1458
      %1766 = vmatpush.msra.mxu0 %v1457
      %1767 = vmatpush.msra.mxu0 %v1456
      %1768 = vmatpush.msra.mxu0 %v1455
      %1769 = vmatpush.msra.mxu0 %v1454
      %1770 = vmatpush.msra.mxu0 %v1453
      %1771 = vmatpush.msra.mxu0 %v1452
      %1772 = vmatpush.msra.mxu0 %v1451
      %1773 = vmatpush.msra.mxu0 %v1450
      %1774 = vmatmul.f32.gmra.mxu0 %v1254
      %v1775 = vpop.f32.mrf.mxu0
      %v1776 = vadd.f32 %v1756, %v1775
      %1777 = vdwg.mxu0
      %1778 = vmatpush.msra.mxu0 %v1481
      %1779 = vmatpush.msra.mxu0 %v1480
      %1780 = vmatpush.msra.mxu0 %v1479
      %1781 = vmatpush.msra.mxu0 %v1478
      %1782 = vmatpush.msra.mxu0 %v1477
      %1783 = vmatpush.msra.mxu0 %v1476
      %1784 = vmatpush.msra.mxu0 %v1475
      %1785 = vmatpush.msra.mxu0 %v1474
      %1786 = vmatpush.msra.mxu0 %v1473
      %1787 = vmatpush.msra.mxu0 %v1472
      %1788 = vmatpush.msra.mxu0 %v1471
      %1789 = vmatpush.msra.mxu0 %v1470
      %1790 = vmatpush.msra.mxu0 %v1469
      %1791 = vmatpush.msra.mxu0 %v1468
      %1792 = vmatpush.msra.mxu0 %v1467
      %1793 = vmatpush.msra.mxu0 %v1466
      %1794 = vmatmul.f32.gmra.mxu0 %v1255
      %v1795 = vpop.f32.mrf.mxu0
      %v1796 = vadd.f32 %v1776, %v1795
      %1797 = vdwg.mxu0
      %1798 = vmatpush.msra.mxu0 %v1497
      %1799 = vmatpush.msra.mxu0 %v1496
      %1800 = vmatpush.msra.mxu0 %v1495
      %1801 = vmatpush.msra.mxu0 %v1494
      %1802 = vmatpush.msra.mxu0 %v1493
      %1803 = vmatpush.msra.mxu0 %v1492
      %1804 = vmatpush.msra.mxu0 %v1491
      %1805 = vmatpush.msra.mxu0 %v1490
      %1806 = vmatpush.msra.mxu0 %v1489
      %1807 = vmatpush.msra.mxu0 %v1488
      %1808 = vmatpush.msra.mxu0 %v1487
      %1809 = vmatpush.msra.mxu0 %v1486
      %1810 = vmatpush.msra.mxu0 %v1485
      %1811 = vmatpush.msra.mxu0 %v1484
      %1812 = vmatpush.msra.mxu0 %v1483
      %1813 = vmatpush.msra.mxu0 %v1482
      %1814 = vmatmul.f32.gmra.mxu0 %v1256
      %v1815 = vpop.f32.mrf.mxu0
      %v1816 = vadd.f32 %v1796, %v1815
      %1817 = vdwg.mxu0
      %1818 = vmatpush.msra.mxu0 %v1513
      %1819 = vmatpush.msra.mxu0 %v1512
      %1820 = vmatpush.msra.mxu0 %v1511
      %1821 = vmatpush.msra.mxu0 %v1510
      %1822 = vmatpush.msra.mxu0 %v1509
      %1823 = vmatpush.msra.mxu0 %v1508
      %1824 = vmatpush.msra.mxu0 %v1507
      %1825 = vmatpush.msra.mxu0 %v1506
      %1826 = vmatpush.msra.mxu0 %v1505
      %1827 = vmatpush.msra.mxu0 %v1504
      %1828 = vmatpush.msra.mxu0 %v1503
      %1829 = vmatpush.msra.mxu0 %v1502
      %1830 = vmatpush.msra.mxu0 %v1501
      %1831 = vmatpush.msra.mxu0 %v1500
      %1832 = vmatpush.msra.mxu0 %v1499
      %1833 = vmatpush.msra.mxu0 %v1498
      %1834 = vmatmul.f32.gmra.mxu0 %v1257
      %v1835 = vpop.f32.mrf.mxu0
      %v1836 = vadd.f32 %v1816, %v1835
      %1837 = vdwg.mxu0
      %v1838 = vld [vmem:[%s11] sm:$0x1]
      %v1839 = vld [vmem:[%s12] sm:$0x1]
      %v1840 = vadd.f32 %v1836, %v818
      %v1841 = vsel %vm445, %v1840, 0.0
      %1842 = vadd.xlane.f32.xlu0 %v1841
      %v1843 = vpop.xlane.xlu0 %1842
      %v1844 = vmul.f32 %v1843, %v791
      %v1845 = vsub.f32 %v1840, %v1844
      %v1846 = vmul.f32 %v1845, %v1845
      %v1847 = vsel %vm445, %v1846, 0.0
      %1848 = vadd.xlane.f32.xlu0 %v1847
      %v1849 = vpop.xlane.xlu0 %1848
      %v1850 = vmul.f32 %v1849, %v791
      %v1851 = vadd.f32 %v1850, 1e-05
      %v1852 = vrsqrt.pop %v1851
      %v1853 = vmul.f32 %v1852, %v1851
      %v1854 = vmul.f32 %v1853, %v1852
      %v1855 = vmul.f32 0.5, %v1854
      %v1856 = vsub.f32 1.5, %v1855
      %v1857 = vmul.f32 %v1852, %v1856
      %vm1858 = vweird.f32 %v1851
      %vm1859 = vweird.f32 %v1852
      %vm1860 = vmor %vm1858, %vm1859
      %v1861 = vsel %vm1860, %v1852, %v1857
      %v1862 = vmul.f32 %v1845, %v1861
      %v1864 = vperm.slane %v1838, 0
      %v1866 = vmul.f32 %v1862, %v1864
      %v1868 = vperm.slane %v1839, 0
      %v1870 = vadd.f32 %v1866, %v1868
      %1871 = vst.msk [vmem:[%s435] sm:$0xff] %vm445, %v1870
      %p1872 = scmp.lt.s32.totalorder %s24, 1
      %s1873 = scalar_select %p1872, %s24, 1
      %s1874 = smul.addr %s1873, 8
      %s1875 = scalar_lea.vmem %s13, %s1874
      // Predicated region
      $region73: #{transformer_forward.7} parent=71 // pred_check
        %p1876 = pneg %p320
      $region74: #{transformer_forward.7} parent=71 // pred_check_branch
        %1878 = sbr.rel (%p1876) target = $region76
      $region75: #{transformer_forward.7} parent=71 // pred_region
        _
      $region76: #{transformer_forward.7} parent=71 // pred_fallthru
        _
    $region72: #{transformer_forward.7} parent=5 // pred_fallthru
      _
    %p1879 = scmp.le.s32.totalorder 2, %s19
    // Predicated region
    $region77: #{transformer_forward.7} parent=5 // pred_check
      %p1880 = pneg %p1879
    $region78: #{transformer_forward.7} parent=5 // pred_check_branch
      %1882 = sbr.rel (%p1880) target = $region80
    $region79: #{transformer_forward.7} parent=5 // pred_region
      %s1883 = ssub.s32 %s19, 2
      // Predicated region
      $region81: #{transformer_forward.7} parent=79 // pred_check
        %p1884 = pneg %p326
      $region82: #{transformer_forward.7} parent=79 // pred_check_branch
        %1886 = sbr.rel (%p1884) target = $region84
      $region83: #{transformer_forward.7} parent=79 // pred_region
        %p1887 = scmp.lt.s32.totalorder %s25, 1
        %s1888 = scalar_select %p1887, %s25, 1
        %s1889 = smul.addr %s1888, 8
        %s1890 = scalar_lea.vmem %s13, %s1889
      $region84: #{transformer_forward.7} parent=79 // pred_fallthru
        _
    $region80: #{transformer_forward.7} parent=5 // pred_fallthru
      _
  $region6: #{transformer_forward.7} parent=0 // loop_footer
    %s23 = sadd.s32 1, %s19
  $region7: #{transformer_forward.7} parent=0 // loop_footer_branch
    %18 = sbr.rel target = $region3
  $region8: #{transformer_forward.7} parent=0 // loop_exit
    _

// kernel: transformer_forward.9
$region0: #{transformer_forward.9}
  #allocation0 [shape = 'u32[]', space=smem, size = 0x4, offset = 0x4, fixed_abs, tag = 'smem constant byte address 0x4 - core index']
  #allocation1 [shape = 'u32[72,128]{1,0:T(1,128)}', space=vmem, size = 0x9000, scoped, tag = 'internal scratch']
  %s0 = inlined_call_operand.vmem [shape: f32[2,8,32], index: 0, kind: input, shape index: {}, may-alias: {0,1}]
  %s1 = inlined_call_operand.vmem [shape: f32[2,8,32], index: 1, kind: input, shape index: {}, may-alias: {0,1}]
  %s2 = inlined_call_operand.vmem [shape: f32[32,96], index: 2, kind: input, shape index: {}]
  %s3 = inlined_call_operand.vmem [shape: f32[1,96], index: 3, kind: input, shape index: {}]
  %s4 = inlined_call_operand.vmem [shape: f32[32,32], index: 4, kind: input, shape index: {}]
  %s5 = inlined_call_operand.vmem [shape: f32[1,32], index: 5, kind: input, shape index: {}]
  %s6 = inlined_call_operand.vmem [shape: f32[1,32], index: 6, kind: input, shape index: {}]
  %s7 = inlined_call_operand.vmem [shape: f32[1,32], index: 7, kind: input, shape index: {}]
  %s8 = inlined_call_operand.vmem [shape: f32[32,32], index: 8, kind: input, shape index: {}]
  %s9 = inlined_call_operand.vmem [shape: f32[1,32], index: 9, kind: input, shape index: {}]
  %s10 = inlined_call_operand.vmem [shape: f32[32,64], index: 10, kind: input, shape index: {}]
  %s11 = inlined_call_operand.vmem [shape: f32[1,64], index: 11, kind: input, shape index: {}]
  %s12 = inlined_call_operand.vmem [shape: f32[32,32], index: 12, kind: input, shape index: {}]
  %s13 = inlined_call_operand.vmem [shape: f32[1,32], index: 13, kind: input, shape index: {}]
  %s14 = inlined_call_operand.vmem [shape: f32[1,32], index: 14, kind: input, shape index: {}]
  %s15 = inlined_call_operand.vmem [shape: f32[1,32], index: 15, kind: input, shape index: {}]
  %s16 = inlined_call_operand.vmem [shape: f32[32,2048], index: 16, kind: input, shape index: {}]
  %s17 = inlined_call_operand.vmem [shape: f32[1,2048], index: 17, kind: input, shape index: {}]
  %s18 = inlined_call_operand.vmem [shape: f32[2048,32], index: 18, kind: input, shape index: {}]
  %s19 = inlined_call_operand.vmem [shape: f32[1,32], index: 19, kind: input, shape index: {}]
  %s20 = inlined_call_operand.vmem [shape: f32[1,32], index: 20, kind: input, shape index: {}]
  %s21 = inlined_call_operand.vmem [shape: f32[1,32], index: 21, kind: input, shape index: {}]
  %s22 = inlined_call_operand.vmem [shape: f32[2,8,32], index: 22, kind: output, shape index: {}]
  %s23 = sld [smem:[#allocation0]]
  $region121: #{transformer_forward.9} parent=0
    _
  %s25 = ssub.s32 1, %s23
  %s26 = scalar_select 0, %s25, %s23
  loop: start=0, step=1, limit=4
  $region2: #{transformer_forward.9} parent=0 // loop_pre_header
    _
  $region3: #{transformer_forward.9} parent=0 // loop_header
    %s28 = sphi 0, %s32
    %p29 = scmp.ge.s32.totalorder %s28, 4
    %s38 = sphi 0, %s40
    %s41 = sphi 0, %s38
    %s42 = sphi 0, %s41
    %s58 = sphi 0, %s42
    %s64 = sphi 0, %s66
    %s67 = sphi 0, %s64
    %s68 = sphi 0, %s67
    %s84 = sphi 0, %s68
    %s88 = sphi 0, %s88
    %s90 = sphi 0, %s88
    %s91 = sphi 0, %s90
    %s105 = sphi 0, %s91
    %s109 = sphi 0, %s109
    %s111 = sphi 0, %s109
    %s112 = sphi 0, %s111
    %s126 = sphi 0, %s112
    %s130 = sphi 0, %s130
    %s132 = sphi 0, %s130
    %s133 = sphi 0, %s132
    %s147 = sphi 0, %s133
    %s151 = sphi 0, %s151
    %s153 = sphi 0, %s151
    %s154 = sphi 0, %s153
    %s168 = sphi 0, %s154
    %s172 = sphi 0, %s172
    %s174 = sphi 0, %s172
    %s175 = sphi 0, %s174
    %s189 = sphi 0, %s175
    %s193 = sphi 0, %s193
    %s195 = sphi 0, %s193
    %s196 = sphi 0, %s195
    %s210 = sphi 0, %s196
    %s214 = sphi 0, %s214
    %s216 = sphi 0, %s214
    %s217 = sphi 0, %s216
    %s231 = sphi 0, %s217
    %s235 = sphi 0, %s235
    %s237 = sphi 0, %s235
    %s238 = sphi 0, %s237
    %s252 = sphi 0, %s238
    %s256 = sphi 0, %s256
    %s258 = sphi 0, %s256
    %s259 = sphi 0, %s258
    %s273 = sphi 0, %s259
    %s277 = sphi 0, %s277
    %s279 = sphi 0, %s277
    %s280 = sphi 0, %s279
    %s294 = sphi 0, %s280
    %s298 = sphi 0, %s298
    %s300 = sphi 0, %s298
    %s301 = sphi 0, %s300
    %s315 = sphi 0, %s301
    %s319 = sphi 0, %s319
    %s321 = sphi 0, %s319
    %s322 = sphi 0, %s321
    %s336 = sphi 0, %s322
    %s340 = sphi 0, %s340
    %s342 = sphi 0, %s340
    %s343 = sphi 0, %s342
    %s357 = sphi 0, %s343
    %s361 = sphi 0, %s361
    %s363 = sphi 0, %s361
    %s364 = sphi 0, %s363
    %s378 = sphi 0, %s364
    %s382 = sphi 0, %s382
    %s384 = sphi 0, %s382
    %s385 = sphi 0, %s384
    %s399 = sphi 0, %s385
    %s403 = sphi 0, %s403
    %s405 = sphi 0, %s403
    %s406 = sphi 0, %s405
    %s420 = sphi 0, %s406
    %s424 = sphi 0, %s424
    %s426 = sphi 0, %s424
    %s427 = sphi 0, %s426
    %s441 = sphi 0, %s427
    %s445 = sphi 0, %s445
    %s447 = sphi 0, %s445
    %s448 = sphi 0, %s447
    %s462 = sphi 0, %s448
    %s466 = sphi 0, %s466
    %s468 = sphi 0, %s466
    %s469 = sphi 0, %s468
    %s483 = sphi 0, %s469
    %s487 = sphi 0, %s487
    %s489 = sphi 0, %s487
    %s490 = sphi 0, %s489
    %s504 = sphi 0, %s490
    %s510 = sphi 0, %s512
    %s513 = sphi 0, %s510
    %s514 = sphi 0, %s513
    %s530 = sphi 0, %s514
  $region4: #{transformer_forward.9} parent=0 // loop_header_branch
    %31 = sbr.rel (%p29) target = $region8
  $region5: #{transformer_forward.9} parent=0 // loop_body
    %s33 = ssub.s32 %s28, 1
    %s34 = ssub.s32 %s28, 2
    %s35 = sadd.s32 %s28, 1
    %s36 = ssub.s32 %s28, %s35
    %p37 = scmp.eq.s32.totalorder %s36, 0
    %s39 = sadd.s32 %s38, 1
    %s40 = scalar_select %p37, %s38, %s39
    %p43 = pneg %p37
    %p44 = scmp.eq.s32.totalorder %s28, 1
    %p45 = por %p43, %p44
    %p46 = scmp.ne.s32.totalorder %s38, %s41
    %p47 = scmp.eq.s32.totalorder %s28, 0
    %p48 = por %p46, %p47
    %p49 = scmp.ne.s32.totalorder %s38, %s41
    %p50 = scmp.eq.s32.totalorder %s33, 1
    %p51 = por %p49, %p50
    %p52 = scmp.ne.s32.totalorder %s41, %s42
    %p53 = scmp.eq.s32.totalorder %s33, 0
    %p54 = por %p52, %p53
    %p55 = scmp.ne.s32.totalorder %s41, %s42
    %p56 = scmp.eq.s32.totalorder %s34, 1
    %p57 = por %p55, %p56
    %p59 = scmp.ne.s32.totalorder %s42, %s58
    %p60 = scmp.eq.s32.totalorder %s34, 0
    %p61 = por %p59, %p60
    %s62 = ssub.s32 %s28, %s35
    %p63 = scmp.eq.s32.totalorder %s62, 0
    %s65 = sadd.s32 %s64, 1
    %s66 = scalar_select %p63, %s64, %s65
    %p69 = pneg %p63
    %p70 = scmp.eq.s32.totalorder %s28, 1
    %p71 = por %p69, %p70
    %p72 = scmp.ne.s32.totalorder %s64, %s67
    %p73 = scmp.eq.s32.totalorder %s28, 0
    %p74 = por %p72, %p73
    %p75 = scmp.ne.s32.totalorder %s64, %s67
    %p76 = scmp.eq.s32.totalorder %s33, 1
    %p77 = por %p75, %p76
    %p78 = scmp.ne.s32.totalorder %s67, %s68
    %p79 = scmp.eq.s32.totalorder %s33, 0
    %p80 = por %p78, %p79
    %p81 = scmp.ne.s32.totalorder %s67, %s68
    %p82 = scmp.eq.s32.totalorder %s34, 1
    %p83 = por %p81, %p82
    %p85 = scmp.ne.s32.totalorder %s68, %s84
    %p86 = scmp.eq.s32.totalorder %s34, 0
    %p87 = por %p85, %p86
    %s89 = sadd.s32 %s88, 1
    %p92 = scmp.eq.s32.totalorder %s28, 1
    %p93 = scmp.ne.s32.totalorder %s88, %s90
    %p94 = scmp.eq.s32.totalorder %s28, 0
    %p95 = por %p93, %p94
    %p96 = scmp.ne.s32.totalorder %s88, %s90
    %p97 = scmp.eq.s32.totalorder %s33, 1
    %p98 = por %p96, %p97
    %p99 = scmp.ne.s32.totalorder %s90, %s91
    %p100 = scmp.eq.s32.totalorder %s33, 0
    %p101 = por %p99, %p100
    %p102 = scmp.ne.s32.totalorder %s90, %s91
    %p103 = scmp.eq.s32.totalorder %s34, 1
    %p104 = por %p102, %p103
    %p106 = scmp.ne.s32.totalorder %s91, %s105
    %p107 = scmp.eq.s32.totalorder %s34, 0
    %p108 = por %p106, %p107
    %s110 = sadd.s32 %s109, 1
    %p113 = scmp.eq.s32.totalorder %s28, 1
    %p114 = scmp.ne.s32.totalorder %s109, %s111
    %p115 = scmp.eq.s32.totalorder %s28, 0
    %p116 = por %p114, %p115
    %p117 = scmp.ne.s32.totalorder %s109, %s111
    %p118 = scmp.eq.s32.totalorder %s33, 1
    %p119 = por %p117, %p118
    %p120 = scmp.ne.s32.totalorder %s111, %s112
    %p121 = scmp.eq.s32.totalorder %s33, 0
    %p122 = por %p120, %p121
    %p123 = scmp.ne.s32.totalorder %s111, %s112
    %p124 = scmp.eq.s32.totalorder %s34, 1
    %p125 = por %p123, %p124
    %p127 = scmp.ne.s32.totalorder %s112, %s126
    %p128 = scmp.eq.s32.totalorder %s34, 0
    %p129 = por %p127, %p128
    %s131 = sadd.s32 %s130, 1
    %p134 = scmp.eq.s32.totalorder %s28, 1
    %p135 = scmp.ne.s32.totalorder %s130, %s132
    %p136 = scmp.eq.s32.totalorder %s28, 0
    %p137 = por %p135, %p136
    %p138 = scmp.ne.s32.totalorder %s130, %s132
    %p139 = scmp.eq.s32.totalorder %s33, 1
    %p140 = por %p138, %p139
    %p141 = scmp.ne.s32.totalorder %s132, %s133
    %p142 = scmp.eq.s32.totalorder %s33, 0
    %p143 = por %p141, %p142
    %p144 = scmp.ne.s32.totalorder %s132, %s133
    %p145 = scmp.eq.s32.totalorder %s34, 1
    %p146 = por %p144, %p145
    %p148 = scmp.ne.s32.totalorder %s133, %s147
    %p149 = scmp.eq.s32.totalorder %s34, 0
    %p150 = por %p148, %p149
    %s152 = sadd.s32 %s151, 1
    %p155 = scmp.eq.s32.totalorder %s28, 1
    %p156 = scmp.ne.s32.totalorder %s151, %s153
    %p157 = scmp.eq.s32.totalorder %s28, 0
    %p158 = por %p156, %p157
    %p159 = scmp.ne.s32.totalorder %s151, %s153
    %p160 = scmp.eq.s32.totalorder %s33, 1
    %p161 = por %p159, %p160
    %p162 = scmp.ne.s32.totalorder %s153, %s154
    %p163 = scmp.eq.s32.totalorder %s33, 0
    %p164 = por %p162, %p163
    %p165 = scmp.ne.s32.totalorder %s153, %s154
    %p166 = scmp.eq.s32.totalorder %s34, 1
    %p167 = por %p165, %p166
    %p169 = scmp.ne.s32.totalorder %s154, %s168
    %p170 = scmp.eq.s32.totalorder %s34, 0
    %p171 = por %p169, %p170
    %s173 = sadd.s32 %s172, 1
    %p176 = scmp.eq.s32.totalorder %s28, 1
    %p177 = scmp.ne.s32.totalorder %s172, %s174
    %p178 = scmp.eq.s32.totalorder %s28, 0
    %p179 = por %p177, %p178
    %p180 = scmp.ne.s32.totalorder %s172, %s174
    %p181 = scmp.eq.s32.totalorder %s33, 1
    %p182 = por %p180, %p181
    %p183 = scmp.ne.s32.totalorder %s174, %s175
    %p184 = scmp.eq.s32.totalorder %s33, 0
    %p185 = por %p183, %p184
    %p186 = scmp.ne.s32.totalorder %s174, %s175
    %p187 = scmp.eq.s32.totalorder %s34, 1
    %p188 = por %p186, %p187
    %p190 = scmp.ne.s32.totalorder %s175, %s189
    %p191 = scmp.eq.s32.totalorder %s34, 0
    %p192 = por %p190, %p191
    %s194 = sadd.s32 %s193, 1
    %p197 = scmp.eq.s32.totalorder %s28, 1
    %p198 = scmp.ne.s32.totalorder %s193, %s195
    %p199 = scmp.eq.s32.totalorder %s28, 0
    %p200 = por %p198, %p199
    %p201 = scmp.ne.s32.totalorder %s193, %s195
    %p202 = scmp.eq.s32.totalorder %s33, 1
    %p203 = por %p201, %p202
    %p204 = scmp.ne.s32.totalorder %s195, %s196
    %p205 = scmp.eq.s32.totalorder %s33, 0
    %p206 = por %p204, %p205
    %p207 = scmp.ne.s32.totalorder %s195, %s196
    %p208 = scmp.eq.s32.totalorder %s34, 1
    %p209 = por %p207, %p208
    %p211 = scmp.ne.s32.totalorder %s196, %s210
    %p212 = scmp.eq.s32.totalorder %s34, 0
    %p213 = por %p211, %p212
    %s215 = sadd.s32 %s214, 1
    %p218 = scmp.eq.s32.totalorder %s28, 1
    %p219 = scmp.ne.s32.totalorder %s214, %s216
    %p220 = scmp.eq.s32.totalorder %s28, 0
    %p221 = por %p219, %p220
    %p222 = scmp.ne.s32.totalorder %s214, %s216
    %p223 = scmp.eq.s32.totalorder %s33, 1
    %p224 = por %p222, %p223
    %p225 = scmp.ne.s32.totalorder %s216, %s217
    %p226 = scmp.eq.s32.totalorder %s33, 0
    %p227 = por %p225, %p226
    %p228 = scmp.ne.s32.totalorder %s216, %s217
    %p229 = scmp.eq.s32.totalorder %s34, 1
    %p230 = por %p228, %p229
    %p232 = scmp.ne.s32.totalorder %s217, %s231
    %p233 = scmp.eq.s32.totalorder %s34, 0
    %p234 = por %p232, %p233
    %s236 = sadd.s32 %s235, 1
    %p239 = scmp.eq.s32.totalorder %s28, 1
    %p240 = scmp.ne.s32.totalorder %s235, %s237
    %p241 = scmp.eq.s32.totalorder %s28, 0
    %p242 = por %p240, %p241
    %p243 = scmp.ne.s32.totalorder %s235, %s237
    %p244 = scmp.eq.s32.totalorder %s33, 1
    %p245 = por %p243, %p244
    %p246 = scmp.ne.s32.totalorder %s237, %s238
    %p247 = scmp.eq.s32.totalorder %s33, 0
    %p248 = por %p246, %p247
    %p249 = scmp.ne.s32.totalorder %s237, %s238
    %p250 = scmp.eq.s32.totalorder %s34, 1
    %p251 = por %p249, %p250
    %p253 = scmp.ne.s32.totalorder %s238, %s252
    %p254 = scmp.eq.s32.totalorder %s34, 0
    %p255 = por %p253, %p254
    %s257 = sadd.s32 %s256, 1
    %p260 = scmp.eq.s32.totalorder %s28, 1
    %p261 = scmp.ne.s32.totalorder %s256, %s258
    %p262 = scmp.eq.s32.totalorder %s28, 0
    %p263 = por %p261, %p262
    %p264 = scmp.ne.s32.totalorder %s256, %s258
    %p265 = scmp.eq.s32.totalorder %s33, 1
    %p266 = por %p264, %p265
    %p267 = scmp.ne.s32.totalorder %s258, %s259
    %p268 = scmp.eq.s32.totalorder %s33, 0
    %p269 = por %p267, %p268
    %p270 = scmp.ne.s32.totalorder %s258, %s259
    %p271 = scmp.eq.s32.totalorder %s34, 1
    %p272 = por %p270, %p271
    %p274 = scmp.ne.s32.totalorder %s259, %s273
    %p275 = scmp.eq.s32.totalorder %s34, 0
    %p276 = por %p274, %p275
    %s278 = sadd.s32 %s277, 1
    %p281 = scmp.eq.s32.totalorder %s28, 1
    %p282 = scmp.ne.s32.totalorder %s277, %s279
    %p283 = scmp.eq.s32.totalorder %s28, 0
    %p284 = por %p282, %p283
    %p285 = scmp.ne.s32.totalorder %s277, %s279
    %p286 = scmp.eq.s32.totalorder %s33, 1
    %p287 = por %p285, %p286
    %p288 = scmp.ne.s32.totalorder %s279, %s280
    %p289 = scmp.eq.s32.totalorder %s33, 0
    %p290 = por %p288, %p289
    %p291 = scmp.ne.s32.totalorder %s279, %s280
    %p292 = scmp.eq.s32.totalorder %s34, 1
    %p293 = por %p291, %p292
    %p295 = scmp.ne.s32.totalorder %s280, %s294
    %p296 = scmp.eq.s32.totalorder %s34, 0
    %p297 = por %p295, %p296
    %s299 = sadd.s32 %s298, 1
    %p302 = scmp.eq.s32.totalorder %s28, 1
    %p303 = scmp.ne.s32.totalorder %s298, %s300
    %p304 = scmp.eq.s32.totalorder %s28, 0
    %p305 = por %p303, %p304
    %p306 = scmp.ne.s32.totalorder %s298, %s300
    %p307 = scmp.eq.s32.totalorder %s33, 1
    %p308 = por %p306, %p307
    %p309 = scmp.ne.s32.totalorder %s300, %s301
    %p310 = scmp.eq.s32.totalorder %s33, 0
    %p311 = por %p309, %p310
    %p312 = scmp.ne.s32.totalorder %s300, %s301
    %p313 = scmp.eq.s32.totalorder %s34, 1
    %p314 = por %p312, %p313
    %p316 = scmp.ne.s32.totalorder %s301, %s315
    %p317 = scmp.eq.s32.totalorder %s34, 0
    %p318 = por %p316, %p317
    %s320 = sadd.s32 %s319, 1
    %p323 = scmp.eq.s32.totalorder %s28, 1
    %p324 = scmp.ne.s32.totalorder %s319, %s321
    %p325 = scmp.eq.s32.totalorder %s28, 0
    %p326 = por %p324, %p325
    %p327 = scmp.ne.s32.totalorder %s319, %s321
    %p328 = scmp.eq.s32.totalorder %s33, 1
    %p329 = por %p327, %p328
    %p330 = scmp.ne.s32.totalorder %s321, %s322
    %p331 = scmp.eq.s32.totalorder %s33, 0
    %p332 = por %p330, %p331
    %p333 = scmp.ne.s32.totalorder %s321, %s322
    %p334 = scmp.eq.s32.totalorder %s34, 1
    %p335 = por %p333, %p334
    %p337 = scmp.ne.s32.totalorder %s322, %s336
    %p338 = scmp.eq.s32.totalorder %s34, 0
    %p339 = por %p337, %p338
    %s341 = sadd.s32 %s340, 1
    %p344 = scmp.eq.s32.totalorder %s28, 1
    %p345 = scmp.ne.s32.totalorder %s340, %s342
    %p346 = scmp.eq.s32.totalorder %s28, 0
    %p347 = por %p345, %p346
    %p348 = scmp.ne.s32.totalorder %s340, %s342
    %p349 = scmp.eq.s32.totalorder %s33, 1
    %p350 = por %p348, %p349
    %p351 = scmp.ne.s32.totalorder %s342, %s343
    %p352 = scmp.eq.s32.totalorder %s33, 0
    %p353 = por %p351, %p352
    %p354 = scmp.ne.s32.totalorder %s342, %s343
    %p355 = scmp.eq.s32.totalorder %s34, 1
    %p356 = por %p354, %p355
    %p358 = scmp.ne.s32.totalorder %s343, %s357
    %p359 = scmp.eq.s32.totalorder %s34, 0
    %p360 = por %p358, %p359
    %s362 = sadd.s32 %s361, 1
    %p365 = scmp.eq.s32.totalorder %s28, 1
    %p366 = scmp.ne.s32.totalorder %s361, %s363
    %p367 = scmp.eq.s32.totalorder %s28, 0
    %p368 = por %p366, %p367
    %p369 = scmp.ne.s32.totalorder %s361, %s363
    %p370 = scmp.eq.s32.totalorder %s33, 1
    %p371 = por %p369, %p370
    %p372 = scmp.ne.s32.totalorder %s363, %s364
    %p373 = scmp.eq.s32.totalorder %s33, 0
    %p374 = por %p372, %p373
    %p375 = scmp.ne.s32.totalorder %s363, %s364
    %p376 = scmp.eq.s32.totalorder %s34, 1
    %p377 = por %p375, %p376
    %p379 = scmp.ne.s32.totalorder %s364, %s378
    %p380 = scmp.eq.s32.totalorder %s34, 0
    %p381 = por %p379, %p380
    %s383 = sadd.s32 %s382, 1
    %p386 = scmp.eq.s32.totalorder %s28, 1
    %p387 = scmp.ne.s32.totalorder %s382, %s384
    %p388 = scmp.eq.s32.totalorder %s28, 0
    %p389 = por %p387, %p388
    %p390 = scmp.ne.s32.totalorder %s382, %s384
    %p391 = scmp.eq.s32.totalorder %s33, 1
    %p392 = por %p390, %p391
    %p393 = scmp.ne.s32.totalorder %s384, %s385
    %p394 = scmp.eq.s32.totalorder %s33, 0
    %p395 = por %p393, %p394
    %p396 = scmp.ne.s32.totalorder %s384, %s385
    %p397 = scmp.eq.s32.totalorder %s34, 1
    %p398 = por %p396, %p397
    %p400 = scmp.ne.s32.totalorder %s385, %s399
    %p401 = scmp.eq.s32.totalorder %s34, 0
    %p402 = por %p400, %p401
    %s404 = sadd.s32 %s403, 1
    %p407 = scmp.eq.s32.totalorder %s28, 1
    %p408 = scmp.ne.s32.totalorder %s403, %s405
    %p409 = scmp.eq.s32.totalorder %s28, 0
    %p410 = por %p408, %p409
    %p411 = scmp.ne.s32.totalorder %s403, %s405
    %p412 = scmp.eq.s32.totalorder %s33, 1
    %p413 = por %p411, %p412
    %p414 = scmp.ne.s32.totalorder %s405, %s406
    %p415 = scmp.eq.s32.totalorder %s33, 0
    %p416 = por %p414, %p415
    %p417 = scmp.ne.s32.totalorder %s405, %s406
    %p418 = scmp.eq.s32.totalorder %s34, 1
    %p419 = por %p417, %p418
    %p421 = scmp.ne.s32.totalorder %s406, %s420
    %p422 = scmp.eq.s32.totalorder %s34, 0
    %p423 = por %p421, %p422
    %s425 = sadd.s32 %s424, 1
    %p428 = scmp.eq.s32.totalorder %s28, 1
    %p429 = scmp.ne.s32.totalorder %s424, %s426
    %p430 = scmp.eq.s32.totalorder %s28, 0
    %p431 = por %p429, %p430
    %p432 = scmp.ne.s32.totalorder %s424, %s426
    %p433 = scmp.eq.s32.totalorder %s33, 1
    %p434 = por %p432, %p433
    %p435 = scmp.ne.s32.totalorder %s426, %s427
    %p436 = scmp.eq.s32.totalorder %s33, 0
    %p437 = por %p435, %p436
    %p438 = scmp.ne.s32.totalorder %s426, %s427
    %p439 = scmp.eq.s32.totalorder %s34, 1
    %p440 = por %p438, %p439
    %p442 = scmp.ne.s32.totalorder %s427, %s441
    %p443 = scmp.eq.s32.totalorder %s34, 0
    %p444 = por %p442, %p443
    %s446 = sadd.s32 %s445, 1
    %p449 = scmp.eq.s32.totalorder %s28, 1
    %p450 = scmp.ne.s32.totalorder %s445, %s447
    %p451 = scmp.eq.s32.totalorder %s28, 0
    %p452 = por %p450, %p451
    %p453 = scmp.ne.s32.totalorder %s445, %s447
    %p454 = scmp.eq.s32.totalorder %s33, 1
    %p455 = por %p453, %p454
    %p456 = scmp.ne.s32.totalorder %s447, %s448
    %p457 = scmp.eq.s32.totalorder %s33, 0
    %p458 = por %p456, %p457
    %p459 = scmp.ne.s32.totalorder %s447, %s448
    %p460 = scmp.eq.s32.totalorder %s34, 1
    %p461 = por %p459, %p460
    %p463 = scmp.ne.s32.totalorder %s448, %s462
    %p464 = scmp.eq.s32.totalorder %s34, 0
    %p465 = por %p463, %p464
    %s467 = sadd.s32 %s466, 1
    %p470 = scmp.eq.s32.totalorder %s28, 1
    %p471 = scmp.ne.s32.totalorder %s466, %s468
    %p472 = scmp.eq.s32.totalorder %s28, 0
    %p473 = por %p471, %p472
    %p474 = scmp.ne.s32.totalorder %s466, %s468
    %p475 = scmp.eq.s32.totalorder %s33, 1
    %p476 = por %p474, %p475
    %p477 = scmp.ne.s32.totalorder %s468, %s469
    %p478 = scmp.eq.s32.totalorder %s33, 0
    %p479 = por %p477, %p478
    %p480 = scmp.ne.s32.totalorder %s468, %s469
    %p481 = scmp.eq.s32.totalorder %s34, 1
    %p482 = por %p480, %p481
    %p484 = scmp.ne.s32.totalorder %s469, %s483
    %p485 = scmp.eq.s32.totalorder %s34, 0
    %p486 = por %p484, %p485
    %s488 = sadd.s32 %s487, 1
    %p491 = scmp.eq.s32.totalorder %s28, 1
    %p492 = scmp.ne.s32.totalorder %s487, %s489
    %p493 = scmp.eq.s32.totalorder %s28, 0
    %p494 = por %p492, %p493
    %p495 = scmp.ne.s32.totalorder %s487, %s489
    %p496 = scmp.eq.s32.totalorder %s33, 1
    %p497 = por %p495, %p496
    %p498 = scmp.ne.s32.totalorder %s489, %s490
    %p499 = scmp.eq.s32.totalorder %s33, 0
    %p500 = por %p498, %p499
    %p501 = scmp.ne.s32.totalorder %s489, %s490
    %p502 = scmp.eq.s32.totalorder %s34, 1
    %p503 = por %p501, %p502
    %p505 = scmp.ne.s32.totalorder %s490, %s504
    %p506 = scmp.eq.s32.totalorder %s34, 0
    %p507 = por %p505, %p506
    %s508 = ssub.s32 %s28, %s35
    %p509 = scmp.eq.s32.totalorder %s508, 0
    %s511 = sadd.s32 %s510, 1
    %s512 = scalar_select %p509, %s510, %s511
    %p515 = pneg %p509
    %p516 = scmp.eq.s32.totalorder %s28, 1
    %p517 = por %p515, %p516
    %p518 = scmp.ne.s32.totalorder %s510, %s513
    %p519 = scmp.eq.s32.totalorder %s28, 0
    %p520 = por %p518, %p519
    %p521 = scmp.ne.s32.totalorder %s510, %s513
    %p522 = scmp.eq.s32.totalorder %s33, 1
    %p523 = por %p521, %p522
    %p524 = scmp.ne.s32.totalorder %s513, %s514
    %p525 = scmp.eq.s32.totalorder %s33, 0
    %p526 = por %p524, %p525
    %p527 = scmp.ne.s32.totalorder %s513, %s514
    %p528 = scmp.eq.s32.totalorder %s34, 1
    %p529 = por %p527, %p528
    %p531 = scmp.ne.s32.totalorder %s514, %s530
    %p532 = scmp.eq.s32.totalorder %s34, 0
    %p533 = por %p531, %p532
    %p534 = scmp.le.s32.totalorder 1, %s28
    %p535 = scmp.lt.s32.totalorder %s28, 3
    %p536 = pnand %p534, %p535
    %p537 = pneg %p536
    // Predicated region
    $region9: #{transformer_forward.9} parent=5 // pred_check
      _
    $region10: #{transformer_forward.9} parent=5 // pred_check_branch
      %539 = sbr.rel (%p536) target = $region12
    $region11: #{transformer_forward.9} parent=5 // pred_region
      %s540 = ssub.s32 %s28, 1
      // Predicated region
      $region13: #{transformer_forward.9} parent=11 // pred_check
        %p541 = pneg %p101
      $region14: #{transformer_forward.9} parent=11 // pred_check_branch
        %543 = sbr.rel (%p541) target = $region16
      $region15: #{transformer_forward.9} parent=11 // pred_region
        _
      $region16: #{transformer_forward.9} parent=11 // pred_fallthru
        _
      // Predicated region
      $region17: #{transformer_forward.9} parent=11 // pred_check
        %p544 = pneg %p122
      $region18: #{transformer_forward.9} parent=11 // pred_check_branch
        %546 = sbr.rel (%p544) target = $region20
      $region19: #{transformer_forward.9} parent=11 // pred_region
        _
      $region20: #{transformer_forward.9} parent=11 // pred_fallthru
        _
      // Predicated region
      $region21: #{transformer_forward.9} parent=11 // pred_check
        %p547 = pneg %p143
      $region22: #{transformer_forward.9} parent=11 // pred_check_branch
        %549 = sbr.rel (%p547) target = $region24
      $region23: #{transformer_forward.9} parent=11 // pred_region
        _
      $region24: #{transformer_forward.9} parent=11 // pred_fallthru
        _
      // Predicated region
      $region25: #{transformer_forward.9} parent=11 // pred_check
        %p550 = pneg %p164
      $region26: #{transformer_forward.9} parent=11 // pred_check_branch
        %552 = sbr.rel (%p550) target = $region28
      $region27: #{transformer_forward.9} parent=11 // pred_region
        _
      $region28: #{transformer_forward.9} parent=11 // pred_fallthru
        _
      // Predicated region
      $region29: #{transformer_forward.9} parent=11 // pred_check
        %p553 = pneg %p185
      $region30: #{transformer_forward.9} parent=11 // pred_check_branch
        %555 = sbr.rel (%p553) target = $region32
      $region31: #{transformer_forward.9} parent=11 // pred_region
        _
      $region32: #{transformer_forward.9} parent=11 // pred_fallthru
        _
      // Predicated region
      $region33: #{transformer_forward.9} parent=11 // pred_check
        %p556 = pneg %p206
      $region34: #{transformer_forward.9} parent=11 // pred_check_branch
        %558 = sbr.rel (%p556) target = $region36
      $region35: #{transformer_forward.9} parent=11 // pred_region
        _
      $region36: #{transformer_forward.9} parent=11 // pred_fallthru
        _
      // Predicated region
      $region37: #{transformer_forward.9} parent=11 // pred_check
        %p559 = pneg %p227
      $region38: #{transformer_forward.9} parent=11 // pred_check_branch
        %561 = sbr.rel (%p559) target = $region40
      $region39: #{transformer_forward.9} parent=11 // pred_region
        _
      $region40: #{transformer_forward.9} parent=11 // pred_fallthru
        _
      // Predicated region
      $region41: #{transformer_forward.9} parent=11 // pred_check
        %p562 = pneg %p248
      $region42: #{transformer_forward.9} parent=11 // pred_check_branch
        %564 = sbr.rel (%p562) target = $region44
      $region43: #{transformer_forward.9} parent=11 // pred_region
        _
      $region44: #{transformer_forward.9} parent=11 // pred_fallthru
        _
      // Predicated region
      $region45: #{transformer_forward.9} parent=11 // pred_check
        %p565 = pneg %p269
      $region46: #{transformer_forward.9} parent=11 // pred_check_branch
        %567 = sbr.rel (%p565) target = $region48
      $region47: #{transformer_forward.9} parent=11 // pred_region
        _
      $region48: #{transformer_forward.9} parent=11 // pred_fallthru
        _
      // Predicated region
      $region49: #{transformer_forward.9} parent=11 // pred_check
        %p568 = pneg %p290
      $region50: #{transformer_forward.9} parent=11 // pred_check_branch
        %570 = sbr.rel (%p568) target = $region52
      $region51: #{transformer_forward.9} parent=11 // pred_region
        _
      $region52: #{transformer_forward.9} parent=11 // pred_fallthru
        _
      // Predicated region
      $region53: #{transformer_forward.9} parent=11 // pred_check
        %p571 = pneg %p311
      $region54: #{transformer_forward.9} parent=11 // pred_check_branch
        %573 = sbr.rel (%p571) target = $region56
      $region55: #{transformer_forward.9} parent=11 // pred_region
        _
      $region56: #{transformer_forward.9} parent=11 // pred_fallthru
        _
      // Predicated region
      $region57: #{transformer_forward.9} parent=11 // pred_check
        %p574 = pneg %p332
      $region58: #{transformer_forward.9} parent=11 // pred_check_branch
        %576 = sbr.rel (%p574) target = $region60
      $region59: #{transformer_forward.9} parent=11 // pred_region
        _
      $region60: #{transformer_forward.9} parent=11 // pred_fallthru
        _
      // Predicated region
      $region61: #{transformer_forward.9} parent=11 // pred_check
        %p577 = pneg %p353
      $region62: #{transformer_forward.9} parent=11 // pred_check_branch
        %579 = sbr.rel (%p577) target = $region64
      $region63: #{transformer_forward.9} parent=11 // pred_region
        _
      $region64: #{transformer_forward.9} parent=11 // pred_fallthru
        _
      // Predicated region
      $region65: #{transformer_forward.9} parent=11 // pred_check
        %p580 = pneg %p374
      $region66: #{transformer_forward.9} parent=11 // pred_check_branch
        %582 = sbr.rel (%p580) target = $region68
      $region67: #{transformer_forward.9} parent=11 // pred_region
        _
      $region68: #{transformer_forward.9} parent=11 // pred_fallthru
        _
      // Predicated region
      $region69: #{transformer_forward.9} parent=11 // pred_check
        %p583 = pneg %p395
      $region70: #{transformer_forward.9} parent=11 // pred_check_branch
        %585 = sbr.rel (%p583) target = $region72
      $region71: #{transformer_forward.9} parent=11 // pred_region
        _
      $region72: #{transformer_forward.9} parent=11 // pred_fallthru
        _
      // Predicated region
      $region73: #{transformer_forward.9} parent=11 // pred_check
        %p586 = pneg %p416
      $region74: #{transformer_forward.9} parent=11 // pred_check_branch
        %588 = sbr.rel (%p586) target = $region76
      $region75: #{transformer_forward.9} parent=11 // pred_region
        _
      $region76: #{transformer_forward.9} parent=11 // pred_fallthru
        _
      // Predicated region
      $region77: #{transformer_forward.9} parent=11 // pred_check
        %p589 = pneg %p437
      $region78: #{transformer_forward.9} parent=11 // pred_check_branch
        %591 = sbr.rel (%p589) target = $region80
      $region79: #{transformer_forward.9} parent=11 // pred_region
        _
      $region80: #{transformer_forward.9} parent=11 // pred_fallthru
        _
      // Predicated region
      $region81: #{transformer_forward.9} parent=11 // pred_check
        %p592 = pneg %p458
      $region82: #{transformer_forward.9} parent=11 // pred_check_branch
        %594 = sbr.rel (%p592) target = $region84
      $region83: #{transformer_forward.9} parent=11 // pred_region
        _
      $region84: #{transformer_forward.9} parent=11 // pred_fallthru
        _
      // Predicated region
      $region85: #{transformer_forward.9} parent=11 // pred_check
        %p595 = pneg %p479
      $region86: #{transformer_forward.9} parent=11 // pred_check_branch
        %597 = sbr.rel (%p595) target = $region88
      $region87: #{transformer_forward.9} parent=11 // pred_region
        _
      $region88: #{transformer_forward.9} parent=11 // pred_fallthru
        _
      // Predicated region
      $region89: #{transformer_forward.9} parent=11 // pred_check
        %p598 = pneg %p500
      $region90: #{transformer_forward.9} parent=11 // pred_check_branch
        %600 = sbr.rel (%p598) target = $region92
      $region91: #{transformer_forward.9} parent=11 // pred_region
        _
      $region92: #{transformer_forward.9} parent=11 // pred_fallthru
        _
    $region12: #{transformer_forward.9} parent=5 // pred_fallthru
      _
    %p601 = scmp.lt.s32.totalorder %s28, 2
    // Predicated region
    $region93: #{transformer_forward.9} parent=5 // pred_check
      %p602 = pneg %p601
    $region94: #{transformer_forward.9} parent=5 // pred_check_branch
      %604 = sbr.rel (%p602) target = $region96
    $region95: #{transformer_forward.9} parent=5 // pred_region
      // Predicated region
      $region97: #{transformer_forward.9} parent=95 // pred_check
        %p605 = pneg %p48
      $region98: #{transformer_forward.9} parent=95 // pred_check_branch
        %607 = sbr.rel (%p605) target = $region100
      $region99: #{transformer_forward.9} parent=95 // pred_region
        %p608 = scmp.lt.s32.totalorder %s28, 1
        %s609 = scalar_select %p608, %s28, 1
        %s610 = smul.addr %s609, 8
        %s611 = scalar_lea.vmem %s0, %s610
      $region100: #{transformer_forward.9} parent=95 // pred_fallthru
        _
      // Predicated region
      $region101: #{transformer_forward.9} parent=95 // pred_check
        %p612 = pneg %p74
      $region102: #{transformer_forward.9} parent=95 // pred_check_branch
        %614 = sbr.rel (%p612) target = $region104
      $region103: #{transformer_forward.9} parent=95 // pred_region
        %p615 = scmp.lt.s32.totalorder %s28, 1
        %s616 = scalar_select %p615, %s28, 1
        %s617 = smul.addr %s616, 8
        %s618 = scalar_lea.vmem %s1, %s617
      $region104: #{transformer_forward.9} parent=95 // pred_fallthru
        _
    $region96: #{transformer_forward.9} parent=5 // pred_fallthru
      _
    %p619 = scmp.le.s32.totalorder 1, %s28
    %p620 = scmp.lt.s32.totalorder %s28, 3
    %p621 = pnand %p619, %p620
    %p622 = pneg %p621
    // Predicated region
    $region105: #{transformer_forward.9} parent=5 // pred_check
      _
    $region106: #{transformer_forward.9} parent=5 // pred_check_branch
      %624 = sbr.rel (%p621) target = $region108
    $region107: #{transformer_forward.9} parent=5 // pred_region
      %s625 = ssub.s32 %s28, 1
      %p626 = scmp.lt.s32.totalorder %s33, 1
      %s627 = scalar_select %p626, %s33, 1
      %s628 = smul.addr %s627, 8
      %s629 = scalar_lea.vmem %s0, %s628
      %p630 = pneg %p54
      %p631 = pneg %p51
      %p632 = scmp.lt.s32.totalorder %s33, 1
      %s633 = scalar_select %p632, %s33, 1
      %s634 = smul.addr %s633, 8
      %s635 = scalar_lea.vmem %s1, %s634
      %p636 = pneg %p80
      %p637 = pneg %p77
      %p638 = pneg %p101
      %p639 = pneg %p98
      %p640 = pneg %p122
      %p641 = pneg %p119
      %p642 = pneg %p143
      %p643 = pneg %p140
      %p644 = pneg %p164
      %p645 = pneg %p161
      %p646 = pneg %p185
      %p647 = pneg %p182
      %p648 = pneg %p206
      %p649 = pneg %p203
      %p650 = pneg %p227
      %p651 = pneg %p224
      %p652 = pneg %p248
      %p653 = pneg %p245
      %p654 = pneg %p269
      %p655 = pneg %p266
      %p656 = pneg %p290
      %p657 = pneg %p287
      %p658 = pneg %p311
      %p659 = pneg %p308
      %p660 = pneg %p332
      %p661 = pneg %p329
      %p662 = pneg %p353
      %p663 = pneg %p350
      %p664 = pneg %p374
      %p665 = pneg %p371
      %p666 = pneg %p395
      %p667 = pneg %p392
      %p668 = pneg %p416
      %p669 = pneg %p413
      %p670 = pneg %p437
      %p671 = pneg %p434
      %p672 = pneg %p458
      %p673 = pneg %p455
      %p674 = pneg %p479
      %p675 = pneg %p476
      %p676 = pneg %p500
      %p677 = pneg %p497
      %p678 = pneg %p526
      %p679 = pneg %p523
      %p680 = scmp.lt.s32.totalorder %s33, 1
      %s681 = scalar_select %p680, %s33, 1
      %s682 = smul.addr %s681, 8
      %s683 = scalar_lea.vmem %s22, %s682
      %p684 = scmp.lt.s32.totalorder %s33, 1
      %s685 = scalar_select %p684, %s33, 1
      %s686 = smul.addr %s685, 8
      %s687 = scalar_lea.vmem %s0, %s686
      %p688 = scmp.lt.s32.totalorder %s33, 1
      %s689 = scalar_select %p688, %s33, 1
      %s690 = smul.addr %s689, 8
      %s691 = scalar_lea.vmem %s1, %s690
      %p692 = scmp.lt.s32.totalorder %s33, 1
      %s693 = scalar_select %p692, %s33, 1
      %s694 = smul.addr %s693, 8
      %s695 = scalar_lea.vmem %s22, %s694
      %v696 = vld [vmem:[%s687] sm:$0xff]
      %v697 = vld [vmem:[%s691] sm:$0xff]
      %v698 = vld [vmem:[%s2] sm:$0xff]
      %v699 = vld [vmem:[%s2 + $0x8] sm:$0xff]
      %v700 = vld [vmem:[%s2 + $0x10] sm:$0xff]
      %v701 = vld [vmem:[%s2 + $0x18] sm:$0xff]
      %v702 = vld [vmem:[%s3] sm:$0x1]
      %v704 = vperm.slane %v702, 0
      %vm706 = vcmask 261120
      %v708 = vsel %vm706, %v696, 0
      %710 = vmatpush.msra.mxu0 0.0
      %711 = vmatpush.msra.mxu0 0.0
      %712 = vmatpush.msra.mxu0 0.0
      %713 = vmatpush.msra.mxu0 0.0
      %714 = vmatpush.msra.mxu0 0.0
      %715 = vmatpush.msra.mxu0 0.0
      %716 = vmatpush.msra.mxu0 0.0
      %717 = vmatpush.msra.mxu0 0.0
      %718 = vmatpush.msra.mxu0 0.0
      %719 = vmatpush.msra.mxu0 0.0
      %720 = vmatpush.msra.mxu0 0.0
      %721 = vmatpush.msra.mxu0 0.0
      %722 = vmatpush.msra.mxu0 %v701
      %723 = vmatpush.msra.mxu0 %v700
      %724 = vmatpush.msra.mxu0 %v699
      %725 = vmatpush.msra.mxu0 %v698
      %726 = vmatmul.f32.gmra.mxu0 %v708
      %v727 = vpop.f32.mrf.mxu0
      %v728 = vadd.f32 %v704, %v727
      %729 = vdwg.mxu0
      %v730 = vmul.f32 %v728, 0.35355338
      %732 = vrot.lane.b32.xlu0 %v728, 96
      %v733 = vpop.permute.xlu0 %732
      %vm734 = vcmask 64512
      %v736 = vsel %vm734, %v730, 0
      %v738 = vsel %vm734, %v733, 0
      %740 = vmatpush.xpose.msra.mxu0 0.0
      %741 = vmatpush.xpose.msra.mxu0 0.0
      %742 = vmatpush.xpose.msra.mxu0 0.0
      %743 = vmatpush.xpose.msra.mxu0 0.0
      %744 = vmatpush.xpose.msra.mxu0 0.0
      %745 = vmatpush.xpose.msra.mxu0 0.0
      %746 = vmatpush.xpose.msra.mxu0 0.0
      %747 = vmatpush.xpose.msra.mxu0 0.0
      %748 = vmatpush.xpose.msra.mxu0 0.0
      %749 = vmatpush.xpose.msra.mxu0 0.0
      %750 = vmatpush.xpose.msra.mxu0 0.0
      %751 = vmatpush.xpose.msra.mxu0 0.0
      %752 = vmatpush.xpose.msra.mxu0 0.0
      %753 = vmatpush.xpose.msra.mxu0 0.0
      %754 = vmatpush.xpose.msra.mxu0 0.0
      %755 = vmatpush.xpose.msra.mxu0 %v738
      %756 = vmatmul.f32.gmra.mxu0 %v736
      %v757 = vpop.f32.mrf.mxu0
      %v758 = vadd.f32 0.0, %v757
      %759 = vdwg.mxu0
      %v760 = vlaneseq
      %v761 = vshrl.u32 %v760, 7
      %v762 = vlaneseq
      %v763 = vand.u32 %v762, 127
      %vm764 = vcmp.gt.s32.totalorder %v763, %v761
      %v765 = vsel %vm764, -inf, %v758
      %v766 = vsel %vm734, %v765, -inf
      %767 = vmax.xlane.f32.xlu0 %v766
      %v768 = vpop.xlane.xlu0 %767
      %v769 = vsub.f32 %v765, %v768
      %v770 = vmul.f32 %v769, 1.442695
      %v771 = vpow.pop %v770
      %v772 = vsel %vm734, %v771, 0.0
      %773 = vadd.xlane.f32.xlu0 %v772
      %v774 = vpop.xlane.xlu0 %773
      %v775 = vrcp.pop %v774
      %v776 = vmul.f32 %v771, %v775
      %777 = vrot.lane.b32.xlu0 %v728, 64
      %v778 = vpop.permute.xlu0 %777
      %v781 = vsel %vm734, %v776, 0
      %783 = vmatpush.msra.mxu0 0.0
      %784 = vmatpush.msra.mxu0 0.0
      %785 = vmatpush.msra.mxu0 0.0
      %786 = vmatpush.msra.mxu0 0.0
      %787 = vmatpush.msra.mxu0 0.0
      %788 = vmatpush.msra.mxu0 0.0
      %789 = vmatpush.msra.mxu0 0.0
      %790 = vmatpush.msra.mxu0 0.0
      %791 = vmatpush.msra.mxu0 0.0
      %792 = vmatpush.msra.mxu0 0.0
      %793 = vmatpush.msra.mxu0 0.0
      %794 = vmatpush.msra.mxu0 0.0
      %795 = vmatpush.msra.mxu0 0.0
      %796 = vmatpush.msra.mxu0 0.0
      %797 = vmatpush.msra.mxu0 0.0
      %798 = vmatpush.msra.mxu0 %v778
      %799 = vmatmul.f32.gmra.mxu0 %v781
      %v800 = vpop.f32.mrf.mxu0
      %v801 = vadd.f32 0.0, %v800
      %802 = vdwg.mxu0
      %803 = vrot.lane.b32.xlu0 %v730, 120
      %v804 = vpop.permute.xlu0 %803
      %805 = vrot.lane.b32.xlu0 %v728, 88
      %v806 = vpop.permute.xlu0 %805
      %v807 = vsel %vm734, %v804, 0
      %v809 = vsel %vm734, %v806, 0
      %811 = vmatpush.xpose.msra.mxu0 0.0
      %812 = vmatpush.xpose.msra.mxu0 0.0
      %813 = vmatpush.xpose.msra.mxu0 0.0
      %814 = vmatpush.xpose.msra.mxu0 0.0
      %815 = vmatpush.xpose.msra.mxu0 0.0
      %816 = vmatpush.xpose.msra.mxu0 0.0
      %817 = vmatpush.xpose.msra.mxu0 0.0
      %818 = vmatpush.xpose.msra.mxu0 0.0
      %819 = vmatpush.xpose.msra.mxu0 0.0
      %820 = vmatpush.xpose.msra.mxu0 0.0
      %821 = vmatpush.xpose.msra.mxu0 0.0
      %822 = vmatpush.xpose.msra.mxu0 0.0
      %823 = vmatpush.xpose.msra.mxu0 0.0
      %824 = vmatpush.xpose.msra.mxu0 0.0
      %825 = vmatpush.xpose.msra.mxu0 0.0
      %826 = vmatpush.xpose.msra.mxu0 %v809
      %827 = vmatmul.f32.gmra.mxu0 %v807
      %v828 = vpop.f32.mrf.mxu0
      %v829 = vadd.f32 0.0, %v828
      %830 = vdwg.mxu0
      %v831 = vsel %vm764, -inf, %v829
      %v832 = vsel %vm734, %v831, -inf
      %833 = vmax.xlane.f32.xlu0 %v832
      %v834 = vpop.xlane.xlu0 %833
      %v835 = vsub.f32 %v831, %v834
      %v836 = vmul.f32 %v835, 1.442695
      %v837 = vpow.pop %v836
      %v838 = vsel %vm734, %v837, 0.0
      %839 = vadd.xlane.f32.xlu0 %v838
      %v840 = vpop.xlane.xlu0 %839
      %v841 = vrcp.pop %v840
      %v842 = vmul.f32 %v837, %v841
      %843 = vrot.lane.b32.xlu0 %v728, 56
      %v844 = vpop.permute.xlu0 %843
      %v847 = vsel %vm734, %v842, 0
      %849 = vmatpush.msra.mxu0 0.0
      %850 = vmatpush.msra.mxu0 0.0
      %851 = vmatpush.msra.mxu0 0.0
      %852 = vmatpush.msra.mxu0 0.0
      %853 = vmatpush.msra.mxu0 0.0
      %854 = vmatpush.msra.mxu0 0.0
      %855 = vmatpush.msra.mxu0 0.0
      %856 = vmatpush.msra.mxu0 0.0
      %857 = vmatpush.msra.mxu0 0.0
      %858 = vmatpush.msra.mxu0 0.0
      %859 = vmatpush.msra.mxu0 0.0
      %860 = vmatpush.msra.mxu0 0.0
      %861 = vmatpush.msra.mxu0 0.0
      %862 = vmatpush.msra.mxu0 0.0
      %863 = vmatpush.msra.mxu0 0.0
      %864 = vmatpush.msra.mxu0 %v844
      %865 = vmatmul.f32.gmra.mxu0 %v847
      %v866 = vpop.f32.mrf.mxu0
      %v867 = vadd.f32 0.0, %v866
      %868 = vdwg.mxu0
      %869 = vrot.lane.b32.xlu0 %v730, 112
      %v870 = vpop.permute.xlu0 %869
      %871 = vrot.lane.b32.xlu0 %v728, 80
      %v872 = vpop.permute.xlu0 %871
      %v873 = vsel %vm734, %v870, 0
      %v875 = vsel %vm734, %v872, 0
      %877 = vmatpush.xpose.msra.mxu0 0.0
      %878 = vmatpush.xpose.msra.mxu0 0.0
      %879 = vmatpush.xpose.msra.mxu0 0.0
      %880 = vmatpush.xpose.msra.mxu0 0.0
      %881 = vmatpush.xpose.msra.mxu0 0.0
      %882 = vmatpush.xpose.msra.mxu0 0.0
      %883 = vmatpush.xpose.msra.mxu0 0.0
      %884 = vmatpush.xpose.msra.mxu0 0.0
      %885 = vmatpush.xpose.msra.mxu0 0.0
      %886 = vmatpush.xpose.msra.mxu0 0.0
      %887 = vmatpush.xpose.msra.mxu0 0.0
      %888 = vmatpush.xpose.msra.mxu0 0.0
      %889 = vmatpush.xpose.msra.mxu0 0.0
      %890 = vmatpush.xpose.msra.mxu0 0.0
      %891 = vmatpush.xpose.msra.mxu0 0.0
      %892 = vmatpush.xpose.msra.mxu0 %v875
      %893 = vmatmul.f32.gmra.mxu0 %v873
      %v894 = vpop.f32.mrf.mxu0
      %v895 = vadd.f32 0.0, %v894
      %896 = vdwg.mxu0
      %v897 = vsel %vm764, -inf, %v895
      %v898 = vsel %vm734, %v897, -inf
      %899 = vmax.xlane.f32.xlu0 %v898
      %v900 = vpop.xlane.xlu0 %899
      %v901 = vsub.f32 %v897, %v900
      %v902 = vmul.f32 %v901, 1.442695
      %v903 = vpow.pop %v902
      %v904 = vsel %vm734, %v903, 0.0
      %905 = vadd.xlane.f32.xlu0 %v904
      %v906 = vpop.xlane.xlu0 %905
      %v907 = vrcp.pop %v906
      %v908 = vmul.f32 %v903, %v907
      %909 = vrot.lane.b32.xlu0 %v728, 48
      %v910 = vpop.permute.xlu0 %909
      %v913 = vsel %vm734, %v908, 0
      %915 = vmatpush.msra.mxu0 0.0
      %916 = vmatpush.msra.mxu0 0.0
      %917 = vmatpush.msra.mxu0 0.0
      %918 = vmatpush.msra.mxu0 0.0
      %919 = vmatpush.msra.mxu0 0.0
      %920 = vmatpush.msra.mxu0 0.0
      %921 = vmatpush.msra.mxu0 0.0
      %922 = vmatpush.msra.mxu0 0.0
      %923 = vmatpush.msra.mxu0 0.0
      %924 = vmatpush.msra.mxu0 0.0
      %925 = vmatpush.msra.mxu0 0.0
      %926 = vmatpush.msra.mxu0 0.0
      %927 = vmatpush.msra.mxu0 0.0
      %928 = vmatpush.msra.mxu0 0.0
      %929 = vmatpush.msra.mxu0 0.0
      %930 = vmatpush.msra.mxu0 %v910
      %931 = vmatmul.f32.gmra.mxu0 %v913
      %v932 = vpop.f32.mrf.mxu0
      %v933 = vadd.f32 0.0, %v932
      %934 = vdwg.mxu0
      %935 = vrot.lane.b32.xlu0 %v730, 104
      %v936 = vpop.permute.xlu0 %935
      %937 = vrot.lane.b32.xlu0 %v728, 72
      %v938 = vpop.permute.xlu0 %937
      %v939 = vsel %vm734, %v936, 0
      %v941 = vsel %vm734, %v938, 0
      %943 = vmatpush.xpose.msra.mxu0 0.0
      %944 = vmatpush.xpose.msra.mxu0 0.0
      %945 = vmatpush.xpose.msra.mxu0 0.0
      %946 = vmatpush.xpose.msra.mxu0 0.0
      %947 = vmatpush.xpose.msra.mxu0 0.0
      %948 = vmatpush.xpose.msra.mxu0 0.0
      %949 = vmatpush.xpose.msra.mxu0 0.0
      %950 = vmatpush.xpose.msra.mxu0 0.0
      %951 = vmatpush.xpose.msra.mxu0 0.0
      %952 = vmatpush.xpose.msra.mxu0 0.0
      %953 = vmatpush.xpose.msra.mxu0 0.0
      %954 = vmatpush.xpose.msra.mxu0 0.0
      %955 = vmatpush.xpose.msra.mxu0 0.0
      %956 = vmatpush.xpose.msra.mxu0 0.0
      %957 = vmatpush.xpose.msra.mxu0 0.0
      %958 = vmatpush.xpose.msra.mxu0 %v941
      %959 = vmatmul.f32.gmra.mxu0 %v939
      %v960 = vpop.f32.mrf.mxu0
      %v961 = vadd.f32 0.0, %v960
      %962 = vdwg.mxu0
      %v963 = vsel %vm764, -inf, %v961
      %v964 = vsel %vm734, %v963, -inf
      %965 = vmax.xlane.f32.xlu0 %v964
      %v966 = vpop.xlane.xlu0 %965
      %v967 = vsub.f32 %v963, %v966
      %v968 = vmul.f32 %v967, 1.442695
      %v969 = vpow.pop %v968
      %v970 = vsel %vm734, %v969, 0.0
      %971 = vadd.xlane.f32.xlu0 %v970
      %v972 = vpop.xlane.xlu0 %971
      %v973 = vrcp.pop %v972
      %v974 = vmul.f32 %v969, %v973
      %975 = vrot.lane.b32.xlu0 %v728, 40
      %v976 = vpop.permute.xlu0 %975
      %v979 = vsel %vm734, %v974, 0
      %981 = vmatpush.msra.mxu0 0.0
      %982 = vmatpush.msra.mxu0 0.0
      %983 = vmatpush.msra.mxu0 0.0
      %984 = vmatpush.msra.mxu0 0.0
      %985 = vmatpush.msra.mxu0 0.0
      %986 = vmatpush.msra.mxu0 0.0
      %987 = vmatpush.msra.mxu0 0.0
      %988 = vmatpush.msra.mxu0 0.0
      %989 = vmatpush.msra.mxu0 0.0
      %990 = vmatpush.msra.mxu0 0.0
      %991 = vmatpush.msra.mxu0 0.0
      %992 = vmatpush.msra.mxu0 0.0
      %993 = vmatpush.msra.mxu0 0.0
      %994 = vmatpush.msra.mxu0 0.0
      %995 = vmatpush.msra.mxu0 0.0
      %996 = vmatpush.msra.mxu0 %v976
      %997 = vmatmul.f32.gmra.mxu0 %v979
      %v998 = vpop.f32.mrf.mxu0
      %v999 = vadd.f32 0.0, %v998
      %1000 = vdwg.mxu0
      %1002 = vrot.lane.b32.xlu0 %v867, 8
      %v1003 = vpop.permute.xlu0 %1002
      %1006 = vrot.lane.b32.xlu0 %v933, 16
      %v1007 = vpop.permute.xlu0 %1006
      %1010 = vrot.lane.b32.xlu0 %v999, 24
      %v1011 = vpop.permute.xlu0 %1010
      %v1013 = vsel %vm734, %v801, %v1003
      %vm1014 = vcmask 130048
      %v1015 = vsel %vm1014, %v1013, %v1007
      %vm1016 = vcmask 195584
      %v1017 = vsel %vm1016, %v1015, %v1011
      %v1018 = vld [vmem:[%s4] sm:$0xff]
      %v1019 = vld [vmem:[%s4 + $0x8] sm:$0xff]
      %v1020 = vld [vmem:[%s4 + $0x10] sm:$0xff]
      %v1021 = vld [vmem:[%s4 + $0x18] sm:$0xff]
      %v1022 = vld [vmem:[%s5] sm:$0x1]
      %v1024 = vperm.slane %v1022, 0
      %v1027 = vsel %vm706, %v1017, 0
      %1029 = vmatpush.msra.mxu0 0.0
      %1030 = vmatpush.msra.mxu0 0.0
      %1031 = vmatpush.msra.mxu0 0.0
      %1032 = vmatpush.msra.mxu0 0.0
      %1033 = vmatpush.msra.mxu0 0.0
      %1034 = vmatpush.msra.mxu0 0.0
      %1035 = vmatpush.msra.mxu0 0.0
      %1036 = vmatpush.msra.mxu0 0.0
      %1037 = vmatpush.msra.mxu0 0.0
      %1038 = vmatpush.msra.mxu0 0.0
      %1039 = vmatpush.msra.mxu0 0.0
      %1040 = vmatpush.msra.mxu0 0.0
      %1041 = vmatpush.msra.mxu0 %v1021
      %1042 = vmatpush.msra.mxu0 %v1020
      %1043 = vmatpush.msra.mxu0 %v1019
      %1044 = vmatpush.msra.mxu0 %v1018
      %1045 = vmatmul.f32.gmra.mxu0 %v1027
      %v1046 = vpop.f32.mrf.mxu0
      %v1047 = vadd.f32 %v1024, %v1046
      %1048 = vdwg.mxu0
      %v1049 = vld [vmem:[%s6] sm:$0x1]
      %v1050 = vld [vmem:[%s7] sm:$0x1]
      %v1051 = vadd.f32 %v1047, %v696
      %v1052 = vsel %vm706, %v1051, 0.0
      %1053 = vadd.xlane.f32.xlu0 %v1052
      %v1054 = vpop.xlane.xlu0 %1053
      %v1055 = vrcp.pop 32.0
      %v1056 = vmul.f32 32.0, %v1055
      %v1057 = vsub.f32 1.0, %v1056
      %v1058 = vmul.f32 %v1055, %v1057
      %v1059 = vadd.f32 %v1055, %v1058
      %vm1060 = vweird.f32 %v1055
      %v1061 = vsel %vm1060, %v1055, %v1059
      %v1062 = vmul.f32 %v1054, %v1061
      %v1063 = vsub.f32 %v1051, %v1062
      %v1064 = vmul.f32 %v1063, %v1063
      %v1065 = vsel %vm706, %v1064, 0.0
      %1066 = vadd.xlane.f32.xlu0 %v1065
      %v1067 = vpop.xlane.xlu0 %1066
      %v1068 = vmul.f32 %v1067, %v1061
      %v1069 = vadd.f32 %v1068, 1e-05
      %v1070 = vrsqrt.pop %v1069
      %v1071 = vmul.f32 %v1070, %v1069
      %v1072 = vmul.f32 %v1071, %v1070
      %v1073 = vmul.f32 0.5, %v1072
      %v1074 = vsub.f32 1.5, %v1073
      %v1075 = vmul.f32 %v1070, %v1074
      %vm1076 = vweird.f32 %v1069
      %vm1077 = vweird.f32 %v1070
      %vm1078 = vmor %vm1076, %vm1077
      %v1079 = vsel %vm1078, %v1070, %v1075
      %v1080 = vmul.f32 %v1063, %v1079
      %v1082 = vperm.slane %v1049, 0
      %v1084 = vmul.f32 %v1080, %v1082
      %v1086 = vperm.slane %v1050, 0
      %v1088 = vadd.f32 %v1084, %v1086
      %v1089 = vld [vmem:[%s8] sm:$0xff]
      %v1090 = vld [vmem:[%s8 + $0x8] sm:$0xff]
      %v1091 = vld [vmem:[%s8 + $0x10] sm:$0xff]
      %v1092 = vld [vmem:[%s8 + $0x18] sm:$0xff]
      %v1093 = vld [vmem:[%s9] sm:$0x1]
      %v1095 = vperm.slane %v1093, 0
      %v1098 = vsel %vm706, %v1088, 0
      %1100 = vmatpush.msra.mxu0 0.0
      %1101 = vmatpush.msra.mxu0 0.0
      %1102 = vmatpush.msra.mxu0 0.0
      %1103 = vmatpush.msra.mxu0 0.0
      %1104 = vmatpush.msra.mxu0 0.0
      %1105 = vmatpush.msra.mxu0 0.0
      %1106 = vmatpush.msra.mxu0 0.0
      %1107 = vmatpush.msra.mxu0 0.0
      %1108 = vmatpush.msra.mxu0 0.0
      %1109 = vmatpush.msra.mxu0 0.0
      %1110 = vmatpush.msra.mxu0 0.0
      %1111 = vmatpush.msra.mxu0 0.0
      %1112 = vmatpush.msra.mxu0 %v1092
      %1113 = vmatpush.msra.mxu0 %v1091
      %1114 = vmatpush.msra.mxu0 %v1090
      %1115 = vmatpush.msra.mxu0 %v1089
      %1116 = vmatmul.f32.gmra.mxu0 %v1098
      %v1117 = vpop.f32.mrf.mxu0
      %v1118 = vadd.f32 %v1095, %v1117
      %1119 = vdwg.mxu0
      %v1120 = vmul.f32 %v1118, 0.35355338
      %v1121 = vld [vmem:[%s10] sm:$0xff]
      %v1122 = vld [vmem:[%s10 + $0x8] sm:$0xff]
      %v1123 = vld [vmem:[%s10 + $0x10] sm:$0xff]
      %v1124 = vld [vmem:[%s10 + $0x18] sm:$0xff]
      %v1125 = vld [vmem:[%s11] sm:$0x1]
      %v1127 = vperm.slane %v1125, 0
      %v1130 = vsel %vm706, %v697, 0
      %1132 = vmatpush.msra.mxu0 0.0
      %1133 = vmatpush.msra.mxu0 0.0
      %1134 = vmatpush.msra.mxu0 0.0
      %1135 = vmatpush.msra.mxu0 0.0
      %1136 = vmatpush.msra.mxu0 0.0
      %1137 = vmatpush.msra.mxu0 0.0
      %1138 = vmatpush.msra.mxu0 0.0
      %1139 = vmatpush.msra.mxu0 0.0
      %1140 = vmatpush.msra.mxu0 0.0
      %1141 = vmatpush.msra.mxu0 0.0
      %1142 = vmatpush.msra.mxu0 0.0
      %1143 = vmatpush.msra.mxu0 0.0
      %1144 = vmatpush.msra.mxu0 %v1124
      %1145 = vmatpush.msra.mxu0 %v1123
      %1146 = vmatpush.msra.mxu0 %v1122
      %1147 = vmatpush.msra.mxu0 %v1121
      %1148 = vmatmul.f32.gmra.mxu0 %v1130
      %v1149 = vpop.f32.mrf.mxu0
      %v1150 = vadd.f32 %v1127, %v1149
      %1151 = vdwg.mxu0
      %v1153 = vsel %vm734, %v1120, 0
      %v1156 = vsel %vm734, %v1150, 0
      %1158 = vmatpush.xpose.msra.mxu0 0.0
      %1159 = vmatpush.xpose.msra.mxu0 0.0
      %1160 = vmatpush.xpose.msra.mxu0 0.0
      %1161 = vmatpush.xpose.msra.mxu0 0.0
      %1162 = vmatpush.xpose.msra.mxu0 0.0
      %1163 = vmatpush.xpose.msra.mxu0 0.0
      %1164 = vmatpush.xpose.msra.mxu0 0.0
      %1165 = vmatpush.xpose.msra.mxu0 0.0
      %1166 = vmatpush.xpose.msra.mxu0 0.0
      %1167 = vmatpush.xpose.msra.mxu0 0.0
      %1168 = vmatpush.xpose.msra.mxu0 0.0
      %1169 = vmatpush.xpose.msra.mxu0 0.0
      %1170 = vmatpush.xpose.msra.mxu0 0.0
      %1171 = vmatpush.xpose.msra.mxu0 0.0
      %1172 = vmatpush.xpose.msra.mxu0 0.0
      %1173 = vmatpush.xpose.msra.mxu0 %v1156
      %1174 = vmatmul.f32.gmra.mxu0 %v1153
      %v1175 = vpop.f32.mrf.mxu0
      %v1176 = vadd.f32 0.0, %v1175
      %1177 = vdwg.mxu0
      %v1178 = vsel %vm734, %v1176, -inf
      %1179 = vmax.xlane.f32.xlu0 %v1178
      %v1180 = vpop.xlane.xlu0 %1179
      %v1181 = vsub.f32 %v1176, %v1180
      %v1182 = vmul.f32 %v1181, 1.442695
      %v1183 = vpow.pop %v1182
      %v1184 = vsel %vm734, %v1183, 0.0
      %1185 = vadd.xlane.f32.xlu0 %v1184
      %v1186 = vpop.xlane.xlu0 %1185
      %v1187 = vrcp.pop %v1186
      %v1188 = vmul.f32 %v1183, %v1187
      %1189 = vrot.lane.b32.xlu0 %v1150, 96
      %v1190 = vpop.permute.xlu0 %1189
      %v1193 = vsel %vm734, %v1188, 0
      %1195 = vmatpush.msra.mxu0 0.0
      %1196 = vmatpush.msra.mxu0 0.0
      %1197 = vmatpush.msra.mxu0 0.0
      %1198 = vmatpush.msra.mxu0 0.0
      %1199 = vmatpush.msra.mxu0 0.0
      %1200 = vmatpush.msra.mxu0 0.0
      %1201 = vmatpush.msra.mxu0 0.0
      %1202 = vmatpush.msra.mxu0 0.0
      %1203 = vmatpush.msra.mxu0 0.0
      %1204 = vmatpush.msra.mxu0 0.0
      %1205 = vmatpush.msra.mxu0 0.0
      %1206 = vmatpush.msra.mxu0 0.0
      %1207 = vmatpush.msra.mxu0 0.0
      %1208 = vmatpush.msra.mxu0 0.0
      %1209 = vmatpush.msra.mxu0 0.0
      %1210 = vmatpush.msra.mxu0 %v1190
      %1211 = vmatmul.f32.gmra.mxu0 %v1193
      %v1212 = vpop.f32.mrf.mxu0
      %v1213 = vadd.f32 0.0, %v1212
      %1214 = vdwg.mxu0
      %1215 = vrot.lane.b32.xlu0 %v1120, 120
      %v1216 = vpop.permute.xlu0 %1215
      %1217 = vrot.lane.b32.xlu0 %v1150, 120
      %v1218 = vpop.permute.xlu0 %1217
      %v1219 = vsel %vm734, %v1216, 0
      %v1221 = vsel %vm734, %v1218, 0
      %1223 = vmatpush.xpose.msra.mxu0 0.0
      %1224 = vmatpush.xpose.msra.mxu0 0.0
      %1225 = vmatpush.xpose.msra.mxu0 0.0
      %1226 = vmatpush.xpose.msra.mxu0 0.0
      %1227 = vmatpush.xpose.msra.mxu0 0.0
      %1228 = vmatpush.xpose.msra.mxu0 0.0
      %1229 = vmatpush.xpose.msra.mxu0 0.0
      %1230 = vmatpush.xpose.msra.mxu0 0.0
      %1231 = vmatpush.xpose.msra.mxu0 0.0
      %1232 = vmatpush.xpose.msra.mxu0 0.0
      %1233 = vmatpush.xpose.msra.mxu0 0.0
      %1234 = vmatpush.xpose.msra.mxu0 0.0
      %1235 = vmatpush.xpose.msra.mxu0 0.0
      %1236 = vmatpush.xpose.msra.mxu0 0.0
      %1237 = vmatpush.xpose.msra.mxu0 0.0
      %1238 = vmatpush.xpose.msra.mxu0 %v1221
      %1239 = vmatmul.f32.gmra.mxu0 %v1219
      %v1240 = vpop.f32.mrf.mxu0
      %v1241 = vadd.f32 0.0, %v1240
      %1242 = vdwg.mxu0
      %v1243 = vsel %vm734, %v1241, -inf
      %1244 = vmax.xlane.f32.xlu0 %v1243
      %v1245 = vpop.xlane.xlu0 %1244
      %v1246 = vsub.f32 %v1241, %v1245
      %v1247 = vmul.f32 %v1246, 1.442695
      %v1248 = vpow.pop %v1247
      %v1249 = vsel %vm734, %v1248, 0.0
      %1250 = vadd.xlane.f32.xlu0 %v1249
      %v1251 = vpop.xlane.xlu0 %1250
      %v1252 = vrcp.pop %v1251
      %v1253 = vmul.f32 %v1248, %v1252
      %1254 = vrot.lane.b32.xlu0 %v1150, 88
      %v1255 = vpop.permute.xlu0 %1254
      %v1258 = vsel %vm734, %v1253, 0
      %1260 = vmatpush.msra.mxu0 0.0
      %1261 = vmatpush.msra.mxu0 0.0
      %1262 = vmatpush.msra.mxu0 0.0
      %1263 = vmatpush.msra.mxu0 0.0
      %1264 = vmatpush.msra.mxu0 0.0
      %1265 = vmatpush.msra.mxu0 0.0
      %1266 = vmatpush.msra.mxu0 0.0
      %1267 = vmatpush.msra.mxu0 0.0
      %1268 = vmatpush.msra.mxu0 0.0
      %1269 = vmatpush.msra.mxu0 0.0
      %1270 = vmatpush.msra.mxu0 0.0
      %1271 = vmatpush.msra.mxu0 0.0
      %1272 = vmatpush.msra.mxu0 0.0
      %1273 = vmatpush.msra.mxu0 0.0
      %1274 = vmatpush.msra.mxu0 0.0
      %1275 = vmatpush.msra.mxu0 %v1255
      %1276 = vmatmul.f32.gmra.mxu0 %v1258
      %v1277 = vpop.f32.mrf.mxu0
      %v1278 = vadd.f32 0.0, %v1277
      %1279 = vdwg.mxu0
      %1280 = vrot.lane.b32.xlu0 %v1120, 112
      %v1281 = vpop.permute.xlu0 %1280
      %1282 = vrot.lane.b32.xlu0 %v1150, 112
      %v1283 = vpop.permute.xlu0 %1282
      %v1284 = vsel %vm734, %v1281, 0
      %v1286 = vsel %vm734, %v1283, 0
      %1288 = vmatpush.xpose.msra.mxu0 0.0
      %1289 = vmatpush.xpose.msra.mxu0 0.0
      %1290 = vmatpush.xpose.msra.mxu0 0.0
      %1291 = vmatpush.xpose.msra.mxu0 0.0
      %1292 = vmatpush.xpose.msra.mxu0 0.0
      %1293 = vmatpush.xpose.msra.mxu0 0.0
      %1294 = vmatpush.xpose.msra.mxu0 0.0
      %1295 = vmatpush.xpose.msra.mxu0 0.0
      %1296 = vmatpush.xpose.msra.mxu0 0.0
      %1297 = vmatpush.xpose.msra.mxu0 0.0
      %1298 = vmatpush.xpose.msra.mxu0 0.0
      %1299 = vmatpush.xpose.msra.mxu0 0.0
      %1300 = vmatpush.xpose.msra.mxu0 0.0
      %1301 = vmatpush.xpose.msra.mxu0 0.0
      %1302 = vmatpush.xpose.msra.mxu0 0.0
      %1303 = vmatpush.xpose.msra.mxu0 %v1286
      %1304 = vmatmul.f32.gmra.mxu0 %v1284
      %v1305 = vpop.f32.mrf.mxu0
      %v1306 = vadd.f32 0.0, %v1305
      %1307 = vdwg.mxu0
      %v1308 = vsel %vm734, %v1306, -inf
      %1309 = vmax.xlane.f32.xlu0 %v1308
      %v1310 = vpop.xlane.xlu0 %1309
      %v1311 = vsub.f32 %v1306, %v1310
      %v1312 = vmul.f32 %v1311, 1.442695
      %v1313 = vpow.pop %v1312
      %v1314 = vsel %vm734, %v1313, 0.0
      %1315 = vadd.xlane.f32.xlu0 %v1314
      %v1316 = vpop.xlane.xlu0 %1315
      %v1317 = vrcp.pop %v1316
      %v1318 = vmul.f32 %v1313, %v1317
      %1319 = vrot.lane.b32.xlu0 %v1150, 80
      %v1320 = vpop.permute.xlu0 %1319
      %v1323 = vsel %vm734, %v1318, 0
      %1325 = vmatpush.msra.mxu0 0.0
      %1326 = vmatpush.msra.mxu0 0.0
      %1327 = vmatpush.msra.mxu0 0.0
      %1328 = vmatpush.msra.mxu0 0.0
      %1329 = vmatpush.msra.mxu0 0.0
      %1330 = vmatpush.msra.mxu0 0.0
      %1331 = vmatpush.msra.mxu0 0.0
      %1332 = vmatpush.msra.mxu0 0.0
      %1333 = vmatpush.msra.mxu0 0.0
      %1334 = vmatpush.msra.mxu0 0.0
      %1335 = vmatpush.msra.mxu0 0.0
      %1336 = vmatpush.msra.mxu0 0.0
      %1337 = vmatpush.msra.mxu0 0.0
      %1338 = vmatpush.msra.mxu0 0.0
      %1339 = vmatpush.msra.mxu0 0.0
      %1340 = vmatpush.msra.mxu0 %v1320
      %1341 = vmatmul.f32.gmra.mxu0 %v1323
      %v1342 = vpop.f32.mrf.mxu0
      %v1343 = vadd.f32 0.0, %v1342
      %1344 = vdwg.mxu0
      %1345 = vrot.lane.b32.xlu0 %v1120, 104
      %v1346 = vpop.permute.xlu0 %1345
      %1347 = vrot.lane.b32.xlu0 %v1150, 104
      %v1348 = vpop.permute.xlu0 %1347
      %v1349 = vsel %vm734, %v1346, 0
      %v1351 = vsel %vm734, %v1348, 0
      %1353 = vmatpush.xpose.msra.mxu0 0.0
      %1354 = vmatpush.xpose.msra.mxu0 0.0
      %1355 = vmatpush.xpose.msra.mxu0 0.0
      %1356 = vmatpush.xpose.msra.mxu0 0.0
      %1357 = vmatpush.xpose.msra.mxu0 0.0
      %1358 = vmatpush.xpose.msra.mxu0 0.0
      %1359 = vmatpush.xpose.msra.mxu0 0.0
      %1360 = vmatpush.xpose.msra.mxu0 0.0
      %1361 = vmatpush.xpose.msra.mxu0 0.0
      %1362 = vmatpush.xpose.msra.mxu0 0.0
      %1363 = vmatpush.xpose.msra.mxu0 0.0
      %1364 = vmatpush.xpose.msra.mxu0 0.0
      %1365 = vmatpush.xpose.msra.mxu0 0.0
      %1366 = vmatpush.xpose.msra.mxu0 0.0
      %1367 = vmatpush.xpose.msra.mxu0 0.0
      %1368 = vmatpush.xpose.msra.mxu0 %v1351
      %1369 = vmatmul.f32.gmra.mxu0 %v1349
      %v1370 = vpop.f32.mrf.mxu0
      %v1371 = vadd.f32 0.0, %v1370
      %1372 = vdwg.mxu0
      %v1373 = vsel %vm734, %v1371, -inf
      %1374 = vmax.xlane.f32.xlu0 %v1373
      %v1375 = vpop.xlane.xlu0 %1374
      %v1376 = vsub.f32 %v1371, %v1375
      %v1377 = vmul.f32 %v1376, 1.442695
      %v1378 = vpow.pop %v1377
      %v1379 = vsel %vm734, %v1378, 0.0
      %1380 = vadd.xlane.f32.xlu0 %v1379
      %v1381 = vpop.xlane.xlu0 %1380
      %v1382 = vrcp.pop %v1381
      %v1383 = vmul.f32 %v1378, %v1382
      %1384 = vrot.lane.b32.xlu0 %v1150, 72
      %v1385 = vpop.permute.xlu0 %1384
      %v1388 = vsel %vm734, %v1383, 0
      %1390 = vmatpush.msra.mxu0 0.0
      %1391 = vmatpush.msra.mxu0 0.0
      %1392 = vmatpush.msra.mxu0 0.0
      %1393 = vmatpush.msra.mxu0 0.0
      %1394 = vmatpush.msra.mxu0 0.0
      %1395 = vmatpush.msra.mxu0 0.0
      %1396 = vmatpush.msra.mxu0 0.0
      %1397 = vmatpush.msra.mxu0 0.0
      %1398 = vmatpush.msra.mxu0 0.0
      %1399 = vmatpush.msra.mxu0 0.0
      %1400 = vmatpush.msra.mxu0 0.0
      %1401 = vmatpush.msra.mxu0 0.0
      %1402 = vmatpush.msra.mxu0 0.0
      %1403 = vmatpush.msra.mxu0 0.0
      %1404 = vmatpush.msra.mxu0 0.0
      %1405 = vmatpush.msra.mxu0 %v1385
      %1406 = vmatmul.f32.gmra.mxu0 %v1388
      %v1407 = vpop.f32.mrf.mxu0
      %v1408 = vadd.f32 0.0, %v1407
      %1409 = vdwg.mxu0
      %1411 = vrot.lane.b32.xlu0 %v1278, 8
      %v1412 = vpop.permute.xlu0 %1411
      %1415 = vrot.lane.b32.xlu0 %v1343, 16
      %v1416 = vpop.permute.xlu0 %1415
      %1419 = vrot.lane.b32.xlu0 %v1408, 24
      %v1420 = vpop.permute.xlu0 %1419
      %v1422 = vsel %vm734, %v1213, %v1412
      %v1423 = vsel %vm1014, %v1422, %v1416
      %v1424 = vsel %vm1016, %v1423, %v1420
      %v1425 = vld [vmem:[%s12] sm:$0xff]
      %v1426 = vld [vmem:[%s12 + $0x8] sm:$0xff]
      %v1427 = vld [vmem:[%s12 + $0x10] sm:$0xff]
      %v1428 = vld [vmem:[%s12 + $0x18] sm:$0xff]
      %v1429 = vld [vmem:[%s13] sm:$0x1]
      %v1431 = vperm.slane %v1429, 0
      %v1434 = vsel %vm706, %v1424, 0
      %1436 = vmatpush.msra.mxu0 0.0
      %1437 = vmatpush.msra.mxu0 0.0
      %1438 = vmatpush.msra.mxu0 0.0
      %1439 = vmatpush.msra.mxu0 0.0
      %1440 = vmatpush.msra.mxu0 0.0
      %1441 = vmatpush.msra.mxu0 0.0
      %1442 = vmatpush.msra.mxu0 0.0
      %1443 = vmatpush.msra.mxu0 0.0
      %1444 = vmatpush.msra.mxu0 0.0
      %1445 = vmatpush.msra.mxu0 0.0
      %1446 = vmatpush.msra.mxu0 0.0
      %1447 = vmatpush.msra.mxu0 0.0
      %1448 = vmatpush.msra.mxu0 %v1428
      %1449 = vmatpush.msra.mxu0 %v1427
      %1450 = vmatpush.msra.mxu0 %v1426
      %1451 = vmatpush.msra.mxu0 %v1425
      %1452 = vmatmul.f32.gmra.mxu0 %v1434
      %v1453 = vpop.f32.mrf.mxu0
      %v1454 = vadd.f32 %v1431, %v1453
      %1455 = vdwg.mxu0
      %v1456 = vld [vmem:[%s14] sm:$0x1]
      %v1457 = vld [vmem:[%s15] sm:$0x1]
      %v1458 = vadd.f32 %v1454, %v1088
      %v1459 = vsel %vm706, %v1458, 0.0
      %1460 = vadd.xlane.f32.xlu0 %v1459
      %v1461 = vpop.xlane.xlu0 %1460
      %v1462 = vmul.f32 %v1461, %v1061
      %v1463 = vsub.f32 %v1458, %v1462
      %v1464 = vmul.f32 %v1463, %v1463
      %v1465 = vsel %vm706, %v1464, 0.0
      %1466 = vadd.xlane.f32.xlu0 %v1465
      %v1467 = vpop.xlane.xlu0 %1466
      %v1468 = vmul.f32 %v1467, %v1061
      %v1469 = vadd.f32 %v1468, 1e-05
      %v1470 = vrsqrt.pop %v1469
      %v1471 = vmul.f32 %v1470, %v1469
      %v1472 = vmul.f32 %v1471, %v1470
      %v1473 = vmul.f32 0.5, %v1472
      %v1474 = vsub.f32 1.5, %v1473
      %v1475 = vmul.f32 %v1470, %v1474
      %vm1476 = vweird.f32 %v1469
      %vm1477 = vweird.f32 %v1470
      %vm1478 = vmor %vm1476, %vm1477
      %v1479 = vsel %vm1478, %v1470, %v1475
      %v1480 = vmul.f32 %v1463, %v1479
      %v1482 = vperm.slane %v1456, 0
      %v1484 = vmul.f32 %v1480, %v1482
      %v1486 = vperm.slane %v1457, 0
      %v1488 = vadd.f32 %v1484, %v1486
      %v1489 = vld [vmem:[%s16] sm:$0xff]
      %v1490 = vld [vmem:[%s16 + $0x8] sm:$0xff]
      %v1491 = vld [vmem:[%s16 + $0x10] sm:$0xff]
      %v1492 = vld [vmem:[%s16 + $0x18] sm:$0xff]
      %v1493 = vld [vmem:[%s16 + $0x20] sm:$0xff]
      %v1494 = vld [vmem:[%s16 + $0x28] sm:$0xff]
      %v1495 = vld [vmem:[%s16 + $0x30] sm:$0xff]
      %v1496 = vld [vmem:[%s16 + $0x38] sm:$0xff]
      %v1497 = vld [vmem:[%s16 + $0x40] sm:$0xff]
      %v1498 = vld [vmem:[%s16 + $0x48] sm:$0xff]
      %v1499 = vld [vmem:[%s16 + $0x50] sm:$0xff]
      %v1500 = vld [vmem:[%s16 + $0x58] sm:$0xff]
      %v1501 = vld [vmem:[%s16 + $0x60] sm:$0xff]
      %v1502 = vld [vmem:[%s16 + $0x68] sm:$0xff]
      %v1503 = vld [vmem:[%s16 + $0x70] sm:$0xff]
      %v1504 = vld [vmem:[%s16 + $0x78] sm:$0xff]
      %v1505 = vld [vmem:[%s16 + $0x80] sm:$0xff]
      %v1506 = vld [vmem:[%s16 + $0x88] sm:$0xff]
      %v1507 = vld [vmem:[%s16 + $0x90] sm:$0xff]
      %v1508 = vld [vmem:[%s16 + $0x98] sm:$0xff]
      %v1509 = vld [vmem:[%s16 + $0xa0] sm:$0xff]
      %v1510 = vld [vmem:[%s16 + $0xa8] sm:$0xff]
      %v1511 = vld [vmem:[%s16 + $0xb0] sm:$0xff]
      %v1512 = vld [vmem:[%s16 + $0xb8] sm:$0xff]
      %v1513 = vld [vmem:[%s16 + $0xc0] sm:$0xff]
      %v1514 = vld [vmem:[%s16 + $0xc8] sm:$0xff]
      %v1515 = vld [vmem:[%s16 + $0xd0] sm:$0xff]
      %v1516 = vld [vmem:[%s16 + $0xd8] sm:$0xff]
      %v1517 = vld [vmem:[%s16 + $0xe0] sm:$0xff]
      %v1518 = vld [vmem:[%s16 + $0xe8] sm:$0xff]
      %v1519 = vld [vmem:[%s16 + $0xf0] sm:$0xff]
      %v1520 = vld [vmem:[%s16 + $0xf8] sm:$0xff]
      %v1521 = vld [vmem:[%s16 + $0x100] sm:$0xff]
      %v1522 = vld [vmem:[%s16 + $0x108] sm:$0xff]
      %v1523 = vld [vmem:[%s16 + $0x110] sm:$0xff]
      %v1524 = vld [vmem:[%s16 + $0x118] sm:$0xff]
      %v1525 = vld [vmem:[%s16 + $0x120] sm:$0xff]
      %v1526 = vld [vmem:[%s16 + $0x128] sm:$0xff]
      %v1527 = vld [vmem:[%s16 + $0x130] sm:$0xff]
      %v1528 = vld [vmem:[%s16 + $0x138] sm:$0xff]
      %v1529 = vld [vmem:[%s16 + $0x140] sm:$0xff]
      %v1530 = vld [vmem:[%s16 + $0x148] sm:$0xff]
      %v1531 = vld [vmem:[%s16 + $0x150] sm:$0xff]
      %v1532 = vld [vmem:[%s16 + $0x158] sm:$0xff]
      %v1533 = vld [vmem:[%s16 + $0x160] sm:$0xff]
      %v1534 = vld [vmem:[%s16 + $0x168] sm:$0xff]
      %v1535 = vld [vmem:[%s16 + $0x170] sm:$0xff]
      %v1536 = vld [vmem:[%s16 + $0x178] sm:$0xff]
      %v1537 = vld [vmem:[%s16 + $0x180] sm:$0xff]
      %v1538 = vld [vmem:[%s16 + $0x188] sm:$0xff]
      %v1539 = vld [vmem:[%s16 + $0x190] sm:$0xff]
      %v1540 = vld [vmem:[%s16 + $0x198] sm:$0xff]
      %v1541 = vld [vmem:[%s16 + $0x1a0] sm:$0xff]
      %v1542 = vld [vmem:[%s16 + $0x1a8] sm:$0xff]
      %v1543 = vld [vmem:[%s16 + $0x1b0] sm:$0xff]
      %v1544 = vld [vmem:[%s16 + $0x1b8] sm:$0xff]
      %v1545 = vld [vmem:[%s16 + $0x1c0] sm:$0xff]
      %v1546 = vld [vmem:[%s16 + $0x1c8] sm:$0xff]
      %v1547 = vld [vmem:[%s16 + $0x1d0] sm:$0xff]
      %v1548 = vld [vmem:[%s16 + $0x1d8] sm:$0xff]
      %v1549 = vld [vmem:[%s16 + $0x1e0] sm:$0xff]
      %v1550 = vld [vmem:[%s16 + $0x1e8] sm:$0xff]
      %v1551 = vld [vmem:[%s16 + $0x1f0] sm:$0xff]
      %v1552 = vld [vmem:[%s16 + $0x1f8] sm:$0xff]
      %v1553 = vld [vmem:[%s17] sm:$0xff]
      %v1554 = vld [vmem:[%s17 + $0x8] sm:$0xff]
      %v1557 = vperm.slane %v1553, 0
      %v1558 = vperm.slane %v1553, 1
      %v1559 = vperm.slane %v1553, 2
      %v1560 = vperm.slane %v1553, 3
      %v1561 = vperm.slane %v1553, 4
      %v1562 = vperm.slane %v1553, 5
      %v1563 = vperm.slane %v1553, 6
      %v1564 = vperm.slane %v1553, 7
      %v1565 = vperm.slane %v1554, 0
      %v1566 = vperm.slane %v1554, 1
      %v1567 = vperm.slane %v1554, 2
      %v1568 = vperm.slane %v1554, 3
      %v1569 = vperm.slane %v1554, 4
      %v1570 = vperm.slane %v1554, 5
      %v1571 = vperm.slane %v1554, 6
      %v1572 = vperm.slane %v1554, 7
      %v1590 = vsel %vm706, %v1488, 0
      %1592 = vmatpush.msra.mxu0 0.0
      %1593 = vmatpush.msra.mxu0 0.0
      %1594 = vmatpush.msra.mxu0 0.0
      %1595 = vmatpush.msra.mxu0 0.0
      %1596 = vmatpush.msra.mxu0 0.0
      %1597 = vmatpush.msra.mxu0 0.0
      %1598 = vmatpush.msra.mxu0 0.0
      %1599 = vmatpush.msra.mxu0 0.0
      %1600 = vmatpush.msra.mxu0 0.0
      %1601 = vmatpush.msra.mxu0 0.0
      %1602 = vmatpush.msra.mxu0 0.0
      %1603 = vmatpush.msra.mxu0 0.0
      %1604 = vmatpush.msra.mxu0 %v1537
      %1605 = vmatpush.msra.mxu0 %v1521
      %1606 = vmatpush.msra.mxu0 %v1505
      %1607 = vmatpush.msra.mxu0 %v1489
      %1608 = vmatmul.f32.gmra.mxu0 %v1590
      %v1609 = vpop.f32.mrf.mxu0
      %v1610 = vadd.f32 %v1557, %v1609
      %1611 = vdwg.mxu0
      %1612 = vmatpush.msra.mxu0 0.0
      %1613 = vmatpush.msra.mxu0 0.0
      %1614 = vmatpush.msra.mxu0 0.0
      %1615 = vmatpush.msra.mxu0 0.0
      %1616 = vmatpush.msra.mxu0 0.0
      %1617 = vmatpush.msra.mxu0 0.0
      %1618 = vmatpush.msra.mxu0 0.0
      %1619 = vmatpush.msra.mxu0 0.0
      %1620 = vmatpush.msra.mxu0 0.0
      %1621 = vmatpush.msra.mxu0 0.0
      %1622 = vmatpush.msra.mxu0 0.0
      %1623 = vmatpush.msra.mxu0 0.0
      %1624 = vmatpush.msra.mxu0 %v1538
      %1625 = vmatpush.msra.mxu0 %v1522
      %1626 = vmatpush.msra.mxu0 %v1506
      %1627 = vmatpush.msra.mxu0 %v1490
      %1628 = vmatmul.f32.gmra.mxu0 %v1590
      %v1629 = vpop.f32.mrf.mxu0
      %v1630 = vadd.f32 %v1558, %v1629
      %1631 = vdwg.mxu0
      %1632 = vmatpush.msra.mxu0 0.0
      %1633 = vmatpush.msra.mxu0 0.0
      %1634 = vmatpush.msra.mxu0 0.0
      %1635 = vmatpush.msra.mxu0 0.0
      %1636 = vmatpush.msra.mxu0 0.0
      %1637 = vmatpush.msra.mxu0 0.0
      %1638 = vmatpush.msra.mxu0 0.0
      %1639 = vmatpush.msra.mxu0 0.0
      %1640 = vmatpush.msra.mxu0 0.0
      %1641 = vmatpush.msra.mxu0 0.0
      %1642 = vmatpush.msra.mxu0 0.0
      %1643 = vmatpush.msra.mxu0 0.0
      %1644 = vmatpush.msra.mxu0 %v1539
      %1645 = vmatpush.msra.mxu0 %v1523
      %1646 = vmatpush.msra.mxu0 %v1507
      %1647 = vmatpush.msra.mxu0 %v1491
      %1648 = vmatmul.f32.gmra.mxu0 %v1590
      %v1649 = vpop.f32.mrf.mxu0
      %v1650 = vadd.f32 %v1559, %v1649
      %1651 = vdwg.mxu0
      %1652 = vmatpush.msra.mxu0 0.0
      %1653 = vmatpush.msra.mxu0 0.0
      %1654 = vmatpush.msra.mxu0 0.0
      %1655 = vmatpush.msra.mxu0 0.0
      %1656 = vmatpush.msra.mxu0 0.0
      %1657 = vmatpush.msra.mxu0 0.0
      %1658 = vmatpush.msra.mxu0 0.0
      %1659 = vmatpush.msra.mxu0 0.0
      %1660 = vmatpush.msra.mxu0 0.0
      %1661 = vmatpush.msra.mxu0 0.0
      %1662 = vmatpush.msra.mxu0 0.0
      %1663 = vmatpush.msra.mxu0 0.0
      %1664 = vmatpush.msra.mxu0 %v1540
      %1665 = vmatpush.msra.mxu0 %v1524
      %1666 = vmatpush.msra.mxu0 %v1508
      %1667 = vmatpush.msra.mxu0 %v1492
      %1668 = vmatmul.f32.gmra.mxu0 %v1590
      %v1669 = vpop.f32.mrf.mxu0
      %v1670 = vadd.f32 %v1560, %v1669
      %1671 = vdwg.mxu0
      %1672 = vmatpush.msra.mxu0 0.0
      %1673 = vmatpush.msra.mxu0 0.0
      %1674 = vmatpush.msra.mxu0 0.0
      %1675 = vmatpush.msra.mxu0 0.0
      %1676 = vmatpush.msra.mxu0 0.0
      %1677 = vmatpush.msra.mxu0 0.0
      %1678 = vmatpush.msra.mxu0 0.0
      %1679 = vmatpush.msra.mxu0 0.0
      %1680 = vmatpush.msra.mxu0 0.0
      %1681 = vmatpush.msra.mxu0 0.0
      %1682 = vmatpush.msra.mxu0 0.0
      %1683 = vmatpush.msra.mxu0 0.0
      %1684 = vmatpush.msra.mxu0 %v1541
      %1685 = vmatpush.msra.mxu0 %v1525
      %1686 = vmatpush.msra.mxu0 %v1509
      %1687 = vmatpush.msra.mxu0 %v1493
      %1688 = vmatmul.f32.gmra.mxu0 %v1590
      %v1689 = vpop.f32.mrf.mxu0
      %v1690 = vadd.f32 %v1561, %v1689
      %1691 = vdwg.mxu0
      %1692 = vmatpush.msra.mxu0 0.0
      %1693 = vmatpush.msra.mxu0 0.0
      %1694 = vmatpush.msra.mxu0 0.0
      %1695 = vmatpush.msra.mxu0 0.0
      %1696 = vmatpush.msra.mxu0 0.0
      %1697 = vmatpush.msra.mxu0 0.0
      %1698 = vmatpush.msra.mxu0 0.0
      %1699 = vmatpush.msra.mxu0 0.0
      %1700 = vmatpush.msra.mxu0 0.0
      %1701 = vmatpush.msra.mxu0 0.0
      %1702 = vmatpush.msra.mxu0 0.0
      %1703 = vmatpush.msra.mxu0 0.0
      %1704 = vmatpush.msra.mxu0 %v1542
      %1705 = vmatpush.msra.mxu0 %v1526
      %1706 = vmatpush.msra.mxu0 %v1510
      %1707 = vmatpush.msra.mxu0 %v1494
      %1708 = vmatmul.f32.gmra.mxu0 %v1590
      %v1709 = vpop.f32.mrf.mxu0
      %v1710 = vadd.f32 %v1562, %v1709
      %1711 = vdwg.mxu0
      %1712 = vmatpush.msra.mxu0 0.0
      %1713 = vmatpush.msra.mxu0 0.0
      %1714 = vmatpush.msra.mxu0 0.0
      %1715 = vmatpush.msra.mxu0 0.0
      %1716 = vmatpush.msra.mxu0 0.0
      %1717 = vmatpush.msra.mxu0 0.0
      %1718 = vmatpush.msra.mxu0 0.0
      %1719 = vmatpush.msra.mxu0 0.0
      %1720 = vmatpush.msra.mxu0 0.0
      %1721 = vmatpush.msra.mxu0 0.0
      %1722 = vmatpush.msra.mxu0 0.0
      %1723 = vmatpush.msra.mxu0 0.0
      %1724 = vmatpush.msra.mxu0 %v1543
      %1725 = vmatpush.msra.mxu0 %v1527
      %1726 = vmatpush.msra.mxu0 %v1511
      %1727 = vmatpush.msra.mxu0 %v1495
      %1728 = vmatmul.f32.gmra.mxu0 %v1590
      %v1729 = vpop.f32.mrf.mxu0
      %v1730 = vadd.f32 %v1563, %v1729
      %1731 = vdwg.mxu0
      %1732 = vmatpush.msra.mxu0 0.0
      %1733 = vmatpush.msra.mxu0 0.0
      %1734 = vmatpush.msra.mxu0 0.0
      %1735 = vmatpush.msra.mxu0 0.0
      %1736 = vmatpush.msra.mxu0 0.0
      %1737 = vmatpush.msra.mxu0 0.0
      %1738 = vmatpush.msra.mxu0 0.0
      %1739 = vmatpush.msra.mxu0 0.0
      %1740 = vmatpush.msra.mxu0 0.0
      %1741 = vmatpush.msra.mxu0 0.0
      %1742 = vmatpush.msra.mxu0 0.0
      %1743 = vmatpush.msra.mxu0 0.0
      %1744 = vmatpush.msra.mxu0 %v1544
      %1745 = vmatpush.msra.mxu0 %v1528
      %1746 = vmatpush.msra.mxu0 %v1512
      %1747 = vmatpush.msra.mxu0 %v1496
      %1748 = vmatmul.f32.gmra.mxu0 %v1590
      %v1749 = vpop.f32.mrf.mxu0
      %v1750 = vadd.f32 %v1564, %v1749
      %1751 = vdwg.mxu0
      %1752 = vmatpush.msra.mxu0 0.0
      %1753 = vmatpush.msra.mxu0 0.0
      %1754 = vmatpush.msra.mxu0 0.0
      %1755 = vmatpush.msra.mxu0 0.0
      %1756 = vmatpush.msra.mxu0 0.0
      %1757 = vmatpush.msra.mxu0 0.0
      %1758 = vmatpush.msra.mxu0 0.0
      %1759 = vmatpush.msra.mxu0 0.0
      %1760 = vmatpush.msra.mxu0 0.0
      %1761 = vmatpush.msra.mxu0 0.0
      %1762 = vmatpush.msra.mxu0 0.0
      %1763 = vmatpush.msra.mxu0 0.0
      %1764 = vmatpush.msra.mxu0 %v1545
      %1765 = vmatpush.msra.mxu0 %v1529
      %1766 = vmatpush.msra.mxu0 %v1513
      %1767 = vmatpush.msra.mxu0 %v1497
      %1768 = vmatmul.f32.gmra.mxu0 %v1590
      %v1769 = vpop.f32.mrf.mxu0
      %v1770 = vadd.f32 %v1565, %v1769
      %1771 = vdwg.mxu0
      %1772 = vmatpush.msra.mxu0 0.0
      %1773 = vmatpush.msra.mxu0 0.0
      %1774 = vmatpush.msra.mxu0 0.0
      %1775 = vmatpush.msra.mxu0 0.0
      %1776 = vmatpush.msra.mxu0 0.0
      %1777 = vmatpush.msra.mxu0 0.0
      %1778 = vmatpush.msra.mxu0 0.0
      %1779 = vmatpush.msra.mxu0 0.0
      %1780 = vmatpush.msra.mxu0 0.0
      %1781 = vmatpush.msra.mxu0 0.0
      %1782 = vmatpush.msra.mxu0 0.0
      %1783 = vmatpush.msra.mxu0 0.0
      %1784 = vmatpush.msra.mxu0 %v1546
      %1785 = vmatpush.msra.mxu0 %v1530
      %1786 = vmatpush.msra.mxu0 %v1514
      %1787 = vmatpush.msra.mxu0 %v1498
      %1788 = vmatmul.f32.gmra.mxu0 %v1590
      %v1789 = vpop.f32.mrf.mxu0
      %v1790 = vadd.f32 %v1566, %v1789
      %1791 = vdwg.mxu0
      %1792 = vmatpush.msra.mxu0 0.0
      %1793 = vmatpush.msra.mxu0 0.0
      %1794 = vmatpush.msra.mxu0 0.0
      %1795 = vmatpush.msra.mxu0 0.0
      %1796 = vmatpush.msra.mxu0 0.0
      %1797 = vmatpush.msra.mxu0 0.0
      %1798 = vmatpush.msra.mxu0 0.0
      %1799 = vmatpush.msra.mxu0 0.0
      %1800 = vmatpush.msra.mxu0 0.0
      %1801 = vmatpush.msra.mxu0 0.0
      %1802 = vmatpush.msra.mxu0 0.0
      %1803 = vmatpush.msra.mxu0 0.0
      %1804 = vmatpush.msra.mxu0 %v1547
      %1805 = vmatpush.msra.mxu0 %v1531
      %1806 = vmatpush.msra.mxu0 %v1515
      %1807 = vmatpush.msra.mxu0 %v1499
      %1808 = vmatmul.f32.gmra.mxu0 %v1590
      %v1809 = vpop.f32.mrf.mxu0
      %v1810 = vadd.f32 %v1567, %v1809
      %1811 = vdwg.mxu0
      %1812 = vmatpush.msra.mxu0 0.0
      %1813 = vmatpush.msra.mxu0 0.0
      %1814 = vmatpush.msra.mxu0 0.0
      %1815 = vmatpush.msra.mxu0 0.0
      %1816 = vmatpush.msra.mxu0 0.0
      %1817 = vmatpush.msra.mxu0 0.0
      %1818 = vmatpush.msra.mxu0 0.0
      %1819 = vmatpush.msra.mxu0 0.0
      %1820 = vmatpush.msra.mxu0 0.0
      %1821 = vmatpush.msra.mxu0 0.0
      %1822 = vmatpush.msra.mxu0 0.0
      %1823 = vmatpush.msra.mxu0 0.0
      %1824 = vmatpush.msra.mxu0 %v1548
      %1825 = vmatpush.msra.mxu0 %v1532
      %1826 = vmatpush.msra.mxu0 %v1516
      %1827 = vmatpush.msra.mxu0 %v1500
      %1828 = vmatmul.f32.gmra.mxu0 %v1590
      %v1829 = vpop.f32.mrf.mxu0
      %v1830 = vadd.f32 %v1568, %v1829
      %1831 = vdwg.mxu0
      %1832 = vmatpush.msra.mxu0 0.0
      %1833 = vmatpush.msra.mxu0 0.0
      %1834 = vmatpush.msra.mxu0 0.0
      %1835 = vmatpush.msra.mxu0 0.0
      %1836 = vmatpush.msra.mxu0 0.0
      %1837 = vmatpush.msra.mxu0 0.0
      %1838 = vmatpush.msra.mxu0 0.0
      %1839 = vmatpush.msra.mxu0 0.0
      %1840 = vmatpush.msra.mxu0 0.0
      %1841 = vmatpush.msra.mxu0 0.0
      %1842 = vmatpush.msra.mxu0 0.0
      %1843 = vmatpush.msra.mxu0 0.0
      %1844 = vmatpush.msra.mxu0 %v1549
      %1845 = vmatpush.msra.mxu0 %v1533
      %1846 = vmatpush.msra.mxu0 %v1517
      %1847 = vmatpush.msra.mxu0 %v1501
      %1848 = vmatmul.f32.gmra.mxu0 %v1590
      %v1849 = vpop.f32.mrf.mxu0
      %v1850 = vadd.f32 %v1569, %v1849
      %1851 = vdwg.mxu0
      %1852 = vmatpush.msra.mxu0 0.0
      %1853 = vmatpush.msra.mxu0 0.0
      %1854 = vmatpush.msra.mxu0 0.0
      %1855 = vmatpush.msra.mxu0 0.0
      %1856 = vmatpush.msra.mxu0 0.0
      %1857 = vmatpush.msra.mxu0 0.0
      %1858 = vmatpush.msra.mxu0 0.0
      %1859 = vmatpush.msra.mxu0 0.0
      %1860 = vmatpush.msra.mxu0 0.0
      %1861 = vmatpush.msra.mxu0 0.0
      %1862 = vmatpush.msra.mxu0 0.0
      %1863 = vmatpush.msra.mxu0 0.0
      %1864 = vmatpush.msra.mxu0 %v1550
      %1865 = vmatpush.msra.mxu0 %v1534
      %1866 = vmatpush.msra.mxu0 %v1518
      %1867 = vmatpush.msra.mxu0 %v1502
      %1868 = vmatmul.f32.gmra.mxu0 %v1590
      %v1869 = vpop.f32.mrf.mxu0
      %v1870 = vadd.f32 %v1570, %v1869
      %1871 = vdwg.mxu0
      %1872 = vmatpush.msra.mxu0 0.0
      %1873 = vmatpush.msra.mxu0 0.0
      %1874 = vmatpush.msra.mxu0 0.0
      %1875 = vmatpush.msra.mxu0 0.0
      %1876 = vmatpush.msra.mxu0 0.0
      %1877 = vmatpush.msra.mxu0 0.0
      %1878 = vmatpush.msra.mxu0 0.0
      %1879 = vmatpush.msra.mxu0 0.0
      %1880 = vmatpush.msra.mxu0 0.0
      %1881 = vmatpush.msra.mxu0 0.0
      %1882 = vmatpush.msra.mxu0 0.0
      %1883 = vmatpush.msra.mxu0 0.0
      %1884 = vmatpush.msra.mxu0 %v1551
      %1885 = vmatpush.msra.mxu0 %v1535
      %1886 = vmatpush.msra.mxu0 %v1519
      %1887 = vmatpush.msra.mxu0 %v1503
      %1888 = vmatmul.f32.gmra.mxu0 %v1590
      %v1889 = vpop.f32.mrf.mxu0
      %v1890 = vadd.f32 %v1571, %v1889
      %1891 = vdwg.mxu0
      %1892 = vmatpush.msra.mxu0 0.0
      %1893 = vmatpush.msra.mxu0 0.0
      %1894 = vmatpush.msra.mxu0 0.0
      %1895 = vmatpush.msra.mxu0 0.0
      %1896 = vmatpush.msra.mxu0 0.0
      %1897 = vmatpush.msra.mxu0 0.0
      %1898 = vmatpush.msra.mxu0 0.0
      %1899 = vmatpush.msra.mxu0 0.0
      %1900 = vmatpush.msra.mxu0 0.0
      %1901 = vmatpush.msra.mxu0 0.0
      %1902 = vmatpush.msra.mxu0 0.0
      %1903 = vmatpush.msra.mxu0 0.0
      %1904 = vmatpush.msra.mxu0 %v1552
      %1905 = vmatpush.msra.mxu0 %v1536
      %1906 = vmatpush.msra.mxu0 %v1520
      %1907 = vmatpush.msra.mxu0 %v1504
      %1908 = vmatmul.f32.gmra.mxu0 %v1590
      %v1909 = vpop.f32.mrf.mxu0
      %v1910 = vadd.f32 %v1572, %v1909
      %1911 = vdwg.mxu0
      %v1912 = vmax.f32 %v1610, 0.0
      %v1913 = vmax.f32 %v1630, 0.0
      %v1914 = vmax.f32 %v1650, 0.0
      %v1915 = vmax.f32 %v1670, 0.0
      %v1916 = vmax.f32 %v1690, 0.0
      %v1917 = vmax.f32 %v1710, 0.0
      %v1918 = vmax.f32 %v1730, 0.0
      %v1919 = vmax.f32 %v1750, 0.0
      %v1920 = vmax.f32 %v1770, 0.0
      %v1921 = vmax.f32 %v1790, 0.0
      %v1922 = vmax.f32 %v1810, 0.0
      %v1923 = vmax.f32 %v1830, 0.0
      %v1924 = vmax.f32 %v1850, 0.0
      %v1925 = vmax.f32 %v1870, 0.0
      %v1926 = vmax.f32 %v1890, 0.0
      %v1927 = vmax.f32 %v1910, 0.0
      %v1928 = vld [vmem:[%s18] sm:$0xff]
      %v1929 = vld [vmem:[%s18 + $0x8] sm:$0xff]
      %v1930 = vld [vmem:[%s18 + $0x10] sm:$0xff]
      %v1931 = vld [vmem:[%s18 + $0x18] sm:$0xff]
      %v1932 = vld [vmem:[%s18 + $0x20] sm:$0xff]
      %v1933 = vld [vmem:[%s18 + $0x28] sm:$0xff]
      %v1934 = vld [vmem:[%s18 + $0x30] sm:$0xff]
      %v1935 = vld [vmem:[%s18 + $0x38] sm:$0xff]
      %v1936 = vld [vmem:[%s18 + $0x40] sm:$0xff]
      %v1937 = vld [vmem:[%s18 + $0x48] sm:$0xff]
      %v1938 = vld [vmem:[%s18 + $0x50] sm:$0xff]
      %v1939 = vld [vmem:[%s18 + $0x58] sm:$0xff]
      %v1940 = vld [vmem:[%s18 + $0x60] sm:$0xff]
      %v1941 = vld [vmem:[%s18 + $0x68] sm:$0xff]
      %v1942 = vld [vmem:[%s18 + $0x70] sm:$0xff]
      %v1943 = vld [vmem:[%s18 + $0x78] sm:$0xff]
      %v1944 = vld [vmem:[%s18 + $0x80] sm:$0xff]
      %v1945 = vld [vmem:[%s18 + $0x88] sm:$0xff]
      %v1946 = vld [vmem:[%s18 + $0x90] sm:$0xff]
      %v1947 = vld [vmem:[%s18 + $0x98] sm:$0xff]
      %v1948 = vld [vmem:[%s18 + $0xa0] sm:$0xff]
      %v1949 = vld [vmem:[%s18 + $0xa8] sm:$0xff]
      %v1950 = vld [vmem:[%s18 + $0xb0] sm:$0xff]
      %v1951 = vld [vmem:[%s18 + $0xb8] sm:$0xff]
      %v1952 = vld [vmem:[%s18 + $0xc0] sm:$0xff]
      %v1953 = vld [vmem:[%s18 + $0xc8] sm:$0xff]
      %v1954 = vld [vmem:[%s18 + $0xd0] sm:$0xff]
      %v1955 = vld [vmem:[%s18 + $0xd8] sm:$0xff]
      %v1956 = vld [vmem:[%s18 + $0xe0] sm:$0xff]
      %v1957 = vld [vmem:[%s18 + $0xe8] sm:$0xff]
      %v1958 = vld [vmem:[%s18 + $0xf0] sm:$0xff]
      %v1959 = vld [vmem:[%s18 + $0xf8] sm:$0xff]
      %v1960 = vld [vmem:[%s18 + $0x100] sm:$0xff]
      %v1961 = vld [vmem:[%s18 + $0x108] sm:$0xff]
      %v1962 = vld [vmem:[%s18 + $0x110] sm:$0xff]
      %v1963 = vld [vmem:[%s18 + $0x118] sm:$0xff]
      %v1964 = vld [vmem:[%s18 + $0x120] sm:$0xff]
      %v1965 = vld [vmem:[%s18 + $0x128] sm:$0xff]
      %v1966 = vld [vmem:[%s18 + $0x130] sm:$0xff]
      %v1967 = vld [vmem:[%s18 + $0x138] sm:$0xff]
      %v1968 = vld [vmem:[%s18 + $0x140] sm:$0xff]
      %v1969 = vld [vmem:[%s18 + $0x148] sm:$0xff]
      %v1970 = vld [vmem:[%s18 + $0x150] sm:$0xff]
      %v1971 = vld [vmem:[%s18 + $0x158] sm:$0xff]
      %v1972 = vld [vmem:[%s18 + $0x160] sm:$0xff]
      %v1973 = vld [vmem:[%s18 + $0x168] sm:$0xff]
      %v1974 = vld [vmem:[%s18 + $0x170] sm:$0xff]
      %v1975 = vld [vmem:[%s18 + $0x178] sm:$0xff]
      %v1976 = vld [vmem:[%s18 + $0x180] sm:$0xff]
      %v1977 = vld [vmem:[%s18 + $0x188] sm:$0xff]
      %v1978 = vld [vmem:[%s18 + $0x190] sm:$0xff]
      %v1979 = vld [vmem:[%s18 + $0x198] sm:$0xff]
      %v1980 = vld [vmem:[%s18 + $0x1a0] sm:$0xff]
      %v1981 = vld [vmem:[%s18 + $0x1a8] sm:$0xff]
      %v1982 = vld [vmem:[%s18 + $0x1b0] sm:$0xff]
      %v1983 = vld [vmem:[%s18 + $0x1b8] sm:$0xff]
      %v1984 = vld [vmem:[%s18 + $0x1c0] sm:$0xff]
      %v1985 = vld [vmem:[%s18 + $0x1c8] sm:$0xff]
      %v1986 = vld [vmem:[%s18 + $0x1d0] sm:$0xff]
      %v1987 = vld [vmem:[%s18 + $0x1d8] sm:$0xff]
      %v1988 = vld [vmem:[%s18 + $0x1e0] sm:$0xff]
      %v1989 = vld [vmem:[%s18 + $0x1e8] sm:$0xff]
      %v1990 = vld [vmem:[%s18 + $0x1f0] sm:$0xff]
      %v1991 = vld [vmem:[%s18 + $0x1f8] sm:$0xff]
      %v1992 = vld [vmem:[%s18 + $0x200] sm:$0xff]
      %v1993 = vld [vmem:[%s18 + $0x208] sm:$0xff]
      %v1994 = vld [vmem:[%s18 + $0x210] sm:$0xff]
      %v1995 = vld [vmem:[%s18 + $0x218] sm:$0xff]
      %v1996 = vld [vmem:[%s18 + $0x220] sm:$0xff]
      %v1997 = vld [vmem:[%s18 + $0x228] sm:$0xff]
      %v1998 = vld [vmem:[%s18 + $0x230] sm:$0xff]
      %v1999 = vld [vmem:[%s18 + $0x238] sm:$0xff]
      %v2000 = vld [vmem:[%s18 + $0x240] sm:$0xff]
      %v2001 = vld [vmem:[%s18 + $0x248] sm:$0xff]
      %v2002 = vld [vmem:[%s18 + $0x250] sm:$0xff]
      %v2003 = vld [vmem:[%s18 + $0x258] sm:$0xff]
      %v2004 = vld [vmem:[%s18 + $0x260] sm:$0xff]
      %v2005 = vld [vmem:[%s18 + $0x268] sm:$0xff]
      %v2006 = vld [vmem:[%s18 + $0x270] sm:$0xff]
      %v2007 = vld [vmem:[%s18 + $0x278] sm:$0xff]
      %v2008 = vld [vmem:[%s18 + $0x280] sm:$0xff]
      %v2009 = vld [vmem:[%s18 + $0x288] sm:$0xff]
      %v2010 = vld [vmem:[%s18 + $0x290] sm:$0xff]
      %v2011 = vld [vmem:[%s18 + $0x298] sm:$0xff]
      %v2012 = vld [vmem:[%s18 + $0x2a0] sm:$0xff]
      %v2013 = vld [vmem:[%s18 + $0x2a8] sm:$0xff]
      %v2014 = vld [vmem:[%s18 + $0x2b0] sm:$0xff]
      %v2015 = vld [vmem:[%s18 + $0x2b8] sm:$0xff]
      %v2016 = vld [vmem:[%s18 + $0x2c0] sm:$0xff]
      %v2017 = vld [vmem:[%s18 + $0x2c8] sm:$0xff]
      %v2018 = vld [vmem:[%s18 + $0x2d0] sm:$0xff]
      %v2019 = vld [vmem:[%s18 + $0x2d8] sm:$0xff]
      %v2020 = vld [vmem:[%s18 + $0x2e0] sm:$0xff]
      %v2021 = vld [vmem:[%s18 + $0x2e8] sm:$0xff]
      %v2022 = vld [vmem:[%s18 + $0x2f0] sm:$0xff]
      %v2023 = vld [vmem:[%s18 + $0x2f8] sm:$0xff]
      %v2024 = vld [vmem:[%s18 + $0x300] sm:$0xff]
      %v2025 = vld [vmem:[%s18 + $0x308] sm:$0xff]
      %v2026 = vld [vmem:[%s18 + $0x310] sm:$0xff]
      %v2027 = vld [vmem:[%s18 + $0x318] sm:$0xff]
      %v2028 = vld [vmem:[%s18 + $0x320] sm:$0xff]
      %v2029 = vld [vmem:[%s18 + $0x328] sm:$0xff]
      %v2030 = vld [vmem:[%s18 + $0x330] sm:$0xff]
      %v2031 = vld [vmem:[%s18 + $0x338] sm:$0xff]
      %v2032 = vld [vmem:[%s18 + $0x340] sm:$0xff]
      %v2033 = vld [vmem:[%s18 + $0x348] sm:$0xff]
      %v2034 = vld [vmem:[%s18 + $0x350] sm:$0xff]
      %v2035 = vld [vmem:[%s18 + $0x358] sm:$0xff]
      %v2036 = vld [vmem:[%s18 + $0x360] sm:$0xff]
      %v2037 = vld [vmem:[%s18 + $0x368] sm:$0xff]
      %v2038 = vld [vmem:[%s18 + $0x370] sm:$0xff]
      %v2039 = vld [vmem:[%s18 + $0x378] sm:$0xff]
      %v2040 = vld [vmem:[%s18 + $0x380] sm:$0xff]
      %v2041 = vld [vmem:[%s18 + $0x388] sm:$0xff]
      %v2042 = vld [vmem:[%s18 + $0x390] sm:$0xff]
      %v2043 = vld [vmem:[%s18 + $0x398] sm:$0xff]
      %v2044 = vld [vmem:[%s18 + $0x3a0] sm:$0xff]
      %v2045 = vld [vmem:[%s18 + $0x3a8] sm:$0xff]
      %v2046 = vld [vmem:[%s18 + $0x3b0] sm:$0xff]
      %v2047 = vld [vmem:[%s18 + $0x3b8] sm:$0xff]
      %v2048 = vld [vmem:[%s18 + $0x3c0] sm:$0xff]
      %v2049 = vld [vmem:[%s18 + $0x3c8] sm:$0xff]
      %v2050 = vld [vmem:[%s18 + $0x3d0] sm:$0xff]
      %v2051 = vld [vmem:[%s18 + $0x3d8] sm:$0xff]
      %v2052 = vld [vmem:[%s18 + $0x3e0] sm:$0xff]
      %v2053 = vld [vmem:[%s18 + $0x3e8] sm:$0xff]
      %v2054 = vld [vmem:[%s18 + $0x3f0] sm:$0xff]
      %v2055 = vld [vmem:[%s18 + $0x3f8] sm:$0xff]
      %v2056 = vld [vmem:[%s18 + $0x400] sm:$0xff]
      %v2057 = vld [vmem:[%s18 + $0x408] sm:$0xff]
      %v2058 = vld [vmem:[%s18 + $0x410] sm:$0xff]
      %v2059 = vld [vmem:[%s18 + $0x418] sm:$0xff]
      %v2060 = vld [vmem:[%s18 + $0x420] sm:$0xff]
      %v2061 = vld [vmem:[%s18 + $0x428] sm:$0xff]
      %v2062 = vld [vmem:[%s18 + $0x430] sm:$0xff]
      %v2063 = vld [vmem:[%s18 + $0x438] sm:$0xff]
      %v2064 = vld [vmem:[%s18 + $0x440] sm:$0xff]
      %v2065 = vld [vmem:[%s18 + $0x448] sm:$0xff]
      %v2066 = vld [vmem:[%s18 + $0x450] sm:$0xff]
      %v2067 = vld [vmem:[%s18 + $0x458] sm:$0xff]
      %v2068 = vld [vmem:[%s18 + $0x460] sm:$0xff]
      %v2069 = vld [vmem:[%s18 + $0x468] sm:$0xff]
      %v2070 = vld [vmem:[%s18 + $0x470] sm:$0xff]
      %v2071 = vld [vmem:[%s18 + $0x478] sm:$0xff]
      %v2072 = vld [vmem:[%s18 + $0x480] sm:$0xff]
      %v2073 = vld [vmem:[%s18 + $0x488] sm:$0xff]
      %v2074 = vld [vmem:[%s18 + $0x490] sm:$0xff]
      %v2075 = vld [vmem:[%s18 + $0x498] sm:$0xff]
      %v2076 = vld [vmem:[%s18 + $0x4a0] sm:$0xff]
      %v2077 = vld [vmem:[%s18 + $0x4a8] sm:$0xff]
      %v2078 = vld [vmem:[%s18 + $0x4b0] sm:$0xff]
      %v2079 = vld [vmem:[%s18 + $0x4b8] sm:$0xff]
      %v2080 = vld [vmem:[%s18 + $0x4c0] sm:$0xff]
      %v2081 = vld [vmem:[%s18 + $0x4c8] sm:$0xff]
      %v2082 = vld [vmem:[%s18 + $0x4d0] sm:$0xff]
      %v2083 = vld [vmem:[%s18 + $0x4d8] sm:$0xff]
      %v2084 = vld [vmem:[%s18 + $0x4e0] sm:$0xff]
      %v2085 = vld [vmem:[%s18 + $0x4e8] sm:$0xff]
      %v2086 = vld [vmem:[%s18 + $0x4f0] sm:$0xff]
      %v2087 = vld [vmem:[%s18 + $0x4f8] sm:$0xff]
      %v2088 = vld [vmem:[%s18 + $0x500] sm:$0xff]
      %v2089 = vld [vmem:[%s18 + $0x508] sm:$0xff]
      %v2090 = vld [vmem:[%s18 + $0x510] sm:$0xff]
      %v2091 = vld [vmem:[%s18 + $0x518] sm:$0xff]
      %v2092 = vld [vmem:[%s18 + $0x520] sm:$0xff]
      %v2093 = vld [vmem:[%s18 + $0x528] sm:$0xff]
      %v2094 = vld [vmem:[%s18 + $0x530] sm:$0xff]
      %v2095 = vld [vmem:[%s18 + $0x538] sm:$0xff]
      %v2096 = vld [vmem:[%s18 + $0x540] sm:$0xff]
      %v2097 = vld [vmem:[%s18 + $0x548] sm:$0xff]
      %v2098 = vld [vmem:[%s18 + $0x550] sm:$0xff]
      %v2099 = vld [vmem:[%s18 + $0x558] sm:$0xff]
      %v2100 = vld [vmem:[%s18 + $0x560] sm:$0xff]
      %v2101 = vld [vmem:[%s18 + $0x568] sm:$0xff]
      %v2102 = vld [vmem:[%s18 + $0x570] sm:$0xff]
      %v2103 = vld [vmem:[%s18 + $0x578] sm:$0xff]
      %v2104 = vld [vmem:[%s18 + $0x580] sm:$0xff]
      %v2105 = vld [vmem:[%s18 + $0x588] sm:$0xff]
      %v2106 = vld [vmem:[%s18 + $0x590] sm:$0xff]
      %v2107 = vld [vmem:[%s18 + $0x598] sm:$0xff]
      %v2108 = vld [vmem:[%s18 + $0x5a0] sm:$0xff]
      %v2109 = vld [vmem:[%s18 + $0x5a8] sm:$0xff]
      %v2110 = vld [vmem:[%s18 + $0x5b0] sm:$0xff]
      %v2111 = vld [vmem:[%s18 + $0x5b8] sm:$0xff]
      %v2112 = vld [vmem:[%s18 + $0x5c0] sm:$0xff]
      %v2113 = vld [vmem:[%s18 + $0x5c8] sm:$0xff]
      %v2114 = vld [vmem:[%s18 + $0x5d0] sm:$0xff]
      %v2115 = vld [vmem:[%s18 + $0x5d8] sm:$0xff]
      %v2116 = vld [vmem:[%s18 + $0x5e0] sm:$0xff]
      %v2117 = vld [vmem:[%s18 + $0x5e8] sm:$0xff]
      %v2118 = vld [vmem:[%s18 + $0x5f0] sm:$0xff]
      %v2119 = vld [vmem:[%s18 + $0x5f8] sm:$0xff]
      %v2120 = vld [vmem:[%s18 + $0x600] sm:$0xff]
      %v2121 = vld [vmem:[%s18 + $0x608] sm:$0xff]
      %v2122 = vld [vmem:[%s18 + $0x610] sm:$0xff]
      %v2123 = vld [vmem:[%s18 + $0x618] sm:$0xff]
      %v2124 = vld [vmem:[%s18 + $0x620] sm:$0xff]
      %v2125 = vld [vmem:[%s18 + $0x628] sm:$0xff]
      %v2126 = vld [vmem:[%s18 + $0x630] sm:$0xff]
      %v2127 = vld [vmem:[%s18 + $0x638] sm:$0xff]
      %v2128 = vld [vmem:[%s18 + $0x640] sm:$0xff]
      %v2129 = vld [vmem:[%s18 + $0x648] sm:$0xff]
      %v2130 = vld [vmem:[%s18 + $0x650] sm:$0xff]
      %v2131 = vld [vmem:[%s18 + $0x658] sm:$0xff]
      %v2132 = vld [vmem:[%s18 + $0x660] sm:$0xff]
      %v2133 = vld [vmem:[%s18 + $0x668] sm:$0xff]
      %v2134 = vld [vmem:[%s18 + $0x670] sm:$0xff]
      %v2135 = vld [vmem:[%s18 + $0x678] sm:$0xff]
      %v2136 = vld [vmem:[%s18 + $0x680] sm:$0xff]
      %v2137 = vld [vmem:[%s18 + $0x688] sm:$0xff]
      %v2138 = vld [vmem:[%s18 + $0x690] sm:$0xff]
      %v2139 = vld [vmem:[%s18 + $0x698] sm:$0xff]
      %v2140 = vld [vmem:[%s18 + $0x6a0] sm:$0xff]
      %v2141 = vld [vmem:[%s18 + $0x6a8] sm:$0xff]
      %v2142 = vld [vmem:[%s18 + $0x6b0] sm:$0xff]
      %v2143 = vld [vmem:[%s18 + $0x6b8] sm:$0xff]
      %v2144 = vld [vmem:[%s18 + $0x6c0] sm:$0xff]
      %v2145 = vld [vmem:[%s18 + $0x6c8] sm:$0xff]
      %v2146 = vld [vmem:[%s18 + $0x6d0] sm:$0xff]
      %v2147 = vld [vmem:[%s18 + $0x6d8] sm:$0xff]
      %v2148 = vld [vmem:[%s18 + $0x6e0] sm:$0xff]
      %v2149 = vld [vmem:[%s18 + $0x6e8] sm:$0xff]
      %v2150 = vld [vmem:[%s18 + $0x6f0] sm:$0xff]
      %v2151 = vld [vmem:[%s18 + $0x6f8] sm:$0xff]
      %v2152 = vld [vmem:[%s18 + $0x700] sm:$0xff]
      %v2153 = vld [vmem:[%s18 + $0x708] sm:$0xff]
      %v2154 = vld [vmem:[%s18 + $0x710] sm:$0xff]
      %v2155 = vld [vmem:[%s18 + $0x718] sm:$0xff]
      %v2156 = vld [vmem:[%s18 + $0x720] sm:$0xff]
      %v2157 = vld [vmem:[%s18 + $0x728] sm:$0xff]
      %v2158 = vld [vmem:[%s18 + $0x730] sm:$0xff]
      %v2159 = vld [vmem:[%s18 + $0x738] sm:$0xff]
      %v2160 = vld [vmem:[%s18 + $0x740] sm:$0xff]
      %v2161 = vld [vmem:[%s18 + $0x748] sm:$0xff]
      %v2162 = vld [vmem:[%s18 + $0x750] sm:$0xff]
      %v2163 = vld [vmem:[%s18 + $0x758] sm:$0xff]
      %v2164 = vld [vmem:[%s18 + $0x760] sm:$0xff]
      %v2165 = vld [vmem:[%s18 + $0x768] sm:$0xff]
      %v2166 = vld [vmem:[%s18 + $0x770] sm:$0xff]
      %v2167 = vld [vmem:[%s18 + $0x778] sm:$0xff]
      %v2168 = vld [vmem:[%s18 + $0x780] sm:$0xff]
      %v2169 = vld [vmem:[%s18 + $0x788] sm:$0xff]
      %v2170 = vld [vmem:[%s18 + $0x790] sm:$0xff]
      %v2171 = vld [vmem:[%s18 + $0x798] sm:$0xff]
      %v2172 = vld [vmem:[%s18 + $0x7a0] sm:$0xff]
      %v2173 = vld [vmem:[%s18 + $0x7a8] sm:$0xff]
      %v2174 = vld [vmem:[%s18 + $0x7b0] sm:$0xff]
      %v2175 = vld [vmem:[%s18 + $0x7b8] sm:$0xff]
      %v2176 = vld [vmem:[%s18 + $0x7c0] sm:$0xff]
      %v2177 = vld [vmem:[%s18 + $0x7c8] sm:$0xff]
      %v2178 = vld [vmem:[%s18 + $0x7d0] sm:$0xff]
      %v2179 = vld [vmem:[%s18 + $0x7d8] sm:$0xff]
      %v2180 = vld [vmem:[%s18 + $0x7e0] sm:$0xff]
      %v2181 = vld [vmem:[%s18 + $0x7e8] sm:$0xff]
      %v2182 = vld [vmem:[%s18 + $0x7f0] sm:$0xff]
      %v2183 = vld [vmem:[%s18 + $0x7f8] sm:$0xff]
      %v2184 = vld [vmem:[%s19] sm:$0x1]
      %v2186 = vperm.slane %v2184, 0
      %2188 = vmatpush.msra.mxu0 %v1943
      %2189 = vmatpush.msra.mxu0 %v1942
      %2190 = vmatpush.msra.mxu0 %v1941
      %2191 = vmatpush.msra.mxu0 %v1940
      %2192 = vmatpush.msra.mxu0 %v1939
      %2193 = vmatpush.msra.mxu0 %v1938
      %2194 = vmatpush.msra.mxu0 %v1937
      %2195 = vmatpush.msra.mxu0 %v1936
      %2196 = vmatpush.msra.mxu0 %v1935
      %2197 = vmatpush.msra.mxu0 %v1934
      %2198 = vmatpush.msra.mxu0 %v1933
      %2199 = vmatpush.msra.mxu0 %v1932
      %2200 = vmatpush.msra.mxu0 %v1931
      %2201 = vmatpush.msra.mxu0 %v1930
      %2202 = vmatpush.msra.mxu0 %v1929
      %2203 = vmatpush.msra.mxu0 %v1928
      %2204 = vmatmul.f32.gmra.mxu0 %v1912
      %v2205 = vpop.f32.mrf.mxu0
      %v2206 = vadd.f32 %v2186, %v2205
      %2207 = vdwg.mxu0
      %2208 = vmatpush.msra.mxu0 %v1959
      %2209 = vmatpush.msra.mxu0 %v1958
      %2210 = vmatpush.msra.mxu0 %v1957
      %2211 = vmatpush.msra.mxu0 %v1956
      %2212 = vmatpush.msra.mxu0 %v1955
      %2213 = vmatpush.msra.mxu0 %v1954
      %2214 = vmatpush.msra.mxu0 %v1953
      %2215 = vmatpush.msra.mxu0 %v1952
      %2216 = vmatpush.msra.mxu0 %v1951
      %2217 = vmatpush.msra.mxu0 %v1950
      %2218 = vmatpush.msra.mxu0 %v1949
      %2219 = vmatpush.msra.mxu0 %v1948
      %2220 = vmatpush.msra.mxu0 %v1947
      %2221 = vmatpush.msra.mxu0 %v1946
      %2222 = vmatpush.msra.mxu0 %v1945
      %2223 = vmatpush.msra.mxu0 %v1944
      %2224 = vmatmul.f32.gmra.mxu0 %v1913
      %v2225 = vpop.f32.mrf.mxu0
      %v2226 = vadd.f32 %v2206, %v2225
      %2227 = vdwg.mxu0
      %2228 = vmatpush.msra.mxu0 %v1975
      %2229 = vmatpush.msra.mxu0 %v1974
      %2230 = vmatpush.msra.mxu0 %v1973
      %2231 = vmatpush.msra.mxu0 %v1972
      %2232 = vmatpush.msra.mxu0 %v1971
      %2233 = vmatpush.msra.mxu0 %v1970
      %2234 = vmatpush.msra.mxu0 %v1969
      %2235 = vmatpush.msra.mxu0 %v1968
      %2236 = vmatpush.msra.mxu0 %v1967
      %2237 = vmatpush.msra.mxu0 %v1966
      %2238 = vmatpush.msra.mxu0 %v1965
      %2239 = vmatpush.msra.mxu0 %v1964
      %2240 = vmatpush.msra.mxu0 %v1963
      %2241 = vmatpush.msra.mxu0 %v1962
      %2242 = vmatpush.msra.mxu0 %v1961
      %2243 = vmatpush.msra.mxu0 %v1960
      %2244 = vmatmul.f32.gmra.mxu0 %v1914
      %v2245 = vpop.f32.mrf.mxu0
      %v2246 = vadd.f32 %v2226, %v2245
      %2247 = vdwg.mxu0
      %2248 = vmatpush.msra.mxu0 %v1991
      %2249 = vmatpush.msra.mxu0 %v1990
      %2250 = vmatpush.msra.mxu0 %v1989
      %2251 = vmatpush.msra.mxu0 %v1988
      %2252 = vmatpush.msra.mxu0 %v1987
      %2253 = vmatpush.msra.mxu0 %v1986
      %2254 = vmatpush.msra.mxu0 %v1985
      %2255 = vmatpush.msra.mxu0 %v1984
      %2256 = vmatpush.msra.mxu0 %v1983
      %2257 = vmatpush.msra.mxu0 %v1982
      %2258 = vmatpush.msra.mxu0 %v1981
      %2259 = vmatpush.msra.mxu0 %v1980
      %2260 = vmatpush.msra.mxu0 %v1979
      %2261 = vmatpush.msra.mxu0 %v1978
      %2262 = vmatpush.msra.mxu0 %v1977
      %2263 = vmatpush.msra.mxu0 %v1976
      %2264 = vmatmul.f32.gmra.mxu0 %v1915
      %v2265 = vpop.f32.mrf.mxu0
      %v2266 = vadd.f32 %v2246, %v2265
      %2267 = vdwg.mxu0
      %2268 = vmatpush.msra.mxu0 %v2007
      %2269 = vmatpush.msra.mxu0 %v2006
      %2270 = vmatpush.msra.mxu0 %v2005
      %2271 = vmatpush.msra.mxu0 %v2004
      %2272 = vmatpush.msra.mxu0 %v2003
      %2273 = vmatpush.msra.mxu0 %v2002
      %2274 = vmatpush.msra.mxu0 %v2001
      %2275 = vmatpush.msra.mxu0 %v2000
      %2276 = vmatpush.msra.mxu0 %v1999
      %2277 = vmatpush.msra.mxu0 %v1998
      %2278 = vmatpush.msra.mxu0 %v1997
      %2279 = vmatpush.msra.mxu0 %v1996
      %2280 = vmatpush.msra.mxu0 %v1995
      %2281 = vmatpush.msra.mxu0 %v1994
      %2282 = vmatpush.msra.mxu0 %v1993
      %2283 = vmatpush.msra.mxu0 %v1992
      %2284 = vmatmul.f32.gmra.mxu0 %v1916
      %v2285 = vpop.f32.mrf.mxu0
      %v2286 = vadd.f32 %v2266, %v2285
      %2287 = vdwg.mxu0
      %2288 = vmatpush.msra.mxu0 %v2023
      %2289 = vmatpush.msra.mxu0 %v2022
      %2290 = vmatpush.msra.mxu0 %v2021
      %2291 = vmatpush.msra.mxu0 %v2020
      %2292 = vmatpush.msra.mxu0 %v2019
      %2293 = vmatpush.msra.mxu0 %v2018
      %2294 = vmatpush.msra.mxu0 %v2017
      %2295 = vmatpush.msra.mxu0 %v2016
      %2296 = vmatpush.msra.mxu0 %v2015
      %2297 = vmatpush.msra.mxu0 %v2014
      %2298 = vmatpush.msra.mxu0 %v2013
      %2299 = vmatpush.msra.mxu0 %v2012
      %2300 = vmatpush.msra.mxu0 %v2011
      %2301 = vmatpush.msra.mxu0 %v2010
      %2302 = vmatpush.msra.mxu0 %v2009
      %2303 = vmatpush.msra.mxu0 %v2008
      %2304 = vmatmul.f32.gmra.mxu0 %v1917
      %v2305 = vpop.f32.mrf.mxu0
      %v2306 = vadd.f32 %v2286, %v2305
      %2307 = vdwg.mxu0
      %2308 = vmatpush.msra.mxu0 %v2039
      %2309 = vmatpush.msra.mxu0 %v2038
      %2310 = vmatpush.msra.mxu0 %v2037
      %2311 = vmatpush.msra.mxu0 %v2036
      %2312 = vmatpush.msra.mxu0 %v2035
      %2313 = vmatpush.msra.mxu0 %v2034
      %2314 = vmatpush.msra.mxu0 %v2033
      %2315 = vmatpush.msra.mxu0 %v2032
      %2316 = vmatpush.msra.mxu0 %v2031
      %2317 = vmatpush.msra.mxu0 %v2030
      %2318 = vmatpush.msra.mxu0 %v2029
      %2319 = vmatpush.msra.mxu0 %v2028
      %2320 = vmatpush.msra.mxu0 %v2027
      %2321 = vmatpush.msra.mxu0 %v2026
      %2322 = vmatpush.msra.mxu0 %v2025
      %2323 = vmatpush.msra.mxu0 %v2024
      %2324 = vmatmul.f32.gmra.mxu0 %v1918
      %v2325 = vpop.f32.mrf.mxu0
      %v2326 = vadd.f32 %v2306, %v2325
      %2327 = vdwg.mxu0
      %2328 = vmatpush.msra.mxu0 %v2055
      %2329 = vmatpush.msra.mxu0 %v2054
      %2330 = vmatpush.msra.mxu0 %v2053
      %2331 = vmatpush.msra.mxu0 %v2052
      %2332 = vmatpush.msra.mxu0 %v2051
      %2333 = vmatpush.msra.mxu0 %v2050
      %2334 = vmatpush.msra.mxu0 %v2049
      %2335 = vmatpush.msra.mxu0 %v2048
      %2336 = vmatpush.msra.mxu0 %v2047
      %2337 = vmatpush.msra.mxu0 %v2046
      %2338 = vmatpush.msra.mxu0 %v2045
      %2339 = vmatpush.msra.mxu0 %v2044
      %2340 = vmatpush.msra.mxu0 %v2043
      %2341 = vmatpush.msra.mxu0 %v2042
      %2342 = vmatpush.msra.mxu0 %v2041
      %2343 = vmatpush.msra.mxu0 %v2040
      %2344 = vmatmul.f32.gmra.mxu0 %v1919
      %v2345 = vpop.f32.mrf.mxu0
      %v2346 = vadd.f32 %v2326, %v2345
      %2347 = vdwg.mxu0
      %2348 = vmatpush.msra.mxu0 %v2071
      %2349 = vmatpush.msra.mxu0 %v2070
      %2350 = vmatpush.msra.mxu0 %v2069
      %2351 = vmatpush.msra.mxu0 %v2068
      %2352 = vmatpush.msra.mxu0 %v2067
      %2353 = vmatpush.msra.mxu0 %v2066
      %2354 = vmatpush.msra.mxu0 %v2065
      %2355 = vmatpush.msra.mxu0 %v2064
      %2356 = vmatpush.msra.mxu0 %v2063
      %2357 = vmatpush.msra.mxu0 %v2062
      %2358 = vmatpush.msra.mxu0 %v2061
      %2359 = vmatpush.msra.mxu0 %v2060
      %2360 = vmatpush.msra.mxu0 %v2059
      %2361 = vmatpush.msra.mxu0 %v2058
      %2362 = vmatpush.msra.mxu0 %v2057
      %2363 = vmatpush.msra.mxu0 %v2056
      %2364 = vmatmul.f32.gmra.mxu0 %v1920
      %v2365 = vpop.f32.mrf.mxu0
      %v2366 = vadd.f32 %v2346, %v2365
      %2367 = vdwg.mxu0
      %2368 = vmatpush.msra.mxu0 %v2087
      %2369 = vmatpush.msra.mxu0 %v2086
      %2370 = vmatpush.msra.mxu0 %v2085
      %2371 = vmatpush.msra.mxu0 %v2084
      %2372 = vmatpush.msra.mxu0 %v2083
      %2373 = vmatpush.msra.mxu0 %v2082
      %2374 = vmatpush.msra.mxu0 %v2081
      %2375 = vmatpush.msra.mxu0 %v2080
      %2376 = vmatpush.msra.mxu0 %v2079
      %2377 = vmatpush.msra.mxu0 %v2078
      %2378 = vmatpush.msra.mxu0 %v2077
      %2379 = vmatpush.msra.mxu0 %v2076
      %2380 = vmatpush.msra.mxu0 %v2075
      %2381 = vmatpush.msra.mxu0 %v2074
      %2382 = vmatpush.msra.mxu0 %v2073
      %2383 = vmatpush.msra.mxu0 %v2072
      %2384 = vmatmul.f32.gmra.mxu0 %v1921
      %v2385 = vpop.f32.mrf.mxu0
      %v2386 = vadd.f32 %v2366, %v2385
      %2387 = vdwg.mxu0
      %2388 = vmatpush.msra.mxu0 %v2103
      %2389 = vmatpush.msra.mxu0 %v2102
      %2390 = vmatpush.msra.mxu0 %v2101
      %2391 = vmatpush.msra.mxu0 %v2100
      %2392 = vmatpush.msra.mxu0 %v2099
      %2393 = vmatpush.msra.mxu0 %v2098
      %2394 = vmatpush.msra.mxu0 %v2097
      %2395 = vmatpush.msra.mxu0 %v2096
      %2396 = vmatpush.msra.mxu0 %v2095
      %2397 = vmatpush.msra.mxu0 %v2094
      %2398 = vmatpush.msra.mxu0 %v2093
      %2399 = vmatpush.msra.mxu0 %v2092
      %2400 = vmatpush.msra.mxu0 %v2091
      %2401 = vmatpush.msra.mxu0 %v2090
      %2402 = vmatpush.msra.mxu0 %v2089
      %2403 = vmatpush.msra.mxu0 %v2088
      %2404 = vmatmul.f32.gmra.mxu0 %v1922
      %v2405 = vpop.f32.mrf.mxu0
      %v2406 = vadd.f32 %v2386, %v2405
      %2407 = vdwg.mxu0
      %2408 = vmatpush.msra.mxu0 %v2119
      %2409 = vmatpush.msra.mxu0 %v2118
      %2410 = vmatpush.msra.mxu0 %v2117
      %2411 = vmatpush.msra.mxu0 %v2116
      %2412 = vmatpush.msra.mxu0 %v2115
      %2413 = vmatpush.msra.mxu0 %v2114
      %2414 = vmatpush.msra.mxu0 %v2113
      %2415 = vmatpush.msra.mxu0 %v2112
      %2416 = vmatpush.msra.mxu0 %v2111
      %2417 = vmatpush.msra.mxu0 %v2110
      %2418 = vmatpush.msra.mxu0 %v2109
      %2419 = vmatpush.msra.mxu0 %v2108
      %2420 = vmatpush.msra.mxu0 %v2107
      %2421 = vmatpush.msra.mxu0 %v2106
      %2422 = vmatpush.msra.mxu0 %v2105
      %2423 = vmatpush.msra.mxu0 %v2104
      %2424 = vmatmul.f32.gmra.mxu0 %v1923
      %v2425 = vpop.f32.mrf.mxu0
      %v2426 = vadd.f32 %v2406, %v2425
      %2427 = vdwg.mxu0
      %2428 = vmatpush.msra.mxu0 %v2135
      %2429 = vmatpush.msra.mxu0 %v2134
      %2430 = vmatpush.msra.mxu0 %v2133
      %2431 = vmatpush.msra.mxu0 %v2132
      %2432 = vmatpush.msra.mxu0 %v2131
      %2433 = vmatpush.msra.mxu0 %v2130
      %2434 = vmatpush.msra.mxu0 %v2129
      %2435 = vmatpush.msra.mxu0 %v2128
      %2436 = vmatpush.msra.mxu0 %v2127
      %2437 = vmatpush.msra.mxu0 %v2126
      %2438 = vmatpush.msra.mxu0 %v2125
      %2439 = vmatpush.msra.mxu0 %v2124
      %2440 = vmatpush.msra.mxu0 %v2123
      %2441 = vmatpush.msra.mxu0 %v2122
      %2442 = vmatpush.msra.mxu0 %v2121
      %2443 = vmatpush.msra.mxu0 %v2120
      %2444 = vmatmul.f32.gmra.mxu0 %v1924
      %v2445 = vpop.f32.mrf.mxu0
      %v2446 = vadd.f32 %v2426, %v2445
      %2447 = vdwg.mxu0
      %2448 = vmatpush.msra.mxu0 %v2151
      %2449 = vmatpush.msra.mxu0 %v2150
      %2450 = vmatpush.msra.mxu0 %v2149
      %2451 = vmatpush.msra.mxu0 %v2148
      %2452 = vmatpush.msra.mxu0 %v2147
      %2453 = vmatpush.msra.mxu0 %v2146
      %2454 = vmatpush.msra.mxu0 %v2145
      %2455 = vmatpush.msra.mxu0 %v2144
      %2456 = vmatpush.msra.mxu0 %v2143
      %2457 = vmatpush.msra.mxu0 %v2142
      %2458 = vmatpush.msra.mxu0 %v2141
      %2459 = vmatpush.msra.mxu0 %v2140
      %2460 = vmatpush.msra.mxu0 %v2139
      %2461 = vmatpush.msra.mxu0 %v2138
      %2462 = vmatpush.msra.mxu0 %v2137
      %2463 = vmatpush.msra.mxu0 %v2136
      %2464 = vmatmul.f32.gmra.mxu0 %v1925
      %v2465 = vpop.f32.mrf.mxu0
      %v2466 = vadd.f32 %v2446, %v2465
      %2467 = vdwg.mxu0
      %2468 = vmatpush.msra.mxu0 %v2167
      %2469 = vmatpush.msra.mxu0 %v2166
      %2470 = vmatpush.msra.mxu0 %v2165
      %2471 = vmatpush.msra.mxu0 %v2164
      %2472 = vmatpush.msra.mxu0 %v2163
      %2473 = vmatpush.msra.mxu0 %v2162
      %2474 = vmatpush.msra.mxu0 %v2161
      %2475 = vmatpush.msra.mxu0 %v2160
      %2476 = vmatpush.msra.mxu0 %v2159
      %2477 = vmatpush.msra.mxu0 %v2158
      %2478 = vmatpush.msra.mxu0 %v2157
      %2479 = vmatpush.msra.mxu0 %v2156
      %2480 = vmatpush.msra.mxu0 %v2155
      %2481 = vmatpush.msra.mxu0 %v2154
      %2482 = vmatpush.msra.mxu0 %v2153
      %2483 = vmatpush.msra.mxu0 %v2152
      %2484 = vmatmul.f32.gmra.mxu0 %v1926
      %v2485 = vpop.f32.mrf.mxu0
      %v2486 = vadd.f32 %v2466, %v2485
      %2487 = vdwg.mxu0
      %2488 = vmatpush.msra.mxu0 %v2183
      %2489 = vmatpush.msra.mxu0 %v2182
      %2490 = vmatpush.msra.mxu0 %v2181
      %2491 = vmatpush.msra.mxu0 %v2180
      %2492 = vmatpush.msra.mxu0 %v2179
      %2493 = vmatpush.msra.mxu0 %v2178
      %2494 = vmatpush.msra.mxu0 %v2177
      %2495 = vmatpush.msra.mxu0 %v2176
      %2496 = vmatpush.msra.mxu0 %v2175
      %2497 = vmatpush.msra.mxu0 %v2174
      %2498 = vmatpush.msra.mxu0 %v2173
      %2499 = vmatpush.msra.mxu0 %v2172
      %2500 = vmatpush.msra.mxu0 %v2171
      %2501 = vmatpush.msra.mxu0 %v2170
      %2502 = vmatpush.msra.mxu0 %v2169
      %2503 = vmatpush.msra.mxu0 %v2168
      %2504 = vmatmul.f32.gmra.mxu0 %v1927
      %v2505 = vpop.f32.mrf.mxu0
      %v2506 = vadd.f32 %v2486, %v2505
      %2507 = vdwg.mxu0
      %v2508 = vld [vmem:[%s20] sm:$0x1]
      %v2509 = vld [vmem:[%s21] sm:$0x1]
      %v2510 = vadd.f32 %v2506, %v1488
      %v2511 = vsel %vm706, %v2510, 0.0
      %2512 = vadd.xlane.f32.xlu0 %v2511
      %v2513 = vpop.xlane.xlu0 %2512
      %v2514 = vmul.f32 %v2513, %v1061
      %v2515 = vsub.f32 %v2510, %v2514
      %v2516 = vmul.f32 %v2515, %v2515
      %v2517 = vsel %vm706, %v2516, 0.0
      %2518 = vadd.xlane.f32.xlu0 %v2517
      %v2519 = vpop.xlane.xlu0 %2518
      %v2520 = vmul.f32 %v2519, %v1061
      %v2521 = vadd.f32 %v2520, 1e-05
      %v2522 = vrsqrt.pop %v2521
      %v2523 = vmul.f32 %v2522, %v2521
      %v2524 = vmul.f32 %v2523, %v2522
      %v2525 = vmul.f32 0.5, %v2524
      %v2526 = vsub.f32 1.5, %v2525
      %v2527 = vmul.f32 %v2522, %v2526
      %vm2528 = vweird.f32 %v2521
      %vm2529 = vweird.f32 %v2522
      %vm2530 = vmor %vm2528, %vm2529
      %v2531 = vsel %vm2530, %v2522, %v2527
      %v2532 = vmul.f32 %v2515, %v2531
      %v2534 = vperm.slane %v2508, 0
      %v2536 = vmul.f32 %v2532, %v2534
      %v2538 = vperm.slane %v2509, 0
      %v2540 = vadd.f32 %v2536, %v2538
      %2541 = vst.msk [vmem:[%s695] sm:$0xff] %vm706, %v2540
      %p2542 = scmp.lt.s32.totalorder %s33, 1
      %s2543 = scalar_select %p2542, %s33, 1
      %s2544 = smul.addr %s2543, 8
      %s2545 = scalar_lea.vmem %s22, %s2544
      // Predicated region
      $region109: #{transformer_forward.9} parent=107 // pred_check
        %p2546 = pneg %p523
      $region110: #{transformer_forward.9} parent=107 // pred_check_branch
        %2548 = sbr.rel (%p2546) target = $region112
      $region111: #{transformer_forward.9} parent=107 // pred_region
        _
      $region112: #{transformer_forward.9} parent=107 // pred_fallthru
        _
    $region108: #{transformer_forward.9} parent=5 // pred_fallthru
      _
    %p2549 = scmp.le.s32.totalorder 2, %s28
    // Predicated region
    $region113: #{transformer_forward.9} parent=5 // pred_check
      %p2550 = pneg %p2549
    $region114: #{transformer_forward.9} parent=5 // pred_check_branch
      %2552 = sbr.rel (%p2550) target = $region116
    $region115: #{transformer_forward.9} parent=5 // pred_region
      %s2553 = ssub.s32 %s28, 2
      // Predicated region
      $region117: #{transformer_forward.9} parent=115 // pred_check
        %p2554 = pneg %p529
      $region118: #{transformer_forward.9} parent=115 // pred_check_branch
        %2556 = sbr.rel (%p2554) target = $region120
      $region119: #{transformer_forward.9} parent=115 // pred_region
        %p2557 = scmp.lt.s32.totalorder %s34, 1
        %s2558 = scalar_select %p2557, %s34, 1
        %s2559 = smul.addr %s2558, 8
        %s2560 = scalar_lea.vmem %s22, %s2559
      $region120: #{transformer_forward.9} parent=115 // pred_fallthru
        _
    $region116: #{transformer_forward.9} parent=5 // pred_fallthru
      _
  $region6: #{transformer_forward.9} parent=0 // loop_footer
    %s32 = sadd.s32 1, %s28
  $region7: #{transformer_forward.9} parent=0 // loop_footer_branch
    %27 = sbr.rel target = $region3
  $region8: #{transformer_forward.9} parent=0 // loop_exit
    _

</llo_original>
